<compile_context>
chip_gen: v7x
topology: tpu7x:2x2x1
jax: 0.10.0
libtpu: 0.0.40
codegen_flags: <defaults>
</compile_context>

<pallas_src>
import functools

import jax
import jax.numpy as jnp
from jax.experimental import pallas as pl
from jax.experimental.pallas import tpu as pltpu


# -----------------------------------------------------------------------------
# Fused kernel: `samples_per_step` full ScalarCNN forwards per grid step
# -----------------------------------------------------------------------------
def _scalar_cnn_kernel(x_ref, w1_ref, b1_ref, g1_ref, be1_ref,
                       w2_ref, b2_ref, g2_ref, be2_ref,
                       w3_ref, b3_ref, g3_ref, be3_ref,
                       w4_ref, b4_ref, m_ref,
                       o_ref,
                       y2_s, y3_s, a2_s, a3_s, *, w, samples_per_step):
    f32 = jnp.float32
    bf16 = jnp.bfloat16
    eps = 1e-5
    step = pl.program_id(0)

    for s in range(samples_per_step):
        # ---- block 1: ConvTranspose2d(1 -> w, k=4) on 1x1 input + ReLU + LayerNorm ----
        xv = x_ref[step * samples_per_step + s]                         # scalar from SMEM
        y1 = jnp.maximum(xv * w1_ref[...] + b1_ref[...], 0.0)           # [16, w] f32
        mu1 = jnp.mean(y1)
        var1 = jnp.mean(jnp.square(y1 - mu1))
        inv1 = jax.lax.rsqrt(var1 + eps)
        a1 = ((y1 - mu1) * inv1 * g1_ref[...] + be1_ref[...]).astype(bf16)   # rows = d1

        # ---- block 2: CT(w -> w, 4x) + ReLU + LayerNorm ----
        y2 = jnp.maximum(
            jnp.dot(a1, w2_ref[...], preferred_element_type=f32) + b2_ref[...], 0.0)
        mu2 = jnp.mean(y2)                         # stats on the live matmul value (f32)
        var2 = jnp.mean(jnp.square(y2 - mu2))
        inv2 = jax.lax.rsqrt(var2 + eps)
        y2_s[...] = y2
        for d in range(16):   # cols (d2, c) -> rows (d2, d1); LN fused into the copy
            lo, hi = d * w, (d + 1) * w
            a2_s[d * 16:(d + 1) * 16, :] = (
                (y2_s[:, lo:hi] - mu2) * inv2 * g2_ref[:, lo:hi].astype(f32)
                + be2_ref[:, lo:hi].astype(f32)).astype(bf16)

        # ---- block 3: CT(w -> w, 4x) + ReLU + LayerNorm ----
        y3 = jnp.maximum(
            jnp.dot(a2_s[...], w3_ref[...], preferred_element_type=f32) + b3_ref[...], 0.0)
        mu3 = jnp.mean(y3)
        var3 = jnp.mean(jnp.square(y3 - mu3))
        inv3 = jax.lax.rsqrt(var3 + eps)
        y3_s[...] = y3
        half = 8 * w
        for h in range(2):    # two 128-aligned [256, 8w] slabs: (d3_hi selects the slab)
            lo, hi = h * half, (h + 1) * half
            a3_s[h * 256:(h + 1) * 256, :] = (
                (y3_s[:, lo:hi] - mu3) * inv3 * g3_ref[:, lo:hi].astype(f32)
                + be3_ref[:, lo:hi].astype(f32)).astype(bf16)

        # ---- block 4: CT(w -> 1, 4x) as one block-diagonal matmul, fused output mask ----
        y4 = jnp.dot(a3_s[...], w4_ref[...], preferred_element_type=f32) + b4_ref[...]
        o_ref[s] = y4 * m_ref[...]                 # [512, 128] lane-dense store


def _vmem_limit_bytes(w, s_per_step):
    f32, bf16 = 4, 2
    consts = (3 * 16 * w * f32 + w * f32                 # w1, g1, be1, b1
              + 2 * (w * 16 * w) * bf16                  # w2, w3
              + 2 * (16 * w) * f32                       # b2, b3
              + 2 * (16 * 16 * w) * bf16                 # g2, be2
              + 2 * (256 * 16 * w) * bf16                # g3, be3
              + (8 * w * 128) * bf16 + 128 * f32         # w4 (block-diag), b4
              + 512 * 128 * f32)                         # mask
    out_blk = s_per_step * 512 * 128 * f32
    scratch = (16 * 16 * w + 256 * 16 * w) * f32 + (256 * w + 512 * 8 * w) * bf16
    ssa = (16 * 16 * w + 256 * 16 * w) * f32 + 512 * 128 * f32   # live y2/y3/y4 values
    need = 2 * (consts + out_blk) + scratch + ssa                # 2x: pipeline double-buffer
    return int(min(max(2 * need, 24 << 20), 48 << 20))


def scalar_cnn_forward(packed, x, *, w=32, samples_per_step=1):
    """x: [B, 1] float32 -> [B, 1, 256, 256] float32."""
    B = x.shape[0]
    S = samples_per_step
    assert B % S == 0, "batch must be divisible by samples_per_step"
    x_flat = x.reshape(B).astype(jnp.float32)
    const = lambda b: (0, 0)

    y4 = pl.pallas_call(
        functools.partial(_scalar_cnn_kernel, w=w, samples_per_step=S),
        out_shape=jax.ShapeDtypeStruct((B, 512, 128), jnp.float32),
        grid_spec=pltpu.PrefetchScalarGridSpec(
            num_scalar_prefetch=0,
            grid=(B // S,),
            in_specs=[
                pl.BlockSpec(memory_space=pltpu.MemorySpace.SMEM),   # x  [B] (1-D, tiny)
                pl.BlockSpec((16, w), const),                        # w1  f32
                pl.BlockSpec((1, w), const),                         # b1
                pl.BlockSpec((16, w), const),                        # g1
                pl.BlockSpec((16, w), const),                        # be1
                pl.BlockSpec((w, 16 * w), const),                    # w2  bf16
                pl.BlockSpec((1, 16 * w), const),                    # b2
                pl.BlockSpec((16, 16 * w), const),                   # g2  bf16
                pl.BlockSpec((16, 16 * w), const),                   # be2 bf16
                pl.BlockSpec((w, 16 * w), const),                    # w3  bf16
                pl.BlockSpec((1, 16 * w), const),                    # b3
                pl.BlockSpec((256, 16 * w), const),                  # g3  bf16
                pl.BlockSpec((256, 16 * w), const),                  # be3 bf16
                pl.BlockSpec((8 * w, 128), const),                   # w4  block-diag bf16
                pl.BlockSpec((1, 128), const),                       # b4
                pl.BlockSpec((512, 128), const),                     # mask (pre-permuted)
            ],
            out_specs=pl.BlockSpec((S, 512, 128), lambda b: (b, 0, 0)),
            scratch_shapes=[
                pltpu.VMEM((16, 16 * w), jnp.float32),    # Y2 (post-bias/ReLU)
                pltpu.VMEM((256, 16 * w), jnp.float32),   # Y3 (post-bias/ReLU)
                pltpu.VMEM((256, w), jnp.bfloat16),       # activation after block 2
                pltpu.VMEM((512, 8 * w), jnp.bfloat16),   # activation after block 3 (d3-grouped)
            ],
        ),
        compiler_params=pltpu.CompilerParams(
            dimension_semantics=("parallel",),
            vmem_limit_bytes=_vmem_limit_bytes(w, S),
        ),
    )(
        x_flat,
        packed["w1"], packed["b1"], packed["g1"], packed["be1"],
        packed["w2"], packed["b2"], packed["g2"], packed["be2"],
        packed["w3"], packed["b3"], packed["g3"], packed["be3"],
        packed["w4"], packed["b4"], packed["m"],
    )

    # Quad-tree (Z-order) decode of the lane-dense kernel layout into the image:
    #   rows = (d3_hi, d2, d1) = (i3_hi, i2, j2, i1, j1), cols = (d3_lo, d4) = (i3_lo, j3, i4, j4)
    img = y4.reshape(B, 2, 4, 4, 4, 4, 2, 4, 4, 4)
    img = img.transpose(0, 4, 2, 1, 6, 8, 5, 3, 7, 9)   # -> (B, i1,i2,i3_hi,i3_lo,i4, j1..j4)
    return img.reshape(B, 1, 256, 256)


# -----------------------------------------------------------------------------
# Parameters (deterministic, synthetic) + packing into kernel layouts
# -----------------------------------------------------------------------------
def init_params(key, w=32):
    ks = jax.random.split(key, 14)

    def ct(kw_key, kb_key, cin, cout):
        scale = 1.0 / (cin * 16) ** 0.5
        wgt = jax.random.normal(kw_key, (cin, cout, 4, 4), jnp.float32) * scale
        bias = jax.random.normal(kb_key, (cout,), jnp.float32) * scale
        return wgt, bias

    p = {}
    p["W1"], p["B1"] = ct(ks[0], ks[1], 1, w)
    p["W2"], p["B2"] = ct(ks[2], ks[3], w, w)
    p["W3"], p["B3"] = ct(ks[4], ks[5], w, w)
    p["W4"], p["B4"] = ct(ks[6], ks[7], w, 1)
    # LayerNorm affine params, mildly randomized so the layout packing is actually exercised.
    p["G1"] = 1.0 + 0.1 * jax.random.normal(ks[8], (w, 4, 4), jnp.float32)
    p["BE1"] = 0.1 * jax.random.normal(ks[9], (w, 4, 4), jnp.float32)
    p["G2"] = 1.0 + 0.1 * jax.random.normal(ks[10], (w, 16, 16), jnp.float32)
    p["BE2"] = 0.1 * jax.random.normal(ks[11], (w, 16, 16), jnp.float32)
    p["G3"] = 1.0 + 0.1 * jax.random.normal(ks[12], (w, 64, 64), jnp.float32)
    p["BE3"] = 0.1 * jax.random.normal(ks[13], (w, 64, 64), jnp.float32)
    return p


def pack_params(p, mask, w=32):
    """Permute torch-layout params/mask into the kernel's quad-tree row/col layouts."""
    bf16 = jnp.bfloat16
    packed = {}
    # block 1: torch weight [1, w, 4, 4] -> [16 (d1 = 4*i1+j1), w]   (VPU path, keep f32)
    packed["w1"] = p["W1"][0].transpose(1, 2, 0).reshape(16, w)
    packed["b1"] = p["B1"].reshape(1, w)
    packed["g1"] = p["G1"].transpose(1, 2, 0).reshape(16, w)
    packed["be1"] = p["BE1"].transpose(1, 2, 0).reshape(16, w)

    # blocks 2/3: weight [w, w, 4, 4] -> [w, 16w] cols ordered (d, cout); bias tiled per d
    def pack_ct(W, Bv):
        return (W.transpose(0, 2, 3, 1).reshape(w, 16 * w).astype(bf16),
                jnp.tile(Bv, 16).reshape(1, 16 * w))

    packed["w2"], packed["b2"] = pack_ct(p["W2"], p["B2"])
    packed["w3"], packed["b3"] = pack_ct(p["W3"], p["B3"])

    # LN2 params [w,16,16] -> [16 (d1), 16w (d2, c)]  matching the Y2 layout (bf16)
    def pack_ln2(G):
        return (G.reshape(w, 4, 4, 4, 4).transpose(1, 3, 2, 4, 0)
                 .reshape(16, 16 * w).astype(bf16))

    packed["g2"], packed["be2"] = pack_ln2(p["G2"]), pack_ln2(p["BE2"])

    # LN3 params [w,64,64] -> [256 (d2,d1), 16w (d3, c)]  matching the Y3 layout (bf16)
    def pack_ln3(G):
        return (G.reshape(w, 4, 4, 4, 4, 4, 4)
                 .transpose(2, 5, 1, 4, 3, 6, 0).reshape(256, 16 * w).astype(bf16))

    packed["g3"], packed["be3"] = pack_ln3(p["G3"]), pack_ln3(p["BE3"])

    # block 4: weight [w, 1, 4, 4] -> [w, 16 (d4)], then block_diag x8 -> [8w, 128]
    w4_flat = p["W4"][:, 0].reshape(w, 16)
    packed["w4"] = jnp.kron(jnp.eye(8, dtype=w4_flat.dtype), w4_flat).astype(bf16)
    packed["b4"] = jnp.full((1, 128), p["B4"][0], jnp.float32)

    # mask [256,256] -> lane-dense quad-tree layout [512 (d3_hi,d2,d1), 128 (d3_lo,d4)]
    m_qt = (mask.reshape(4, 4, 4, 4, 4, 4, 4, 4)       # (i1,i2,i3,i4, j1,j2,j3,j4)
                .transpose(2, 6, 1, 5, 0, 4, 3, 7)      # (i3,j3,i2,j2,i1,j1,i4,j4)
                .reshape(4096, 16))                     # [(d3,d2,d1), d4]
    packed["m"] = m_qt.reshape(2, 8, 256, 16).transpose(0, 2, 1, 3).reshape(512, 128)
    return packed


# -----------------------------------------------------------------------------
# Pure-JAX f32 reference (reconstructed module) for a correctness check
# -----------------------------------------------------------------------------
def reference_forward(p, mask, x):
    hp = jax.lax.Precision.HIGHEST
    eps = 1e-5

    def ln(y, g, b):
        mu = jnp.mean(y, axis=(1, 2, 3), keepdims=True)
        var = jnp.mean(jnp.square(y - mu), axis=(1, 2, 3), keepdims=True)
        return (y - mu) * jax.lax.rsqrt(var + eps) * g[None] + b[None]

    def ct4(y, Wt, Bv):   # stride==kernel==4 ConvTranspose2d
        o = jnp.einsum("nchw,cdij->ndhiwj", y, Wt, precision=hp)
        n, d, H, _, W_, _ = o.shape
        return o.reshape(n, d, H * 4, W_ * 4) + Bv[None, :, None, None]

    y = x[:, :, None, None] * p["W1"][0][None] + p["B1"][None, :, None, None]
    y = ln(jnp.maximum(y, 0.0), p["G1"], p["BE1"])
    y = ln(jnp.maximum(ct4(y, p["W2"], p["B2"]), 0.0), p["G2"], p["BE2"])
    y = ln(jnp.maximum(ct4(y, p["W3"], p["B3"]), 0.0), p["G3"], p["BE3"])
    y = ct4(y, p["W4"], p["B4"])
    return y * mask[None, None]


if __name__ == "__main__":
    W_CH = 32    # module default is 128; small-shape run per instructions
    B = 4
    S = 2        # samples per grid step -> grid=(2,), keeps both v7x TensorCores busy
    key = jax.random.PRNGKey(0)
    kx, kp = jax.random.split(key)
    x = jax.random.normal(kx, (B, 1), jnp.float32)
    params = init_params(kp, W_CH)

    # deterministic stand-in for shape.final_mask(): 256x256 disk mask
    yy, xx = jnp.meshgrid(jnp.arange(256), jnp.arange(256), indexing="ij")
    mask = (((yy - 127.5) ** 2 + (xx - 127.5) ** 2) < 100.0 ** 2).astype(jnp.float32)

    packed = pack_params(params, mask, W_CH)   # one-time layout permutation of params/mask

    fwd = jax.jit(functools.partial(scalar_cnn_forward, w=W_CH, samples_per_step=S))
    out = fwd(packed, x)
    jax.block_until_ready(out)

    assert out.shape == (B, 1, 256, 256) and out.dtype == jnp.float32
    assert bool(jnp.all(jnp.isfinite(out)))
    ref = reference_forward(params, mask, x)
    max_err = float(jnp.max(jnp.abs(out - ref)))   # bf16 activations/weights vs f32 reference
    assert max_err < 0.15, f"max abs err vs reference: {max_err}"
    print("KERNEL_OK")
</pallas_src>

<mosaic_0001>
module attributes {stable_mosaic.version = 11 : i64} {
  func.func @_scalar_cnn_kernel(%arg0: i32, %arg1: memref<4xf32, #tpu.memory_space<smem>>, %arg2: memref<16x32xf32, #tpu.memory_space<vmem>>, %arg3: memref<1x32xf32, #tpu.memory_space<vmem>>, %arg4: memref<16x32xf32, #tpu.memory_space<vmem>>, %arg5: memref<16x32xf32, #tpu.memory_space<vmem>>, %arg6: memref<32x512xbf16, #tpu.memory_space<vmem>>, %arg7: memref<1x512xf32, #tpu.memory_space<vmem>>, %arg8: memref<16x512xbf16, #tpu.memory_space<vmem>>, %arg9: memref<16x512xbf16, #tpu.memory_space<vmem>>, %arg10: memref<32x512xbf16, #tpu.memory_space<vmem>>, %arg11: memref<1x512xf32, #tpu.memory_space<vmem>>, %arg12: memref<256x512xbf16, #tpu.memory_space<vmem>>, %arg13: memref<256x512xbf16, #tpu.memory_space<vmem>>, %arg14: memref<256x128xbf16, #tpu.memory_space<vmem>>, %arg15: memref<1x128xf32, #tpu.memory_space<vmem>>, %arg16: memref<512x128xf32, #tpu.memory_space<vmem>>, %arg17: memref<2x512x128xf32, #tpu.memory_space<vmem>>, %arg18: memref<16x512xf32, #tpu.memory_space<vmem>>, %arg19: memref<256x512xf32, #tpu.memory_space<vmem>>, %arg20: memref<256x32xbf16, #tpu.memory_space<vmem>>, %arg21: memref<512x256xbf16, #tpu.memory_space<vmem>>) attributes {dimension_semantics = [#tpu.dimension_semantics<parallel>], iteration_bounds = array<i64: 2>, scalar_prefetch = 0 : i64, scratch_operands = 4 : i64, tpu.core_type = #tpu.core_type<tc>, window_params = [{transform_indices = @transform_0, window_bounds = array<i64: 4>}, {pipeline_mode = #tpu.pipeline_mode<synchronous>, transform_indices = @transform_1, window_bounds = array<i64: 16, 32>}, {pipeline_mode = #tpu.pipeline_mode<synchronous>, transform_indices = @transform_2, window_bounds = array<i64: 1, 32>}, {pipeline_mode = #tpu.pipeline_mode<synchronous>, transform_indices = @transform_3, window_bounds = array<i64: 16, 32>}, {pipeline_mode = #tpu.pipeline_mode<synchronous>, transform_indices = @transform_4, window_bounds = array<i64: 16, 32>}, {pipeline_mode = #tpu.pipeline_mode<synchronous>, transform_indices = @transform_5, window_bounds = array<i64: 32, 512>}, {pipeline_mode = #tpu.pipeline_mode<synchronous>, transform_indices = @transform_6, window_bounds = array<i64: 1, 512>}, {pipeline_mode = #tpu.pipeline_mode<synchronous>, transform_indices = @transform_7, window_bounds = array<i64: 16, 512>}, {pipeline_mode = #tpu.pipeline_mode<synchronous>, transform_indices = @transform_8, window_bounds = array<i64: 16, 512>}, {pipeline_mode = #tpu.pipeline_mode<synchronous>, transform_indices = @transform_9, window_bounds = array<i64: 32, 512>}, {pipeline_mode = #tpu.pipeline_mode<synchronous>, transform_indices = @transform_10, window_bounds = array<i64: 1, 512>}, {pipeline_mode = #tpu.pipeline_mode<synchronous>, transform_indices = @transform_11, window_bounds = array<i64: 256, 512>}, {pipeline_mode = #tpu.pipeline_mode<synchronous>, transform_indices = @transform_12, window_bounds = array<i64: 256, 512>}, {pipeline_mode = #tpu.pipeline_mode<synchronous>, transform_indices = @transform_13, window_bounds = array<i64: 256, 128>}, {pipeline_mode = #tpu.pipeline_mode<synchronous>, transform_indices = @transform_14, window_bounds = array<i64: 1, 128>}, {pipeline_mode = #tpu.pipeline_mode<synchronous>, transform_indices = @transform_15, window_bounds = array<i64: 512, 128>}, {transform_indices = @transform_16, window_bounds = array<i64: 2, 512, 128>}]} {
    %c2_i32 = arith.constant 2 : i32
    %0 = arith.muli %arg0, %c2_i32 : i32
    %c0_i32 = arith.constant 0 : i32
    %1 = arith.addi %0, %c0_i32 : i32
    %2 = arith.index_cast %1 : i32 to index
    %3 = memref.load %arg1[%2] : memref<4xf32, #tpu.memory_space<smem>>
    %c0 = arith.constant 0 : index
    %c0_0 = arith.constant 0 : index
    %4 = vector.load %arg2[%c0, %c0_0] : memref<16x32xf32, #tpu.memory_space<vmem>>, vector<16x32xf32>
    %5 = vector.broadcast %3 : f32 to vector<16x32xf32>
    %6 = arith.mulf %5, %4 : vector<16x32xf32>
    %c0_1 = arith.constant 0 : index
    %c0_2 = arith.constant 0 : index
    %7 = vector.load %arg3[%c0_1, %c0_2] : memref<1x32xf32, #tpu.memory_space<vmem>>, vector<1x32xf32>
    %8 = vector.broadcast %7 : vector<1x32xf32> to vector<16x32xf32>
    %9 = arith.addf %6, %8 : vector<16x32xf32>
    %cst = arith.constant 0.000000e+00 : f32
    %10 = vector.broadcast %cst : f32 to vector<16x32xf32>
    %11 = arith.maximumf %9, %10 : vector<16x32xf32>
    %12 = vector.shape_cast %11 : vector<16x32xf32> to vector<1x16x32xf32>
    %cst_3 = arith.constant dense<0.000000e+00> : vector<1xf32>
    %13 = vector.multi_reduction <add>, %12, %cst_3 [1, 2] : vector<1x16x32xf32> to vector<1xf32>
    %14 = vector.shape_cast %13 : vector<1xf32> to vector<1x1x1xf32>
    %15 = vector.extract %14[0, 0, 0] : f32 from vector<1x1x1xf32>
    %cst_4 = arith.constant 5.120000e+02 : f32
    %16 = arith.divf %15, %cst_4 : f32
    %17 = vector.broadcast %16 : f32 to vector<16x32xf32>
    %18 = arith.subf %11, %17 : vector<16x32xf32>
    %19 = arith.mulf %18, %18 : vector<16x32xf32>
    %20 = vector.shape_cast %19 : vector<16x32xf32> to vector<1x16x32xf32>
    %cst_5 = arith.constant dense<0.000000e+00> : vector<1xf32>
    %21 = vector.multi_reduction <add>, %20, %cst_5 [1, 2] : vector<1x16x32xf32> to vector<1xf32>
    %22 = vector.shape_cast %21 : vector<1xf32> to vector<1x1x1xf32>
    %23 = vector.extract %22[0, 0, 0] : f32 from vector<1x1x1xf32>
    %cst_6 = arith.constant 5.120000e+02 : f32
    %24 = arith.divf %23, %cst_6 : f32
    %cst_7 = arith.constant 9.99999974E-6 : f32
    %25 = arith.addf %24, %cst_7 : f32
    %26 = math.rsqrt %25 : f32
    %27 = vector.broadcast %16 : f32 to vector<16x32xf32>
    %28 = arith.subf %11, %27 : vector<16x32xf32>
    %29 = vector.broadcast %26 : f32 to vector<16x32xf32>
    %30 = arith.mulf %28, %29 : vector<16x32xf32>
    %c0_8 = arith.constant 0 : index
    %c0_9 = arith.constant 0 : index
    %31 = vector.load %arg4[%c0_8, %c0_9] : memref<16x32xf32, #tpu.memory_space<vmem>>, vector<16x32xf32>
    %32 = arith.mulf %30, %31 : vector<16x32xf32>
    %c0_10 = arith.constant 0 : index
    %c0_11 = arith.constant 0 : index
    %33 = vector.load %arg5[%c0_10, %c0_11] : memref<16x32xf32, #tpu.memory_space<vmem>>, vector<16x32xf32>
    %34 = arith.addf %32, %33 : vector<16x32xf32>
    %35 = arith.truncf %34 : vector<16x32xf32> to vector<16x32xbf16>
    %c0_12 = arith.constant 0 : index
    %c0_13 = arith.constant 0 : index
    %36 = vector.load %arg6[%c0_12, %c0_13] : memref<32x512xbf16, #tpu.memory_space<vmem>>, vector<32x512xbf16>
    %cst_14 = arith.constant dense<0.000000e+00> : vector<16x512xf32>
    %37 = tpu.matmul %35, %36, %cst_14 {dimension_numbers = #tpu.dot_dimension_numbers<[1], [0], [0], [1], [0, 0, 1, 1], [], []>} : vector<16x32xbf16>, vector<32x512xbf16>, vector<16x512xf32> -> vector<16x512xf32>
    %c0_15 = arith.constant 0 : index
    %c0_16 = arith.constant 0 : index
    %38 = vector.load %arg7[%c0_15, %c0_16] : memref<1x512xf32, #tpu.memory_space<vmem>>, vector<1x512xf32>
    %39 = vector.broadcast %38 : vector<1x512xf32> to vector<16x512xf32>
    %40 = arith.addf %37, %39 : vector<16x512xf32>
    %cst_17 = arith.constant 0.000000e+00 : f32
    %41 = vector.broadcast %cst_17 : f32 to vector<16x512xf32>
    %42 = arith.maximumf %40, %41 : vector<16x512xf32>
    %43 = vector.shape_cast %42 : vector<16x512xf32> to vector<1x16x512xf32>
    %cst_18 = arith.constant dense<0.000000e+00> : vector<1xf32>
    %44 = vector.multi_reduction <add>, %43, %cst_18 [1, 2] : vector<1x16x512xf32> to vector<1xf32>
    %45 = vector.shape_cast %44 : vector<1xf32> to vector<1x1x1xf32>
    %46 = vector.extract %45[0, 0, 0] : f32 from vector<1x1x1xf32>
    %cst_19 = arith.constant 8.192000e+03 : f32
    %47 = arith.divf %46, %cst_19 : f32
    %48 = vector.broadcast %47 : f32 to vector<16x512xf32>
    %49 = arith.subf %42, %48 : vector<16x512xf32>
    %50 = arith.mulf %49, %49 : vector<16x512xf32>
    %51 = vector.shape_cast %50 : vector<16x512xf32> to vector<1x16x512xf32>
    %cst_20 = arith.constant dense<0.000000e+00> : vector<1xf32>
    %52 = vector.multi_reduction <add>, %51, %cst_20 [1, 2] : vector<1x16x512xf32> to vector<1xf32>
    %53 = vector.shape_cast %52 : vector<1xf32> to vector<1x1x1xf32>
    %54 = vector.extract %53[0, 0, 0] : f32 from vector<1x1x1xf32>
    %cst_21 = arith.constant 8.192000e+03 : f32
    %55 = arith.divf %54, %cst_21 : f32
    %cst_22 = arith.constant 9.99999974E-6 : f32
    %56 = arith.addf %55, %cst_22 : f32
    %57 = math.rsqrt %56 : f32
    %c0_23 = arith.constant 0 : index
    %c0_24 = arith.constant 0 : index
    %58 = vector.load %arg18[%c0_23, %c0_24] : memref<16x512xf32, #tpu.memory_space<vmem>>, vector<16x512xf32>
    tpu.vector_store %arg18[%c0_23, %c0_24], %42 {strides = array<i32>} : memref<16x512xf32, #tpu.memory_space<vmem>>, vector<16x512xf32>,
    %c0_25 = arith.constant 0 : index
    %c0_26 = arith.constant 0 : index
    %59 = vector.load %arg18[%c0_25, %c0_26] : memref<16x512xf32, #tpu.memory_space<vmem>>, vector<16x32xf32>
    %60 = vector.broadcast %47 : f32 to vector<16x32xf32>
    %61 = arith.subf %59, %60 : vector<16x32xf32>
    %62 = vector.broadcast %57 : f32 to vector<16x32xf32>
    %63 = arith.mulf %61, %62 : vector<16x32xf32>
    %c0_27 = arith.constant 0 : index
    %c0_28 = arith.constant 0 : index
    %64 = vector.load %arg8[%c0_27, %c0_28] : memref<16x512xbf16, #tpu.memory_space<vmem>>, vector<16x32xbf16>
    %65 = arith.extf %64 : vector<16x32xbf16> to vector<16x32xf32>
    %66 = arith.mulf %63, %65 : vector<16x32xf32>
    %c0_29 = arith.constant 0 : index
    %c0_30 = arith.constant 0 : index
    %67 = vector.load %arg9[%c0_29, %c0_30] : memref<16x512xbf16, #tpu.memory_space<vmem>>, vector<16x32xbf16>
    %68 = arith.extf %67 : vector<16x32xbf16> to vector<16x32xf32>
    %69 = arith.addf %66, %68 : vector<16x32xf32>
    %70 = arith.truncf %69 : vector<16x32xf32> to vector<16x32xbf16>
    %c0_31 = arith.constant 0 : index
    %c0_32 = arith.constant 0 : index
    %71 = vector.load %arg20[%c0_31, %c0_32] : memref<256x32xbf16, #tpu.memory_space<vmem>>, vector<16x32xbf16>
    tpu.vector_store %arg20[%c0_31, %c0_32], %70 {strides = array<i32>} : memref<256x32xbf16, #tpu.memory_space<vmem>>, vector<16x32xbf16>,
    %c0_33 = arith.constant 0 : index
    %c32 = arith.constant 32 : index
    %72 = vector.load %arg18[%c0_33, %c32] : memref<16x512xf32, #tpu.memory_space<vmem>>, vector<16x32xf32>
    %73 = vector.broadcast %47 : f32 to vector<16x32xf32>
    %74 = arith.subf %72, %73 : vector<16x32xf32>
    %75 = vector.broadcast %57 : f32 to vector<16x32xf32>
    %76 = arith.mulf %74, %75 : vector<16x32xf32>
    %c0_34 = arith.constant 0 : index
    %c32_35 = arith.constant 32 : index
    %77 = vector.load %arg8[%c0_34, %c32_35] : memref<16x512xbf16, #tpu.memory_space<vmem>>, vector<16x32xbf16>
    %78 = arith.extf %77 : vector<16x32xbf16> to vector<16x32xf32>
    %79 = arith.mulf %76, %78 : vector<16x32xf32>
    %c0_36 = arith.constant 0 : index
    %c32_37 = arith.constant 32 : index
    %80 = vector.load %arg9[%c0_36, %c32_37] : memref<16x512xbf16, #tpu.memory_space<vmem>>, vector<16x32xbf16>
    %81 = arith.extf %80 : vector<16x32xbf16> to vector<16x32xf32>
    %82 = arith.addf %79, %81 : vector<16x32xf32>
    %83 = arith.truncf %82 : vector<16x32xf32> to vector<16x32xbf16>
    %c16 = arith.constant 16 : index
    %c0_38 = arith.constant 0 : index
    %84 = vector.load %arg20[%c16, %c0_38] : memref<256x32xbf16, #tpu.memory_space<vmem>>, vector<16x32xbf16>
    tpu.vector_store %arg20[%c16, %c0_38], %83 {strides = array<i32>} : memref<256x32xbf16, #tpu.memory_space<vmem>>, vector<16x32xbf16>,
    %c0_39 = arith.constant 0 : index
    %c64 = arith.constant 64 : index
    %85 = vector.load %arg18[%c0_39, %c64] : memref<16x512xf32, #tpu.memory_space<vmem>>, vector<16x32xf32>
    %86 = vector.broadcast %47 : f32 to vector<16x32xf32>
    %87 = arith.subf %85, %86 : vector<16x32xf32>
    %88 = vector.broadcast %57 : f32 to vector<16x32xf32>
    %89 = arith.mulf %87, %88 : vector<16x32xf32>
    %c0_40 = arith.constant 0 : index
    %c64_41 = arith.constant 64 : index
    %90 = vector.load %arg8[%c0_40, %c64_41] : memref<16x512xbf16, #tpu.memory_space<vmem>>, vector<16x32xbf16>
    %91 = arith.extf %90 : vector<16x32xbf16> to vector<16x32xf32>
    %92 = arith.mulf %89, %91 : vector<16x32xf32>
    %c0_42 = arith.constant 0 : index
    %c64_43 = arith.constant 64 : index
    %93 = vector.load %arg9[%c0_42, %c64_43] : memref<16x512xbf16, #tpu.memory_space<vmem>>, vector<16x32xbf16>
    %94 = arith.extf %93 : vector<16x32xbf16> to vector<16x32xf32>
    %95 = arith.addf %92, %94 : vector<16x32xf32>
    %96 = arith.truncf %95 : vector<16x32xf32> to vector<16x32xbf16>
    %c32_44 = arith.constant 32 : index
    %c0_45 = arith.constant 0 : index
    %97 = vector.load %arg20[%c32_44, %c0_45] : memref<256x32xbf16, #tpu.memory_space<vmem>>, vector<16x32xbf16>
    tpu.vector_store %arg20[%c32_44, %c0_45], %96 {strides = array<i32>} : memref<256x32xbf16, #tpu.memory_space<vmem>>, vector<16x32xbf16>,
    %c0_46 = arith.constant 0 : index
    %c96 = arith.constant 96 : index
    %98 = vector.load %arg18[%c0_46, %c96] : memref<16x512xf32, #tpu.memory_space<vmem>>, vector<16x32xf32>
    %99 = vector.broadcast %47 : f32 to vector<16x32xf32>
    %100 = arith.subf %98, %99 : vector<16x32xf32>
    %101 = vector.broadcast %57 : f32 to vector<16x32xf32>
    %102 = arith.mulf %100, %101 : vector<16x32xf32>
    %c0_47 = arith.constant 0 : index
    %c96_48 = arith.constant 96 : index
    %103 = vector.load %arg8[%c0_47, %c96_48] : memref<16x512xbf16, #tpu.memory_space<vmem>>, vector<16x32xbf16>
    %104 = arith.extf %103 : vector<16x32xbf16> to vector<16x32xf32>
    %105 = arith.mulf %102, %104 : vector<16x32xf32>
    %c0_49 = arith.constant 0 : index
    %c96_50 = arith.constant 96 : index
    %106 = vector.load %arg9[%c0_49, %c96_50] : memref<16x512xbf16, #tpu.memory_space<vmem>>, vector<16x32xbf16>
    %107 = arith.extf %106 : vector<16x32xbf16> to vector<16x32xf32>
    %108 = arith.addf %105, %107 : vector<16x32xf32>
    %109 = arith.truncf %108 : vector<16x32xf32> to vector<16x32xbf16>
    %c48 = arith.constant 48 : index
    %c0_51 = arith.constant 0 : index
    %110 = vector.load %arg20[%c48, %c0_51] : memref<256x32xbf16, #tpu.memory_space<vmem>>, vector<16x32xbf16>
    tpu.vector_store %arg20[%c48, %c0_51], %109 {strides = array<i32>} : memref<256x32xbf16, #tpu.memory_space<vmem>>, vector<16x32xbf16>,
    %c0_52 = arith.constant 0 : index
    %c128 = arith.constant 128 : index
    %111 = vector.load %arg18[%c0_52, %c128] : memref<16x512xf32, #tpu.memory_space<vmem>>, vector<16x32xf32>
    %112 = vector.broadcast %47 : f32 to vector<16x32xf32>
    %113 = arith.subf %111, %112 : vector<16x32xf32>
    %114 = vector.broadcast %57 : f32 to vector<16x32xf32>
    %115 = arith.mulf %113, %114 : vector<16x32xf32>
    %c0_53 = arith.constant 0 : index
    %c128_54 = arith.constant 128 : index
    %116 = vector.load %arg8[%c0_53, %c128_54] : memref<16x512xbf16, #tpu.memory_space<vmem>>, vector<16x32xbf16>
    %117 = arith.extf %116 : vector<16x32xbf16> to vector<16x32xf32>
    %118 = arith.mulf %115, %117 : vector<16x32xf32>
    %c0_55 = arith.constant 0 : index
    %c128_56 = arith.constant 128 : index
    %119 = vector.load %arg9[%c0_55, %c128_56] : memref<16x512xbf16, #tpu.memory_space<vmem>>, vector<16x32xbf16>
    %120 = arith.extf %119 : vector<16x32xbf16> to vector<16x32xf32>
    %121 = arith.addf %118, %120 : vector<16x32xf32>
    %122 = arith.truncf %121 : vector<16x32xf32> to vector<16x32xbf16>
    %c64_57 = arith.constant 64 : index
    %c0_58 = arith.constant 0 : index
    %123 = vector.load %arg20[%c64_57, %c0_58] : memref<256x32xbf16, #tpu.memory_space<vmem>>, vector<16x32xbf16>
    tpu.vector_store %arg20[%c64_57, %c0_58], %122 {strides = array<i32>} : memref<256x32xbf16, #tpu.memory_space<vmem>>, vector<16x32xbf16>,
    %c0_59 = arith.constant 0 : index
    %c160 = arith.constant 160 : index
    %124 = vector.load %arg18[%c0_59, %c160] : memref<16x512xf32, #tpu.memory_space<vmem>>, vector<16x32xf32>
    %125 = vector.broadcast %47 : f32 to vector<16x32xf32>
    %126 = arith.subf %124, %125 : vector<16x32xf32>
    %127 = vector.broadcast %57 : f32 to vector<16x32xf32>
    %128 = arith.mulf %126, %127 : vector<16x32xf32>
    %c0_60 = arith.constant 0 : index
    %c160_61 = arith.constant 160 : index
    %129 = vector.load %arg8[%c0_60, %c160_61] : memref<16x512xbf16, #tpu.memory_space<vmem>>, vector<16x32xbf16>
    %130 = arith.extf %129 : vector<16x32xbf16> to vector<16x32xf32>
    %131 = arith.mulf %128, %130 : vector<16x32xf32>
    %c0_62 = arith.constant 0 : index
    %c160_63 = arith.constant 160 : index
    %132 = vector.load %arg9[%c0_62, %c160_63] : memref<16x512xbf16, #tpu.memory_space<vmem>>, vector<16x32xbf16>
    %133 = arith.extf %132 : vector<16x32xbf16> to vector<16x32xf32>
    %134 = arith.addf %131, %133 : vector<16x32xf32>
    %135 = arith.truncf %134 : vector<16x32xf32> to vector<16x32xbf16>
    %c80 = arith.constant 80 : index
    %c0_64 = arith.constant 0 : index
    %136 = vector.load %arg20[%c80, %c0_64] : memref<256x32xbf16, #tpu.memory_space<vmem>>, vector<16x32xbf16>
    tpu.vector_store %arg20[%c80, %c0_64], %135 {strides = array<i32>} : memref<256x32xbf16, #tpu.memory_space<vmem>>, vector<16x32xbf16>,
    %c0_65 = arith.constant 0 : index
    %c192 = arith.constant 192 : index
    %137 = vector.load %arg18[%c0_65, %c192] : memref<16x512xf32, #tpu.memory_space<vmem>>, vector<16x32xf32>
    %138 = vector.broadcast %47 : f32 to vector<16x32xf32>
    %139 = arith.subf %137, %138 : vector<16x32xf32>
    %140 = vector.broadcast %57 : f32 to vector<16x32xf32>
    %141 = arith.mulf %139, %140 : vector<16x32xf32>
    %c0_66 = arith.constant 0 : index
    %c192_67 = arith.constant 192 : index
    %142 = vector.load %arg8[%c0_66, %c192_67] : memref<16x512xbf16, #tpu.memory_space<vmem>>, vector<16x32xbf16>
    %143 = arith.extf %142 : vector<16x32xbf16> to vector<16x32xf32>
    %144 = arith.mulf %141, %143 : vector<16x32xf32>
    %c0_68 = arith.constant 0 : index
    %c192_69 = arith.constant 192 : index
    %145 = vector.load %arg9[%c0_68, %c192_69] : memref<16x512xbf16, #tpu.memory_space<vmem>>, vector<16x32xbf16>
    %146 = arith.extf %145 : vector<16x32xbf16> to vector<16x32xf32>
    %147 = arith.addf %144, %146 : vector<16x32xf32>
    %148 = arith.truncf %147 : vector<16x32xf32> to vector<16x32xbf16>
    %c96_70 = arith.constant 96 : index
    %c0_71 = arith.constant 0 : index
    %149 = vector.load %arg20[%c96_70, %c0_71] : memref<256x32xbf16, #tpu.memory_space<vmem>>, vector<16x32xbf16>
    tpu.vector_store %arg20[%c96_70, %c0_71], %148 {strides = array<i32>} : memref<256x32xbf16, #tpu.memory_space<vmem>>, vector<16x32xbf16>,
    %c0_72 = arith.constant 0 : index
    %c224 = arith.constant 224 : index
    %150 = vector.load %arg18[%c0_72, %c224] : memref<16x512xf32, #tpu.memory_space<vmem>>, vector<16x32xf32>
    %151 = vector.broadcast %47 : f32 to vector<16x32xf32>
    %152 = arith.subf %150, %151 : vector<16x32xf32>
    %153 = vector.broadcast %57 : f32 to vector<16x32xf32>
    %154 = arith.mulf %152, %153 : vector<16x32xf32>
    %c0_73 = arith.constant 0 : index
    %c224_74 = arith.constant 224 : index
    %155 = vector.load %arg8[%c0_73, %c224_74] : memref<16x512xbf16, #tpu.memory_space<vmem>>, vector<16x32xbf16>
    %156 = arith.extf %155 : vector<16x32xbf16> to vector<16x32xf32>
    %157 = arith.mulf %154, %156 : vector<16x32xf32>
    %c0_75 = arith.constant 0 : index
    %c224_76 = arith.constant 224 : index
    %158 = vector.load %arg9[%c0_75, %c224_76] : memref<16x512xbf16, #tpu.memory_space<vmem>>, vector<16x32xbf16>
    %159 = arith.extf %158 : vector<16x32xbf16> to vector<16x32xf32>
    %160 = arith.addf %157, %159 : vector<16x32xf32>
    %161 = arith.truncf %160 : vector<16x32xf32> to vector<16x32xbf16>
    %c112 = arith.constant 112 : index
    %c0_77 = arith.constant 0 : index
    %162 = vector.load %arg20[%c112, %c0_77] : memref<256x32xbf16, #tpu.memory_space<vmem>>, vector<16x32xbf16>
    tpu.vector_store %arg20[%c112, %c0_77], %161 {strides = array<i32>} : memref<256x32xbf16, #tpu.memory_space<vmem>>, vector<16x32xbf16>,
    %c0_78 = arith.constant 0 : index
    %c256 = arith.constant 256 : index
    %163 = vector.load %arg18[%c0_78, %c256] : memref<16x512xf32, #tpu.memory_space<vmem>>, vector<16x32xf32>
    %164 = vector.broadcast %47 : f32 to vector<16x32xf32>
    %165 = arith.subf %163, %164 : vector<16x32xf32>
    %166 = vector.broadcast %57 : f32 to vector<16x32xf32>
    %167 = arith.mulf %165, %166 : vector<16x32xf32>
    %c0_79 = arith.constant 0 : index
    %c256_80 = arith.constant 256 : index
    %168 = vector.load %arg8[%c0_79, %c256_80] : memref<16x512xbf16, #tpu.memory_space<vmem>>, vector<16x32xbf16>
    %169 = arith.extf %168 : vector<16x32xbf16> to vector<16x32xf32>
    %170 = arith.mulf %167, %169 : vector<16x32xf32>
    %c0_81 = arith.constant 0 : index
    %c256_82 = arith.constant 256 : index
    %171 = vector.load %arg9[%c0_81, %c256_82] : memref<16x512xbf16, #tpu.memory_space<vmem>>, vector<16x32xbf16>
    %172 = arith.extf %171 : vector<16x32xbf16> to vector<16x32xf32>
    %173 = arith.addf %170, %172 : vector<16x32xf32>
    %174 = arith.truncf %173 : vector<16x32xf32> to vector<16x32xbf16>
    %c128_83 = arith.constant 128 : index
    %c0_84 = arith.constant 0 : index
    %175 = vector.load %arg20[%c128_83, %c0_84] : memref<256x32xbf16, #tpu.memory_space<vmem>>, vector<16x32xbf16>
    tpu.vector_store %arg20[%c128_83, %c0_84], %174 {strides = array<i32>} : memref<256x32xbf16, #tpu.memory_space<vmem>>, vector<16x32xbf16>,
    %c0_85 = arith.constant 0 : index
    %c288 = arith.constant 288 : index
    %176 = vector.load %arg18[%c0_85, %c288] : memref<16x512xf32, #tpu.memory_space<vmem>>, vector<16x32xf32>
    %177 = vector.broadcast %47 : f32 to vector<16x32xf32>
    %178 = arith.subf %176, %177 : vector<16x32xf32>
    %179 = vector.broadcast %57 : f32 to vector<16x32xf32>
    %180 = arith.mulf %178, %179 : vector<16x32xf32>
    %c0_86 = arith.constant 0 : index
    %c288_87 = arith.constant 288 : index
    %181 = vector.load %arg8[%c0_86, %c288_87] : memref<16x512xbf16, #tpu.memory_space<vmem>>, vector<16x32xbf16>
    %182 = arith.extf %181 : vector<16x32xbf16> to vector<16x32xf32>
    %183 = arith.mulf %180, %182 : vector<16x32xf32>
    %c0_88 = arith.constant 0 : index
    %c288_89 = arith.constant 288 : index
    %184 = vector.load %arg9[%c0_88, %c288_89] : memref<16x512xbf16, #tpu.memory_space<vmem>>, vector<16x32xbf16>
    %185 = arith.extf %184 : vector<16x32xbf16> to vector<16x32xf32>
    %186 = arith.addf %183, %185 : vector<16x32xf32>
    %187 = arith.truncf %186 : vector<16x32xf32> to vector<16x32xbf16>
    %c144 = arith.constant 144 : index
    %c0_90 = arith.constant 0 : index
    %188 = vector.load %arg20[%c144, %c0_90] : memref<256x32xbf16, #tpu.memory_space<vmem>>, vector<16x32xbf16>
    tpu.vector_store %arg20[%c144, %c0_90], %187 {strides = array<i32>} : memref<256x32xbf16, #tpu.memory_space<vmem>>, vector<16x32xbf16>,
    %c0_91 = arith.constant 0 : index
    %c320 = arith.constant 320 : index
    %189 = vector.load %arg18[%c0_91, %c320] : memref<16x512xf32, #tpu.memory_space<vmem>>, vector<16x32xf32>
    %190 = vector.broadcast %47 : f32 to vector<16x32xf32>
    %191 = arith.subf %189, %190 : vector<16x32xf32>
    %192 = vector.broadcast %57 : f32 to vector<16x32xf32>
    %193 = arith.mulf %191, %192 : vector<16x32xf32>
    %c0_92 = arith.constant 0 : index
    %c320_93 = arith.constant 320 : index
    %194 = vector.load %arg8[%c0_92, %c320_93] : memref<16x512xbf16, #tpu.memory_space<vmem>>, vector<16x32xbf16>
    %195 = arith.extf %194 : vector<16x32xbf16> to vector<16x32xf32>
    %196 = arith.mulf %193, %195 : vector<16x32xf32>
    %c0_94 = arith.constant 0 : index
    %c320_95 = arith.constant 320 : index
    %197 = vector.load %arg9[%c0_94, %c320_95] : memref<16x512xbf16, #tpu.memory_space<vmem>>, vector<16x32xbf16>
    %198 = arith.extf %197 : vector<16x32xbf16> to vector<16x32xf32>
    %199 = arith.addf %196, %198 : vector<16x32xf32>
    %200 = arith.truncf %199 : vector<16x32xf32> to vector<16x32xbf16>
    %c160_96 = arith.constant 160 : index
    %c0_97 = arith.constant 0 : index
    %201 = vector.load %arg20[%c160_96, %c0_97] : memref<256x32xbf16, #tpu.memory_space<vmem>>, vector<16x32xbf16>
    tpu.vector_store %arg20[%c160_96, %c0_97], %200 {strides = array<i32>} : memref<256x32xbf16, #tpu.memory_space<vmem>>, vector<16x32xbf16>,
    %c0_98 = arith.constant 0 : index
    %c352 = arith.constant 352 : index
    %202 = vector.load %arg18[%c0_98, %c352] : memref<16x512xf32, #tpu.memory_space<vmem>>, vector<16x32xf32>
    %203 = vector.broadcast %47 : f32 to vector<16x32xf32>
    %204 = arith.subf %202, %203 : vector<16x32xf32>
    %205 = vector.broadcast %57 : f32 to vector<16x32xf32>
    %206 = arith.mulf %204, %205 : vector<16x32xf32>
    %c0_99 = arith.constant 0 : index
    %c352_100 = arith.constant 352 : index
    %207 = vector.load %arg8[%c0_99, %c352_100] : memref<16x512xbf16, #tpu.memory_space<vmem>>, vector<16x32xbf16>
    %208 = arith.extf %207 : vector<16x32xbf16> to vector<16x32xf32>
    %209 = arith.mulf %206, %208 : vector<16x32xf32>
    %c0_101 = arith.constant 0 : index
    %c352_102 = arith.constant 352 : index
    %210 = vector.load %arg9[%c0_101, %c352_102] : memref<16x512xbf16, #tpu.memory_space<vmem>>, vector<16x32xbf16>
    %211 = arith.extf %210 : vector<16x32xbf16> to vector<16x32xf32>
    %212 = arith.addf %209, %211 : vector<16x32xf32>
    %213 = arith.truncf %212 : vector<16x32xf32> to vector<16x32xbf16>
    %c176 = arith.constant 176 : index
    %c0_103 = arith.constant 0 : index
    %214 = vector.load %arg20[%c176, %c0_103] : memref<256x32xbf16, #tpu.memory_space<vmem>>, vector<16x32xbf16>
    tpu.vector_store %arg20[%c176, %c0_103], %213 {strides = array<i32>} : memref<256x32xbf16, #tpu.memory_space<vmem>>, vector<16x32xbf16>,
    %c0_104 = arith.constant 0 : index
    %c384 = arith.constant 384 : index
    %215 = vector.load %arg18[%c0_104, %c384] : memref<16x512xf32, #tpu.memory_space<vmem>>, vector<16x32xf32>
    %216 = vector.broadcast %47 : f32 to vector<16x32xf32>
    %217 = arith.subf %215, %216 : vector<16x32xf32>
    %218 = vector.broadcast %57 : f32 to vector<16x32xf32>
    %219 = arith.mulf %217, %218 : vector<16x32xf32>
    %c0_105 = arith.constant 0 : index
    %c384_106 = arith.constant 384 : index
    %220 = vector.load %arg8[%c0_105, %c384_106] : memref<16x512xbf16, #tpu.memory_space<vmem>>, vector<16x32xbf16>
    %221 = arith.extf %220 : vector<16x32xbf16> to vector<16x32xf32>
    %222 = arith.mulf %219, %221 : vector<16x32xf32>
    %c0_107 = arith.constant 0 : index
    %c384_108 = arith.constant 384 : index
    %223 = vector.load %arg9[%c0_107, %c384_108] : memref<16x512xbf16, #tpu.memory_space<vmem>>, vector<16x32xbf16>
    %224 = arith.extf %223 : vector<16x32xbf16> to vector<16x32xf32>
    %225 = arith.addf %222, %224 : vector<16x32xf32>
    %226 = arith.truncf %225 : vector<16x32xf32> to vector<16x32xbf16>
    %c192_109 = arith.constant 192 : index
    %c0_110 = arith.constant 0 : index
    %227 = vector.load %arg20[%c192_109, %c0_110] : memref<256x32xbf16, #tpu.memory_space<vmem>>, vector<16x32xbf16>
    tpu.vector_store %arg20[%c192_109, %c0_110], %226 {strides = array<i32>} : memref<256x32xbf16, #tpu.memory_space<vmem>>, vector<16x32xbf16>,
    %c0_111 = arith.constant 0 : index
    %c416 = arith.constant 416 : index
    %228 = vector.load %arg18[%c0_111, %c416] : memref<16x512xf32, #tpu.memory_space<vmem>>, vector<16x32xf32>
    %229 = vector.broadcast %47 : f32 to vector<16x32xf32>
    %230 = arith.subf %228, %229 : vector<16x32xf32>
    %231 = vector.broadcast %57 : f32 to vector<16x32xf32>
    %232 = arith.mulf %230, %231 : vector<16x32xf32>
    %c0_112 = arith.constant 0 : index
    %c416_113 = arith.constant 416 : index
    %233 = vector.load %arg8[%c0_112, %c416_113] : memref<16x512xbf16, #tpu.memory_space<vmem>>, vector<16x32xbf16>
    %234 = arith.extf %233 : vector<16x32xbf16> to vector<16x32xf32>
    %235 = arith.mulf %232, %234 : vector<16x32xf32>
    %c0_114 = arith.constant 0 : index
    %c416_115 = arith.constant 416 : index
    %236 = vector.load %arg9[%c0_114, %c416_115] : memref<16x512xbf16, #tpu.memory_space<vmem>>, vector<16x32xbf16>
    %237 = arith.extf %236 : vector<16x32xbf16> to vector<16x32xf32>
    %238 = arith.addf %235, %237 : vector<16x32xf32>
    %239 = arith.truncf %238 : vector<16x32xf32> to vector<16x32xbf16>
    %c208 = arith.constant 208 : index
    %c0_116 = arith.constant 0 : index
    %240 = vector.load %arg20[%c208, %c0_116] : memref<256x32xbf16, #tpu.memory_space<vmem>>, vector<16x32xbf16>
    tpu.vector_store %arg20[%c208, %c0_116], %239 {strides = array<i32>} : memref<256x32xbf16, #tpu.memory_space<vmem>>, vector<16x32xbf16>,
    %c0_117 = arith.constant 0 : index
    %c448 = arith.constant 448 : index
    %241 = vector.load %arg18[%c0_117, %c448] : memref<16x512xf32, #tpu.memory_space<vmem>>, vector<16x32xf32>
    %242 = vector.broadcast %47 : f32 to vector<16x32xf32>
    %243 = arith.subf %241, %242 : vector<16x32xf32>
    %244 = vector.broadcast %57 : f32 to vector<16x32xf32>
    %245 = arith.mulf %243, %244 : vector<16x32xf32>
    %c0_118 = arith.constant 0 : index
    %c448_119 = arith.constant 448 : index
    %246 = vector.load %arg8[%c0_118, %c448_119] : memref<16x512xbf16, #tpu.memory_space<vmem>>, vector<16x32xbf16>
    %247 = arith.extf %246 : vector<16x32xbf16> to vector<16x32xf32>
    %248 = arith.mulf %245, %247 : vector<16x32xf32>
    %c0_120 = arith.constant 0 : index
    %c448_121 = arith.constant 448 : index
    %249 = vector.load %arg9[%c0_120, %c448_121] : memref<16x512xbf16, #tpu.memory_space<vmem>>, vector<16x32xbf16>
    %250 = arith.extf %249 : vector<16x32xbf16> to vector<16x32xf32>
    %251 = arith.addf %248, %250 : vector<16x32xf32>
    %252 = arith.truncf %251 : vector<16x32xf32> to vector<16x32xbf16>
    %c224_122 = arith.constant 224 : index
    %c0_123 = arith.constant 0 : index
    %253 = vector.load %arg20[%c224_122, %c0_123] : memref<256x32xbf16, #tpu.memory_space<vmem>>, vector<16x32xbf16>
    tpu.vector_store %arg20[%c224_122, %c0_123], %252 {strides = array<i32>} : memref<256x32xbf16, #tpu.memory_space<vmem>>, vector<16x32xbf16>,
    %c0_124 = arith.constant 0 : index
    %c480 = arith.constant 480 : index
    %254 = vector.load %arg18[%c0_124, %c480] : memref<16x512xf32, #tpu.memory_space<vmem>>, vector<16x32xf32>
    %255 = vector.broadcast %47 : f32 to vector<16x32xf32>
    %256 = arith.subf %254, %255 : vector<16x32xf32>
    %257 = vector.broadcast %57 : f32 to vector<16x32xf32>
    %258 = arith.mulf %256, %257 : vector<16x32xf32>
    %c0_125 = arith.constant 0 : index
    %c480_126 = arith.constant 480 : index
    %259 = vector.load %arg8[%c0_125, %c480_126] : memref<16x512xbf16, #tpu.memory_space<vmem>>, vector<16x32xbf16>
    %260 = arith.extf %259 : vector<16x32xbf16> to vector<16x32xf32>
    %261 = arith.mulf %258, %260 : vector<16x32xf32>
    %c0_127 = arith.constant 0 : index
    %c480_128 = arith.constant 480 : index
    %262 = vector.load %arg9[%c0_127, %c480_128] : memref<16x512xbf16, #tpu.memory_space<vmem>>, vector<16x32xbf16>
    %263 = arith.extf %262 : vector<16x32xbf16> to vector<16x32xf32>
    %264 = arith.addf %261, %263 : vector<16x32xf32>
    %265 = arith.truncf %264 : vector<16x32xf32> to vector<16x32xbf16>
    %c240 = arith.constant 240 : index
    %c0_129 = arith.constant 0 : index
    %266 = vector.load %arg20[%c240, %c0_129] : memref<256x32xbf16, #tpu.memory_space<vmem>>, vector<16x32xbf16>
    tpu.vector_store %arg20[%c240, %c0_129], %265 {strides = array<i32>} : memref<256x32xbf16, #tpu.memory_space<vmem>>, vector<16x32xbf16>,
    %c0_130 = arith.constant 0 : index
    %c0_131 = arith.constant 0 : index
    %267 = vector.load %arg20[%c0_130, %c0_131] : memref<256x32xbf16, #tpu.memory_space<vmem>>, vector<256x32xbf16>
    %c0_132 = arith.constant 0 : index
    %c0_133 = arith.constant 0 : index
    %268 = vector.load %arg10[%c0_132, %c0_133] : memref<32x512xbf16, #tpu.memory_space<vmem>>, vector<32x512xbf16>
    %cst_134 = arith.constant dense<0.000000e+00> : vector<256x512xf32>
    %269 = tpu.matmul %267, %268, %cst_134 {dimension_numbers = #tpu.dot_dimension_numbers<[1], [0], [0], [1], [0, 0, 1, 1], [], []>} : vector<256x32xbf16>, vector<32x512xbf16>, vector<256x512xf32> -> vector<256x512xf32>
    %c0_135 = arith.constant 0 : index
    %c0_136 = arith.constant 0 : index
    %270 = vector.load %arg11[%c0_135, %c0_136] : memref<1x512xf32, #tpu.memory_space<vmem>>, vector<1x512xf32>
    %271 = vector.broadcast %270 : vector<1x512xf32> to vector<256x512xf32>
    %272 = arith.addf %269, %271 : vector<256x512xf32>
    %cst_137 = arith.constant 0.000000e+00 : f32
    %273 = vector.broadcast %cst_137 : f32 to vector<256x512xf32>
    %274 = arith.maximumf %272, %273 : vector<256x512xf32>
    %275 = vector.shape_cast %274 : vector<256x512xf32> to vector<1x256x512xf32>
    %cst_138 = arith.constant dense<0.000000e+00> : vector<1xf32>
    %276 = vector.multi_reduction <add>, %275, %cst_138 [1, 2] : vector<1x256x512xf32> to vector<1xf32>
    %277 = vector.shape_cast %276 : vector<1xf32> to vector<1x1x1xf32>
    %278 = vector.extract %277[0, 0, 0] : f32 from vector<1x1x1xf32>
    %cst_139 = arith.constant 1.310720e+05 : f32
    %279 = arith.divf %278, %cst_139 : f32
    %280 = vector.broadcast %279 : f32 to vector<256x512xf32>
    %281 = arith.subf %274, %280 : vector<256x512xf32>
    %282 = arith.mulf %281, %281 : vector<256x512xf32>
    %283 = vector.shape_cast %282 : vector<256x512xf32> to vector<1x256x512xf32>
    %cst_140 = arith.constant dense<0.000000e+00> : vector<1xf32>
    %284 = vector.multi_reduction <add>, %283, %cst_140 [1, 2] : vector<1x256x512xf32> to vector<1xf32>
    %285 = vector.shape_cast %284 : vector<1xf32> to vector<1x1x1xf32>
    %286 = vector.extract %285[0, 0, 0] : f32 from vector<1x1x1xf32>
    %cst_141 = arith.constant 1.310720e+05 : f32
    %287 = arith.divf %286, %cst_141 : f32
    %cst_142 = arith.constant 9.99999974E-6 : f32
    %288 = arith.addf %287, %cst_142 : f32
    %289 = math.rsqrt %288 : f32
    %c0_143 = arith.constant 0 : index
    %c0_144 = arith.constant 0 : index
    %290 = vector.load %arg19[%c0_143, %c0_144] : memref<256x512xf32, #tpu.memory_space<vmem>>, vector<256x512xf32>
    tpu.vector_store %arg19[%c0_143, %c0_144], %274 {strides = array<i32>} : memref<256x512xf32, #tpu.memory_space<vmem>>, vector<256x512xf32>,
    %c0_145 = arith.constant 0 : index
    %c0_146 = arith.constant 0 : index
    %291 = vector.load %arg19[%c0_145, %c0_146] : memref<256x512xf32, #tpu.memory_space<vmem>>, vector<256x256xf32>
    %292 = vector.broadcast %279 : f32 to vector<256x256xf32>
    %293 = arith.subf %291, %292 : vector<256x256xf32>
    %294 = vector.broadcast %289 : f32 to vector<256x256xf32>
    %295 = arith.mulf %293, %294 : vector<256x256xf32>
    %c0_147 = arith.constant 0 : index
    %c0_148 = arith.constant 0 : index
    %296 = vector.load %arg12[%c0_147, %c0_148] : memref<256x512xbf16, #tpu.memory_space<vmem>>, vector<256x256xbf16>
    %297 = arith.extf %296 : vector<256x256xbf16> to vector<256x256xf32>
    %298 = arith.mulf %295, %297 : vector<256x256xf32>
    %c0_149 = arith.constant 0 : index
    %c0_150 = arith.constant 0 : index
    %299 = vector.load %arg13[%c0_149, %c0_150] : memref<256x512xbf16, #tpu.memory_space<vmem>>, vector<256x256xbf16>
    %300 = arith.extf %299 : vector<256x256xbf16> to vector<256x256xf32>
    %301 = arith.addf %298, %300 : vector<256x256xf32>
    %302 = arith.truncf %301 : vector<256x256xf32> to vector<256x256xbf16>
    %c0_151 = arith.constant 0 : index
    %c0_152 = arith.constant 0 : index
    %303 = vector.load %arg21[%c0_151, %c0_152] : memref<512x256xbf16, #tpu.memory_space<vmem>>, vector<256x256xbf16>
    tpu.vector_store %arg21[%c0_151, %c0_152], %302 {strides = array<i32>} : memref<512x256xbf16, #tpu.memory_space<vmem>>, vector<256x256xbf16>,
    %c0_153 = arith.constant 0 : index
    %c256_154 = arith.constant 256 : index
    %304 = vector.load %arg19[%c0_153, %c256_154] : memref<256x512xf32, #tpu.memory_space<vmem>>, vector<256x256xf32>
    %305 = vector.broadcast %279 : f32 to vector<256x256xf32>
    %306 = arith.subf %304, %305 : vector<256x256xf32>
    %307 = vector.broadcast %289 : f32 to vector<256x256xf32>
    %308 = arith.mulf %306, %307 : vector<256x256xf32>
    %c0_155 = arith.constant 0 : index
    %c256_156 = arith.constant 256 : index
    %309 = vector.load %arg12[%c0_155, %c256_156] : memref<256x512xbf16, #tpu.memory_space<vmem>>, vector<256x256xbf16>
    %310 = arith.extf %309 : vector<256x256xbf16> to vector<256x256xf32>
    %311 = arith.mulf %308, %310 : vector<256x256xf32>
    %c0_157 = arith.constant 0 : index
    %c256_158 = arith.constant 256 : index
    %312 = vector.load %arg13[%c0_157, %c256_158] : memref<256x512xbf16, #tpu.memory_space<vmem>>, vector<256x256xbf16>
    %313 = arith.extf %312 : vector<256x256xbf16> to vector<256x256xf32>
    %314 = arith.addf %311, %313 : vector<256x256xf32>
    %315 = arith.truncf %314 : vector<256x256xf32> to vector<256x256xbf16>
    %c256_159 = arith.constant 256 : index
    %c0_160 = arith.constant 0 : index
    %316 = vector.load %arg21[%c256_159, %c0_160] : memref<512x256xbf16, #tpu.memory_space<vmem>>, vector<256x256xbf16>
    tpu.vector_store %arg21[%c256_159, %c0_160], %315 {strides = array<i32>} : memref<512x256xbf16, #tpu.memory_space<vmem>>, vector<256x256xbf16>,
    %c0_161 = arith.constant 0 : index
    %c0_162 = arith.constant 0 : index
    %317 = vector.load %arg21[%c0_161, %c0_162] : memref<512x256xbf16, #tpu.memory_space<vmem>>, vector<512x256xbf16>
    %c0_163 = arith.constant 0 : index
    %c0_164 = arith.constant 0 : index
    %318 = vector.load %arg14[%c0_163, %c0_164] : memref<256x128xbf16, #tpu.memory_space<vmem>>, vector<256x128xbf16>
    %cst_165 = arith.constant dense<0.000000e+00> : vector<512x128xf32>
    %319 = tpu.matmul %317, %318, %cst_165 {dimension_numbers = #tpu.dot_dimension_numbers<[1], [0], [0], [1], [0, 0, 1, 1], [], []>} : vector<512x256xbf16>, vector<256x128xbf16>, vector<512x128xf32> -> vector<512x128xf32>
    %c0_166 = arith.constant 0 : index
    %c0_167 = arith.constant 0 : index
    %320 = vector.load %arg15[%c0_166, %c0_167] : memref<1x128xf32, #tpu.memory_space<vmem>>, vector<1x128xf32>
    %321 = vector.broadcast %320 : vector<1x128xf32> to vector<512x128xf32>
    %322 = arith.addf %319, %321 : vector<512x128xf32>
    %c0_168 = arith.constant 0 : index
    %c0_169 = arith.constant 0 : index
    %323 = vector.load %arg16[%c0_168, %c0_169] : memref<512x128xf32, #tpu.memory_space<vmem>>, vector<512x128xf32>
    %324 = arith.mulf %322, %323 : vector<512x128xf32>
    %c0_170 = arith.constant 0 : index
    %c0_171 = arith.constant 0 : index
    %c0_172 = arith.constant 0 : index
    %325 = vector.load %arg17[%c0_170, %c0_171, %c0_172] : memref<2x512x128xf32, #tpu.memory_space<vmem>>, vector<1x512x128xf32>
    %326 = vector.shape_cast %325 : vector<1x512x128xf32> to vector<512x128xf32>
    %327 = vector.shape_cast %324 : vector<512x128xf32> to vector<1x512x128xf32>
    tpu.vector_store %arg17[%c0_170, %c0_171, %c0_172], %327 {strides = array<i32>} : memref<2x512x128xf32, #tpu.memory_space<vmem>>, vector<1x512x128xf32>,
    %c2_i32_173 = arith.constant 2 : i32
    %328 = arith.muli %arg0, %c2_i32_173 : i32
    %c1_i32 = arith.constant 1 : i32
    %329 = arith.addi %328, %c1_i32 : i32
    %330 = arith.index_cast %329 : i32 to index
    %331 = memref.load %arg1[%330] : memref<4xf32, #tpu.memory_space<smem>>
    %c0_174 = arith.constant 0 : index
    %c0_175 = arith.constant 0 : index
    %332 = vector.load %arg2[%c0_174, %c0_175] : memref<16x32xf32, #tpu.memory_space<vmem>>, vector<16x32xf32>
    %333 = vector.broadcast %331 : f32 to vector<16x32xf32>
    %334 = arith.mulf %333, %332 : vector<16x32xf32>
    %c0_176 = arith.constant 0 : index
    %c0_177 = arith.constant 0 : index
    %335 = vector.load %arg3[%c0_176, %c0_177] : memref<1x32xf32, #tpu.memory_space<vmem>>, vector<1x32xf32>
    %336 = vector.broadcast %335 : vector<1x32xf32> to vector<16x32xf32>
    %337 = arith.addf %334, %336 : vector<16x32xf32>
    %cst_178 = arith.constant 0.000000e+00 : f32
    %338 = vector.broadcast %cst_178 : f32 to vector<16x32xf32>
    %339 = arith.maximumf %337, %338 : vector<16x32xf32>
    %340 = vector.shape_cast %339 : vector<16x32xf32> to vector<1x16x32xf32>
    %cst_179 = arith.constant dense<0.000000e+00> : vector<1xf32>
    %341 = vector.multi_reduction <add>, %340, %cst_179 [1, 2] : vector<1x16x32xf32> to vector<1xf32>
    %342 = vector.shape_cast %341 : vector<1xf32> to vector<1x1x1xf32>
    %343 = vector.extract %342[0, 0, 0] : f32 from vector<1x1x1xf32>
    %cst_180 = arith.constant 5.120000e+02 : f32
    %344 = arith.divf %343, %cst_180 : f32
    %345 = vector.broadcast %344 : f32 to vector<16x32xf32>
    %346 = arith.subf %339, %345 : vector<16x32xf32>
    %347 = arith.mulf %346, %346 : vector<16x32xf32>
    %348 = vector.shape_cast %347 : vector<16x32xf32> to vector<1x16x32xf32>
    %cst_181 = arith.constant dense<0.000000e+00> : vector<1xf32>
    %349 = vector.multi_reduction <add>, %348, %cst_181 [1, 2] : vector<1x16x32xf32> to vector<1xf32>
    %350 = vector.shape_cast %349 : vector<1xf32> to vector<1x1x1xf32>
    %351 = vector.extract %350[0, 0, 0] : f32 from vector<1x1x1xf32>
    %cst_182 = arith.constant 5.120000e+02 : f32
    %352 = arith.divf %351, %cst_182 : f32
    %cst_183 = arith.constant 9.99999974E-6 : f32
    %353 = arith.addf %352, %cst_183 : f32
    %354 = math.rsqrt %353 : f32
    %355 = vector.broadcast %344 : f32 to vector<16x32xf32>
    %356 = arith.subf %339, %355 : vector<16x32xf32>
    %357 = vector.broadcast %354 : f32 to vector<16x32xf32>
    %358 = arith.mulf %356, %357 : vector<16x32xf32>
    %c0_184 = arith.constant 0 : index
    %c0_185 = arith.constant 0 : index
    %359 = vector.load %arg4[%c0_184, %c0_185] : memref<16x32xf32, #tpu.memory_space<vmem>>, vector<16x32xf32>
    %360 = arith.mulf %358, %359 : vector<16x32xf32>
    %c0_186 = arith.constant 0 : index
    %c0_187 = arith.constant 0 : index
    %361 = vector.load %arg5[%c0_186, %c0_187] : memref<16x32xf32, #tpu.memory_space<vmem>>, vector<16x32xf32>
    %362 = arith.addf %360, %361 : vector<16x32xf32>
    %363 = arith.truncf %362 : vector<16x32xf32> to vector<16x32xbf16>
    %c0_188 = arith.constant 0 : index
    %c0_189 = arith.constant 0 : index
    %364 = vector.load %arg6[%c0_188, %c0_189] : memref<32x512xbf16, #tpu.memory_space<vmem>>, vector<32x512xbf16>
    %cst_190 = arith.constant dense<0.000000e+00> : vector<16x512xf32>
    %365 = tpu.matmul %363, %364, %cst_190 {dimension_numbers = #tpu.dot_dimension_numbers<[1], [0], [0], [1], [0, 0, 1, 1], [], []>} : vector<16x32xbf16>, vector<32x512xbf16>, vector<16x512xf32> -> vector<16x512xf32>
    %c0_191 = arith.constant 0 : index
    %c0_192 = arith.constant 0 : index
    %366 = vector.load %arg7[%c0_191, %c0_192] : memref<1x512xf32, #tpu.memory_space<vmem>>, vector<1x512xf32>
    %367 = vector.broadcast %366 : vector<1x512xf32> to vector<16x512xf32>
    %368 = arith.addf %365, %367 : vector<16x512xf32>
    %cst_193 = arith.constant 0.000000e+00 : f32
    %369 = vector.broadcast %cst_193 : f32 to vector<16x512xf32>
    %370 = arith.maximumf %368, %369 : vector<16x512xf32>
    %371 = vector.shape_cast %370 : vector<16x512xf32> to vector<1x16x512xf32>
    %cst_194 = arith.constant dense<0.000000e+00> : vector<1xf32>
    %372 = vector.multi_reduction <add>, %371, %cst_194 [1, 2] : vector<1x16x512xf32> to vector<1xf32>
    %373 = vector.shape_cast %372 : vector<1xf32> to vector<1x1x1xf32>
    %374 = vector.extract %373[0, 0, 0] : f32 from vector<1x1x1xf32>
    %cst_195 = arith.constant 8.192000e+03 : f32
    %375 = arith.divf %374, %cst_195 : f32
    %376 = vector.broadcast %375 : f32 to vector<16x512xf32>
    %377 = arith.subf %370, %376 : vector<16x512xf32>
    %378 = arith.mulf %377, %377 : vector<16x512xf32>
    %379 = vector.shape_cast %378 : vector<16x512xf32> to vector<1x16x512xf32>
    %cst_196 = arith.constant dense<0.000000e+00> : vector<1xf32>
    %380 = vector.multi_reduction <add>, %379, %cst_196 [1, 2] : vector<1x16x512xf32> to vector<1xf32>
    %381 = vector.shape_cast %380 : vector<1xf32> to vector<1x1x1xf32>
    %382 = vector.extract %381[0, 0, 0] : f32 from vector<1x1x1xf32>
    %cst_197 = arith.constant 8.192000e+03 : f32
    %383 = arith.divf %382, %cst_197 : f32
    %cst_198 = arith.constant 9.99999974E-6 : f32
    %384 = arith.addf %383, %cst_198 : f32
    %385 = math.rsqrt %384 : f32
    %c0_199 = arith.constant 0 : index
    %c0_200 = arith.constant 0 : index
    %386 = vector.load %arg18[%c0_199, %c0_200] : memref<16x512xf32, #tpu.memory_space<vmem>>, vector<16x512xf32>
    tpu.vector_store %arg18[%c0_199, %c0_200], %370 {strides = array<i32>} : memref<16x512xf32, #tpu.memory_space<vmem>>, vector<16x512xf32>,
    %c0_201 = arith.constant 0 : index
    %c0_202 = arith.constant 0 : index
    %387 = vector.load %arg18[%c0_201, %c0_202] : memref<16x512xf32, #tpu.memory_space<vmem>>, vector<16x32xf32>
    %388 = vector.broadcast %375 : f32 to vector<16x32xf32>
    %389 = arith.subf %387, %388 : vector<16x32xf32>
    %390 = vector.broadcast %385 : f32 to vector<16x32xf32>
    %391 = arith.mulf %389, %390 : vector<16x32xf32>
    %c0_203 = arith.constant 0 : index
    %c0_204 = arith.constant 0 : index
    %392 = vector.load %arg8[%c0_203, %c0_204] : memref<16x512xbf16, #tpu.memory_space<vmem>>, vector<16x32xbf16>
    %393 = arith.extf %392 : vector<16x32xbf16> to vector<16x32xf32>
    %394 = arith.mulf %391, %393 : vector<16x32xf32>
    %c0_205 = arith.constant 0 : index
    %c0_206 = arith.constant 0 : index
    %395 = vector.load %arg9[%c0_205, %c0_206] : memref<16x512xbf16, #tpu.memory_space<vmem>>, vector<16x32xbf16>
    %396 = arith.extf %395 : vector<16x32xbf16> to vector<16x32xf32>
    %397 = arith.addf %394, %396 : vector<16x32xf32>
    %398 = arith.truncf %397 : vector<16x32xf32> to vector<16x32xbf16>
    %c0_207 = arith.constant 0 : index
    %c0_208 = arith.constant 0 : index
    %399 = vector.load %arg20[%c0_207, %c0_208] : memref<256x32xbf16, #tpu.memory_space<vmem>>, vector<16x32xbf16>
    tpu.vector_store %arg20[%c0_207, %c0_208], %398 {strides = array<i32>} : memref<256x32xbf16, #tpu.memory_space<vmem>>, vector<16x32xbf16>,
    %c0_209 = arith.constant 0 : index
    %c32_210 = arith.constant 32 : index
    %400 = vector.load %arg18[%c0_209, %c32_210] : memref<16x512xf32, #tpu.memory_space<vmem>>, vector<16x32xf32>
    %401 = vector.broadcast %375 : f32 to vector<16x32xf32>
    %402 = arith.subf %400, %401 : vector<16x32xf32>
    %403 = vector.broadcast %385 : f32 to vector<16x32xf32>
    %404 = arith.mulf %402, %403 : vector<16x32xf32>
    %c0_211 = arith.constant 0 : index
    %c32_212 = arith.constant 32 : index
    %405 = vector.load %arg8[%c0_211, %c32_212] : memref<16x512xbf16, #tpu.memory_space<vmem>>, vector<16x32xbf16>
    %406 = arith.extf %405 : vector<16x32xbf16> to vector<16x32xf32>
    %407 = arith.mulf %404, %406 : vector<16x32xf32>
    %c0_213 = arith.constant 0 : index
    %c32_214 = arith.constant 32 : index
    %408 = vector.load %arg9[%c0_213, %c32_214] : memref<16x512xbf16, #tpu.memory_space<vmem>>, vector<16x32xbf16>
    %409 = arith.extf %408 : vector<16x32xbf16> to vector<16x32xf32>
    %410 = arith.addf %407, %409 : vector<16x32xf32>
    %411 = arith.truncf %410 : vector<16x32xf32> to vector<16x32xbf16>
    %c16_215 = arith.constant 16 : index
    %c0_216 = arith.constant 0 : index
    %412 = vector.load %arg20[%c16_215, %c0_216] : memref<256x32xbf16, #tpu.memory_space<vmem>>, vector<16x32xbf16>
    tpu.vector_store %arg20[%c16_215, %c0_216], %411 {strides = array<i32>} : memref<256x32xbf16, #tpu.memory_space<vmem>>, vector<16x32xbf16>,
    %c0_217 = arith.constant 0 : index
    %c64_218 = arith.constant 64 : index
    %413 = vector.load %arg18[%c0_217, %c64_218] : memref<16x512xf32, #tpu.memory_space<vmem>>, vector<16x32xf32>
    %414 = vector.broadcast %375 : f32 to vector<16x32xf32>
    %415 = arith.subf %413, %414 : vector<16x32xf32>
    %416 = vector.broadcast %385 : f32 to vector<16x32xf32>
    %417 = arith.mulf %415, %416 : vector<16x32xf32>
    %c0_219 = arith.constant 0 : index
    %c64_220 = arith.constant 64 : index
    %418 = vector.load %arg8[%c0_219, %c64_220] : memref<16x512xbf16, #tpu.memory_space<vmem>>, vector<16x32xbf16>
    %419 = arith.extf %418 : vector<16x32xbf16> to vector<16x32xf32>
    %420 = arith.mulf %417, %419 : vector<16x32xf32>
    %c0_221 = arith.constant 0 : index
    %c64_222 = arith.constant 64 : index
    %421 = vector.load %arg9[%c0_221, %c64_222] : memref<16x512xbf16, #tpu.memory_space<vmem>>, vector<16x32xbf16>
    %422 = arith.extf %421 : vector<16x32xbf16> to vector<16x32xf32>
    %423 = arith.addf %420, %422 : vector<16x32xf32>
    %424 = arith.truncf %423 : vector<16x32xf32> to vector<16x32xbf16>
    %c32_223 = arith.constant 32 : index
    %c0_224 = arith.constant 0 : index
    %425 = vector.load %arg20[%c32_223, %c0_224] : memref<256x32xbf16, #tpu.memory_space<vmem>>, vector<16x32xbf16>
    tpu.vector_store %arg20[%c32_223, %c0_224], %424 {strides = array<i32>} : memref<256x32xbf16, #tpu.memory_space<vmem>>, vector<16x32xbf16>,
    %c0_225 = arith.constant 0 : index
    %c96_226 = arith.constant 96 : index
    %426 = vector.load %arg18[%c0_225, %c96_226] : memref<16x512xf32, #tpu.memory_space<vmem>>, vector<16x32xf32>
    %427 = vector.broadcast %375 : f32 to vector<16x32xf32>
    %428 = arith.subf %426, %427 : vector<16x32xf32>
    %429 = vector.broadcast %385 : f32 to vector<16x32xf32>
    %430 = arith.mulf %428, %429 : vector<16x32xf32>
    %c0_227 = arith.constant 0 : index
    %c96_228 = arith.constant 96 : index
    %431 = vector.load %arg8[%c0_227, %c96_228] : memref<16x512xbf16, #tpu.memory_space<vmem>>, vector<16x32xbf16>
    %432 = arith.extf %431 : vector<16x32xbf16> to vector<16x32xf32>
    %433 = arith.mulf %430, %432 : vector<16x32xf32>
    %c0_229 = arith.constant 0 : index
    %c96_230 = arith.constant 96 : index
    %434 = vector.load %arg9[%c0_229, %c96_230] : memref<16x512xbf16, #tpu.memory_space<vmem>>, vector<16x32xbf16>
    %435 = arith.extf %434 : vector<16x32xbf16> to vector<16x32xf32>
    %436 = arith.addf %433, %435 : vector<16x32xf32>
    %437 = arith.truncf %436 : vector<16x32xf32> to vector<16x32xbf16>
    %c48_231 = arith.constant 48 : index
    %c0_232 = arith.constant 0 : index
    %438 = vector.load %arg20[%c48_231, %c0_232] : memref<256x32xbf16, #tpu.memory_space<vmem>>, vector<16x32xbf16>
    tpu.vector_store %arg20[%c48_231, %c0_232], %437 {strides = array<i32>} : memref<256x32xbf16, #tpu.memory_space<vmem>>, vector<16x32xbf16>,
    %c0_233 = arith.constant 0 : index
    %c128_234 = arith.constant 128 : index
    %439 = vector.load %arg18[%c0_233, %c128_234] : memref<16x512xf32, #tpu.memory_space<vmem>>, vector<16x32xf32>
    %440 = vector.broadcast %375 : f32 to vector<16x32xf32>
    %441 = arith.subf %439, %440 : vector<16x32xf32>
    %442 = vector.broadcast %385 : f32 to vector<16x32xf32>
    %443 = arith.mulf %441, %442 : vector<16x32xf32>
    %c0_235 = arith.constant 0 : index
    %c128_236 = arith.constant 128 : index
    %444 = vector.load %arg8[%c0_235, %c128_236] : memref<16x512xbf16, #tpu.memory_space<vmem>>, vector<16x32xbf16>
    %445 = arith.extf %444 : vector<16x32xbf16> to vector<16x32xf32>
    %446 = arith.mulf %443, %445 : vector<16x32xf32>
    %c0_237 = arith.constant 0 : index
    %c128_238 = arith.constant 128 : index
    %447 = vector.load %arg9[%c0_237, %c128_238] : memref<16x512xbf16, #tpu.memory_space<vmem>>, vector<16x32xbf16>
    %448 = arith.extf %447 : vector<16x32xbf16> to vector<16x32xf32>
    %449 = arith.addf %446, %448 : vector<16x32xf32>
    %450 = arith.truncf %449 : vector<16x32xf32> to vector<16x32xbf16>
    %c64_239 = arith.constant 64 : index
    %c0_240 = arith.constant 0 : index
    %451 = vector.load %arg20[%c64_239, %c0_240] : memref<256x32xbf16, #tpu.memory_space<vmem>>, vector<16x32xbf16>
    tpu.vector_store %arg20[%c64_239, %c0_240], %450 {strides = array<i32>} : memref<256x32xbf16, #tpu.memory_space<vmem>>, vector<16x32xbf16>,
    %c0_241 = arith.constant 0 : index
    %c160_242 = arith.constant 160 : index
    %452 = vector.load %arg18[%c0_241, %c160_242] : memref<16x512xf32, #tpu.memory_space<vmem>>, vector<16x32xf32>
    %453 = vector.broadcast %375 : f32 to vector<16x32xf32>
    %454 = arith.subf %452, %453 : vector<16x32xf32>
    %455 = vector.broadcast %385 : f32 to vector<16x32xf32>
    %456 = arith.mulf %454, %455 : vector<16x32xf32>
    %c0_243 = arith.constant 0 : index
    %c160_244 = arith.constant 160 : index
    %457 = vector.load %arg8[%c0_243, %c160_244] : memref<16x512xbf16, #tpu.memory_space<vmem>>, vector<16x32xbf16>
    %458 = arith.extf %457 : vector<16x32xbf16> to vector<16x32xf32>
    %459 = arith.mulf %456, %458 : vector<16x32xf32>
    %c0_245 = arith.constant 0 : index
    %c160_246 = arith.constant 160 : index
    %460 = vector.load %arg9[%c0_245, %c160_246] : memref<16x512xbf16, #tpu.memory_space<vmem>>, vector<16x32xbf16>
    %461 = arith.extf %460 : vector<16x32xbf16> to vector<16x32xf32>
    %462 = arith.addf %459, %461 : vector<16x32xf32>
    %463 = arith.truncf %462 : vector<16x32xf32> to vector<16x32xbf16>
    %c80_247 = arith.constant 80 : index
    %c0_248 = arith.constant 0 : index
    %464 = vector.load %arg20[%c80_247, %c0_248] : memref<256x32xbf16, #tpu.memory_space<vmem>>, vector<16x32xbf16>
    tpu.vector_store %arg20[%c80_247, %c0_248], %463 {strides = array<i32>} : memref<256x32xbf16, #tpu.memory_space<vmem>>, vector<16x32xbf16>,
    %c0_249 = arith.constant 0 : index
    %c192_250 = arith.constant 192 : index
    %465 = vector.load %arg18[%c0_249, %c192_250] : memref<16x512xf32, #tpu.memory_space<vmem>>, vector<16x32xf32>
    %466 = vector.broadcast %375 : f32 to vector<16x32xf32>
    %467 = arith.subf %465, %466 : vector<16x32xf32>
    %468 = vector.broadcast %385 : f32 to vector<16x32xf32>
    %469 = arith.mulf %467, %468 : vector<16x32xf32>
    %c0_251 = arith.constant 0 : index
    %c192_252 = arith.constant 192 : index
    %470 = vector.load %arg8[%c0_251, %c192_252] : memref<16x512xbf16, #tpu.memory_space<vmem>>, vector<16x32xbf16>
    %471 = arith.extf %470 : vector<16x32xbf16> to vector<16x32xf32>
    %472 = arith.mulf %469, %471 : vector<16x32xf32>
    %c0_253 = arith.constant 0 : index
    %c192_254 = arith.constant 192 : index
    %473 = vector.load %arg9[%c0_253, %c192_254] : memref<16x512xbf16, #tpu.memory_space<vmem>>, vector<16x32xbf16>
    %474 = arith.extf %473 : vector<16x32xbf16> to vector<16x32xf32>
    %475 = arith.addf %472, %474 : vector<16x32xf32>
    %476 = arith.truncf %475 : vector<16x32xf32> to vector<16x32xbf16>
    %c96_255 = arith.constant 96 : index
    %c0_256 = arith.constant 0 : index
    %477 = vector.load %arg20[%c96_255, %c0_256] : memref<256x32xbf16, #tpu.memory_space<vmem>>, vector<16x32xbf16>
    tpu.vector_store %arg20[%c96_255, %c0_256], %476 {strides = array<i32>} : memref<256x32xbf16, #tpu.memory_space<vmem>>, vector<16x32xbf16>,
    %c0_257 = arith.constant 0 : index
    %c224_258 = arith.constant 224 : index
    %478 = vector.load %arg18[%c0_257, %c224_258] : memref<16x512xf32, #tpu.memory_space<vmem>>, vector<16x32xf32>
    %479 = vector.broadcast %375 : f32 to vector<16x32xf32>
    %480 = arith.subf %478, %479 : vector<16x32xf32>
    %481 = vector.broadcast %385 : f32 to vector<16x32xf32>
    %482 = arith.mulf %480, %481 : vector<16x32xf32>
    %c0_259 = arith.constant 0 : index
    %c224_260 = arith.constant 224 : index
    %483 = vector.load %arg8[%c0_259, %c224_260] : memref<16x512xbf16, #tpu.memory_space<vmem>>, vector<16x32xbf16>
    %484 = arith.extf %483 : vector<16x32xbf16> to vector<16x32xf32>
    %485 = arith.mulf %482, %484 : vector<16x32xf32>
    %c0_261 = arith.constant 0 : index
    %c224_262 = arith.constant 224 : index
    %486 = vector.load %arg9[%c0_261, %c224_262] : memref<16x512xbf16, #tpu.memory_space<vmem>>, vector<16x32xbf16>
    %487 = arith.extf %486 : vector<16x32xbf16> to vector<16x32xf32>
    %488 = arith.addf %485, %487 : vector<16x32xf32>
    %489 = arith.truncf %488 : vector<16x32xf32> to vector<16x32xbf16>
    %c112_263 = arith.constant 112 : index
    %c0_264 = arith.constant 0 : index
    %490 = vector.load %arg20[%c112_263, %c0_264] : memref<256x32xbf16, #tpu.memory_space<vmem>>, vector<16x32xbf16>
    tpu.vector_store %arg20[%c112_263, %c0_264], %489 {strides = array<i32>} : memref<256x32xbf16, #tpu.memory_space<vmem>>, vector<16x32xbf16>,
    %c0_265 = arith.constant 0 : index
    %c256_266 = arith.constant 256 : index
    %491 = vector.load %arg18[%c0_265, %c256_266] : memref<16x512xf32, #tpu.memory_space<vmem>>, vector<16x32xf32>
    %492 = vector.broadcast %375 : f32 to vector<16x32xf32>
    %493 = arith.subf %491, %492 : vector<16x32xf32>
    %494 = vector.broadcast %385 : f32 to vector<16x32xf32>
    %495 = arith.mulf %493, %494 : vector<16x32xf32>
    %c0_267 = arith.constant 0 : index
    %c256_268 = arith.constant 256 : index
    %496 = vector.load %arg8[%c0_267, %c256_268] : memref<16x512xbf16, #tpu.memory_space<vmem>>, vector<16x32xbf16>
    %497 = arith.extf %496 : vector<16x32xbf16> to vector<16x32xf32>
    %498 = arith.mulf %495, %497 : vector<16x32xf32>
    %c0_269 = arith.constant 0 : index
    %c256_270 = arith.constant 256 : index
    %499 = vector.load %arg9[%c0_269, %c256_270] : memref<16x512xbf16, #tpu.memory_space<vmem>>, vector<16x32xbf16>
    %500 = arith.extf %499 : vector<16x32xbf16> to vector<16x32xf32>
    %501 = arith.addf %498, %500 : vector<16x32xf32>
    %502 = arith.truncf %501 : vector<16x32xf32> to vector<16x32xbf16>
    %c128_271 = arith.constant 128 : index
    %c0_272 = arith.constant 0 : index
    %503 = vector.load %arg20[%c128_271, %c0_272] : memref<256x32xbf16, #tpu.memory_space<vmem>>, vector<16x32xbf16>
    tpu.vector_store %arg20[%c128_271, %c0_272], %502 {strides = array<i32>} : memref<256x32xbf16, #tpu.memory_space<vmem>>, vector<16x32xbf16>,
    %c0_273 = arith.constant 0 : index
    %c288_274 = arith.constant 288 : index
    %504 = vector.load %arg18[%c0_273, %c288_274] : memref<16x512xf32, #tpu.memory_space<vmem>>, vector<16x32xf32>
    %505 = vector.broadcast %375 : f32 to vector<16x32xf32>
    %506 = arith.subf %504, %505 : vector<16x32xf32>
    %507 = vector.broadcast %385 : f32 to vector<16x32xf32>
    %508 = arith.mulf %506, %507 : vector<16x32xf32>
    %c0_275 = arith.constant 0 : index
    %c288_276 = arith.constant 288 : index
    %509 = vector.load %arg8[%c0_275, %c288_276] : memref<16x512xbf16, #tpu.memory_space<vmem>>, vector<16x32xbf16>
    %510 = arith.extf %509 : vector<16x32xbf16> to vector<16x32xf32>
    %511 = arith.mulf %508, %510 : vector<16x32xf32>
    %c0_277 = arith.constant 0 : index
    %c288_278 = arith.constant 288 : index
    %512 = vector.load %arg9[%c0_277, %c288_278] : memref<16x512xbf16, #tpu.memory_space<vmem>>, vector<16x32xbf16>
    %513 = arith.extf %512 : vector<16x32xbf16> to vector<16x32xf32>
    %514 = arith.addf %511, %513 : vector<16x32xf32>
    %515 = arith.truncf %514 : vector<16x32xf32> to vector<16x32xbf16>
    %c144_279 = arith.constant 144 : index
    %c0_280 = arith.constant 0 : index
    %516 = vector.load %arg20[%c144_279, %c0_280] : memref<256x32xbf16, #tpu.memory_space<vmem>>, vector<16x32xbf16>
    tpu.vector_store %arg20[%c144_279, %c0_280], %515 {strides = array<i32>} : memref<256x32xbf16, #tpu.memory_space<vmem>>, vector<16x32xbf16>,
    %c0_281 = arith.constant 0 : index
    %c320_282 = arith.constant 320 : index
    %517 = vector.load %arg18[%c0_281, %c320_282] : memref<16x512xf32, #tpu.memory_space<vmem>>, vector<16x32xf32>
    %518 = vector.broadcast %375 : f32 to vector<16x32xf32>
    %519 = arith.subf %517, %518 : vector<16x32xf32>
    %520 = vector.broadcast %385 : f32 to vector<16x32xf32>
    %521 = arith.mulf %519, %520 : vector<16x32xf32>
    %c0_283 = arith.constant 0 : index
    %c320_284 = arith.constant 320 : index
    %522 = vector.load %arg8[%c0_283, %c320_284] : memref<16x512xbf16, #tpu.memory_space<vmem>>, vector<16x32xbf16>
    %523 = arith.extf %522 : vector<16x32xbf16> to vector<16x32xf32>
    %524 = arith.mulf %521, %523 : vector<16x32xf32>
    %c0_285 = arith.constant 0 : index
    %c320_286 = arith.constant 320 : index
    %525 = vector.load %arg9[%c0_285, %c320_286] : memref<16x512xbf16, #tpu.memory_space<vmem>>, vector<16x32xbf16>
    %526 = arith.extf %525 : vector<16x32xbf16> to vector<16x32xf32>
    %527 = arith.addf %524, %526 : vector<16x32xf32>
    %528 = arith.truncf %527 : vector<16x32xf32> to vector<16x32xbf16>
    %c160_287 = arith.constant 160 : index
    %c0_288 = arith.constant 0 : index
    %529 = vector.load %arg20[%c160_287, %c0_288] : memref<256x32xbf16, #tpu.memory_space<vmem>>, vector<16x32xbf16>
    tpu.vector_store %arg20[%c160_287, %c0_288], %528 {strides = array<i32>} : memref<256x32xbf16, #tpu.memory_space<vmem>>, vector<16x32xbf16>,
    %c0_289 = arith.constant 0 : index
    %c352_290 = arith.constant 352 : index
    %530 = vector.load %arg18[%c0_289, %c352_290] : memref<16x512xf32, #tpu.memory_space<vmem>>, vector<16x32xf32>
    %531 = vector.broadcast %375 : f32 to vector<16x32xf32>
    %532 = arith.subf %530, %531 : vector<16x32xf32>
    %533 = vector.broadcast %385 : f32 to vector<16x32xf32>
    %534 = arith.mulf %532, %533 : vector<16x32xf32>
    %c0_291 = arith.constant 0 : index
    %c352_292 = arith.constant 352 : index
    %535 = vector.load %arg8[%c0_291, %c352_292] : memref<16x512xbf16, #tpu.memory_space<vmem>>, vector<16x32xbf16>
    %536 = arith.extf %535 : vector<16x32xbf16> to vector<16x32xf32>
    %537 = arith.mulf %534, %536 : vector<16x32xf32>
    %c0_293 = arith.constant 0 : index
    %c352_294 = arith.constant 352 : index
    %538 = vector.load %arg9[%c0_293, %c352_294] : memref<16x512xbf16, #tpu.memory_space<vmem>>, vector<16x32xbf16>
    %539 = arith.extf %538 : vector<16x32xbf16> to vector<16x32xf32>
    %540 = arith.addf %537, %539 : vector<16x32xf32>
    %541 = arith.truncf %540 : vector<16x32xf32> to vector<16x32xbf16>
    %c176_295 = arith.constant 176 : index
    %c0_296 = arith.constant 0 : index
    %542 = vector.load %arg20[%c176_295, %c0_296] : memref<256x32xbf16, #tpu.memory_space<vmem>>, vector<16x32xbf16>
    tpu.vector_store %arg20[%c176_295, %c0_296], %541 {strides = array<i32>} : memref<256x32xbf16, #tpu.memory_space<vmem>>, vector<16x32xbf16>,
    %c0_297 = arith.constant 0 : index
    %c384_298 = arith.constant 384 : index
    %543 = vector.load %arg18[%c0_297, %c384_298] : memref<16x512xf32, #tpu.memory_space<vmem>>, vector<16x32xf32>
    %544 = vector.broadcast %375 : f32 to vector<16x32xf32>
    %545 = arith.subf %543, %544 : vector<16x32xf32>
    %546 = vector.broadcast %385 : f32 to vector<16x32xf32>
    %547 = arith.mulf %545, %546 : vector<16x32xf32>
    %c0_299 = arith.constant 0 : index
    %c384_300 = arith.constant 384 : index
    %548 = vector.load %arg8[%c0_299, %c384_300] : memref<16x512xbf16, #tpu.memory_space<vmem>>, vector<16x32xbf16>
    %549 = arith.extf %548 : vector<16x32xbf16> to vector<16x32xf32>
    %550 = arith.mulf %547, %549 : vector<16x32xf32>
    %c0_301 = arith.constant 0 : index
    %c384_302 = arith.constant 384 : index
    %551 = vector.load %arg9[%c0_301, %c384_302] : memref<16x512xbf16, #tpu.memory_space<vmem>>, vector<16x32xbf16>
    %552 = arith.extf %551 : vector<16x32xbf16> to vector<16x32xf32>
    %553 = arith.addf %550, %552 : vector<16x32xf32>
    %554 = arith.truncf %553 : vector<16x32xf32> to vector<16x32xbf16>
    %c192_303 = arith.constant 192 : index
    %c0_304 = arith.constant 0 : index
    %555 = vector.load %arg20[%c192_303, %c0_304] : memref<256x32xbf16, #tpu.memory_space<vmem>>, vector<16x32xbf16>
    tpu.vector_store %arg20[%c192_303, %c0_304], %554 {strides = array<i32>} : memref<256x32xbf16, #tpu.memory_space<vmem>>, vector<16x32xbf16>,
    %c0_305 = arith.constant 0 : index
    %c416_306 = arith.constant 416 : index
    %556 = vector.load %arg18[%c0_305, %c416_306] : memref<16x512xf32, #tpu.memory_space<vmem>>, vector<16x32xf32>
    %557 = vector.broadcast %375 : f32 to vector<16x32xf32>
    %558 = arith.subf %556, %557 : vector<16x32xf32>
    %559 = vector.broadcast %385 : f32 to vector<16x32xf32>
    %560 = arith.mulf %558, %559 : vector<16x32xf32>
    %c0_307 = arith.constant 0 : index
    %c416_308 = arith.constant 416 : index
    %561 = vector.load %arg8[%c0_307, %c416_308] : memref<16x512xbf16, #tpu.memory_space<vmem>>, vector<16x32xbf16>
    %562 = arith.extf %561 : vector<16x32xbf16> to vector<16x32xf32>
    %563 = arith.mulf %560, %562 : vector<16x32xf32>
    %c0_309 = arith.constant 0 : index
    %c416_310 = arith.constant 416 : index
    %564 = vector.load %arg9[%c0_309, %c416_310] : memref<16x512xbf16, #tpu.memory_space<vmem>>, vector<16x32xbf16>
    %565 = arith.extf %564 : vector<16x32xbf16> to vector<16x32xf32>
    %566 = arith.addf %563, %565 : vector<16x32xf32>
    %567 = arith.truncf %566 : vector<16x32xf32> to vector<16x32xbf16>
    %c208_311 = arith.constant 208 : index
    %c0_312 = arith.constant 0 : index
    %568 = vector.load %arg20[%c208_311, %c0_312] : memref<256x32xbf16, #tpu.memory_space<vmem>>, vector<16x32xbf16>
    tpu.vector_store %arg20[%c208_311, %c0_312], %567 {strides = array<i32>} : memref<256x32xbf16, #tpu.memory_space<vmem>>, vector<16x32xbf16>,
    %c0_313 = arith.constant 0 : index
    %c448_314 = arith.constant 448 : index
    %569 = vector.load %arg18[%c0_313, %c448_314] : memref<16x512xf32, #tpu.memory_space<vmem>>, vector<16x32xf32>
    %570 = vector.broadcast %375 : f32 to vector<16x32xf32>
    %571 = arith.subf %569, %570 : vector<16x32xf32>
    %572 = vector.broadcast %385 : f32 to vector<16x32xf32>
    %573 = arith.mulf %571, %572 : vector<16x32xf32>
    %c0_315 = arith.constant 0 : index
    %c448_316 = arith.constant 448 : index
    %574 = vector.load %arg8[%c0_315, %c448_316] : memref<16x512xbf16, #tpu.memory_space<vmem>>, vector<16x32xbf16>
    %575 = arith.extf %574 : vector<16x32xbf16> to vector<16x32xf32>
    %576 = arith.mulf %573, %575 : vector<16x32xf32>
    %c0_317 = arith.constant 0 : index
    %c448_318 = arith.constant 448 : index
    %577 = vector.load %arg9[%c0_317, %c448_318] : memref<16x512xbf16, #tpu.memory_space<vmem>>, vector<16x32xbf16>
    %578 = arith.extf %577 : vector<16x32xbf16> to vector<16x32xf32>
    %579 = arith.addf %576, %578 : vector<16x32xf32>
    %580 = arith.truncf %579 : vector<16x32xf32> to vector<16x32xbf16>
    %c224_319 = arith.constant 224 : index
    %c0_320 = arith.constant 0 : index
    %581 = vector.load %arg20[%c224_319, %c0_320] : memref<256x32xbf16, #tpu.memory_space<vmem>>, vector<16x32xbf16>
    tpu.vector_store %arg20[%c224_319, %c0_320], %580 {strides = array<i32>} : memref<256x32xbf16, #tpu.memory_space<vmem>>, vector<16x32xbf16>,
    %c0_321 = arith.constant 0 : index
    %c480_322 = arith.constant 480 : index
    %582 = vector.load %arg18[%c0_321, %c480_322] : memref<16x512xf32, #tpu.memory_space<vmem>>, vector<16x32xf32>
    %583 = vector.broadcast %375 : f32 to vector<16x32xf32>
    %584 = arith.subf %582, %583 : vector<16x32xf32>
    %585 = vector.broadcast %385 : f32 to vector<16x32xf32>
    %586 = arith.mulf %584, %585 : vector<16x32xf32>
    %c0_323 = arith.constant 0 : index
    %c480_324 = arith.constant 480 : index
    %587 = vector.load %arg8[%c0_323, %c480_324] : memref<16x512xbf16, #tpu.memory_space<vmem>>, vector<16x32xbf16>
    %588 = arith.extf %587 : vector<16x32xbf16> to vector<16x32xf32>
    %589 = arith.mulf %586, %588 : vector<16x32xf32>
    %c0_325 = arith.constant 0 : index
    %c480_326 = arith.constant 480 : index
    %590 = vector.load %arg9[%c0_325, %c480_326] : memref<16x512xbf16, #tpu.memory_space<vmem>>, vector<16x32xbf16>
    %591 = arith.extf %590 : vector<16x32xbf16> to vector<16x32xf32>
    %592 = arith.addf %589, %591 : vector<16x32xf32>
    %593 = arith.truncf %592 : vector<16x32xf32> to vector<16x32xbf16>
    %c240_327 = arith.constant 240 : index
    %c0_328 = arith.constant 0 : index
    %594 = vector.load %arg20[%c240_327, %c0_328] : memref<256x32xbf16, #tpu.memory_space<vmem>>, vector<16x32xbf16>
    tpu.vector_store %arg20[%c240_327, %c0_328], %593 {strides = array<i32>} : memref<256x32xbf16, #tpu.memory_space<vmem>>, vector<16x32xbf16>,
    %c0_329 = arith.constant 0 : index
    %c0_330 = arith.constant 0 : index
    %595 = vector.load %arg20[%c0_329, %c0_330] : memref<256x32xbf16, #tpu.memory_space<vmem>>, vector<256x32xbf16>
    %c0_331 = arith.constant 0 : index
    %c0_332 = arith.constant 0 : index
    %596 = vector.load %arg10[%c0_331, %c0_332] : memref<32x512xbf16, #tpu.memory_space<vmem>>, vector<32x512xbf16>
    %cst_333 = arith.constant dense<0.000000e+00> : vector<256x512xf32>
    %597 = tpu.matmul %595, %596, %cst_333 {dimension_numbers = #tpu.dot_dimension_numbers<[1], [0], [0], [1], [0, 0, 1, 1], [], []>} : vector<256x32xbf16>, vector<32x512xbf16>, vector<256x512xf32> -> vector<256x512xf32>
    %c0_334 = arith.constant 0 : index
    %c0_335 = arith.constant 0 : index
    %598 = vector.load %arg11[%c0_334, %c0_335] : memref<1x512xf32, #tpu.memory_space<vmem>>, vector<1x512xf32>
    %599 = vector.broadcast %598 : vector<1x512xf32> to vector<256x512xf32>
    %600 = arith.addf %597, %599 : vector<256x512xf32>
    %cst_336 = arith.constant 0.000000e+00 : f32
    %601 = vector.broadcast %cst_336 : f32 to vector<256x512xf32>
    %602 = arith.maximumf %600, %601 : vector<256x512xf32>
    %603 = vector.shape_cast %602 : vector<256x512xf32> to vector<1x256x512xf32>
    %cst_337 = arith.constant dense<0.000000e+00> : vector<1xf32>
    %604 = vector.multi_reduction <add>, %603, %cst_337 [1, 2] : vector<1x256x512xf32> to vector<1xf32>
    %605 = vector.shape_cast %604 : vector<1xf32> to vector<1x1x1xf32>
    %606 = vector.extract %605[0, 0, 0] : f32 from vector<1x1x1xf32>
    %cst_338 = arith.constant 1.310720e+05 : f32
    %607 = arith.divf %606, %cst_338 : f32
    %608 = vector.broadcast %607 : f32 to vector<256x512xf32>
    %609 = arith.subf %602, %608 : vector<256x512xf32>
    %610 = arith.mulf %609, %609 : vector<256x512xf32>
    %611 = vector.shape_cast %610 : vector<256x512xf32> to vector<1x256x512xf32>
    %cst_339 = arith.constant dense<0.000000e+00> : vector<1xf32>
    %612 = vector.multi_reduction <add>, %611, %cst_339 [1, 2] : vector<1x256x512xf32> to vector<1xf32>
    %613 = vector.shape_cast %612 : vector<1xf32> to vector<1x1x1xf32>
    %614 = vector.extract %613[0, 0, 0] : f32 from vector<1x1x1xf32>
    %cst_340 = arith.constant 1.310720e+05 : f32
    %615 = arith.divf %614, %cst_340 : f32
    %cst_341 = arith.constant 9.99999974E-6 : f32
    %616 = arith.addf %615, %cst_341 : f32
    %617 = math.rsqrt %616 : f32
    %c0_342 = arith.constant 0 : index
    %c0_343 = arith.constant 0 : index
    %618 = vector.load %arg19[%c0_342, %c0_343] : memref<256x512xf32, #tpu.memory_space<vmem>>, vector<256x512xf32>
    tpu.vector_store %arg19[%c0_342, %c0_343], %602 {strides = array<i32>} : memref<256x512xf32, #tpu.memory_space<vmem>>, vector<256x512xf32>,
    %c0_344 = arith.constant 0 : index
    %c0_345 = arith.constant 0 : index
    %619 = vector.load %arg19[%c0_344, %c0_345] : memref<256x512xf32, #tpu.memory_space<vmem>>, vector<256x256xf32>
    %620 = vector.broadcast %607 : f32 to vector<256x256xf32>
    %621 = arith.subf %619, %620 : vector<256x256xf32>
    %622 = vector.broadcast %617 : f32 to vector<256x256xf32>
    %623 = arith.mulf %621, %622 : vector<256x256xf32>
    %c0_346 = arith.constant 0 : index
    %c0_347 = arith.constant 0 : index
    %624 = vector.load %arg12[%c0_346, %c0_347] : memref<256x512xbf16, #tpu.memory_space<vmem>>, vector<256x256xbf16>
    %625 = arith.extf %624 : vector<256x256xbf16> to vector<256x256xf32>
    %626 = arith.mulf %623, %625 : vector<256x256xf32>
    %c0_348 = arith.constant 0 : index
    %c0_349 = arith.constant 0 : index
    %627 = vector.load %arg13[%c0_348, %c0_349] : memref<256x512xbf16, #tpu.memory_space<vmem>>, vector<256x256xbf16>
    %628 = arith.extf %627 : vector<256x256xbf16> to vector<256x256xf32>
    %629 = arith.addf %626, %628 : vector<256x256xf32>
    %630 = arith.truncf %629 : vector<256x256xf32> to vector<256x256xbf16>
    %c0_350 = arith.constant 0 : index
    %c0_351 = arith.constant 0 : index
    %631 = vector.load %arg21[%c0_350, %c0_351] : memref<512x256xbf16, #tpu.memory_space<vmem>>, vector<256x256xbf16>
    tpu.vector_store %arg21[%c0_350, %c0_351], %630 {strides = array<i32>} : memref<512x256xbf16, #tpu.memory_space<vmem>>, vector<256x256xbf16>,
    %c0_352 = arith.constant 0 : index
    %c256_353 = arith.constant 256 : index
    %632 = vector.load %arg19[%c0_352, %c256_353] : memref<256x512xf32, #tpu.memory_space<vmem>>, vector<256x256xf32>
    %633 = vector.broadcast %607 : f32 to vector<256x256xf32>
    %634 = arith.subf %632, %633 : vector<256x256xf32>
    %635 = vector.broadcast %617 : f32 to vector<256x256xf32>
    %636 = arith.mulf %634, %635 : vector<256x256xf32>
    %c0_354 = arith.constant 0 : index
    %c256_355 = arith.constant 256 : index
    %637 = vector.load %arg12[%c0_354, %c256_355] : memref<256x512xbf16, #tpu.memory_space<vmem>>, vector<256x256xbf16>
    %638 = arith.extf %637 : vector<256x256xbf16> to vector<256x256xf32>
    %639 = arith.mulf %636, %638 : vector<256x256xf32>
    %c0_356 = arith.constant 0 : index
    %c256_357 = arith.constant 256 : index
    %640 = vector.load %arg13[%c0_356, %c256_357] : memref<256x512xbf16, #tpu.memory_space<vmem>>, vector<256x256xbf16>
    %641 = arith.extf %640 : vector<256x256xbf16> to vector<256x256xf32>
    %642 = arith.addf %639, %641 : vector<256x256xf32>
    %643 = arith.truncf %642 : vector<256x256xf32> to vector<256x256xbf16>
    %c256_358 = arith.constant 256 : index
    %c0_359 = arith.constant 0 : index
    %644 = vector.load %arg21[%c256_358, %c0_359] : memref<512x256xbf16, #tpu.memory_space<vmem>>, vector<256x256xbf16>
    tpu.vector_store %arg21[%c256_358, %c0_359], %643 {strides = array<i32>} : memref<512x256xbf16, #tpu.memory_space<vmem>>, vector<256x256xbf16>,
    %c0_360 = arith.constant 0 : index
    %c0_361 = arith.constant 0 : index
    %645 = vector.load %arg21[%c0_360, %c0_361] : memref<512x256xbf16, #tpu.memory_space<vmem>>, vector<512x256xbf16>
    %c0_362 = arith.constant 0 : index
    %c0_363 = arith.constant 0 : index
    %646 = vector.load %arg14[%c0_362, %c0_363] : memref<256x128xbf16, #tpu.memory_space<vmem>>, vector<256x128xbf16>
    %cst_364 = arith.constant dense<0.000000e+00> : vector<512x128xf32>
    %647 = tpu.matmul %645, %646, %cst_364 {dimension_numbers = #tpu.dot_dimension_numbers<[1], [0], [0], [1], [0, 0, 1, 1], [], []>} : vector<512x256xbf16>, vector<256x128xbf16>, vector<512x128xf32> -> vector<512x128xf32>
    %c0_365 = arith.constant 0 : index
    %c0_366 = arith.constant 0 : index
    %648 = vector.load %arg15[%c0_365, %c0_366] : memref<1x128xf32, #tpu.memory_space<vmem>>, vector<1x128xf32>
    %649 = vector.broadcast %648 : vector<1x128xf32> to vector<512x128xf32>
    %650 = arith.addf %647, %649 : vector<512x128xf32>
    %c0_367 = arith.constant 0 : index
    %c0_368 = arith.constant 0 : index
    %651 = vector.load %arg16[%c0_367, %c0_368] : memref<512x128xf32, #tpu.memory_space<vmem>>, vector<512x128xf32>
    %652 = arith.mulf %650, %651 : vector<512x128xf32>
    %c1 = arith.constant 1 : index
    %c0_369 = arith.constant 0 : index
    %c0_370 = arith.constant 0 : index
    %653 = vector.load %arg17[%c1, %c0_369, %c0_370] : memref<2x512x128xf32, #tpu.memory_space<vmem>>, vector<1x512x128xf32>
    %654 = vector.shape_cast %653 : vector<1x512x128xf32> to vector<512x128xf32>
    %655 = vector.shape_cast %652 : vector<512x128xf32> to vector<1x512x128xf32>
    tpu.vector_store %arg17[%c1, %c0_369, %c0_370], %655 {strides = array<i32>} : memref<2x512x128xf32, #tpu.memory_space<vmem>>, vector<1x512x128xf32>,
    return
  }
  func.func @transform_0(%arg0: i32) -> i32 {
    %c0_i32 = arith.constant 0 : i32
    %c0_i32_0 = arith.constant 0 : i32
    return %c0_i32 : i32
  }
  func.func @transform_1(%arg0: i32) -> (i32, i32) {
    %c0_i32 = arith.constant 0 : i32
    %c0_i32_0 = arith.constant 0 : i32
    %c0_i32_1 = arith.constant 0 : i32
    return %c0_i32, %c0_i32_0 : i32, i32
  }
  func.func @transform_2(%arg0: i32) -> (i32, i32) {
    %c0_i32 = arith.constant 0 : i32
    %c0_i32_0 = arith.constant 0 : i32
    %c0_i32_1 = arith.constant 0 : i32
    return %c0_i32, %c0_i32_0 : i32, i32
  }
  func.func @transform_3(%arg0: i32) -> (i32, i32) {
    %c0_i32 = arith.constant 0 : i32
    %c0_i32_0 = arith.constant 0 : i32
    %c0_i32_1 = arith.constant 0 : i32
    return %c0_i32, %c0_i32_0 : i32, i32
  }
  func.func @transform_4(%arg0: i32) -> (i32, i32) {
    %c0_i32 = arith.constant 0 : i32
    %c0_i32_0 = arith.constant 0 : i32
    %c0_i32_1 = arith.constant 0 : i32
    return %c0_i32, %c0_i32_0 : i32, i32
  }
  func.func @transform_5(%arg0: i32) -> (i32, i32) {
    %c0_i32 = arith.constant 0 : i32
    %c0_i32_0 = arith.constant 0 : i32
    %c0_i32_1 = arith.constant 0 : i32
    return %c0_i32, %c0_i32_0 : i32, i32
  }
  func.func @transform_6(%arg0: i32) -> (i32, i32) {
    %c0_i32 = arith.constant 0 : i32
    %c0_i32_0 = arith.constant 0 : i32
    %c0_i32_1 = arith.constant 0 : i32
    return %c0_i32, %c0_i32_0 : i32, i32
  }
  func.func @transform_7(%arg0: i32) -> (i32, i32) {
    %c0_i32 = arith.constant 0 : i32
    %c0_i32_0 = arith.constant 0 : i32
    %c0_i32_1 = arith.constant 0 : i32
    return %c0_i32, %c0_i32_0 : i32, i32
  }
  func.func @transform_8(%arg0: i32) -> (i32, i32) {
    %c0_i32 = arith.constant 0 : i32
    %c0_i32_0 = arith.constant 0 : i32
    %c0_i32_1 = arith.constant 0 : i32
    return %c0_i32, %c0_i32_0 : i32, i32
  }
  func.func @transform_9(%arg0: i32) -> (i32, i32) {
    %c0_i32 = arith.constant 0 : i32
    %c0_i32_0 = arith.constant 0 : i32
    %c0_i32_1 = arith.constant 0 : i32
    return %c0_i32, %c0_i32_0 : i32, i32
  }
  func.func @transform_10(%arg0: i32) -> (i32, i32) {
    %c0_i32 = arith.constant 0 : i32
    %c0_i32_0 = arith.constant 0 : i32
    %c0_i32_1 = arith.constant 0 : i32
    return %c0_i32, %c0_i32_0 : i32, i32
  }
  func.func @transform_11(%arg0: i32) -> (i32, i32) {
    %c0_i32 = arith.constant 0 : i32
    %c0_i32_0 = arith.constant 0 : i32
    %c0_i32_1 = arith.constant 0 : i32
    return %c0_i32, %c0_i32_0 : i32, i32
  }
  func.func @transform_12(%arg0: i32) -> (i32, i32) {
    %c0_i32 = arith.constant 0 : i32
    %c0_i32_0 = arith.constant 0 : i32
    %c0_i32_1 = arith.constant 0 : i32
    return %c0_i32, %c0_i32_0 : i32, i32
  }
  func.func @transform_13(%arg0: i32) -> (i32, i32) {
    %c0_i32 = arith.constant 0 : i32
    %c0_i32_0 = arith.constant 0 : i32
    %c0_i32_1 = arith.constant 0 : i32
    return %c0_i32, %c0_i32_0 : i32, i32
  }
  func.func @transform_14(%arg0: i32) -> (i32, i32) {
    %c0_i32 = arith.constant 0 : i32
    %c0_i32_0 = arith.constant 0 : i32
    %c0_i32_1 = arith.constant 0 : i32
    return %c0_i32, %c0_i32_0 : i32, i32
  }
  func.func @transform_15(%arg0: i32) -> (i32, i32) {
    %c0_i32 = arith.constant 0 : i32
    %c0_i32_0 = arith.constant 0 : i32
    %c0_i32_1 = arith.constant 0 : i32
    return %c0_i32, %c0_i32_0 : i32, i32
  }
  func.func @transform_16(%arg0: i32) -> (i32, i32, i32) {
    %c0_i32 = arith.constant 0 : i32
    %c0_i32_0 = arith.constant 0 : i32
    %c0_i32_1 = arith.constant 0 : i32
    return %arg0, %c0_i32, %c0_i32_0 : i32, i32, i32
  }
}

</mosaic_0001>

<llo_original>
// kernel: scalar_cnn_forward.1
$region0: #{scalar_cnn_forward.1}
  #allocation0 [shape = 'u32[]', space=smem, size = 0x4, offset = 0x4, fixed_abs, tag = 'smem constant byte address 0x4 - core index']
  #allocation1 [shape = 'u32[144,128]{1,0:T(1,128)}', space=vmem, size = 0x12000, scoped, tag = 'internal scratch']
  #allocation2 [shape = 'f32[16,512]{1,0:T(8,128)}', space=vmem, size = 0x8000, scoped, tag = 'scratch operand']
  #allocation3 [shape = 'f32[256,512]{1,0:T(8,128)}', space=vmem, size = 0x80000, scoped, tag = 'scratch operand']
  #allocation4 [shape = 'bf16[256,32]{1,0:T(16,128)(2,1)}', space=vmem, size = 0x10000, scoped, tag = 'scratch operand']
  #allocation5 [shape = 'bf16[512,256]{1,0:T(16,128)(2,1)}', space=vmem, size = 0x40000, scoped, tag = 'scratch operand']
  %s0 = inlined_call_operand.hbm [shape: f32[4], index: 0, kind: input, shape index: {}]
  %s1 = inlined_call_operand.hbm [shape: f32[16,32], index: 1, kind: input, shape index: {}]
  %s2 = inlined_call_operand.hbm [shape: f32[1,32], index: 2, kind: input, shape index: {}]
  %s3 = inlined_call_operand.hbm [shape: f32[16,32], index: 3, kind: input, shape index: {}]
  %s4 = inlined_call_operand.hbm [shape: f32[16,32], index: 4, kind: input, shape index: {}]
  %s5 = inlined_call_operand.hbm [shape: bf16[32,512], index: 5, kind: input, shape index: {}]
  %s6 = inlined_call_operand.hbm [shape: f32[1,512], index: 6, kind: input, shape index: {}]
  %s7 = inlined_call_operand.hbm [shape: bf16[16,512], index: 7, kind: input, shape index: {}]
  %s8 = inlined_call_operand.hbm [shape: bf16[16,512], index: 8, kind: input, shape index: {}]
  %s9 = inlined_call_operand.hbm [shape: bf16[32,512], index: 9, kind: input, shape index: {}]
  %s10 = inlined_call_operand.hbm [shape: f32[1,512], index: 10, kind: input, shape index: {}]
  %s11 = inlined_call_operand.hbm [shape: bf16[256,512], index: 11, kind: input, shape index: {}]
  %s12 = inlined_call_operand.hbm [shape: bf16[256,512], index: 12, kind: input, shape index: {}]
  %s13 = inlined_call_operand.hbm [shape: bf16[256,128], index: 13, kind: input, shape index: {}]
  %s14 = inlined_call_operand.hbm [shape: f32[1,128], index: 14, kind: input, shape index: {}]
  %s15 = inlined_call_operand.hbm [shape: f32[512,128], index: 15, kind: input, shape index: {}]
  %s16 = inlined_call_operand.hbm [shape: f32[4,512,128], index: 16, kind: output, shape index: {}]
  %s17 = sld [smem:[#allocation0]]
  $region161: #{scalar_cnn_forward.1} parent=0
    _
  %s19 = ssub.s32 1, %s17
  %s20 = scalar_select 0, %s19, %s17
  $region1: #{scalar_cnn_forward.1} parent=0
    #allocation6 [shape = 'u8[512]{0}', space=smem, size = 0x200, scoped, tag = 'input window, operand 0, single buffered']
    #allocation7 [shape = 's32[2]{0}', space=sflag, size = 0x8, scoped, tag = 'scoped memory for scalar_cnn_forward.1']
    #allocation8 [shape = 's32[2]{0}', space=sflag, size = 0x8, scoped, tag = 'scoped memory for scalar_cnn_forward.1']
    #allocation9 [shape = 's32[2]{0}', space=sflag, size = 0x8, scoped, tag = 'scoped memory for scalar_cnn_forward.1']
    #allocation10 [shape = 'u8[8192]{0}', space=vmem, size = 0x2000, scoped, tag = 'input window, operand 1, single buffered']
    #allocation11 [shape = 'u8[512]{0}', space=vmem, size = 0x400, scoped, tag = 'input window, operand 2, single buffered']
    #allocation12 [shape = 's32[1]{0}', space=sflag, size = 0x4, scoped, tag = 'scoped memory for scalar_cnn_forward.1']
    #allocation13 [shape = 'u8[8192]{0}', space=vmem, size = 0x2000, scoped, tag = 'input window, operand 3, single buffered']
    #allocation14 [shape = 'u8[8192]{0}', space=vmem, size = 0x2000, scoped, tag = 'input window, operand 4, single buffered']
    #allocation15 [shape = 's32[1]{0}', space=sflag, size = 0x4, scoped, tag = 'scoped memory for scalar_cnn_forward.1']
    #allocation16 [shape = 'u8[32768]{0}', space=vmem, size = 0x8000, scoped, tag = 'input window, operand 5, single buffered']
    #allocation17 [shape = 'u8[2048]{0}', space=vmem, size = 0x800, scoped, tag = 'input window, operand 6, single buffered']
    #allocation18 [shape = 's32[1]{0}', space=sflag, size = 0x4, scoped, tag = 'scoped memory for scalar_cnn_forward.1']
    #allocation19 [shape = 'u8[16384]{0}', space=vmem, size = 0x4000, scoped, tag = 'input window, operand 7, single buffered']
    #allocation20 [shape = 'u8[16384]{0}', space=vmem, size = 0x4000, scoped, tag = 'input window, operand 8, single buffered']
    #allocation21 [shape = 's32[1]{0}', space=sflag, size = 0x4, scoped, tag = 'scoped memory for scalar_cnn_forward.1']
    #allocation22 [shape = 'u8[32768]{0}', space=vmem, size = 0x8000, scoped, tag = 'input window, operand 9, single buffered']
    #allocation23 [shape = 'u8[2048]{0}', space=vmem, size = 0x800, scoped, tag = 'input window, operand 10, single buffered']
    #allocation24 [shape = 's32[1]{0}', space=sflag, size = 0x4, scoped, tag = 'scoped memory for scalar_cnn_forward.1']
    #allocation25 [shape = 'u8[262144]{0}', space=vmem, size = 0x40000, scoped, tag = 'input window, operand 11, single buffered']
    #allocation26 [shape = 'u8[262144]{0}', space=vmem, size = 0x40000, scoped, tag = 'input window, operand 12, single buffered']
    #allocation27 [shape = 's32[1]{0}', space=sflag, size = 0x4, scoped, tag = 'scoped memory for scalar_cnn_forward.1']
    #allocation28 [shape = 'u8[65536]{0}', space=vmem, size = 0x10000, scoped, tag = 'input window, operand 13, single buffered']
    #allocation29 [shape = 'u8[512]{0}', space=vmem, size = 0x400, scoped, tag = 'input window, operand 14, single buffered']
    #allocation30 [shape = 's32[1]{0}', space=sflag, size = 0x4, scoped, tag = 'scoped memory for scalar_cnn_forward.1']
    #allocation31 [shape = 'u8[262144]{0}', space=vmem, size = 0x40000, scoped, tag = 'input window, operand 15, single buffered']
    #allocation32 [shape = 'u8[1048576]{0}', space=vmem, size = 0x100000, scoped, tag = 'output window, operand 0']
    %21 = vsyncpa [#allocation9], 0
    %22 = vsyncpa [#allocation7], 0
    %23 = vsyncpa [#allocation12], 0
    %24 = vsyncpa [#allocation15], 0
    %25 = vsyncpa [#allocation18], 0
    %26 = vsyncpa [#allocation21], 0
    %27 = vsyncpa [#allocation24], 0
    %28 = vsyncpa [#allocation27], 0
    %29 = vsyncpa [#allocation30], 0
    %30 = vsyncpa [#allocation8], 0
    %s31 = scalar_lea.sflag [#allocation8], 1
    %32 = vsyncpa %s31, 0
    loop: start=0, step=1, limit=4
    $region2: #{scalar_cnn_forward.1} parent=1 // loop_pre_header
      _
    $region3: #{scalar_cnn_forward.1} parent=1 // loop_header
      %s34 = sphi 0, %s38
      %p35 = scmp.ge.s32.totalorder %s34, 4
      %s42 = sphi 0, %s42
      %s44 = sphi 0, %s42
      %s45 = sphi 0, %s44
      %s59 = sphi 0, %s45
      %s63 = sphi 0, %s63
      %s65 = sphi 0, %s63
      %s66 = sphi 0, %s65
      %s80 = sphi 0, %s66
      %s84 = sphi 0, %s84
      %s86 = sphi 0, %s84
      %s87 = sphi 0, %s86
      %s101 = sphi 0, %s87
      %s105 = sphi 0, %s105
      %s107 = sphi 0, %s105
      %s108 = sphi 0, %s107
      %s122 = sphi 0, %s108
      %s126 = sphi 0, %s126
      %s128 = sphi 0, %s126
      %s129 = sphi 0, %s128
      %s143 = sphi 0, %s129
      %s147 = sphi 0, %s147
      %s149 = sphi 0, %s147
      %s150 = sphi 0, %s149
      %s164 = sphi 0, %s150
      %s168 = sphi 0, %s168
      %s170 = sphi 0, %s168
      %s171 = sphi 0, %s170
      %s185 = sphi 0, %s171
      %s189 = sphi 0, %s189
      %s191 = sphi 0, %s189
      %s192 = sphi 0, %s191
      %s206 = sphi 0, %s192
      %s210 = sphi 0, %s210
      %s212 = sphi 0, %s210
      %s213 = sphi 0, %s212
      %s227 = sphi 0, %s213
      %s231 = sphi 0, %s231
      %s233 = sphi 0, %s231
      %s234 = sphi 0, %s233
      %s248 = sphi 0, %s234
      %s252 = sphi 0, %s252
      %s254 = sphi 0, %s252
      %s255 = sphi 0, %s254
      %s269 = sphi 0, %s255
      %s273 = sphi 0, %s273
      %s275 = sphi 0, %s273
      %s276 = sphi 0, %s275
      %s290 = sphi 0, %s276
      %s294 = sphi 0, %s294
      %s296 = sphi 0, %s294
      %s297 = sphi 0, %s296
      %s311 = sphi 0, %s297
      %s315 = sphi 0, %s315
      %s317 = sphi 0, %s315
      %s318 = sphi 0, %s317
      %s332 = sphi 0, %s318
      %s336 = sphi 0, %s336
      %s338 = sphi 0, %s336
      %s339 = sphi 0, %s338
      %s353 = sphi 0, %s339
      %s357 = sphi 0, %s357
      %s359 = sphi 0, %s357
      %s360 = sphi 0, %s359
      %s374 = sphi 0, %s360
      %s380 = sphi 0, %s382
      %s383 = sphi 0, %s380
      %s384 = sphi 0, %s383
      %s400 = sphi 0, %s384
    $region4: #{scalar_cnn_forward.1} parent=1 // loop_header_branch
      %37 = sbr.rel (%p35) target = $region8
    $region5: #{scalar_cnn_forward.1} parent=1 // loop_body
      %s39 = ssub.s32 %s34, 1
      %s40 = ssub.s32 %s34, 2
      %s41 = sadd.s32 %s34, 1
      %s43 = sadd.s32 %s42, 1
      %p46 = scmp.eq.s32.totalorder %s34, 1
      %p47 = scmp.ne.s32.totalorder %s42, %s44
      %p48 = scmp.eq.s32.totalorder %s34, 0
      %p49 = por %p47, %p48
      %p50 = scmp.ne.s32.totalorder %s42, %s44
      %p51 = scmp.eq.s32.totalorder %s39, 1
      %p52 = por %p50, %p51
      %p53 = scmp.ne.s32.totalorder %s44, %s45
      %p54 = scmp.eq.s32.totalorder %s39, 0
      %p55 = por %p53, %p54
      %p56 = scmp.ne.s32.totalorder %s44, %s45
      %p57 = scmp.eq.s32.totalorder %s40, 1
      %p58 = por %p56, %p57
      %p60 = scmp.ne.s32.totalorder %s45, %s59
      %p61 = scmp.eq.s32.totalorder %s40, 0
      %p62 = por %p60, %p61
      %s64 = sadd.s32 %s63, 1
      %p67 = scmp.eq.s32.totalorder %s34, 1
      %p68 = scmp.ne.s32.totalorder %s63, %s65
      %p69 = scmp.eq.s32.totalorder %s34, 0
      %p70 = por %p68, %p69
      %p71 = scmp.ne.s32.totalorder %s63, %s65
      %p72 = scmp.eq.s32.totalorder %s39, 1
      %p73 = por %p71, %p72
      %p74 = scmp.ne.s32.totalorder %s65, %s66
      %p75 = scmp.eq.s32.totalorder %s39, 0
      %p76 = por %p74, %p75
      %p77 = scmp.ne.s32.totalorder %s65, %s66
      %p78 = scmp.eq.s32.totalorder %s40, 1
      %p79 = por %p77, %p78
      %p81 = scmp.ne.s32.totalorder %s66, %s80
      %p82 = scmp.eq.s32.totalorder %s40, 0
      %p83 = por %p81, %p82
      %s85 = sadd.s32 %s84, 1
      %p88 = scmp.eq.s32.totalorder %s34, 1
      %p89 = scmp.ne.s32.totalorder %s84, %s86
      %p90 = scmp.eq.s32.totalorder %s34, 0
      %p91 = por %p89, %p90
      %p92 = scmp.ne.s32.totalorder %s84, %s86
      %p93 = scmp.eq.s32.totalorder %s39, 1
      %p94 = por %p92, %p93
      %p95 = scmp.ne.s32.totalorder %s86, %s87
      %p96 = scmp.eq.s32.totalorder %s39, 0
      %p97 = por %p95, %p96
      %p98 = scmp.ne.s32.totalorder %s86, %s87
      %p99 = scmp.eq.s32.totalorder %s40, 1
      %p100 = por %p98, %p99
      %p102 = scmp.ne.s32.totalorder %s87, %s101
      %p103 = scmp.eq.s32.totalorder %s40, 0
      %p104 = por %p102, %p103
      %s106 = sadd.s32 %s105, 1
      %p109 = scmp.eq.s32.totalorder %s34, 1
      %p110 = scmp.ne.s32.totalorder %s105, %s107
      %p111 = scmp.eq.s32.totalorder %s34, 0
      %p112 = por %p110, %p111
      %p113 = scmp.ne.s32.totalorder %s105, %s107
      %p114 = scmp.eq.s32.totalorder %s39, 1
      %p115 = por %p113, %p114
      %p116 = scmp.ne.s32.totalorder %s107, %s108
      %p117 = scmp.eq.s32.totalorder %s39, 0
      %p118 = por %p116, %p117
      %p119 = scmp.ne.s32.totalorder %s107, %s108
      %p120 = scmp.eq.s32.totalorder %s40, 1
      %p121 = por %p119, %p120
      %p123 = scmp.ne.s32.totalorder %s108, %s122
      %p124 = scmp.eq.s32.totalorder %s40, 0
      %p125 = por %p123, %p124
      %s127 = sadd.s32 %s126, 1
      %p130 = scmp.eq.s32.totalorder %s34, 1
      %p131 = scmp.ne.s32.totalorder %s126, %s128
      %p132 = scmp.eq.s32.totalorder %s34, 0
      %p133 = por %p131, %p132
      %p134 = scmp.ne.s32.totalorder %s126, %s128
      %p135 = scmp.eq.s32.totalorder %s39, 1
      %p136 = por %p134, %p135
      %p137 = scmp.ne.s32.totalorder %s128, %s129
      %p138 = scmp.eq.s32.totalorder %s39, 0
      %p139 = por %p137, %p138
      %p140 = scmp.ne.s32.totalorder %s128, %s129
      %p141 = scmp.eq.s32.totalorder %s40, 1
      %p142 = por %p140, %p141
      %p144 = scmp.ne.s32.totalorder %s129, %s143
      %p145 = scmp.eq.s32.totalorder %s40, 0
      %p146 = por %p144, %p145
      %s148 = sadd.s32 %s147, 1
      %p151 = scmp.eq.s32.totalorder %s34, 1
      %p152 = scmp.ne.s32.totalorder %s147, %s149
      %p153 = scmp.eq.s32.totalorder %s34, 0
      %p154 = por %p152, %p153
      %p155 = scmp.ne.s32.totalorder %s147, %s149
      %p156 = scmp.eq.s32.totalorder %s39, 1
      %p157 = por %p155, %p156
      %p158 = scmp.ne.s32.totalorder %s149, %s150
      %p159 = scmp.eq.s32.totalorder %s39, 0
      %p160 = por %p158, %p159
      %p161 = scmp.ne.s32.totalorder %s149, %s150
      %p162 = scmp.eq.s32.totalorder %s40, 1
      %p163 = por %p161, %p162
      %p165 = scmp.ne.s32.totalorder %s150, %s164
      %p166 = scmp.eq.s32.totalorder %s40, 0
      %p167 = por %p165, %p166
      %s169 = sadd.s32 %s168, 1
      %p172 = scmp.eq.s32.totalorder %s34, 1
      %p173 = scmp.ne.s32.totalorder %s168, %s170
      %p174 = scmp.eq.s32.totalorder %s34, 0
      %p175 = por %p173, %p174
      %p176 = scmp.ne.s32.totalorder %s168, %s170
      %p177 = scmp.eq.s32.totalorder %s39, 1
      %p178 = por %p176, %p177
      %p179 = scmp.ne.s32.totalorder %s170, %s171
      %p180 = scmp.eq.s32.totalorder %s39, 0
      %p181 = por %p179, %p180
      %p182 = scmp.ne.s32.totalorder %s170, %s171
      %p183 = scmp.eq.s32.totalorder %s40, 1
      %p184 = por %p182, %p183
      %p186 = scmp.ne.s32.totalorder %s171, %s185
      %p187 = scmp.eq.s32.totalorder %s40, 0
      %p188 = por %p186, %p187
      %s190 = sadd.s32 %s189, 1
      %p193 = scmp.eq.s32.totalorder %s34, 1
      %p194 = scmp.ne.s32.totalorder %s189, %s191
      %p195 = scmp.eq.s32.totalorder %s34, 0
      %p196 = por %p194, %p195
      %p197 = scmp.ne.s32.totalorder %s189, %s191
      %p198 = scmp.eq.s32.totalorder %s39, 1
      %p199 = por %p197, %p198
      %p200 = scmp.ne.s32.totalorder %s191, %s192
      %p201 = scmp.eq.s32.totalorder %s39, 0
      %p202 = por %p200, %p201
      %p203 = scmp.ne.s32.totalorder %s191, %s192
      %p204 = scmp.eq.s32.totalorder %s40, 1
      %p205 = por %p203, %p204
      %p207 = scmp.ne.s32.totalorder %s192, %s206
      %p208 = scmp.eq.s32.totalorder %s40, 0
      %p209 = por %p207, %p208
      %s211 = sadd.s32 %s210, 1
      %p214 = scmp.eq.s32.totalorder %s34, 1
      %p215 = scmp.ne.s32.totalorder %s210, %s212
      %p216 = scmp.eq.s32.totalorder %s34, 0
      %p217 = por %p215, %p216
      %p218 = scmp.ne.s32.totalorder %s210, %s212
      %p219 = scmp.eq.s32.totalorder %s39, 1
      %p220 = por %p218, %p219
      %p221 = scmp.ne.s32.totalorder %s212, %s213
      %p222 = scmp.eq.s32.totalorder %s39, 0
      %p223 = por %p221, %p222
      %p224 = scmp.ne.s32.totalorder %s212, %s213
      %p225 = scmp.eq.s32.totalorder %s40, 1
      %p226 = por %p224, %p225
      %p228 = scmp.ne.s32.totalorder %s213, %s227
      %p229 = scmp.eq.s32.totalorder %s40, 0
      %p230 = por %p228, %p229
      %s232 = sadd.s32 %s231, 1
      %p235 = scmp.eq.s32.totalorder %s34, 1
      %p236 = scmp.ne.s32.totalorder %s231, %s233
      %p237 = scmp.eq.s32.totalorder %s34, 0
      %p238 = por %p236, %p237
      %p239 = scmp.ne.s32.totalorder %s231, %s233
      %p240 = scmp.eq.s32.totalorder %s39, 1
      %p241 = por %p239, %p240
      %p242 = scmp.ne.s32.totalorder %s233, %s234
      %p243 = scmp.eq.s32.totalorder %s39, 0
      %p244 = por %p242, %p243
      %p245 = scmp.ne.s32.totalorder %s233, %s234
      %p246 = scmp.eq.s32.totalorder %s40, 1
      %p247 = por %p245, %p246
      %p249 = scmp.ne.s32.totalorder %s234, %s248
      %p250 = scmp.eq.s32.totalorder %s40, 0
      %p251 = por %p249, %p250
      %s253 = sadd.s32 %s252, 1
      %p256 = scmp.eq.s32.totalorder %s34, 1
      %p257 = scmp.ne.s32.totalorder %s252, %s254
      %p258 = scmp.eq.s32.totalorder %s34, 0
      %p259 = por %p257, %p258
      %p260 = scmp.ne.s32.totalorder %s252, %s254
      %p261 = scmp.eq.s32.totalorder %s39, 1
      %p262 = por %p260, %p261
      %p263 = scmp.ne.s32.totalorder %s254, %s255
      %p264 = scmp.eq.s32.totalorder %s39, 0
      %p265 = por %p263, %p264
      %p266 = scmp.ne.s32.totalorder %s254, %s255
      %p267 = scmp.eq.s32.totalorder %s40, 1
      %p268 = por %p266, %p267
      %p270 = scmp.ne.s32.totalorder %s255, %s269
      %p271 = scmp.eq.s32.totalorder %s40, 0
      %p272 = por %p270, %p271
      %s274 = sadd.s32 %s273, 1
      %p277 = scmp.eq.s32.totalorder %s34, 1
      %p278 = scmp.ne.s32.totalorder %s273, %s275
      %p279 = scmp.eq.s32.totalorder %s34, 0
      %p280 = por %p278, %p279
      %p281 = scmp.ne.s32.totalorder %s273, %s275
      %p282 = scmp.eq.s32.totalorder %s39, 1
      %p283 = por %p281, %p282
      %p284 = scmp.ne.s32.totalorder %s275, %s276
      %p285 = scmp.eq.s32.totalorder %s39, 0
      %p286 = por %p284, %p285
      %p287 = scmp.ne.s32.totalorder %s275, %s276
      %p288 = scmp.eq.s32.totalorder %s40, 1
      %p289 = por %p287, %p288
      %p291 = scmp.ne.s32.totalorder %s276, %s290
      %p292 = scmp.eq.s32.totalorder %s40, 0
      %p293 = por %p291, %p292
      %s295 = sadd.s32 %s294, 1
      %p298 = scmp.eq.s32.totalorder %s34, 1
      %p299 = scmp.ne.s32.totalorder %s294, %s296
      %p300 = scmp.eq.s32.totalorder %s34, 0
      %p301 = por %p299, %p300
      %p302 = scmp.ne.s32.totalorder %s294, %s296
      %p303 = scmp.eq.s32.totalorder %s39, 1
      %p304 = por %p302, %p303
      %p305 = scmp.ne.s32.totalorder %s296, %s297
      %p306 = scmp.eq.s32.totalorder %s39, 0
      %p307 = por %p305, %p306
      %p308 = scmp.ne.s32.totalorder %s296, %s297
      %p309 = scmp.eq.s32.totalorder %s40, 1
      %p310 = por %p308, %p309
      %p312 = scmp.ne.s32.totalorder %s297, %s311
      %p313 = scmp.eq.s32.totalorder %s40, 0
      %p314 = por %p312, %p313
      %s316 = sadd.s32 %s315, 1
      %p319 = scmp.eq.s32.totalorder %s34, 1
      %p320 = scmp.ne.s32.totalorder %s315, %s317
      %p321 = scmp.eq.s32.totalorder %s34, 0
      %p322 = por %p320, %p321
      %p323 = scmp.ne.s32.totalorder %s315, %s317
      %p324 = scmp.eq.s32.totalorder %s39, 1
      %p325 = por %p323, %p324
      %p326 = scmp.ne.s32.totalorder %s317, %s318
      %p327 = scmp.eq.s32.totalorder %s39, 0
      %p328 = por %p326, %p327
      %p329 = scmp.ne.s32.totalorder %s317, %s318
      %p330 = scmp.eq.s32.totalorder %s40, 1
      %p331 = por %p329, %p330
      %p333 = scmp.ne.s32.totalorder %s318, %s332
      %p334 = scmp.eq.s32.totalorder %s40, 0
      %p335 = por %p333, %p334
      %s337 = sadd.s32 %s336, 1
      %p340 = scmp.eq.s32.totalorder %s34, 1
      %p341 = scmp.ne.s32.totalorder %s336, %s338
      %p342 = scmp.eq.s32.totalorder %s34, 0
      %p343 = por %p341, %p342
      %p344 = scmp.ne.s32.totalorder %s336, %s338
      %p345 = scmp.eq.s32.totalorder %s39, 1
      %p346 = por %p344, %p345
      %p347 = scmp.ne.s32.totalorder %s338, %s339
      %p348 = scmp.eq.s32.totalorder %s39, 0
      %p349 = por %p347, %p348
      %p350 = scmp.ne.s32.totalorder %s338, %s339
      %p351 = scmp.eq.s32.totalorder %s40, 1
      %p352 = por %p350, %p351
      %p354 = scmp.ne.s32.totalorder %s339, %s353
      %p355 = scmp.eq.s32.totalorder %s40, 0
      %p356 = por %p354, %p355
      %s358 = sadd.s32 %s357, 1
      %p361 = scmp.eq.s32.totalorder %s34, 1
      %p362 = scmp.ne.s32.totalorder %s357, %s359
      %p363 = scmp.eq.s32.totalorder %s34, 0
      %p364 = por %p362, %p363
      %p365 = scmp.ne.s32.totalorder %s357, %s359
      %p366 = scmp.eq.s32.totalorder %s39, 1
      %p367 = por %p365, %p366
      %p368 = scmp.ne.s32.totalorder %s359, %s360
      %p369 = scmp.eq.s32.totalorder %s39, 0
      %p370 = por %p368, %p369
      %p371 = scmp.ne.s32.totalorder %s359, %s360
      %p372 = scmp.eq.s32.totalorder %s40, 1
      %p373 = por %p371, %p372
      %p375 = scmp.ne.s32.totalorder %s360, %s374
      %p376 = scmp.eq.s32.totalorder %s40, 0
      %p377 = por %p375, %p376
      %s378 = ssub.s32 %s34, %s41
      %p379 = scmp.eq.s32.totalorder %s378, 0
      %s381 = sadd.s32 %s380, 1
      %s382 = scalar_select %p379, %s380, %s381
      %p385 = pneg %p379
      %p386 = scmp.eq.s32.totalorder %s34, 1
      %p387 = por %p385, %p386
      %p388 = scmp.ne.s32.totalorder %s380, %s383
      %p389 = scmp.eq.s32.totalorder %s34, 0
      %p390 = por %p388, %p389
      %p391 = scmp.ne.s32.totalorder %s380, %s383
      %p392 = scmp.eq.s32.totalorder %s39, 1
      %p393 = por %p391, %p392
      %p394 = scmp.ne.s32.totalorder %s383, %s384
      %p395 = scmp.eq.s32.totalorder %s39, 0
      %p396 = por %p394, %p395
      %p397 = scmp.ne.s32.totalorder %s383, %s384
      %p398 = scmp.eq.s32.totalorder %s40, 1
      %p399 = por %p397, %p398
      %p401 = scmp.ne.s32.totalorder %s384, %s400
      %p402 = scmp.eq.s32.totalorder %s40, 0
      %p403 = por %p401, %p402
      %p404 = scmp.le.s32.totalorder 1, %s34
      %p405 = scmp.lt.s32.totalorder %s34, 3
      %p406 = pnand %p404, %p405
      %p407 = pneg %p406
      // Predicated region
      $region9: #{scalar_cnn_forward.1} parent=5 // pred_check
        _
      $region10: #{scalar_cnn_forward.1} parent=5 // pred_check_branch
        %409 = sbr.rel (%p406) target = $region12
      $region11: #{scalar_cnn_forward.1} parent=5 // pred_region
        %s410 = ssub.s32 %s34, 1
        // Predicated region
        $region13: #{scalar_cnn_forward.1} parent=11 // pred_check
          %p411 = pneg %p55
        $region14: #{scalar_cnn_forward.1} parent=11 // pred_check_branch
          %413 = sbr.rel (%p411) target = $region16
        $region15: #{scalar_cnn_forward.1} parent=11 // pred_region
          %s415 = ssub.s32 16, 16
          %416 = vsyncadd [#allocation9], %s415
          %419 = dma.hbm_to_smem %s0, 16, [#allocation6], [#allocation9]
        $region16: #{scalar_cnn_forward.1} parent=11 // pred_fallthru
          _
        // Predicated region
        $region17: #{scalar_cnn_forward.1} parent=11 // pred_check
          %p420 = pneg %p76
        $region18: #{scalar_cnn_forward.1} parent=11 // pred_check_branch
          %422 = sbr.rel (%p420) target = $region20
        $region19: #{scalar_cnn_forward.1} parent=11 // pred_region
          %s424 = ssub.s32 256, 256
          %425 = vsyncadd [#allocation7], %s424
          %s426 = sshll.u32 [#allocation10], 4
          %s427 = int_to_ptr.vmem [resolvable:$true] %s426
          %432 = dma.hbm_to_vmem [thread:$0]  %s1, 256, %s427, [#allocation7], 128, 128, 8
        $region20: #{scalar_cnn_forward.1} parent=11 // pred_fallthru
          _
        // Predicated region
        $region21: #{scalar_cnn_forward.1} parent=11 // pred_check
          %p433 = pneg %p97
        $region22: #{scalar_cnn_forward.1} parent=11 // pred_check_branch
          %435 = sbr.rel (%p433) target = $region24
        $region23: #{scalar_cnn_forward.1} parent=11 // pred_region
          %s437 = ssub.s32 16, 16
          %438 = vsyncadd [#allocation12], %s437
          %s440 = sshll.u32 [#allocation11], 4
          %s441 = int_to_ptr.vmem [resolvable:$true] %s440
          %443 = dma.hbm_to_vmem [thread:$0]  %s2, 16, %s441, [#allocation12]
        $region24: #{scalar_cnn_forward.1} parent=11 // pred_fallthru
          _
        // Predicated region
        $region25: #{scalar_cnn_forward.1} parent=11 // pred_check
          %p444 = pneg %p118
        $region26: #{scalar_cnn_forward.1} parent=11 // pred_check_branch
          %446 = sbr.rel (%p444) target = $region28
        $region27: #{scalar_cnn_forward.1} parent=11 // pred_region
          %s448 = ssub.s32 256, 256
          %449 = vsyncadd [#allocation12], %s448
          %s450 = sshll.u32 [#allocation13], 4
          %s451 = int_to_ptr.vmem [resolvable:$true] %s450
          %456 = dma.hbm_to_vmem [thread:$0]  %s3, 256, %s451, [#allocation12], 128, 128, 8
        $region28: #{scalar_cnn_forward.1} parent=11 // pred_fallthru
          _
        // Predicated region
        $region29: #{scalar_cnn_forward.1} parent=11 // pred_check
          %p457 = pneg %p139
        $region30: #{scalar_cnn_forward.1} parent=11 // pred_check_branch
          %459 = sbr.rel (%p457) target = $region32
        $region31: #{scalar_cnn_forward.1} parent=11 // pred_region
          %s461 = ssub.s32 256, 256
          %462 = vsyncadd [#allocation15], %s461
          %s463 = sshll.u32 [#allocation14], 4
          %s464 = int_to_ptr.vmem [resolvable:$true] %s463
          %469 = dma.hbm_to_vmem [thread:$0]  %s4, 256, %s464, [#allocation15], 128, 128, 8
        $region32: #{scalar_cnn_forward.1} parent=11 // pred_fallthru
          _
        // Predicated region
        $region33: #{scalar_cnn_forward.1} parent=11 // pred_check
          %p470 = pneg %p160
        $region34: #{scalar_cnn_forward.1} parent=11 // pred_check_branch
          %472 = sbr.rel (%p470) target = $region36
        $region35: #{scalar_cnn_forward.1} parent=11 // pred_region
          %s474 = ssub.s32 1024, 1024
          %475 = vsyncadd [#allocation15], %s474
          %s476 = sshll.u32 [#allocation16], 4
          %s477 = int_to_ptr.vmem [resolvable:$true] %s476
          %482 = dma.hbm_to_vmem [thread:$0]  %s5, 1024, %s477, [#allocation15], 256, 256, 16
        $region36: #{scalar_cnn_forward.1} parent=11 // pred_fallthru
          _
        // Predicated region
        $region37: #{scalar_cnn_forward.1} parent=11 // pred_check
          %p483 = pneg %p181
        $region38: #{scalar_cnn_forward.1} parent=11 // pred_check_branch
          %485 = sbr.rel (%p483) target = $region40
        $region39: #{scalar_cnn_forward.1} parent=11 // pred_region
          %s487 = ssub.s32 64, 64
          %488 = vsyncadd [#allocation18], %s487
          %s490 = sshll.u32 [#allocation17], 4
          %s491 = int_to_ptr.vmem [resolvable:$true] %s490
          %493 = dma.hbm_to_vmem [thread:$0]  %s6, 64, %s491, [#allocation18]
        $region40: #{scalar_cnn_forward.1} parent=11 // pred_fallthru
          _
        // Predicated region
        $region41: #{scalar_cnn_forward.1} parent=11 // pred_check
          %p494 = pneg %p202
        $region42: #{scalar_cnn_forward.1} parent=11 // pred_check_branch
          %496 = sbr.rel (%p494) target = $region44
        $region43: #{scalar_cnn_forward.1} parent=11 // pred_region
          %s498 = ssub.s32 512, 512
          %499 = vsyncadd [#allocation18], %s498
          %s500 = sshll.u32 [#allocation19], 4
          %s501 = int_to_ptr.vmem [resolvable:$true] %s500
          %506 = dma.hbm_to_vmem [thread:$0]  %s7, 512, %s501, [#allocation18], 256, 256, 16
        $region44: #{scalar_cnn_forward.1} parent=11 // pred_fallthru
          _
        // Predicated region
        $region45: #{scalar_cnn_forward.1} parent=11 // pred_check
          %p507 = pneg %p223
        $region46: #{scalar_cnn_forward.1} parent=11 // pred_check_branch
          %509 = sbr.rel (%p507) target = $region48
        $region47: #{scalar_cnn_forward.1} parent=11 // pred_region
          %s511 = ssub.s32 512, 512
          %512 = vsyncadd [#allocation21], %s511
          %s513 = sshll.u32 [#allocation20], 4
          %s514 = int_to_ptr.vmem [resolvable:$true] %s513
          %519 = dma.hbm_to_vmem [thread:$0]  %s8, 512, %s514, [#allocation21], 256, 256, 16
        $region48: #{scalar_cnn_forward.1} parent=11 // pred_fallthru
          _
        // Predicated region
        $region49: #{scalar_cnn_forward.1} parent=11 // pred_check
          %p520 = pneg %p244
        $region50: #{scalar_cnn_forward.1} parent=11 // pred_check_branch
          %522 = sbr.rel (%p520) target = $region52
        $region51: #{scalar_cnn_forward.1} parent=11 // pred_region
          %s524 = ssub.s32 1024, 1024
          %525 = vsyncadd [#allocation21], %s524
          %s526 = sshll.u32 [#allocation22], 4
          %s527 = int_to_ptr.vmem [resolvable:$true] %s526
          %532 = dma.hbm_to_vmem [thread:$0]  %s9, 1024, %s527, [#allocation21], 256, 256, 16
        $region52: #{scalar_cnn_forward.1} parent=11 // pred_fallthru
          _
        // Predicated region
        $region53: #{scalar_cnn_forward.1} parent=11 // pred_check
          %p533 = pneg %p265
        $region54: #{scalar_cnn_forward.1} parent=11 // pred_check_branch
          %535 = sbr.rel (%p533) target = $region56
        $region55: #{scalar_cnn_forward.1} parent=11 // pred_region
          %s537 = ssub.s32 64, 64
          %538 = vsyncadd [#allocation24], %s537
          %s540 = sshll.u32 [#allocation23], 4
          %s541 = int_to_ptr.vmem [resolvable:$true] %s540
          %543 = dma.hbm_to_vmem [thread:$0]  %s10, 64, %s541, [#allocation24]
        $region56: #{scalar_cnn_forward.1} parent=11 // pred_fallthru
          _
        // Predicated region
        $region57: #{scalar_cnn_forward.1} parent=11 // pred_check
          %p544 = pneg %p286
        $region58: #{scalar_cnn_forward.1} parent=11 // pred_check_branch
          %546 = sbr.rel (%p544) target = $region60
        $region59: #{scalar_cnn_forward.1} parent=11 // pred_region
          %s548 = ssub.s32 8192, 8192
          %549 = vsyncadd [#allocation24], %s548
          %s550 = sshll.u32 [#allocation25], 4
          %s551 = int_to_ptr.vmem [resolvable:$true] %s550
          %556 = dma.hbm_to_vmem [thread:$0]  %s11, 8192, %s551, [#allocation24], 256, 256, 16
        $region60: #{scalar_cnn_forward.1} parent=11 // pred_fallthru
          _
        // Predicated region
        $region61: #{scalar_cnn_forward.1} parent=11 // pred_check
          %p557 = pneg %p307
        $region62: #{scalar_cnn_forward.1} parent=11 // pred_check_branch
          %559 = sbr.rel (%p557) target = $region64
        $region63: #{scalar_cnn_forward.1} parent=11 // pred_region
          %s561 = ssub.s32 8192, 8192
          %562 = vsyncadd [#allocation27], %s561
          %s563 = sshll.u32 [#allocation26], 4
          %s564 = int_to_ptr.vmem [resolvable:$true] %s563
          %569 = dma.hbm_to_vmem [thread:$0]  %s12, 8192, %s564, [#allocation27], 256, 256, 16
        $region64: #{scalar_cnn_forward.1} parent=11 // pred_fallthru
          _
        // Predicated region
        $region65: #{scalar_cnn_forward.1} parent=11 // pred_check
          %p570 = pneg %p328
        $region66: #{scalar_cnn_forward.1} parent=11 // pred_check_branch
          %572 = sbr.rel (%p570) target = $region68
        $region67: #{scalar_cnn_forward.1} parent=11 // pred_region
          %s574 = ssub.s32 2048, 2048
          %575 = vsyncadd [#allocation27], %s574
          %s576 = sshll.u32 [#allocation28], 4
          %s577 = int_to_ptr.vmem [resolvable:$true] %s576
          %582 = dma.hbm_to_vmem [thread:$0]  %s13, 2048, %s577, [#allocation27], 64, 64, 4
        $region68: #{scalar_cnn_forward.1} parent=11 // pred_fallthru
          _
        // Predicated region
        $region69: #{scalar_cnn_forward.1} parent=11 // pred_check
          %p583 = pneg %p349
        $region70: #{scalar_cnn_forward.1} parent=11 // pred_check_branch
          %585 = sbr.rel (%p583) target = $region72
        $region71: #{scalar_cnn_forward.1} parent=11 // pred_region
          %s587 = ssub.s32 16, 16
          %588 = vsyncadd [#allocation30], %s587
          %s590 = sshll.u32 [#allocation29], 4
          %s591 = int_to_ptr.vmem [resolvable:$true] %s590
          %593 = dma.hbm_to_vmem [thread:$0]  %s14, 16, %s591, [#allocation30]
        $region72: #{scalar_cnn_forward.1} parent=11 // pred_fallthru
          _
        // Predicated region
        $region73: #{scalar_cnn_forward.1} parent=11 // pred_check
          %p594 = pneg %p370
        $region74: #{scalar_cnn_forward.1} parent=11 // pred_check_branch
          %596 = sbr.rel (%p594) target = $region76
        $region75: #{scalar_cnn_forward.1} parent=11 // pred_region
          %s598 = ssub.s32 8192, 8192
          %599 = vsyncadd [#allocation30], %s598
          %s600 = sshll.u32 [#allocation31], 4
          %s601 = int_to_ptr.vmem [resolvable:$true] %s600
          %606 = dma.hbm_to_vmem [thread:$0]  %s15, 8192, %s601, [#allocation30], 128, 128, 8
        $region76: #{scalar_cnn_forward.1} parent=11 // pred_fallthru
          _
      $region12: #{scalar_cnn_forward.1} parent=5 // pred_fallthru
        _
      %p607 = scmp.lt.s32.totalorder %s34, 2
      // Predicated region
      $region77: #{scalar_cnn_forward.1} parent=5 // pred_check
        %p608 = pneg %p607
      $region78: #{scalar_cnn_forward.1} parent=5 // pred_check_branch
        %610 = sbr.rel (%p608) target = $region80
      $region79: #{scalar_cnn_forward.1} parent=5 // pred_region
        _
      $region80: #{scalar_cnn_forward.1} parent=5 // pred_fallthru
        _
      %p611 = scmp.le.s32.totalorder 1, %s34
      %p612 = scmp.lt.s32.totalorder %s34, 3
      %p613 = pnand %p611, %p612
      %p614 = pneg %p613
      // Predicated region
      $region81: #{scalar_cnn_forward.1} parent=5 // pred_check
        _
      $region82: #{scalar_cnn_forward.1} parent=5 // pred_check_branch
        %616 = sbr.rel (%p613) target = $region84
      $region83: #{scalar_cnn_forward.1} parent=5 // pred_region
        %s617 = ssub.s32 %s34, 1
        // Predicated region
        $region85: #{scalar_cnn_forward.1} parent=83 // pred_check
          %p618 = pneg %p55
        $region86: #{scalar_cnn_forward.1} parent=83 // pred_check_branch
          %620 = sbr.rel (%p618) target = $region88
        $region87: #{scalar_cnn_forward.1} parent=83 // pred_region
          %621 = dma.done [#allocation9], 16
        $region88: #{scalar_cnn_forward.1} parent=83 // pred_fallthru
          _
        // Predicated region
        $region89: #{scalar_cnn_forward.1} parent=83 // pred_check
          %p622 = pneg %p76
        $region90: #{scalar_cnn_forward.1} parent=83 // pred_check_branch
          %624 = sbr.rel (%p622) target = $region92
        $region91: #{scalar_cnn_forward.1} parent=83 // pred_region
          %625 = dma.done [#allocation7], 256
        $region92: #{scalar_cnn_forward.1} parent=83 // pred_fallthru
          _
        // Predicated region
        $region93: #{scalar_cnn_forward.1} parent=83 // pred_check
          %p626 = pneg %p97
        $region94: #{scalar_cnn_forward.1} parent=83 // pred_check_branch
          %628 = sbr.rel (%p626) target = $region96
        $region95: #{scalar_cnn_forward.1} parent=83 // pred_region
          %629 = dma.done [#allocation12], 16
        $region96: #{scalar_cnn_forward.1} parent=83 // pred_fallthru
          _
        // Predicated region
        $region97: #{scalar_cnn_forward.1} parent=83 // pred_check
          %p630 = pneg %p118
        $region98: #{scalar_cnn_forward.1} parent=83 // pred_check_branch
          %632 = sbr.rel (%p630) target = $region100
        $region99: #{scalar_cnn_forward.1} parent=83 // pred_region
          %633 = dma.done [#allocation12], 256
        $region100: #{scalar_cnn_forward.1} parent=83 // pred_fallthru
          _
        // Predicated region
        $region101: #{scalar_cnn_forward.1} parent=83 // pred_check
          %p634 = pneg %p139
        $region102: #{scalar_cnn_forward.1} parent=83 // pred_check_branch
          %636 = sbr.rel (%p634) target = $region104
        $region103: #{scalar_cnn_forward.1} parent=83 // pred_region
          %637 = dma.done [#allocation15], 256
        $region104: #{scalar_cnn_forward.1} parent=83 // pred_fallthru
          _
        // Predicated region
        $region105: #{scalar_cnn_forward.1} parent=83 // pred_check
          %p638 = pneg %p160
        $region106: #{scalar_cnn_forward.1} parent=83 // pred_check_branch
          %640 = sbr.rel (%p638) target = $region108
        $region107: #{scalar_cnn_forward.1} parent=83 // pred_region
          %641 = dma.done [#allocation15], 1024
        $region108: #{scalar_cnn_forward.1} parent=83 // pred_fallthru
          _
        // Predicated region
        $region109: #{scalar_cnn_forward.1} parent=83 // pred_check
          %p642 = pneg %p181
        $region110: #{scalar_cnn_forward.1} parent=83 // pred_check_branch
          %644 = sbr.rel (%p642) target = $region112
        $region111: #{scalar_cnn_forward.1} parent=83 // pred_region
          %645 = dma.done [#allocation18], 64
        $region112: #{scalar_cnn_forward.1} parent=83 // pred_fallthru
          _
        // Predicated region
        $region113: #{scalar_cnn_forward.1} parent=83 // pred_check
          %p646 = pneg %p202
        $region114: #{scalar_cnn_forward.1} parent=83 // pred_check_branch
          %648 = sbr.rel (%p646) target = $region116
        $region115: #{scalar_cnn_forward.1} parent=83 // pred_region
          %649 = dma.done [#allocation18], 512
        $region116: #{scalar_cnn_forward.1} parent=83 // pred_fallthru
          _
        // Predicated region
        $region117: #{scalar_cnn_forward.1} parent=83 // pred_check
          %p650 = pneg %p223
        $region118: #{scalar_cnn_forward.1} parent=83 // pred_check_branch
          %652 = sbr.rel (%p650) target = $region120
        $region119: #{scalar_cnn_forward.1} parent=83 // pred_region
          %653 = dma.done [#allocation21], 512
        $region120: #{scalar_cnn_forward.1} parent=83 // pred_fallthru
          _
        // Predicated region
        $region121: #{scalar_cnn_forward.1} parent=83 // pred_check
          %p654 = pneg %p244
        $region122: #{scalar_cnn_forward.1} parent=83 // pred_check_branch
          %656 = sbr.rel (%p654) target = $region124
        $region123: #{scalar_cnn_forward.1} parent=83 // pred_region
          %657 = dma.done [#allocation21], 1024
        $region124: #{scalar_cnn_forward.1} parent=83 // pred_fallthru
          _
        // Predicated region
        $region125: #{scalar_cnn_forward.1} parent=83 // pred_check
          %p658 = pneg %p265
        $region126: #{scalar_cnn_forward.1} parent=83 // pred_check_branch
          %660 = sbr.rel (%p658) target = $region128
        $region127: #{scalar_cnn_forward.1} parent=83 // pred_region
          %661 = dma.done [#allocation24], 64
        $region128: #{scalar_cnn_forward.1} parent=83 // pred_fallthru
          _
        // Predicated region
        $region129: #{scalar_cnn_forward.1} parent=83 // pred_check
          %p662 = pneg %p286
        $region130: #{scalar_cnn_forward.1} parent=83 // pred_check_branch
          %664 = sbr.rel (%p662) target = $region132
        $region131: #{scalar_cnn_forward.1} parent=83 // pred_region
          %665 = dma.done [#allocation24], 8192
        $region132: #{scalar_cnn_forward.1} parent=83 // pred_fallthru
          _
        // Predicated region
        $region133: #{scalar_cnn_forward.1} parent=83 // pred_check
          %p666 = pneg %p307
        $region134: #{scalar_cnn_forward.1} parent=83 // pred_check_branch
          %668 = sbr.rel (%p666) target = $region136
        $region135: #{scalar_cnn_forward.1} parent=83 // pred_region
          %669 = dma.done [#allocation27], 8192
        $region136: #{scalar_cnn_forward.1} parent=83 // pred_fallthru
          _
        // Predicated region
        $region137: #{scalar_cnn_forward.1} parent=83 // pred_check
          %p670 = pneg %p328
        $region138: #{scalar_cnn_forward.1} parent=83 // pred_check_branch
          %672 = sbr.rel (%p670) target = $region140
        $region139: #{scalar_cnn_forward.1} parent=83 // pred_region
          %673 = dma.done [#allocation27], 2048
        $region140: #{scalar_cnn_forward.1} parent=83 // pred_fallthru
          _
        // Predicated region
        $region141: #{scalar_cnn_forward.1} parent=83 // pred_check
          %p674 = pneg %p349
        $region142: #{scalar_cnn_forward.1} parent=83 // pred_check_branch
          %676 = sbr.rel (%p674) target = $region144
        $region143: #{scalar_cnn_forward.1} parent=83 // pred_region
          %677 = dma.done [#allocation30], 16
        $region144: #{scalar_cnn_forward.1} parent=83 // pred_fallthru
          _
        // Predicated region
        $region145: #{scalar_cnn_forward.1} parent=83 // pred_check
          %p678 = pneg %p370
        $region146: #{scalar_cnn_forward.1} parent=83 // pred_check_branch
          %680 = sbr.rel (%p678) target = $region148
        $region147: #{scalar_cnn_forward.1} parent=83 // pred_region
          %681 = dma.done [#allocation30], 8192
        $region148: #{scalar_cnn_forward.1} parent=83 // pred_fallthru
          _
        %682 = sfence
        %p683 = pneg %p55
        %p684 = pneg %p52
        %p685 = pneg %p76
        %p686 = pneg %p73
        %p687 = pneg %p97
        %p688 = pneg %p94
        %p689 = pneg %p118
        %p690 = pneg %p115
        %p691 = pneg %p139
        %p692 = pneg %p136
        %p693 = pneg %p160
        %p694 = pneg %p157
        %p695 = pneg %p181
        %p696 = pneg %p178
        %p697 = pneg %p202
        %p698 = pneg %p199
        %p699 = pneg %p223
        %p700 = pneg %p220
        %p701 = pneg %p244
        %p702 = pneg %p241
        %p703 = pneg %p265
        %p704 = pneg %p262
        %p705 = pneg %p286
        %p706 = pneg %p283
        %p707 = pneg %p307
        %p708 = pneg %p304
        %p709 = pneg %p328
        %p710 = pneg %p325
        %p711 = pneg %p349
        %p712 = pneg %p346
        %p713 = pneg %p370
        %p714 = pneg %p367
        %p715 = pneg %p396
        %p716 = pneg %p393
        %s717 = sand.u32 %s383, 1
        %s718 = scalar_lea.sflag [#allocation8], %s717
        %s719 = sand.u32 %s383, 1
        %s720 = smul.addr %s719, 1024
        %s721 = scalar_lea.vmem [#allocation32], %s720
        %s722 = smul.u32 2, %s39
        %s724 = smul.u32 %s39, 2
        %s725 = sld [smem:[#allocation6 + %s724]]
        %v726 = vld [vmem:[#allocation10] sm:$0xff]
        %v727 = vld [vmem:[#allocation10 + $0x8] sm:$0xff]
        %v728 = vstv %s725
        %v729 = vmul.f32 %v728, %v726
        %v730 = vmul.f32 %v728, %v727
        %v731 = vld [vmem:[#allocation11] sm:$0x1]
        %v733 = vlaneseq
        %v734 = vshrl.u32 %v733, 7
        %v735 = vsub.s32 0, %v734
        %v736 = vrot.slane %v731, %v735
        %v738 = vadd.f32 %v729, %v736
        %v739 = vadd.f32 %v730, %v736
        %v740 = vmax.f32 %v738, 0.0
        %v741 = vmax.f32 %v739, 0.0
        %vm742 = vcmask 261120
        %v743 = vsel %vm742, %v740, 0.0
        %v744 = vsel %vm742, %v741, 0.0
        %v745 = vadd.f32 %v743, %v744
        %746 = vadd.xlane.f32.xlu0 %v745
        %v747 = vpop.xlane.xlu0 %746
        %v748 = vrot.slane %v747, 4
        %v749 = vadd.f32 %v747, %v748
        %v750 = vrot.slane %v749, 2
        %v751 = vadd.f32 %v749, %v750
        %v752 = vrot.slane %v751, 1
        %v753 = vadd.f32 %v751, %v752
        %s754 = vtos %v753
        %v755 = vrcp.pop 512.0
        %s756 = vtos %v755
        %s757 = smul.f32 %s754, %s756
        %v758 = vstv %s757
        %v759 = vsub.f32 %v740, %v758
        %v760 = vsub.f32 %v741, %v758
        %v761 = vmul.f32 %v759, %v759
        %v762 = vmul.f32 %v760, %v760
        %v763 = vsel %vm742, %v761, 0.0
        %v764 = vsel %vm742, %v762, 0.0
        %v765 = vadd.f32 %v763, %v764
        %766 = vadd.xlane.f32.xlu0 %v765
        %v767 = vpop.xlane.xlu0 %766
        %v768 = vrot.slane %v767, 4
        %v769 = vadd.f32 %v767, %v768
        %v770 = vrot.slane %v769, 2
        %v771 = vadd.f32 %v769, %v770
        %v772 = vrot.slane %v771, 1
        %v773 = vadd.f32 %v771, %v772
        %s774 = vtos %v773
        %v775 = vrcp.pop 512.0
        %s776 = vtos %v775
        %s777 = smul.f32 %s774, %s776
        %s778 = sadd.f32 %s777, 1e-05
        %v779 = vstv %s778
        %v780 = vrsqrt.pop %v779
        %s781 = vtos %v780
        %v782 = vstv %s781
        %v783 = vmul.f32 %v759, %v782
        %v784 = vmul.f32 %v760, %v782
        %v785 = vld [vmem:[#allocation13] sm:$0xff]
        %v786 = vld [vmem:[#allocation13 + $0x8] sm:$0xff]
        %v787 = vmul.f32 %v783, %v785
        %v788 = vmul.f32 %v784, %v786
        %v789 = vld [vmem:[#allocation14] sm:$0xff]
        %v790 = vld [vmem:[#allocation14 + $0x8] sm:$0xff]
        %v791 = vadd.f32 %v787, %v789
        %v792 = vadd.f32 %v788, %v790
        %v793 = vpack.c.bf16 %v792, %v791
        %v794 = vld [vmem:[#allocation16] sm:$0xff]
        %v795 = vld [vmem:[#allocation16 + $0x8] sm:$0xff]
        %v796 = vld [vmem:[#allocation16 + $0x10] sm:$0xff]
        %v797 = vld [vmem:[#allocation16 + $0x18] sm:$0xff]
        %v798 = vld [vmem:[#allocation16 + $0x20] sm:$0xff]
        %v799 = vld [vmem:[#allocation16 + $0x28] sm:$0xff]
        %v800 = vld [vmem:[#allocation16 + $0x30] sm:$0xff]
        %v801 = vld [vmem:[#allocation16 + $0x38] sm:$0xff]
        %v802 = vld [vmem:[#allocation17] sm:$0xf]
        %v804 = vlaneseq
        %v805 = vshrl.u32 %v804, 7
        %v806 = vsub.s32 0, %v805
        %v807 = vrot.slane %v802, %v806
        %v808 = vlaneseq
        %v809 = vshrl.u32 %v808, 7
        %v810 = vsub.s32 1, %v809
        %v811 = vrot.slane %v802, %v810
        %v812 = vlaneseq
        %v813 = vshrl.u32 %v812, 7
        %v814 = vsub.s32 2, %v813
        %v815 = vrot.slane %v802, %v814
        %v816 = vlaneseq
        %v817 = vshrl.u32 %v816, 7
        %v818 = vsub.s32 3, %v817
        %v819 = vrot.slane %v802, %v818
        %v832 = vunpack.c.l.b16 %v794
        %v833 = vunpack.c.h.b16 %v794
        %v834 = vunpack.c.l.b16 %v795
        %v835 = vunpack.c.h.b16 %v795
        %v836 = vunpack.c.l.b16 %v796
        %v837 = vunpack.c.h.b16 %v796
        %v838 = vunpack.c.l.b16 %v797
        %v839 = vunpack.c.h.b16 %v797
        %v840 = vunpack.c.l.b16 %v798
        %v841 = vunpack.c.h.b16 %v798
        %v842 = vunpack.c.l.b16 %v799
        %v843 = vunpack.c.h.b16 %v799
        %v844 = vunpack.c.l.b16 %v800
        %v845 = vunpack.c.h.b16 %v800
        %v846 = vunpack.c.l.b16 %v801
        %v847 = vunpack.c.h.b16 %v801
        %v848 = vpack.c.b16 %v836, %v832
        %v849 = vpack.c.b16 %v837, %v833
        %v850 = vpack.c.b16 %v838, %v834
        %v851 = vpack.c.b16 %v839, %v835
        %v852 = vpack.c.b16 %v844, %v840
        %v853 = vpack.c.b16 %v845, %v841
        %v854 = vpack.c.b16 %v846, %v842
        %v855 = vpack.c.b16 %v847, %v843
        %v865 = vsel %vm742, %v793, 0
        %867 = vmatprep.subr.bf16.mxu0 %v849
        %868 = vmatpush1.bf16.msra.mxu0 %v848
        %869 = vmatprep.subr.bf16.mxu0 %v853
        %870 = vmatpush1.bf16.msra.mxu0 %v852
        %871 = vmatprep.subr.bf16.mxu0 0
        %872 = vmatpush1.bf16.msra.mxu0 0
        %873 = vmatprep.subr.bf16.mxu0 0
        %874 = vmatpush1.bf16.msra.mxu0 0
        %875 = vmatprep.subr.bf16.mxu0 0
        %876 = vmatpush1.bf16.msra.mxu0 0
        %877 = vmatprep.subr.bf16.mxu0 0
        %878 = vmatpush1.bf16.msra.mxu0 0
        %879 = vmatprep.subr.bf16.mxu0 0
        %880 = vmatpush1.bf16.msra.mxu0 0
        %881 = vmatprep.subr.bf16.mxu0 0
        %882 = vmatpush1.bf16.msra.mxu0 0
        %883 = vmatprep.subr.bf16.mxu0 0
        %884 = vmatpush1.bf16.msra.mxu0 0
        %885 = vmatprep.subr.bf16.mxu0 0
        %886 = vmatpush1.bf16.msra.mxu0 0
        %887 = vmatprep.subr.bf16.mxu0 0
        %888 = vmatpush1.bf16.msra.mxu0 0
        %889 = vmatprep.subr.bf16.mxu0 0
        %890 = vmatpush1.bf16.msra.mxu0 0
        %891 = vmatprep.subr.bf16.mxu0 0
        %892 = vmatpush1.bf16.msra.mxu0 0
        %893 = vmatprep.subr.bf16.mxu0 0
        %894 = vmatpush1.bf16.msra.mxu0 0
        %895 = vmatprep.subr.bf16.mxu0 0
        %896 = vmatpush1.bf16.msra.mxu0 0
        %897 = vmatprep.subr.bf16.mxu0 0
        %898 = vmatpush1.bf16.msra.mxu0 0
        %899 = vmatprep.mubr.bf16.mxu0 0
        %900 = vmatmul.mubr.bf16.gmra.mrb[0].mxu0 %v865
        %v901 = vpop.f32.mrb[0].mxu0
        %v902 = vadd.f32 %v807, %v901
        %v903 = vpop.f32.mrb[0].mxu0
        %v904 = vadd.f32 %v811, %v903
        %v905 = vpop.f32.mrb[0].mxu0
        %v906 = vadd.f32 %v807, %v905
        %v907 = vpop.f32.mrb[0].mxu0
        %v908 = vadd.f32 %v811, %v907
        %909 = vdwg.mxu0
        %910 = vmatprep.subr.bf16.mxu0 %v851
        %911 = vmatpush1.bf16.msra.mxu0 %v850
        %912 = vmatprep.subr.bf16.mxu0 %v855
        %913 = vmatpush1.bf16.msra.mxu0 %v854
        %914 = vmatprep.subr.bf16.mxu0 0
        %915 = vmatpush1.bf16.msra.mxu0 0
        %916 = vmatprep.subr.bf16.mxu0 0
        %917 = vmatpush1.bf16.msra.mxu0 0
        %918 = vmatprep.subr.bf16.mxu0 0
        %919 = vmatpush1.bf16.msra.mxu0 0
        %920 = vmatprep.subr.bf16.mxu0 0
        %921 = vmatpush1.bf16.msra.mxu0 0
        %922 = vmatprep.subr.bf16.mxu0 0
        %923 = vmatpush1.bf16.msra.mxu0 0
        %924 = vmatprep.subr.bf16.mxu0 0
        %925 = vmatpush1.bf16.msra.mxu0 0
        %926 = vmatprep.subr.bf16.mxu0 0
        %927 = vmatpush1.bf16.msra.mxu0 0
        %928 = vmatprep.subr.bf16.mxu0 0
        %929 = vmatpush1.bf16.msra.mxu0 0
        %930 = vmatprep.subr.bf16.mxu0 0
        %931 = vmatpush1.bf16.msra.mxu0 0
        %932 = vmatprep.subr.bf16.mxu0 0
        %933 = vmatpush1.bf16.msra.mxu0 0
        %934 = vmatprep.subr.bf16.mxu0 0
        %935 = vmatpush1.bf16.msra.mxu0 0
        %936 = vmatprep.subr.bf16.mxu0 0
        %937 = vmatpush1.bf16.msra.mxu0 0
        %938 = vmatprep.subr.bf16.mxu0 0
        %939 = vmatpush1.bf16.msra.mxu0 0
        %940 = vmatprep.subr.bf16.mxu0 0
        %941 = vmatpush1.bf16.msra.mxu0 0
        %942 = vmatprep.mubr.bf16.mxu0 0
        %943 = vmatmul.mubr.bf16.gmra.mrb[0].mxu0 %v865
        %v944 = vpop.f32.mrb[0].mxu0
        %v945 = vadd.f32 %v815, %v944
        %v946 = vpop.f32.mrb[0].mxu0
        %v947 = vadd.f32 %v819, %v946
        %v948 = vpop.f32.mrb[0].mxu0
        %v949 = vadd.f32 %v815, %v948
        %v950 = vpop.f32.mrb[0].mxu0
        %v951 = vadd.f32 %v819, %v950
        %952 = vdwg.mxu0
        %v953 = vmax.f32 %v902, 0.0
        %v954 = vmax.f32 %v904, 0.0
        %v955 = vmax.f32 %v945, 0.0
        %v956 = vmax.f32 %v947, 0.0
        %v957 = vmax.f32 %v906, 0.0
        %v958 = vmax.f32 %v908, 0.0
        %v959 = vmax.f32 %v949, 0.0
        %v960 = vmax.f32 %v951, 0.0
        %v961 = vadd.f32 %v953, %v954
        %v962 = vadd.f32 %v961, %v955
        %v963 = vadd.f32 %v962, %v956
        %v964 = vadd.f32 %v963, %v957
        %v965 = vadd.f32 %v964, %v958
        %v966 = vadd.f32 %v965, %v959
        %v967 = vadd.f32 %v966, %v960
        %968 = vadd.xlane.f32.xlu0 %v967
        %v969 = vpop.xlane.xlu0 %968
        %v970 = vrot.slane %v969, 4
        %v971 = vadd.f32 %v969, %v970
        %v972 = vrot.slane %v971, 2
        %v973 = vadd.f32 %v971, %v972
        %v974 = vrot.slane %v973, 1
        %v975 = vadd.f32 %v973, %v974
        %s976 = vtos %v975
        %v977 = vrcp.pop 8192.0
        %s978 = vtos %v977
        %s979 = smul.f32 %s976, %s978
        %v980 = vstv %s979
        %v981 = vsub.f32 %v953, %v980
        %v982 = vsub.f32 %v954, %v980
        %v983 = vsub.f32 %v955, %v980
        %v984 = vsub.f32 %v956, %v980
        %v985 = vsub.f32 %v957, %v980
        %v986 = vsub.f32 %v958, %v980
        %v987 = vsub.f32 %v959, %v980
        %v988 = vsub.f32 %v960, %v980
        %v989 = vmul.f32 %v981, %v981
        %v990 = vmul.f32 %v982, %v982
        %v991 = vmul.f32 %v983, %v983
        %v992 = vmul.f32 %v984, %v984
        %v993 = vmul.f32 %v985, %v985
        %v994 = vmul.f32 %v986, %v986
        %v995 = vmul.f32 %v987, %v987
        %v996 = vmul.f32 %v988, %v988
        %v997 = vadd.f32 %v989, %v990
        %v998 = vadd.f32 %v997, %v991
        %v999 = vadd.f32 %v998, %v992
        %v1000 = vadd.f32 %v999, %v993
        %v1001 = vadd.f32 %v1000, %v994
        %v1002 = vadd.f32 %v1001, %v995
        %v1003 = vadd.f32 %v1002, %v996
        %1004 = vadd.xlane.f32.xlu0 %v1003
        %v1005 = vpop.xlane.xlu0 %1004
        %v1006 = vrot.slane %v1005, 4
        %v1007 = vadd.f32 %v1005, %v1006
        %v1008 = vrot.slane %v1007, 2
        %v1009 = vadd.f32 %v1007, %v1008
        %v1010 = vrot.slane %v1009, 1
        %v1011 = vadd.f32 %v1009, %v1010
        %s1012 = vtos %v1011
        %v1013 = vrcp.pop 8192.0
        %s1014 = vtos %v1013
        %s1015 = smul.f32 %s1012, %s1014
        %s1016 = sadd.f32 %s1015, 1e-05
        %v1017 = vstv %s1016
        %v1018 = vrsqrt.pop %v1017
        %s1019 = vtos %v1018
        %1020 = vst [vmem:[#allocation2] sm:$0xff] %v953
        %1021 = vst [vmem:[#allocation2 + $0x8] sm:$0xff] %v954
        %1022 = vst [vmem:[#allocation2 + $0x10] sm:$0xff] %v955
        %1023 = vst [vmem:[#allocation2 + $0x18] sm:$0xff] %v956
        %1024 = vst [vmem:[#allocation2 + $0x20] sm:$0xff] %v957
        %1025 = vst [vmem:[#allocation2 + $0x28] sm:$0xff] %v958
        %1026 = vst [vmem:[#allocation2 + $0x30] sm:$0xff] %v959
        %1027 = vst [vmem:[#allocation2 + $0x38] sm:$0xff] %v960
        %v1028 = vld [vmem:[#allocation2] sm:$0xff]
        %v1029 = vld [vmem:[#allocation2 + $0x20] sm:$0xff]
        %v1030 = vsub.f32 %v1028, %v980
        %v1031 = vsub.f32 %v1029, %v980
        %v1032 = vstv %s1019
        %v1033 = vmul.f32 %v1030, %v1032
        %v1034 = vmul.f32 %v1031, %v1032
        %v1035 = vld [vmem:[#allocation19] sm:$0xf]
        %v1036 = vld [vmem:[#allocation19 + $0x10] sm:$0xf]
        %v1037 = vunpack.c.l.bf16 %v1035
        %v1038 = vunpack.c.l.bf16 %v1036
        %v1039 = vmul.f32 %v1033, %v1037
        %v1040 = vmul.f32 %v1034, %v1038
        %v1041 = vld [vmem:[#allocation20] sm:$0xf]
        %v1042 = vld [vmem:[#allocation20 + $0x10] sm:$0xf]
        %v1043 = vunpack.c.l.bf16 %v1041
        %v1044 = vunpack.c.l.bf16 %v1042
        %v1045 = vadd.f32 %v1039, %v1043
        %v1046 = vadd.f32 %v1040, %v1044
        %v1047 = vpack.c.bf16 %v1046, %v1045
        %1048 = vst.msk [vmem:[#allocation4] sm:$0xff] %vm742, %v1047
        %v1049 = vld [vmem:[#allocation2] sm:$0xff]
        %v1050 = vld [vmem:[#allocation2 + $0x20] sm:$0xff]
        %v1051 = vsub.f32 %v1049, %v980
        %v1052 = vsub.f32 %v1050, %v980
        %v1053 = vmul.f32 %v1051, %v1032
        %v1054 = vmul.f32 %v1052, %v1032
        %v1055 = vld [vmem:[#allocation19] sm:$0xf]
        %v1056 = vld [vmem:[#allocation19 + $0x10] sm:$0xf]
        %v1057 = vunpack.c.l.bf16 %v1055
        %v1058 = vunpack.c.l.bf16 %v1056
        %v1059 = vmul.f32 %v1053, %v1057
        %v1060 = vmul.f32 %v1054, %v1058
        %v1061 = vld [vmem:[#allocation20] sm:$0xf]
        %v1062 = vld [vmem:[#allocation20 + $0x10] sm:$0xf]
        %v1063 = vunpack.c.l.bf16 %v1061
        %v1064 = vunpack.c.l.bf16 %v1062
        %v1065 = vadd.f32 %v1059, %v1063
        %v1066 = vadd.f32 %v1060, %v1064
        %v1067 = vpack.c.bf16 %v1066, %v1065
        %1069 = vrot.lane.b32.xlu0 %v1067, 96
        %v1070 = vpop.permute.xlu0 %1069
        %1072 = vst.msk [vmem:[#allocation4 + $0x8] sm:$0xff] %vm742, %v1070
        %v1073 = vld [vmem:[#allocation2] sm:$0xff]
        %v1074 = vld [vmem:[#allocation2 + $0x20] sm:$0xff]
        %v1075 = vsub.f32 %v1073, %v980
        %v1076 = vsub.f32 %v1074, %v980
        %v1077 = vmul.f32 %v1075, %v1032
        %v1078 = vmul.f32 %v1076, %v1032
        %v1079 = vld [vmem:[#allocation19] sm:$0xf]
        %v1080 = vld [vmem:[#allocation19 + $0x10] sm:$0xf]
        %v1081 = vunpack.c.l.bf16 %v1079
        %v1082 = vunpack.c.l.bf16 %v1080
        %v1083 = vmul.f32 %v1077, %v1081
        %v1084 = vmul.f32 %v1078, %v1082
        %v1085 = vld [vmem:[#allocation20] sm:$0xf]
        %v1086 = vld [vmem:[#allocation20 + $0x10] sm:$0xf]
        %v1087 = vunpack.c.l.bf16 %v1085
        %v1088 = vunpack.c.l.bf16 %v1086
        %v1089 = vadd.f32 %v1083, %v1087
        %v1090 = vadd.f32 %v1084, %v1088
        %v1091 = vpack.c.bf16 %v1090, %v1089
        %1093 = vrot.lane.b32.xlu0 %v1091, 64
        %v1094 = vpop.permute.xlu0 %1093
        %1096 = vst.msk [vmem:[#allocation4 + $0x10] sm:$0xff] %vm742, %v1094
        %v1097 = vld [vmem:[#allocation2] sm:$0xff]
        %v1098 = vld [vmem:[#allocation2 + $0x20] sm:$0xff]
        %v1099 = vsub.f32 %v1097, %v980
        %v1100 = vsub.f32 %v1098, %v980
        %v1101 = vmul.f32 %v1099, %v1032
        %v1102 = vmul.f32 %v1100, %v1032
        %v1103 = vld [vmem:[#allocation19] sm:$0xf]
        %v1104 = vld [vmem:[#allocation19 + $0x10] sm:$0xf]
        %v1105 = vunpack.c.l.bf16 %v1103
        %v1106 = vunpack.c.l.bf16 %v1104
        %v1107 = vmul.f32 %v1101, %v1105
        %v1108 = vmul.f32 %v1102, %v1106
        %v1109 = vld [vmem:[#allocation20] sm:$0xf]
        %v1110 = vld [vmem:[#allocation20 + $0x10] sm:$0xf]
        %v1111 = vunpack.c.l.bf16 %v1109
        %v1112 = vunpack.c.l.bf16 %v1110
        %v1113 = vadd.f32 %v1107, %v1111
        %v1114 = vadd.f32 %v1108, %v1112
        %v1115 = vpack.c.bf16 %v1114, %v1113
        %1117 = vrot.lane.b32.xlu0 %v1115, 32
        %v1118 = vpop.permute.xlu0 %1117
        %1120 = vst.msk [vmem:[#allocation4 + $0x18] sm:$0xff] %vm742, %v1118
        %v1121 = vld [vmem:[#allocation2 + $0x8] sm:$0xff]
        %v1122 = vld [vmem:[#allocation2 + $0x28] sm:$0xff]
        %v1123 = vsub.f32 %v1121, %v980
        %v1124 = vsub.f32 %v1122, %v980
        %v1125 = vmul.f32 %v1123, %v1032
        %v1126 = vmul.f32 %v1124, %v1032
        %v1127 = vld [vmem:[#allocation19 + $0x4] sm:$0xf]
        %v1128 = vld [vmem:[#allocation19 + $0x14] sm:$0xf]
        %v1129 = vunpack.c.l.bf16 %v1127
        %v1130 = vunpack.c.l.bf16 %v1128
        %v1131 = vmul.f32 %v1125, %v1129
        %v1132 = vmul.f32 %v1126, %v1130
        %v1133 = vld [vmem:[#allocation20 + $0x4] sm:$0xf]
        %v1134 = vld [vmem:[#allocation20 + $0x14] sm:$0xf]
        %v1135 = vunpack.c.l.bf16 %v1133
        %v1136 = vunpack.c.l.bf16 %v1134
        %v1137 = vadd.f32 %v1131, %v1135
        %v1138 = vadd.f32 %v1132, %v1136
        %v1139 = vpack.c.bf16 %v1138, %v1137
        %1140 = vst.msk [vmem:[#allocation4 + $0x20] sm:$0xff] %vm742, %v1139
        %v1141 = vld [vmem:[#allocation2 + $0x8] sm:$0xff]
        %v1142 = vld [vmem:[#allocation2 + $0x28] sm:$0xff]
        %v1143 = vsub.f32 %v1141, %v980
        %v1144 = vsub.f32 %v1142, %v980
        %v1145 = vmul.f32 %v1143, %v1032
        %v1146 = vmul.f32 %v1144, %v1032
        %v1147 = vld [vmem:[#allocation19 + $0x4] sm:$0xf]
        %v1148 = vld [vmem:[#allocation19 + $0x14] sm:$0xf]
        %v1149 = vunpack.c.l.bf16 %v1147
        %v1150 = vunpack.c.l.bf16 %v1148
        %v1151 = vmul.f32 %v1145, %v1149
        %v1152 = vmul.f32 %v1146, %v1150
        %v1153 = vld [vmem:[#allocation20 + $0x4] sm:$0xf]
        %v1154 = vld [vmem:[#allocation20 + $0x14] sm:$0xf]
        %v1155 = vunpack.c.l.bf16 %v1153
        %v1156 = vunpack.c.l.bf16 %v1154
        %v1157 = vadd.f32 %v1151, %v1155
        %v1158 = vadd.f32 %v1152, %v1156
        %v1159 = vpack.c.bf16 %v1158, %v1157
        %1161 = vrot.lane.b32.xlu0 %v1159, 96
        %v1162 = vpop.permute.xlu0 %1161
        %1164 = vst.msk [vmem:[#allocation4 + $0x28] sm:$0xff] %vm742, %v1162
        %v1165 = vld [vmem:[#allocation2 + $0x8] sm:$0xff]
        %v1166 = vld [vmem:[#allocation2 + $0x28] sm:$0xff]
        %v1167 = vsub.f32 %v1165, %v980
        %v1168 = vsub.f32 %v1166, %v980
        %v1169 = vmul.f32 %v1167, %v1032
        %v1170 = vmul.f32 %v1168, %v1032
        %v1171 = vld [vmem:[#allocation19 + $0x4] sm:$0xf]
        %v1172 = vld [vmem:[#allocation19 + $0x14] sm:$0xf]
        %v1173 = vunpack.c.l.bf16 %v1171
        %v1174 = vunpack.c.l.bf16 %v1172
        %v1175 = vmul.f32 %v1169, %v1173
        %v1176 = vmul.f32 %v1170, %v1174
        %v1177 = vld [vmem:[#allocation20 + $0x4] sm:$0xf]
        %v1178 = vld [vmem:[#allocation20 + $0x14] sm:$0xf]
        %v1179 = vunpack.c.l.bf16 %v1177
        %v1180 = vunpack.c.l.bf16 %v1178
        %v1181 = vadd.f32 %v1175, %v1179
        %v1182 = vadd.f32 %v1176, %v1180
        %v1183 = vpack.c.bf16 %v1182, %v1181
        %1185 = vrot.lane.b32.xlu0 %v1183, 64
        %v1186 = vpop.permute.xlu0 %1185
        %1188 = vst.msk [vmem:[#allocation4 + $0x30] sm:$0xff] %vm742, %v1186
        %v1189 = vld [vmem:[#allocation2 + $0x8] sm:$0xff]
        %v1190 = vld [vmem:[#allocation2 + $0x28] sm:$0xff]
        %v1191 = vsub.f32 %v1189, %v980
        %v1192 = vsub.f32 %v1190, %v980
        %v1193 = vmul.f32 %v1191, %v1032
        %v1194 = vmul.f32 %v1192, %v1032
        %v1195 = vld [vmem:[#allocation19 + $0x4] sm:$0xf]
        %v1196 = vld [vmem:[#allocation19 + $0x14] sm:$0xf]
        %v1197 = vunpack.c.l.bf16 %v1195
        %v1198 = vunpack.c.l.bf16 %v1196
        %v1199 = vmul.f32 %v1193, %v1197
        %v1200 = vmul.f32 %v1194, %v1198
        %v1201 = vld [vmem:[#allocation20 + $0x4] sm:$0xf]
        %v1202 = vld [vmem:[#allocation20 + $0x14] sm:$0xf]
        %v1203 = vunpack.c.l.bf16 %v1201
        %v1204 = vunpack.c.l.bf16 %v1202
        %v1205 = vadd.f32 %v1199, %v1203
        %v1206 = vadd.f32 %v1200, %v1204
        %v1207 = vpack.c.bf16 %v1206, %v1205
        %1209 = vrot.lane.b32.xlu0 %v1207, 32
        %v1210 = vpop.permute.xlu0 %1209
        %1212 = vst.msk [vmem:[#allocation4 + $0x38] sm:$0xff] %vm742, %v1210
        %v1213 = vld [vmem:[#allocation2 + $0x10] sm:$0xff]
        %v1214 = vld [vmem:[#allocation2 + $0x30] sm:$0xff]
        %v1215 = vsub.f32 %v1213, %v980
        %v1216 = vsub.f32 %v1214, %v980
        %v1217 = vmul.f32 %v1215, %v1032
        %v1218 = vmul.f32 %v1216, %v1032
        %v1219 = vld [vmem:[#allocation19 + $0x8] sm:$0xf]
        %v1220 = vld [vmem:[#allocation19 + $0x18] sm:$0xf]
        %v1221 = vunpack.c.l.bf16 %v1219
        %v1222 = vunpack.c.l.bf16 %v1220
        %v1223 = vmul.f32 %v1217, %v1221
        %v1224 = vmul.f32 %v1218, %v1222
        %v1225 = vld [vmem:[#allocation20 + $0x8] sm:$0xf]
        %v1226 = vld [vmem:[#allocation20 + $0x18] sm:$0xf]
        %v1227 = vunpack.c.l.bf16 %v1225
        %v1228 = vunpack.c.l.bf16 %v1226
        %v1229 = vadd.f32 %v1223, %v1227
        %v1230 = vadd.f32 %v1224, %v1228
        %v1231 = vpack.c.bf16 %v1230, %v1229
        %1232 = vst.msk [vmem:[#allocation4 + $0x40] sm:$0xff] %vm742, %v1231
        %v1233 = vld [vmem:[#allocation2 + $0x10] sm:$0xff]
        %v1234 = vld [vmem:[#allocation2 + $0x30] sm:$0xff]
        %v1235 = vsub.f32 %v1233, %v980
        %v1236 = vsub.f32 %v1234, %v980
        %v1237 = vmul.f32 %v1235, %v1032
        %v1238 = vmul.f32 %v1236, %v1032
        %v1239 = vld [vmem:[#allocation19 + $0x8] sm:$0xf]
        %v1240 = vld [vmem:[#allocation19 + $0x18] sm:$0xf]
        %v1241 = vunpack.c.l.bf16 %v1239
        %v1242 = vunpack.c.l.bf16 %v1240
        %v1243 = vmul.f32 %v1237, %v1241
        %v1244 = vmul.f32 %v1238, %v1242
        %v1245 = vld [vmem:[#allocation20 + $0x8] sm:$0xf]
        %v1246 = vld [vmem:[#allocation20 + $0x18] sm:$0xf]
        %v1247 = vunpack.c.l.bf16 %v1245
        %v1248 = vunpack.c.l.bf16 %v1246
        %v1249 = vadd.f32 %v1243, %v1247
        %v1250 = vadd.f32 %v1244, %v1248
        %v1251 = vpack.c.bf16 %v1250, %v1249
        %1253 = vrot.lane.b32.xlu0 %v1251, 96
        %v1254 = vpop.permute.xlu0 %1253
        %1256 = vst.msk [vmem:[#allocation4 + $0x48] sm:$0xff] %vm742, %v1254
        %v1257 = vld [vmem:[#allocation2 + $0x10] sm:$0xff]
        %v1258 = vld [vmem:[#allocation2 + $0x30] sm:$0xff]
        %v1259 = vsub.f32 %v1257, %v980
        %v1260 = vsub.f32 %v1258, %v980
        %v1261 = vmul.f32 %v1259, %v1032
        %v1262 = vmul.f32 %v1260, %v1032
        %v1263 = vld [vmem:[#allocation19 + $0x8] sm:$0xf]
        %v1264 = vld [vmem:[#allocation19 + $0x18] sm:$0xf]
        %v1265 = vunpack.c.l.bf16 %v1263
        %v1266 = vunpack.c.l.bf16 %v1264
        %v1267 = vmul.f32 %v1261, %v1265
        %v1268 = vmul.f32 %v1262, %v1266
        %v1269 = vld [vmem:[#allocation20 + $0x8] sm:$0xf]
        %v1270 = vld [vmem:[#allocation20 + $0x18] sm:$0xf]
        %v1271 = vunpack.c.l.bf16 %v1269
        %v1272 = vunpack.c.l.bf16 %v1270
        %v1273 = vadd.f32 %v1267, %v1271
        %v1274 = vadd.f32 %v1268, %v1272
        %v1275 = vpack.c.bf16 %v1274, %v1273
        %1277 = vrot.lane.b32.xlu0 %v1275, 64
        %v1278 = vpop.permute.xlu0 %1277
        %1280 = vst.msk [vmem:[#allocation4 + $0x50] sm:$0xff] %vm742, %v1278
        %v1281 = vld [vmem:[#allocation2 + $0x10] sm:$0xff]
        %v1282 = vld [vmem:[#allocation2 + $0x30] sm:$0xff]
        %v1283 = vsub.f32 %v1281, %v980
        %v1284 = vsub.f32 %v1282, %v980
        %v1285 = vmul.f32 %v1283, %v1032
        %v1286 = vmul.f32 %v1284, %v1032
        %v1287 = vld [vmem:[#allocation19 + $0x8] sm:$0xf]
        %v1288 = vld [vmem:[#allocation19 + $0x18] sm:$0xf]
        %v1289 = vunpack.c.l.bf16 %v1287
        %v1290 = vunpack.c.l.bf16 %v1288
        %v1291 = vmul.f32 %v1285, %v1289
        %v1292 = vmul.f32 %v1286, %v1290
        %v1293 = vld [vmem:[#allocation20 + $0x8] sm:$0xf]
        %v1294 = vld [vmem:[#allocation20 + $0x18] sm:$0xf]
        %v1295 = vunpack.c.l.bf16 %v1293
        %v1296 = vunpack.c.l.bf16 %v1294
        %v1297 = vadd.f32 %v1291, %v1295
        %v1298 = vadd.f32 %v1292, %v1296
        %v1299 = vpack.c.bf16 %v1298, %v1297
        %1301 = vrot.lane.b32.xlu0 %v1299, 32
        %v1302 = vpop.permute.xlu0 %1301
        %1304 = vst.msk [vmem:[#allocation4 + $0x58] sm:$0xff] %vm742, %v1302
        %v1305 = vld [vmem:[#allocation2 + $0x18] sm:$0xff]
        %v1306 = vld [vmem:[#allocation2 + $0x38] sm:$0xff]
        %v1307 = vsub.f32 %v1305, %v980
        %v1308 = vsub.f32 %v1306, %v980
        %v1309 = vmul.f32 %v1307, %v1032
        %v1310 = vmul.f32 %v1308, %v1032
        %v1311 = vld [vmem:[#allocation19 + $0xc] sm:$0xf]
        %v1312 = vld [vmem:[#allocation19 + $0x1c] sm:$0xf]
        %v1313 = vunpack.c.l.bf16 %v1311
        %v1314 = vunpack.c.l.bf16 %v1312
        %v1315 = vmul.f32 %v1309, %v1313
        %v1316 = vmul.f32 %v1310, %v1314
        %v1317 = vld [vmem:[#allocation20 + $0xc] sm:$0xf]
        %v1318 = vld [vmem:[#allocation20 + $0x1c] sm:$0xf]
        %v1319 = vunpack.c.l.bf16 %v1317
        %v1320 = vunpack.c.l.bf16 %v1318
        %v1321 = vadd.f32 %v1315, %v1319
        %v1322 = vadd.f32 %v1316, %v1320
        %v1323 = vpack.c.bf16 %v1322, %v1321
        %1324 = vst.msk [vmem:[#allocation4 + $0x60] sm:$0xff] %vm742, %v1323
        %v1325 = vld [vmem:[#allocation2 + $0x18] sm:$0xff]
        %v1326 = vld [vmem:[#allocation2 + $0x38] sm:$0xff]
        %v1327 = vsub.f32 %v1325, %v980
        %v1328 = vsub.f32 %v1326, %v980
        %v1329 = vmul.f32 %v1327, %v1032
        %v1330 = vmul.f32 %v1328, %v1032
        %v1331 = vld [vmem:[#allocation19 + $0xc] sm:$0xf]
        %v1332 = vld [vmem:[#allocation19 + $0x1c] sm:$0xf]
        %v1333 = vunpack.c.l.bf16 %v1331
        %v1334 = vunpack.c.l.bf16 %v1332
        %v1335 = vmul.f32 %v1329, %v1333
        %v1336 = vmul.f32 %v1330, %v1334
        %v1337 = vld [vmem:[#allocation20 + $0xc] sm:$0xf]
        %v1338 = vld [vmem:[#allocation20 + $0x1c] sm:$0xf]
        %v1339 = vunpack.c.l.bf16 %v1337
        %v1340 = vunpack.c.l.bf16 %v1338
        %v1341 = vadd.f32 %v1335, %v1339
        %v1342 = vadd.f32 %v1336, %v1340
        %v1343 = vpack.c.bf16 %v1342, %v1341
        %1345 = vrot.lane.b32.xlu0 %v1343, 96
        %v1346 = vpop.permute.xlu0 %1345
        %1348 = vst.msk [vmem:[#allocation4 + $0x68] sm:$0xff] %vm742, %v1346
        %v1349 = vld [vmem:[#allocation2 + $0x18] sm:$0xff]
        %v1350 = vld [vmem:[#allocation2 + $0x38] sm:$0xff]
        %v1351 = vsub.f32 %v1349, %v980
        %v1352 = vsub.f32 %v1350, %v980
        %v1353 = vmul.f32 %v1351, %v1032
        %v1354 = vmul.f32 %v1352, %v1032
        %v1355 = vld [vmem:[#allocation19 + $0xc] sm:$0xf]
        %v1356 = vld [vmem:[#allocation19 + $0x1c] sm:$0xf]
        %v1357 = vunpack.c.l.bf16 %v1355
        %v1358 = vunpack.c.l.bf16 %v1356
        %v1359 = vmul.f32 %v1353, %v1357
        %v1360 = vmul.f32 %v1354, %v1358
        %v1361 = vld [vmem:[#allocation20 + $0xc] sm:$0xf]
        %v1362 = vld [vmem:[#allocation20 + $0x1c] sm:$0xf]
        %v1363 = vunpack.c.l.bf16 %v1361
        %v1364 = vunpack.c.l.bf16 %v1362
        %v1365 = vadd.f32 %v1359, %v1363
        %v1366 = vadd.f32 %v1360, %v1364
        %v1367 = vpack.c.bf16 %v1366, %v1365
        %1369 = vrot.lane.b32.xlu0 %v1367, 64
        %v1370 = vpop.permute.xlu0 %1369
        %1372 = vst.msk [vmem:[#allocation4 + $0x70] sm:$0xff] %vm742, %v1370
        %v1373 = vld [vmem:[#allocation2 + $0x18] sm:$0xff]
        %v1374 = vld [vmem:[#allocation2 + $0x38] sm:$0xff]
        %v1375 = vsub.f32 %v1373, %v980
        %v1376 = vsub.f32 %v1374, %v980
        %v1377 = vmul.f32 %v1375, %v1032
        %v1378 = vmul.f32 %v1376, %v1032
        %v1379 = vld [vmem:[#allocation19 + $0xc] sm:$0xf]
        %v1380 = vld [vmem:[#allocation19 + $0x1c] sm:$0xf]
        %v1381 = vunpack.c.l.bf16 %v1379
        %v1382 = vunpack.c.l.bf16 %v1380
        %v1383 = vmul.f32 %v1377, %v1381
        %v1384 = vmul.f32 %v1378, %v1382
        %v1385 = vld [vmem:[#allocation20 + $0xc] sm:$0xf]
        %v1386 = vld [vmem:[#allocation20 + $0x1c] sm:$0xf]
        %v1387 = vunpack.c.l.bf16 %v1385
        %v1388 = vunpack.c.l.bf16 %v1386
        %v1389 = vadd.f32 %v1383, %v1387
        %v1390 = vadd.f32 %v1384, %v1388
        %v1391 = vpack.c.bf16 %v1390, %v1389
        %1393 = vrot.lane.b32.xlu0 %v1391, 32
        %v1394 = vpop.permute.xlu0 %1393
        %1396 = vst.msk [vmem:[#allocation4 + $0x78] sm:$0xff] %vm742, %v1394
        %v1397 = vld [vmem:[#allocation4] sm:$0xff]
        %v1398 = vld [vmem:[#allocation4 + $0x8] sm:$0xff]
        %v1399 = vld [vmem:[#allocation4 + $0x10] sm:$0xff]
        %v1400 = vld [vmem:[#allocation4 + $0x18] sm:$0xff]
        %v1401 = vld [vmem:[#allocation4 + $0x20] sm:$0xff]
        %v1402 = vld [vmem:[#allocation4 + $0x28] sm:$0xff]
        %v1403 = vld [vmem:[#allocation4 + $0x30] sm:$0xff]
        %v1404 = vld [vmem:[#allocation4 + $0x38] sm:$0xff]
        %v1405 = vld [vmem:[#allocation4 + $0x40] sm:$0xff]
        %v1406 = vld [vmem:[#allocation4 + $0x48] sm:$0xff]
        %v1407 = vld [vmem:[#allocation4 + $0x50] sm:$0xff]
        %v1408 = vld [vmem:[#allocation4 + $0x58] sm:$0xff]
        %v1409 = vld [vmem:[#allocation4 + $0x60] sm:$0xff]
        %v1410 = vld [vmem:[#allocation4 + $0x68] sm:$0xff]
        %v1411 = vld [vmem:[#allocation4 + $0x70] sm:$0xff]
        %v1412 = vld [vmem:[#allocation4 + $0x78] sm:$0xff]
        %v1413 = vld [vmem:[#allocation22] sm:$0xff]
        %v1414 = vld [vmem:[#allocation22 + $0x8] sm:$0xff]
        %v1415 = vld [vmem:[#allocation22 + $0x10] sm:$0xff]
        %v1416 = vld [vmem:[#allocation22 + $0x18] sm:$0xff]
        %v1417 = vld [vmem:[#allocation22 + $0x20] sm:$0xff]
        %v1418 = vld [vmem:[#allocation22 + $0x28] sm:$0xff]
        %v1419 = vld [vmem:[#allocation22 + $0x30] sm:$0xff]
        %v1420 = vld [vmem:[#allocation22 + $0x38] sm:$0xff]
        %v1421 = vld [vmem:[#allocation23] sm:$0xf]
        %v1423 = vlaneseq
        %v1424 = vshrl.u32 %v1423, 7
        %v1425 = vsub.s32 0, %v1424
        %v1426 = vrot.slane %v1421, %v1425
        %v1427 = vlaneseq
        %v1428 = vshrl.u32 %v1427, 7
        %v1429 = vsub.s32 1, %v1428
        %v1430 = vrot.slane %v1421, %v1429
        %v1431 = vlaneseq
        %v1432 = vshrl.u32 %v1431, 7
        %v1433 = vsub.s32 2, %v1432
        %v1434 = vrot.slane %v1421, %v1433
        %v1435 = vlaneseq
        %v1436 = vshrl.u32 %v1435, 7
        %v1437 = vsub.s32 3, %v1436
        %v1438 = vrot.slane %v1421, %v1437
        %v1451 = vunpack.c.l.b16 %v1413
        %v1452 = vunpack.c.h.b16 %v1413
        %v1453 = vunpack.c.l.b16 %v1414
        %v1454 = vunpack.c.h.b16 %v1414
        %v1455 = vunpack.c.l.b16 %v1415
        %v1456 = vunpack.c.h.b16 %v1415
        %v1457 = vunpack.c.l.b16 %v1416
        %v1458 = vunpack.c.h.b16 %v1416
        %v1459 = vunpack.c.l.b16 %v1417
        %v1460 = vunpack.c.h.b16 %v1417
        %v1461 = vunpack.c.l.b16 %v1418
        %v1462 = vunpack.c.h.b16 %v1418
        %v1463 = vunpack.c.l.b16 %v1419
        %v1464 = vunpack.c.h.b16 %v1419
        %v1465 = vunpack.c.l.b16 %v1420
        %v1466 = vunpack.c.h.b16 %v1420
        %v1467 = vpack.c.b16 %v1455, %v1451
        %v1468 = vpack.c.b16 %v1456, %v1452
        %v1469 = vpack.c.b16 %v1457, %v1453
        %v1470 = vpack.c.b16 %v1458, %v1454
        %v1471 = vpack.c.b16 %v1463, %v1459
        %v1472 = vpack.c.b16 %v1464, %v1460
        %v1473 = vpack.c.b16 %v1465, %v1461
        %v1474 = vpack.c.b16 %v1466, %v1462
        %v1484 = vsel %vm742, %v1397, 0
        %v1487 = vsel %vm742, %v1398, 0
        %v1490 = vsel %vm742, %v1399, 0
        %v1493 = vsel %vm742, %v1400, 0
        %v1496 = vsel %vm742, %v1401, 0
        %v1499 = vsel %vm742, %v1402, 0
        %v1502 = vsel %vm742, %v1403, 0
        %v1505 = vsel %vm742, %v1404, 0
        %v1508 = vsel %vm742, %v1405, 0
        %v1511 = vsel %vm742, %v1406, 0
        %v1514 = vsel %vm742, %v1407, 0
        %v1517 = vsel %vm742, %v1408, 0
        %v1520 = vsel %vm742, %v1409, 0
        %v1523 = vsel %vm742, %v1410, 0
        %v1526 = vsel %vm742, %v1411, 0
        %v1529 = vsel %vm742, %v1412, 0
        %1531 = vmatprep.subr.bf16.mxu0 %v1468
        %1532 = vmatpush1.bf16.msra.mxu0 %v1467
        %1533 = vmatprep.subr.bf16.mxu0 %v1472
        %1534 = vmatpush1.bf16.msra.mxu0 %v1471
        %1535 = vmatprep.subr.bf16.mxu0 0
        %1536 = vmatpush1.bf16.msra.mxu0 0
        %1537 = vmatprep.subr.bf16.mxu0 0
        %1538 = vmatpush1.bf16.msra.mxu0 0
        %1539 = vmatprep.subr.bf16.mxu0 0
        %1540 = vmatpush1.bf16.msra.mxu0 0
        %1541 = vmatprep.subr.bf16.mxu0 0
        %1542 = vmatpush1.bf16.msra.mxu0 0
        %1543 = vmatprep.subr.bf16.mxu0 0
        %1544 = vmatpush1.bf16.msra.mxu0 0
        %1545 = vmatprep.subr.bf16.mxu0 0
        %1546 = vmatpush1.bf16.msra.mxu0 0
        %1547 = vmatprep.subr.bf16.mxu0 0
        %1548 = vmatpush1.bf16.msra.mxu0 0
        %1549 = vmatprep.subr.bf16.mxu0 0
        %1550 = vmatpush1.bf16.msra.mxu0 0
        %1551 = vmatprep.subr.bf16.mxu0 0
        %1552 = vmatpush1.bf16.msra.mxu0 0
        %1553 = vmatprep.subr.bf16.mxu0 0
        %1554 = vmatpush1.bf16.msra.mxu0 0
        %1555 = vmatprep.subr.bf16.mxu0 0
        %1556 = vmatpush1.bf16.msra.mxu0 0
        %1557 = vmatprep.subr.bf16.mxu0 0
        %1558 = vmatpush1.bf16.msra.mxu0 0
        %1559 = vmatprep.subr.bf16.mxu0 0
        %1560 = vmatpush1.bf16.msra.mxu0 0
        %1561 = vmatprep.subr.bf16.mxu0 0
        %1562 = vmatpush1.bf16.msra.mxu0 0
        %1563 = vmatprep.mubr.bf16.mxu0 0
        %1564 = vmatmul.mubr.bf16.gmra.mrb[0].mxu0 %v1484
        %v1565 = vpop.f32.mrb[0].mxu0
        %v1566 = vadd.f32 %v1426, %v1565
        %v1567 = vpop.f32.mrb[0].mxu0
        %v1568 = vadd.f32 %v1430, %v1567
        %v1569 = vpop.f32.mrb[0].mxu0
        %v1570 = vadd.f32 %v1426, %v1569
        %v1571 = vpop.f32.mrb[0].mxu0
        %v1572 = vadd.f32 %v1430, %v1571
        %1573 = vmatprep.mubr.bf16.mxu0 0
        %1574 = vmatmul.mubr.bf16.gmra.mrb[0].mxu0 %v1487
        %v1575 = vpop.f32.mrb[0].mxu0
        %v1576 = vadd.f32 %v1426, %v1575
        %v1577 = vpop.f32.mrb[0].mxu0
        %v1578 = vadd.f32 %v1430, %v1577
        %v1579 = vpop.f32.mrb[0].mxu0
        %v1580 = vadd.f32 %v1426, %v1579
        %v1581 = vpop.f32.mrb[0].mxu0
        %v1582 = vadd.f32 %v1430, %v1581
        %1583 = vmatprep.mubr.bf16.mxu0 0
        %1584 = vmatmul.mubr.bf16.gmra.mrb[0].mxu0 %v1490
        %v1585 = vpop.f32.mrb[0].mxu0
        %v1586 = vadd.f32 %v1426, %v1585
        %v1587 = vpop.f32.mrb[0].mxu0
        %v1588 = vadd.f32 %v1430, %v1587
        %v1589 = vpop.f32.mrb[0].mxu0
        %v1590 = vadd.f32 %v1426, %v1589
        %v1591 = vpop.f32.mrb[0].mxu0
        %v1592 = vadd.f32 %v1430, %v1591
        %1593 = vmatprep.mubr.bf16.mxu0 0
        %1594 = vmatmul.mubr.bf16.gmra.mrb[0].mxu0 %v1493
        %v1595 = vpop.f32.mrb[0].mxu0
        %v1596 = vadd.f32 %v1426, %v1595
        %v1597 = vpop.f32.mrb[0].mxu0
        %v1598 = vadd.f32 %v1430, %v1597
        %v1599 = vpop.f32.mrb[0].mxu0
        %v1600 = vadd.f32 %v1426, %v1599
        %v1601 = vpop.f32.mrb[0].mxu0
        %v1602 = vadd.f32 %v1430, %v1601
        %1603 = vmatprep.mubr.bf16.mxu0 0
        %1604 = vmatmul.mubr.bf16.gmra.mrb[0].mxu0 %v1496
        %v1605 = vpop.f32.mrb[0].mxu0
        %v1606 = vadd.f32 %v1426, %v1605
        %v1607 = vpop.f32.mrb[0].mxu0
        %v1608 = vadd.f32 %v1430, %v1607
        %v1609 = vpop.f32.mrb[0].mxu0
        %v1610 = vadd.f32 %v1426, %v1609
        %v1611 = vpop.f32.mrb[0].mxu0
        %v1612 = vadd.f32 %v1430, %v1611
        %1613 = vmatprep.mubr.bf16.mxu0 0
        %1614 = vmatmul.mubr.bf16.gmra.mrb[0].mxu0 %v1499
        %v1615 = vpop.f32.mrb[0].mxu0
        %v1616 = vadd.f32 %v1426, %v1615
        %v1617 = vpop.f32.mrb[0].mxu0
        %v1618 = vadd.f32 %v1430, %v1617
        %v1619 = vpop.f32.mrb[0].mxu0
        %v1620 = vadd.f32 %v1426, %v1619
        %v1621 = vpop.f32.mrb[0].mxu0
        %v1622 = vadd.f32 %v1430, %v1621
        %1623 = vmatprep.mubr.bf16.mxu0 0
        %1624 = vmatmul.mubr.bf16.gmra.mrb[0].mxu0 %v1502
        %v1625 = vpop.f32.mrb[0].mxu0
        %v1626 = vadd.f32 %v1426, %v1625
        %v1627 = vpop.f32.mrb[0].mxu0
        %v1628 = vadd.f32 %v1430, %v1627
        %v1629 = vpop.f32.mrb[0].mxu0
        %v1630 = vadd.f32 %v1426, %v1629
        %v1631 = vpop.f32.mrb[0].mxu0
        %v1632 = vadd.f32 %v1430, %v1631
        %1633 = vmatprep.mubr.bf16.mxu0 0
        %1634 = vmatmul.mubr.bf16.gmra.mrb[0].mxu0 %v1505
        %v1635 = vpop.f32.mrb[0].mxu0
        %v1636 = vadd.f32 %v1426, %v1635
        %v1637 = vpop.f32.mrb[0].mxu0
        %v1638 = vadd.f32 %v1430, %v1637
        %v1639 = vpop.f32.mrb[0].mxu0
        %v1640 = vadd.f32 %v1426, %v1639
        %v1641 = vpop.f32.mrb[0].mxu0
        %v1642 = vadd.f32 %v1430, %v1641
        %1643 = vmatprep.mubr.bf16.mxu0 0
        %1644 = vmatmul.mubr.bf16.gmra.mrb[0].mxu0 %v1508
        %v1645 = vpop.f32.mrb[0].mxu0
        %v1646 = vadd.f32 %v1426, %v1645
        %v1647 = vpop.f32.mrb[0].mxu0
        %v1648 = vadd.f32 %v1430, %v1647
        %v1649 = vpop.f32.mrb[0].mxu0
        %v1650 = vadd.f32 %v1426, %v1649
        %v1651 = vpop.f32.mrb[0].mxu0
        %v1652 = vadd.f32 %v1430, %v1651
        %1653 = vmatprep.mubr.bf16.mxu0 0
        %1654 = vmatmul.mubr.bf16.gmra.mrb[0].mxu0 %v1511
        %v1655 = vpop.f32.mrb[0].mxu0
        %v1656 = vadd.f32 %v1426, %v1655
        %v1657 = vpop.f32.mrb[0].mxu0
        %v1658 = vadd.f32 %v1430, %v1657
        %v1659 = vpop.f32.mrb[0].mxu0
        %v1660 = vadd.f32 %v1426, %v1659
        %v1661 = vpop.f32.mrb[0].mxu0
        %v1662 = vadd.f32 %v1430, %v1661
        %1663 = vmatprep.mubr.bf16.mxu0 0
        %1664 = vmatmul.mubr.bf16.gmra.mrb[0].mxu0 %v1514
        %v1665 = vpop.f32.mrb[0].mxu0
        %v1666 = vadd.f32 %v1426, %v1665
        %v1667 = vpop.f32.mrb[0].mxu0
        %v1668 = vadd.f32 %v1430, %v1667
        %v1669 = vpop.f32.mrb[0].mxu0
        %v1670 = vadd.f32 %v1426, %v1669
        %v1671 = vpop.f32.mrb[0].mxu0
        %v1672 = vadd.f32 %v1430, %v1671
        %1673 = vmatprep.mubr.bf16.mxu0 0
        %1674 = vmatmul.mubr.bf16.gmra.mrb[0].mxu0 %v1517
        %v1675 = vpop.f32.mrb[0].mxu0
        %v1676 = vadd.f32 %v1426, %v1675
        %v1677 = vpop.f32.mrb[0].mxu0
        %v1678 = vadd.f32 %v1430, %v1677
        %v1679 = vpop.f32.mrb[0].mxu0
        %v1680 = vadd.f32 %v1426, %v1679
        %v1681 = vpop.f32.mrb[0].mxu0
        %v1682 = vadd.f32 %v1430, %v1681
        %1683 = vmatprep.mubr.bf16.mxu0 0
        %1684 = vmatmul.mubr.bf16.gmra.mrb[0].mxu0 %v1520
        %v1685 = vpop.f32.mrb[0].mxu0
        %v1686 = vadd.f32 %v1426, %v1685
        %v1687 = vpop.f32.mrb[0].mxu0
        %v1688 = vadd.f32 %v1430, %v1687
        %v1689 = vpop.f32.mrb[0].mxu0
        %v1690 = vadd.f32 %v1426, %v1689
        %v1691 = vpop.f32.mrb[0].mxu0
        %v1692 = vadd.f32 %v1430, %v1691
        %1693 = vmatprep.mubr.bf16.mxu0 0
        %1694 = vmatmul.mubr.bf16.gmra.mrb[0].mxu0 %v1523
        %v1695 = vpop.f32.mrb[0].mxu0
        %v1696 = vadd.f32 %v1426, %v1695
        %v1697 = vpop.f32.mrb[0].mxu0
        %v1698 = vadd.f32 %v1430, %v1697
        %v1699 = vpop.f32.mrb[0].mxu0
        %v1700 = vadd.f32 %v1426, %v1699
        %v1701 = vpop.f32.mrb[0].mxu0
        %v1702 = vadd.f32 %v1430, %v1701
        %1703 = vmatprep.mubr.bf16.mxu0 0
        %1704 = vmatmul.mubr.bf16.gmra.mrb[0].mxu0 %v1526
        %v1705 = vpop.f32.mrb[0].mxu0
        %v1706 = vadd.f32 %v1426, %v1705
        %v1707 = vpop.f32.mrb[0].mxu0
        %v1708 = vadd.f32 %v1430, %v1707
        %v1709 = vpop.f32.mrb[0].mxu0
        %v1710 = vadd.f32 %v1426, %v1709
        %v1711 = vpop.f32.mrb[0].mxu0
        %v1712 = vadd.f32 %v1430, %v1711
        %1713 = vmatprep.mubr.bf16.mxu0 0
        %1714 = vmatmul.mubr.bf16.gmra.mrb[0].mxu0 %v1529
        %v1715 = vpop.f32.mrb[0].mxu0
        %v1716 = vadd.f32 %v1426, %v1715
        %v1717 = vpop.f32.mrb[0].mxu0
        %v1718 = vadd.f32 %v1430, %v1717
        %v1719 = vpop.f32.mrb[0].mxu0
        %v1720 = vadd.f32 %v1426, %v1719
        %v1721 = vpop.f32.mrb[0].mxu0
        %v1722 = vadd.f32 %v1430, %v1721
        %1723 = vdwg.mxu0
        %1724 = vmatprep.subr.bf16.mxu0 %v1470
        %1725 = vmatpush1.bf16.msra.mxu0 %v1469
        %1726 = vmatprep.subr.bf16.mxu0 %v1474
        %1727 = vmatpush1.bf16.msra.mxu0 %v1473
        %1728 = vmatprep.subr.bf16.mxu0 0
        %1729 = vmatpush1.bf16.msra.mxu0 0
        %1730 = vmatprep.subr.bf16.mxu0 0
        %1731 = vmatpush1.bf16.msra.mxu0 0
        %1732 = vmatprep.subr.bf16.mxu0 0
        %1733 = vmatpush1.bf16.msra.mxu0 0
        %1734 = vmatprep.subr.bf16.mxu0 0
        %1735 = vmatpush1.bf16.msra.mxu0 0
        %1736 = vmatprep.subr.bf16.mxu0 0
        %1737 = vmatpush1.bf16.msra.mxu0 0
        %1738 = vmatprep.subr.bf16.mxu0 0
        %1739 = vmatpush1.bf16.msra.mxu0 0
        %1740 = vmatprep.subr.bf16.mxu0 0
        %1741 = vmatpush1.bf16.msra.mxu0 0
        %1742 = vmatprep.subr.bf16.mxu0 0
        %1743 = vmatpush1.bf16.msra.mxu0 0
        %1744 = vmatprep.subr.bf16.mxu0 0
        %1745 = vmatpush1.bf16.msra.mxu0 0
        %1746 = vmatprep.subr.bf16.mxu0 0
        %1747 = vmatpush1.bf16.msra.mxu0 0
        %1748 = vmatprep.subr.bf16.mxu0 0
        %1749 = vmatpush1.bf16.msra.mxu0 0
        %1750 = vmatprep.subr.bf16.mxu0 0
        %1751 = vmatpush1.bf16.msra.mxu0 0
        %1752 = vmatprep.subr.bf16.mxu0 0
        %1753 = vmatpush1.bf16.msra.mxu0 0
        %1754 = vmatprep.subr.bf16.mxu0 0
        %1755 = vmatpush1.bf16.msra.mxu0 0
        %1756 = vmatprep.mubr.bf16.mxu0 0
        %1757 = vmatmul.mubr.bf16.gmra.mrb[0].mxu0 %v1484
        %v1758 = vpop.f32.mrb[0].mxu0
        %v1759 = vadd.f32 %v1434, %v1758
        %v1760 = vpop.f32.mrb[0].mxu0
        %v1761 = vadd.f32 %v1438, %v1760
        %v1762 = vpop.f32.mrb[0].mxu0
        %v1763 = vadd.f32 %v1434, %v1762
        %v1764 = vpop.f32.mrb[0].mxu0
        %v1765 = vadd.f32 %v1438, %v1764
        %1766 = vmatprep.mubr.bf16.mxu0 0
        %1767 = vmatmul.mubr.bf16.gmra.mrb[0].mxu0 %v1487
        %v1768 = vpop.f32.mrb[0].mxu0
        %v1769 = vadd.f32 %v1434, %v1768
        %v1770 = vpop.f32.mrb[0].mxu0
        %v1771 = vadd.f32 %v1438, %v1770
        %v1772 = vpop.f32.mrb[0].mxu0
        %v1773 = vadd.f32 %v1434, %v1772
        %v1774 = vpop.f32.mrb[0].mxu0
        %v1775 = vadd.f32 %v1438, %v1774
        %1776 = vmatprep.mubr.bf16.mxu0 0
        %1777 = vmatmul.mubr.bf16.gmra.mrb[0].mxu0 %v1490
        %v1778 = vpop.f32.mrb[0].mxu0
        %v1779 = vadd.f32 %v1434, %v1778
        %v1780 = vpop.f32.mrb[0].mxu0
        %v1781 = vadd.f32 %v1438, %v1780
        %v1782 = vpop.f32.mrb[0].mxu0
        %v1783 = vadd.f32 %v1434, %v1782
        %v1784 = vpop.f32.mrb[0].mxu0
        %v1785 = vadd.f32 %v1438, %v1784
        %1786 = vmatprep.mubr.bf16.mxu0 0
        %1787 = vmatmul.mubr.bf16.gmra.mrb[0].mxu0 %v1493
        %v1788 = vpop.f32.mrb[0].mxu0
        %v1789 = vadd.f32 %v1434, %v1788
        %v1790 = vpop.f32.mrb[0].mxu0
        %v1791 = vadd.f32 %v1438, %v1790
        %v1792 = vpop.f32.mrb[0].mxu0
        %v1793 = vadd.f32 %v1434, %v1792
        %v1794 = vpop.f32.mrb[0].mxu0
        %v1795 = vadd.f32 %v1438, %v1794
        %1796 = vmatprep.mubr.bf16.mxu0 0
        %1797 = vmatmul.mubr.bf16.gmra.mrb[0].mxu0 %v1496
        %v1798 = vpop.f32.mrb[0].mxu0
        %v1799 = vadd.f32 %v1434, %v1798
        %v1800 = vpop.f32.mrb[0].mxu0
        %v1801 = vadd.f32 %v1438, %v1800
        %v1802 = vpop.f32.mrb[0].mxu0
        %v1803 = vadd.f32 %v1434, %v1802
        %v1804 = vpop.f32.mrb[0].mxu0
        %v1805 = vadd.f32 %v1438, %v1804
        %1806 = vmatprep.mubr.bf16.mxu0 0
        %1807 = vmatmul.mubr.bf16.gmra.mrb[0].mxu0 %v1499
        %v1808 = vpop.f32.mrb[0].mxu0
        %v1809 = vadd.f32 %v1434, %v1808
        %v1810 = vpop.f32.mrb[0].mxu0
        %v1811 = vadd.f32 %v1438, %v1810
        %v1812 = vpop.f32.mrb[0].mxu0
        %v1813 = vadd.f32 %v1434, %v1812
        %v1814 = vpop.f32.mrb[0].mxu0
        %v1815 = vadd.f32 %v1438, %v1814
        %1816 = vmatprep.mubr.bf16.mxu0 0
        %1817 = vmatmul.mubr.bf16.gmra.mrb[0].mxu0 %v1502
        %v1818 = vpop.f32.mrb[0].mxu0
        %v1819 = vadd.f32 %v1434, %v1818
        %v1820 = vpop.f32.mrb[0].mxu0
        %v1821 = vadd.f32 %v1438, %v1820
        %v1822 = vpop.f32.mrb[0].mxu0
        %v1823 = vadd.f32 %v1434, %v1822
        %v1824 = vpop.f32.mrb[0].mxu0
        %v1825 = vadd.f32 %v1438, %v1824
        %1826 = vmatprep.mubr.bf16.mxu0 0
        %1827 = vmatmul.mubr.bf16.gmra.mrb[0].mxu0 %v1505
        %v1828 = vpop.f32.mrb[0].mxu0
        %v1829 = vadd.f32 %v1434, %v1828
        %v1830 = vpop.f32.mrb[0].mxu0
        %v1831 = vadd.f32 %v1438, %v1830
        %v1832 = vpop.f32.mrb[0].mxu0
        %v1833 = vadd.f32 %v1434, %v1832
        %v1834 = vpop.f32.mrb[0].mxu0
        %v1835 = vadd.f32 %v1438, %v1834
        %1836 = vmatprep.mubr.bf16.mxu0 0
        %1837 = vmatmul.mubr.bf16.gmra.mrb[0].mxu0 %v1508
        %v1838 = vpop.f32.mrb[0].mxu0
        %v1839 = vadd.f32 %v1434, %v1838
        %v1840 = vpop.f32.mrb[0].mxu0
        %v1841 = vadd.f32 %v1438, %v1840
        %v1842 = vpop.f32.mrb[0].mxu0
        %v1843 = vadd.f32 %v1434, %v1842
        %v1844 = vpop.f32.mrb[0].mxu0
        %v1845 = vadd.f32 %v1438, %v1844
        %1846 = vmatprep.mubr.bf16.mxu0 0
        %1847 = vmatmul.mubr.bf16.gmra.mrb[0].mxu0 %v1511
        %v1848 = vpop.f32.mrb[0].mxu0
        %v1849 = vadd.f32 %v1434, %v1848
        %v1850 = vpop.f32.mrb[0].mxu0
        %v1851 = vadd.f32 %v1438, %v1850
        %v1852 = vpop.f32.mrb[0].mxu0
        %v1853 = vadd.f32 %v1434, %v1852
        %v1854 = vpop.f32.mrb[0].mxu0
        %v1855 = vadd.f32 %v1438, %v1854
        %1856 = vmatprep.mubr.bf16.mxu0 0
        %1857 = vmatmul.mubr.bf16.gmra.mrb[0].mxu0 %v1514
        %v1858 = vpop.f32.mrb[0].mxu0
        %v1859 = vadd.f32 %v1434, %v1858
        %v1860 = vpop.f32.mrb[0].mxu0
        %v1861 = vadd.f32 %v1438, %v1860
        %v1862 = vpop.f32.mrb[0].mxu0
        %v1863 = vadd.f32 %v1434, %v1862
        %v1864 = vpop.f32.mrb[0].mxu0
        %v1865 = vadd.f32 %v1438, %v1864
        %1866 = vmatprep.mubr.bf16.mxu0 0
        %1867 = vmatmul.mubr.bf16.gmra.mrb[0].mxu0 %v1517
        %v1868 = vpop.f32.mrb[0].mxu0
        %v1869 = vadd.f32 %v1434, %v1868
        %v1870 = vpop.f32.mrb[0].mxu0
        %v1871 = vadd.f32 %v1438, %v1870
        %v1872 = vpop.f32.mrb[0].mxu0
        %v1873 = vadd.f32 %v1434, %v1872
        %v1874 = vpop.f32.mrb[0].mxu0
        %v1875 = vadd.f32 %v1438, %v1874
        %1876 = vmatprep.mubr.bf16.mxu0 0
        %1877 = vmatmul.mubr.bf16.gmra.mrb[0].mxu0 %v1520
        %v1878 = vpop.f32.mrb[0].mxu0
        %v1879 = vadd.f32 %v1434, %v1878
        %v1880 = vpop.f32.mrb[0].mxu0
        %v1881 = vadd.f32 %v1438, %v1880
        %v1882 = vpop.f32.mrb[0].mxu0
        %v1883 = vadd.f32 %v1434, %v1882
        %v1884 = vpop.f32.mrb[0].mxu0
        %v1885 = vadd.f32 %v1438, %v1884
        %1886 = vmatprep.mubr.bf16.mxu0 0
        %1887 = vmatmul.mubr.bf16.gmra.mrb[0].mxu0 %v1523
        %v1888 = vpop.f32.mrb[0].mxu0
        %v1889 = vadd.f32 %v1434, %v1888
        %v1890 = vpop.f32.mrb[0].mxu0
        %v1891 = vadd.f32 %v1438, %v1890
        %v1892 = vpop.f32.mrb[0].mxu0
        %v1893 = vadd.f32 %v1434, %v1892
        %v1894 = vpop.f32.mrb[0].mxu0
        %v1895 = vadd.f32 %v1438, %v1894
        %1896 = vmatprep.mubr.bf16.mxu0 0
        %1897 = vmatmul.mubr.bf16.gmra.mrb[0].mxu0 %v1526
        %v1898 = vpop.f32.mrb[0].mxu0
        %v1899 = vadd.f32 %v1434, %v1898
        %v1900 = vpop.f32.mrb[0].mxu0
        %v1901 = vadd.f32 %v1438, %v1900
        %v1902 = vpop.f32.mrb[0].mxu0
        %v1903 = vadd.f32 %v1434, %v1902
        %v1904 = vpop.f32.mrb[0].mxu0
        %v1905 = vadd.f32 %v1438, %v1904
        %1906 = vmatprep.mubr.bf16.mxu0 0
        %1907 = vmatmul.mubr.bf16.gmra.mrb[0].mxu0 %v1529
        %v1908 = vpop.f32.mrb[0].mxu0
        %v1909 = vadd.f32 %v1434, %v1908
        %v1910 = vpop.f32.mrb[0].mxu0
        %v1911 = vadd.f32 %v1438, %v1910
        %v1912 = vpop.f32.mrb[0].mxu0
        %v1913 = vadd.f32 %v1434, %v1912
        %v1914 = vpop.f32.mrb[0].mxu0
        %v1915 = vadd.f32 %v1438, %v1914
        %1916 = vdwg.mxu0
        %v1917 = vmax.f32 %v1566, 0.0
        %v1918 = vmax.f32 %v1568, 0.0
        %v1919 = vmax.f32 %v1759, 0.0
        %v1920 = vmax.f32 %v1761, 0.0
        %v1921 = vmax.f32 %v1570, 0.0
        %v1922 = vmax.f32 %v1572, 0.0
        %v1923 = vmax.f32 %v1763, 0.0
        %v1924 = vmax.f32 %v1765, 0.0
        %v1925 = vmax.f32 %v1576, 0.0
        %v1926 = vmax.f32 %v1578, 0.0
        %v1927 = vmax.f32 %v1769, 0.0
        %v1928 = vmax.f32 %v1771, 0.0
        %v1929 = vmax.f32 %v1580, 0.0
        %v1930 = vmax.f32 %v1582, 0.0
        %v1931 = vmax.f32 %v1773, 0.0
        %v1932 = vmax.f32 %v1775, 0.0
        %v1933 = vmax.f32 %v1586, 0.0
        %v1934 = vmax.f32 %v1588, 0.0
        %v1935 = vmax.f32 %v1779, 0.0
        %v1936 = vmax.f32 %v1781, 0.0
        %v1937 = vmax.f32 %v1590, 0.0
        %v1938 = vmax.f32 %v1592, 0.0
        %v1939 = vmax.f32 %v1783, 0.0
        %v1940 = vmax.f32 %v1785, 0.0
        %v1941 = vmax.f32 %v1596, 0.0
        %v1942 = vmax.f32 %v1598, 0.0
        %v1943 = vmax.f32 %v1789, 0.0
        %v1944 = vmax.f32 %v1791, 0.0
        %v1945 = vmax.f32 %v1600, 0.0
        %v1946 = vmax.f32 %v1602, 0.0
        %v1947 = vmax.f32 %v1793, 0.0
        %v1948 = vmax.f32 %v1795, 0.0
        %v1949 = vmax.f32 %v1606, 0.0
        %v1950 = vmax.f32 %v1608, 0.0
        %v1951 = vmax.f32 %v1799, 0.0
        %v1952 = vmax.f32 %v1801, 0.0
        %v1953 = vmax.f32 %v1610, 0.0
        %v1954 = vmax.f32 %v1612, 0.0
        %v1955 = vmax.f32 %v1803, 0.0
        %v1956 = vmax.f32 %v1805, 0.0
        %v1957 = vmax.f32 %v1616, 0.0
        %v1958 = vmax.f32 %v1618, 0.0
        %v1959 = vmax.f32 %v1809, 0.0
        %v1960 = vmax.f32 %v1811, 0.0
        %v1961 = vmax.f32 %v1620, 0.0
        %v1962 = vmax.f32 %v1622, 0.0
        %v1963 = vmax.f32 %v1813, 0.0
        %v1964 = vmax.f32 %v1815, 0.0
        %v1965 = vmax.f32 %v1626, 0.0
        %v1966 = vmax.f32 %v1628, 0.0
        %v1967 = vmax.f32 %v1819, 0.0
        %v1968 = vmax.f32 %v1821, 0.0
        %v1969 = vmax.f32 %v1630, 0.0
        %v1970 = vmax.f32 %v1632, 0.0
        %v1971 = vmax.f32 %v1823, 0.0
        %v1972 = vmax.f32 %v1825, 0.0
        %v1973 = vmax.f32 %v1636, 0.0
        %v1974 = vmax.f32 %v1638, 0.0
        %v1975 = vmax.f32 %v1829, 0.0
        %v1976 = vmax.f32 %v1831, 0.0
        %v1977 = vmax.f32 %v1640, 0.0
        %v1978 = vmax.f32 %v1642, 0.0
        %v1979 = vmax.f32 %v1833, 0.0
        %v1980 = vmax.f32 %v1835, 0.0
        %v1981 = vmax.f32 %v1646, 0.0
        %v1982 = vmax.f32 %v1648, 0.0
        %v1983 = vmax.f32 %v1839, 0.0
        %v1984 = vmax.f32 %v1841, 0.0
        %v1985 = vmax.f32 %v1650, 0.0
        %v1986 = vmax.f32 %v1652, 0.0
        %v1987 = vmax.f32 %v1843, 0.0
        %v1988 = vmax.f32 %v1845, 0.0
        %v1989 = vmax.f32 %v1656, 0.0
        %v1990 = vmax.f32 %v1658, 0.0
        %v1991 = vmax.f32 %v1849, 0.0
        %v1992 = vmax.f32 %v1851, 0.0
        %v1993 = vmax.f32 %v1660, 0.0
        %v1994 = vmax.f32 %v1662, 0.0
        %v1995 = vmax.f32 %v1853, 0.0
        %v1996 = vmax.f32 %v1855, 0.0
        %v1997 = vmax.f32 %v1666, 0.0
        %v1998 = vmax.f32 %v1668, 0.0
        %v1999 = vmax.f32 %v1859, 0.0
        %v2000 = vmax.f32 %v1861, 0.0
        %v2001 = vmax.f32 %v1670, 0.0
        %v2002 = vmax.f32 %v1672, 0.0
        %v2003 = vmax.f32 %v1863, 0.0
        %v2004 = vmax.f32 %v1865, 0.0
        %v2005 = vmax.f32 %v1676, 0.0
        %v2006 = vmax.f32 %v1678, 0.0
        %v2007 = vmax.f32 %v1869, 0.0
        %v2008 = vmax.f32 %v1871, 0.0
        %v2009 = vmax.f32 %v1680, 0.0
        %v2010 = vmax.f32 %v1682, 0.0
        %v2011 = vmax.f32 %v1873, 0.0
        %v2012 = vmax.f32 %v1875, 0.0
        %v2013 = vmax.f32 %v1686, 0.0
        %v2014 = vmax.f32 %v1688, 0.0
        %v2015 = vmax.f32 %v1879, 0.0
        %v2016 = vmax.f32 %v1881, 0.0
        %v2017 = vmax.f32 %v1690, 0.0
        %v2018 = vmax.f32 %v1692, 0.0
        %v2019 = vmax.f32 %v1883, 0.0
        %v2020 = vmax.f32 %v1885, 0.0
        %v2021 = vmax.f32 %v1696, 0.0
        %v2022 = vmax.f32 %v1698, 0.0
        %v2023 = vmax.f32 %v1889, 0.0
        %v2024 = vmax.f32 %v1891, 0.0
        %v2025 = vmax.f32 %v1700, 0.0
        %v2026 = vmax.f32 %v1702, 0.0
        %v2027 = vmax.f32 %v1893, 0.0
        %v2028 = vmax.f32 %v1895, 0.0
        %v2029 = vmax.f32 %v1706, 0.0
        %v2030 = vmax.f32 %v1708, 0.0
        %v2031 = vmax.f32 %v1899, 0.0
        %v2032 = vmax.f32 %v1901, 0.0
        %v2033 = vmax.f32 %v1710, 0.0
        %v2034 = vmax.f32 %v1712, 0.0
        %v2035 = vmax.f32 %v1903, 0.0
        %v2036 = vmax.f32 %v1905, 0.0
        %v2037 = vmax.f32 %v1716, 0.0
        %v2038 = vmax.f32 %v1718, 0.0
        %v2039 = vmax.f32 %v1909, 0.0
        %v2040 = vmax.f32 %v1911, 0.0
        %v2041 = vmax.f32 %v1720, 0.0
        %v2042 = vmax.f32 %v1722, 0.0
        %v2043 = vmax.f32 %v1913, 0.0
        %v2044 = vmax.f32 %v1915, 0.0
        %v2045 = vadd.f32 %v1917, %v1918
        %v2046 = vadd.f32 %v2045, %v1919
        %v2047 = vadd.f32 %v2046, %v1920
        %v2048 = vadd.f32 %v2047, %v1921
        %v2049 = vadd.f32 %v2048, %v1922
        %v2050 = vadd.f32 %v2049, %v1923
        %v2051 = vadd.f32 %v2050, %v1924
        %v2052 = vadd.f32 %v2051, %v1925
        %v2053 = vadd.f32 %v2052, %v1926
        %v2054 = vadd.f32 %v2053, %v1927
        %v2055 = vadd.f32 %v2054, %v1928
        %v2056 = vadd.f32 %v2055, %v1929
        %v2057 = vadd.f32 %v2056, %v1930
        %v2058 = vadd.f32 %v2057, %v1931
        %v2059 = vadd.f32 %v2058, %v1932
        %v2060 = vadd.f32 %v2059, %v1933
        %v2061 = vadd.f32 %v2060, %v1934
        %v2062 = vadd.f32 %v2061, %v1935
        %v2063 = vadd.f32 %v2062, %v1936
        %v2064 = vadd.f32 %v2063, %v1937
        %v2065 = vadd.f32 %v2064, %v1938
        %v2066 = vadd.f32 %v2065, %v1939
        %v2067 = vadd.f32 %v2066, %v1940
        %v2068 = vadd.f32 %v2067, %v1941
        %v2069 = vadd.f32 %v2068, %v1942
        %v2070 = vadd.f32 %v2069, %v1943
        %v2071 = vadd.f32 %v2070, %v1944
        %v2072 = vadd.f32 %v2071, %v1945
        %v2073 = vadd.f32 %v2072, %v1946
        %v2074 = vadd.f32 %v2073, %v1947
        %v2075 = vadd.f32 %v2074, %v1948
        %v2076 = vadd.f32 %v2075, %v1949
        %v2077 = vadd.f32 %v2076, %v1950
        %v2078 = vadd.f32 %v2077, %v1951
        %v2079 = vadd.f32 %v2078, %v1952
        %v2080 = vadd.f32 %v2079, %v1953
        %v2081 = vadd.f32 %v2080, %v1954
        %v2082 = vadd.f32 %v2081, %v1955
        %v2083 = vadd.f32 %v2082, %v1956
        %v2084 = vadd.f32 %v2083, %v1957
        %v2085 = vadd.f32 %v2084, %v1958
        %v2086 = vadd.f32 %v2085, %v1959
        %v2087 = vadd.f32 %v2086, %v1960
        %v2088 = vadd.f32 %v2087, %v1961
        %v2089 = vadd.f32 %v2088, %v1962
        %v2090 = vadd.f32 %v2089, %v1963
        %v2091 = vadd.f32 %v2090, %v1964
        %v2092 = vadd.f32 %v2091, %v1965
        %v2093 = vadd.f32 %v2092, %v1966
        %v2094 = vadd.f32 %v2093, %v1967
        %v2095 = vadd.f32 %v2094, %v1968
        %v2096 = vadd.f32 %v2095, %v1969
        %v2097 = vadd.f32 %v2096, %v1970
        %v2098 = vadd.f32 %v2097, %v1971
        %v2099 = vadd.f32 %v2098, %v1972
        %v2100 = vadd.f32 %v2099, %v1973
        %v2101 = vadd.f32 %v2100, %v1974
        %v2102 = vadd.f32 %v2101, %v1975
        %v2103 = vadd.f32 %v2102, %v1976
        %v2104 = vadd.f32 %v2103, %v1977
        %v2105 = vadd.f32 %v2104, %v1978
        %v2106 = vadd.f32 %v2105, %v1979
        %v2107 = vadd.f32 %v2106, %v1980
        %v2108 = vadd.f32 %v2107, %v1981
        %v2109 = vadd.f32 %v2108, %v1982
        %v2110 = vadd.f32 %v2109, %v1983
        %v2111 = vadd.f32 %v2110, %v1984
        %v2112 = vadd.f32 %v2111, %v1985
        %v2113 = vadd.f32 %v2112, %v1986
        %v2114 = vadd.f32 %v2113, %v1987
        %v2115 = vadd.f32 %v2114, %v1988
        %v2116 = vadd.f32 %v2115, %v1989
        %v2117 = vadd.f32 %v2116, %v1990
        %v2118 = vadd.f32 %v2117, %v1991
        %v2119 = vadd.f32 %v2118, %v1992
        %v2120 = vadd.f32 %v2119, %v1993
        %v2121 = vadd.f32 %v2120, %v1994
        %v2122 = vadd.f32 %v2121, %v1995
        %v2123 = vadd.f32 %v2122, %v1996
        %v2124 = vadd.f32 %v2123, %v1997
        %v2125 = vadd.f32 %v2124, %v1998
        %v2126 = vadd.f32 %v2125, %v1999
        %v2127 = vadd.f32 %v2126, %v2000
        %v2128 = vadd.f32 %v2127, %v2001
        %v2129 = vadd.f32 %v2128, %v2002
        %v2130 = vadd.f32 %v2129, %v2003
        %v2131 = vadd.f32 %v2130, %v2004
        %v2132 = vadd.f32 %v2131, %v2005
        %v2133 = vadd.f32 %v2132, %v2006
        %v2134 = vadd.f32 %v2133, %v2007
        %v2135 = vadd.f32 %v2134, %v2008
        %v2136 = vadd.f32 %v2135, %v2009
        %v2137 = vadd.f32 %v2136, %v2010
        %v2138 = vadd.f32 %v2137, %v2011
        %v2139 = vadd.f32 %v2138, %v2012
        %v2140 = vadd.f32 %v2139, %v2013
        %v2141 = vadd.f32 %v2140, %v2014
        %v2142 = vadd.f32 %v2141, %v2015
        %v2143 = vadd.f32 %v2142, %v2016
        %v2144 = vadd.f32 %v2143, %v2017
        %v2145 = vadd.f32 %v2144, %v2018
        %v2146 = vadd.f32 %v2145, %v2019
        %v2147 = vadd.f32 %v2146, %v2020
        %v2148 = vadd.f32 %v2147, %v2021
        %v2149 = vadd.f32 %v2148, %v2022
        %v2150 = vadd.f32 %v2149, %v2023
        %v2151 = vadd.f32 %v2150, %v2024
        %v2152 = vadd.f32 %v2151, %v2025
        %v2153 = vadd.f32 %v2152, %v2026
        %v2154 = vadd.f32 %v2153, %v2027
        %v2155 = vadd.f32 %v2154, %v2028
        %v2156 = vadd.f32 %v2155, %v2029
        %v2157 = vadd.f32 %v2156, %v2030
        %v2158 = vadd.f32 %v2157, %v2031
        %v2159 = vadd.f32 %v2158, %v2032
        %v2160 = vadd.f32 %v2159, %v2033
        %v2161 = vadd.f32 %v2160, %v2034
        %v2162 = vadd.f32 %v2161, %v2035
        %v2163 = vadd.f32 %v2162, %v2036
        %v2164 = vadd.f32 %v2163, %v2037
        %v2165 = vadd.f32 %v2164, %v2038
        %v2166 = vadd.f32 %v2165, %v2039
        %v2167 = vadd.f32 %v2166, %v2040
        %v2168 = vadd.f32 %v2167, %v2041
        %v2169 = vadd.f32 %v2168, %v2042
        %v2170 = vadd.f32 %v2169, %v2043
        %v2171 = vadd.f32 %v2170, %v2044
        %2172 = vadd.xlane.f32.xlu0 %v2171
        %v2173 = vpop.xlane.xlu0 %2172
        %v2174 = vrot.slane %v2173, 4
        %v2175 = vadd.f32 %v2173, %v2174
        %v2176 = vrot.slane %v2175, 2
        %v2177 = vadd.f32 %v2175, %v2176
        %v2178 = vrot.slane %v2177, 1
        %v2179 = vadd.f32 %v2177, %v2178
        %s2180 = vtos %v2179
        %v2181 = vrcp.pop 131072.0
        %s2182 = vtos %v2181
        %s2183 = smul.f32 %s2180, %s2182
        %v2184 = vstv %s2183
        %v2185 = vsub.f32 %v1917, %v2184
        %v2186 = vsub.f32 %v1918, %v2184
        %v2187 = vsub.f32 %v1919, %v2184
        %v2188 = vsub.f32 %v1920, %v2184
        %v2189 = vsub.f32 %v1921, %v2184
        %v2190 = vsub.f32 %v1922, %v2184
        %v2191 = vsub.f32 %v1923, %v2184
        %v2192 = vsub.f32 %v1924, %v2184
        %v2193 = vsub.f32 %v1925, %v2184
        %v2194 = vsub.f32 %v1926, %v2184
        %v2195 = vsub.f32 %v1927, %v2184
        %v2196 = vsub.f32 %v1928, %v2184
        %v2197 = vsub.f32 %v1929, %v2184
        %v2198 = vsub.f32 %v1930, %v2184
        %v2199 = vsub.f32 %v1931, %v2184
        %v2200 = vsub.f32 %v1932, %v2184
        %v2201 = vsub.f32 %v1933, %v2184
        %v2202 = vsub.f32 %v1934, %v2184
        %v2203 = vsub.f32 %v1935, %v2184
        %v2204 = vsub.f32 %v1936, %v2184
        %v2205 = vsub.f32 %v1937, %v2184
        %v2206 = vsub.f32 %v1938, %v2184
        %v2207 = vsub.f32 %v1939, %v2184
        %v2208 = vsub.f32 %v1940, %v2184
        %v2209 = vsub.f32 %v1941, %v2184
        %v2210 = vsub.f32 %v1942, %v2184
        %v2211 = vsub.f32 %v1943, %v2184
        %v2212 = vsub.f32 %v1944, %v2184
        %v2213 = vsub.f32 %v1945, %v2184
        %v2214 = vsub.f32 %v1946, %v2184
        %v2215 = vsub.f32 %v1947, %v2184
        %v2216 = vsub.f32 %v1948, %v2184
        %v2217 = vsub.f32 %v1949, %v2184
        %v2218 = vsub.f32 %v1950, %v2184
        %v2219 = vsub.f32 %v1951, %v2184
        %v2220 = vsub.f32 %v1952, %v2184
        %v2221 = vsub.f32 %v1953, %v2184
        %v2222 = vsub.f32 %v1954, %v2184
        %v2223 = vsub.f32 %v1955, %v2184
        %v2224 = vsub.f32 %v1956, %v2184
        %v2225 = vsub.f32 %v1957, %v2184
        %v2226 = vsub.f32 %v1958, %v2184
        %v2227 = vsub.f32 %v1959, %v2184
        %v2228 = vsub.f32 %v1960, %v2184
        %v2229 = vsub.f32 %v1961, %v2184
        %v2230 = vsub.f32 %v1962, %v2184
        %v2231 = vsub.f32 %v1963, %v2184
        %v2232 = vsub.f32 %v1964, %v2184
        %v2233 = vsub.f32 %v1965, %v2184
        %v2234 = vsub.f32 %v1966, %v2184
        %v2235 = vsub.f32 %v1967, %v2184
        %v2236 = vsub.f32 %v1968, %v2184
        %v2237 = vsub.f32 %v1969, %v2184
        %v2238 = vsub.f32 %v1970, %v2184
        %v2239 = vsub.f32 %v1971, %v2184
        %v2240 = vsub.f32 %v1972, %v2184
        %v2241 = vsub.f32 %v1973, %v2184
        %v2242 = vsub.f32 %v1974, %v2184
        %v2243 = vsub.f32 %v1975, %v2184
        %v2244 = vsub.f32 %v1976, %v2184
        %v2245 = vsub.f32 %v1977, %v2184
        %v2246 = vsub.f32 %v1978, %v2184
        %v2247 = vsub.f32 %v1979, %v2184
        %v2248 = vsub.f32 %v1980, %v2184
        %v2249 = vsub.f32 %v1981, %v2184
        %v2250 = vsub.f32 %v1982, %v2184
        %v2251 = vsub.f32 %v1983, %v2184
        %v2252 = vsub.f32 %v1984, %v2184
        %v2253 = vsub.f32 %v1985, %v2184
        %v2254 = vsub.f32 %v1986, %v2184
        %v2255 = vsub.f32 %v1987, %v2184
        %v2256 = vsub.f32 %v1988, %v2184
        %v2257 = vsub.f32 %v1989, %v2184
        %v2258 = vsub.f32 %v1990, %v2184
        %v2259 = vsub.f32 %v1991, %v2184
        %v2260 = vsub.f32 %v1992, %v2184
        %v2261 = vsub.f32 %v1993, %v2184
        %v2262 = vsub.f32 %v1994, %v2184
        %v2263 = vsub.f32 %v1995, %v2184
        %v2264 = vsub.f32 %v1996, %v2184
        %v2265 = vsub.f32 %v1997, %v2184
        %v2266 = vsub.f32 %v1998, %v2184
        %v2267 = vsub.f32 %v1999, %v2184
        %v2268 = vsub.f32 %v2000, %v2184
        %v2269 = vsub.f32 %v2001, %v2184
        %v2270 = vsub.f32 %v2002, %v2184
        %v2271 = vsub.f32 %v2003, %v2184
        %v2272 = vsub.f32 %v2004, %v2184
        %v2273 = vsub.f32 %v2005, %v2184
        %v2274 = vsub.f32 %v2006, %v2184
        %v2275 = vsub.f32 %v2007, %v2184
        %v2276 = vsub.f32 %v2008, %v2184
        %v2277 = vsub.f32 %v2009, %v2184
        %v2278 = vsub.f32 %v2010, %v2184
        %v2279 = vsub.f32 %v2011, %v2184
        %v2280 = vsub.f32 %v2012, %v2184
        %v2281 = vsub.f32 %v2013, %v2184
        %v2282 = vsub.f32 %v2014, %v2184
        %v2283 = vsub.f32 %v2015, %v2184
        %v2284 = vsub.f32 %v2016, %v2184
        %v2285 = vsub.f32 %v2017, %v2184
        %v2286 = vsub.f32 %v2018, %v2184
        %v2287 = vsub.f32 %v2019, %v2184
        %v2288 = vsub.f32 %v2020, %v2184
        %v2289 = vsub.f32 %v2021, %v2184
        %v2290 = vsub.f32 %v2022, %v2184
        %v2291 = vsub.f32 %v2023, %v2184
        %v2292 = vsub.f32 %v2024, %v2184
        %v2293 = vsub.f32 %v2025, %v2184
        %v2294 = vsub.f32 %v2026, %v2184
        %v2295 = vsub.f32 %v2027, %v2184
        %v2296 = vsub.f32 %v2028, %v2184
        %v2297 = vsub.f32 %v2029, %v2184
        %v2298 = vsub.f32 %v2030, %v2184
        %v2299 = vsub.f32 %v2031, %v2184
        %v2300 = vsub.f32 %v2032, %v2184
        %v2301 = vsub.f32 %v2033, %v2184
        %v2302 = vsub.f32 %v2034, %v2184
        %v2303 = vsub.f32 %v2035, %v2184
        %v2304 = vsub.f32 %v2036, %v2184
        %v2305 = vsub.f32 %v2037, %v2184
        %v2306 = vsub.f32 %v2038, %v2184
        %v2307 = vsub.f32 %v2039, %v2184
        %v2308 = vsub.f32 %v2040, %v2184
        %v2309 = vsub.f32 %v2041, %v2184
        %v2310 = vsub.f32 %v2042, %v2184
        %v2311 = vsub.f32 %v2043, %v2184
        %v2312 = vsub.f32 %v2044, %v2184
        %v2313 = vmul.f32 %v2185, %v2185
        %v2314 = vmul.f32 %v2186, %v2186
        %v2315 = vmul.f32 %v2187, %v2187
        %v2316 = vmul.f32 %v2188, %v2188
        %v2317 = vmul.f32 %v2189, %v2189
        %v2318 = vmul.f32 %v2190, %v2190
        %v2319 = vmul.f32 %v2191, %v2191
        %v2320 = vmul.f32 %v2192, %v2192
        %v2321 = vmul.f32 %v2193, %v2193
        %v2322 = vmul.f32 %v2194, %v2194
        %v2323 = vmul.f32 %v2195, %v2195
        %v2324 = vmul.f32 %v2196, %v2196
        %v2325 = vmul.f32 %v2197, %v2197
        %v2326 = vmul.f32 %v2198, %v2198
        %v2327 = vmul.f32 %v2199, %v2199
        %v2328 = vmul.f32 %v2200, %v2200
        %v2329 = vmul.f32 %v2201, %v2201
        %v2330 = vmul.f32 %v2202, %v2202
        %v2331 = vmul.f32 %v2203, %v2203
        %v2332 = vmul.f32 %v2204, %v2204
        %v2333 = vmul.f32 %v2205, %v2205
        %v2334 = vmul.f32 %v2206, %v2206
        %v2335 = vmul.f32 %v2207, %v2207
        %v2336 = vmul.f32 %v2208, %v2208
        %v2337 = vmul.f32 %v2209, %v2209
        %v2338 = vmul.f32 %v2210, %v2210
        %v2339 = vmul.f32 %v2211, %v2211
        %v2340 = vmul.f32 %v2212, %v2212
        %v2341 = vmul.f32 %v2213, %v2213
        %v2342 = vmul.f32 %v2214, %v2214
        %v2343 = vmul.f32 %v2215, %v2215
        %v2344 = vmul.f32 %v2216, %v2216
        %v2345 = vmul.f32 %v2217, %v2217
        %v2346 = vmul.f32 %v2218, %v2218
        %v2347 = vmul.f32 %v2219, %v2219
        %v2348 = vmul.f32 %v2220, %v2220
        %v2349 = vmul.f32 %v2221, %v2221
        %v2350 = vmul.f32 %v2222, %v2222
        %v2351 = vmul.f32 %v2223, %v2223
        %v2352 = vmul.f32 %v2224, %v2224
        %v2353 = vmul.f32 %v2225, %v2225
        %v2354 = vmul.f32 %v2226, %v2226
        %v2355 = vmul.f32 %v2227, %v2227
        %v2356 = vmul.f32 %v2228, %v2228
        %v2357 = vmul.f32 %v2229, %v2229
        %v2358 = vmul.f32 %v2230, %v2230
        %v2359 = vmul.f32 %v2231, %v2231
        %v2360 = vmul.f32 %v2232, %v2232
        %v2361 = vmul.f32 %v2233, %v2233
        %v2362 = vmul.f32 %v2234, %v2234
        %v2363 = vmul.f32 %v2235, %v2235
        %v2364 = vmul.f32 %v2236, %v2236
        %v2365 = vmul.f32 %v2237, %v2237
        %v2366 = vmul.f32 %v2238, %v2238
        %v2367 = vmul.f32 %v2239, %v2239
        %v2368 = vmul.f32 %v2240, %v2240
        %v2369 = vmul.f32 %v2241, %v2241
        %v2370 = vmul.f32 %v2242, %v2242
        %v2371 = vmul.f32 %v2243, %v2243
        %v2372 = vmul.f32 %v2244, %v2244
        %v2373 = vmul.f32 %v2245, %v2245
        %v2374 = vmul.f32 %v2246, %v2246
        %v2375 = vmul.f32 %v2247, %v2247
        %v2376 = vmul.f32 %v2248, %v2248
        %v2377 = vmul.f32 %v2249, %v2249
        %v2378 = vmul.f32 %v2250, %v2250
        %v2379 = vmul.f32 %v2251, %v2251
        %v2380 = vmul.f32 %v2252, %v2252
        %v2381 = vmul.f32 %v2253, %v2253
        %v2382 = vmul.f32 %v2254, %v2254
        %v2383 = vmul.f32 %v2255, %v2255
        %v2384 = vmul.f32 %v2256, %v2256
        %v2385 = vmul.f32 %v2257, %v2257
        %v2386 = vmul.f32 %v2258, %v2258
        %v2387 = vmul.f32 %v2259, %v2259
        %v2388 = vmul.f32 %v2260, %v2260
        %v2389 = vmul.f32 %v2261, %v2261
        %v2390 = vmul.f32 %v2262, %v2262
        %v2391 = vmul.f32 %v2263, %v2263
        %v2392 = vmul.f32 %v2264, %v2264
        %v2393 = vmul.f32 %v2265, %v2265
        %v2394 = vmul.f32 %v2266, %v2266
        %v2395 = vmul.f32 %v2267, %v2267
        %v2396 = vmul.f32 %v2268, %v2268
        %v2397 = vmul.f32 %v2269, %v2269
        %v2398 = vmul.f32 %v2270, %v2270
        %v2399 = vmul.f32 %v2271, %v2271
        %v2400 = vmul.f32 %v2272, %v2272
        %v2401 = vmul.f32 %v2273, %v2273
        %v2402 = vmul.f32 %v2274, %v2274
        %v2403 = vmul.f32 %v2275, %v2275
        %v2404 = vmul.f32 %v2276, %v2276
        %v2405 = vmul.f32 %v2277, %v2277
        %v2406 = vmul.f32 %v2278, %v2278
        %v2407 = vmul.f32 %v2279, %v2279
        %v2408 = vmul.f32 %v2280, %v2280
        %v2409 = vmul.f32 %v2281, %v2281
        %v2410 = vmul.f32 %v2282, %v2282
        %v2411 = vmul.f32 %v2283, %v2283
        %v2412 = vmul.f32 %v2284, %v2284
        %v2413 = vmul.f32 %v2285, %v2285
        %v2414 = vmul.f32 %v2286, %v2286
        %v2415 = vmul.f32 %v2287, %v2287
        %v2416 = vmul.f32 %v2288, %v2288
        %v2417 = vmul.f32 %v2289, %v2289
        %v2418 = vmul.f32 %v2290, %v2290
        %v2419 = vmul.f32 %v2291, %v2291
        %v2420 = vmul.f32 %v2292, %v2292
        %v2421 = vmul.f32 %v2293, %v2293
        %v2422 = vmul.f32 %v2294, %v2294
        %v2423 = vmul.f32 %v2295, %v2295
        %v2424 = vmul.f32 %v2296, %v2296
        %v2425 = vmul.f32 %v2297, %v2297
        %v2426 = vmul.f32 %v2298, %v2298
        %v2427 = vmul.f32 %v2299, %v2299
        %v2428 = vmul.f32 %v2300, %v2300
        %v2429 = vmul.f32 %v2301, %v2301
        %v2430 = vmul.f32 %v2302, %v2302
        %v2431 = vmul.f32 %v2303, %v2303
        %v2432 = vmul.f32 %v2304, %v2304
        %v2433 = vmul.f32 %v2305, %v2305
        %v2434 = vmul.f32 %v2306, %v2306
        %v2435 = vmul.f32 %v2307, %v2307
        %v2436 = vmul.f32 %v2308, %v2308
        %v2437 = vmul.f32 %v2309, %v2309
        %v2438 = vmul.f32 %v2310, %v2310
        %v2439 = vmul.f32 %v2311, %v2311
        %v2440 = vmul.f32 %v2312, %v2312
        %v2441 = vadd.f32 %v2313, %v2314
        %v2442 = vadd.f32 %v2441, %v2315
        %v2443 = vadd.f32 %v2442, %v2316
        %v2444 = vadd.f32 %v2443, %v2317
        %v2445 = vadd.f32 %v2444, %v2318
        %v2446 = vadd.f32 %v2445, %v2319
        %v2447 = vadd.f32 %v2446, %v2320
        %v2448 = vadd.f32 %v2447, %v2321
        %v2449 = vadd.f32 %v2448, %v2322
        %v2450 = vadd.f32 %v2449, %v2323
        %v2451 = vadd.f32 %v2450, %v2324
        %v2452 = vadd.f32 %v2451, %v2325
        %v2453 = vadd.f32 %v2452, %v2326
        %v2454 = vadd.f32 %v2453, %v2327
        %v2455 = vadd.f32 %v2454, %v2328
        %v2456 = vadd.f32 %v2455, %v2329
        %v2457 = vadd.f32 %v2456, %v2330
        %v2458 = vadd.f32 %v2457, %v2331
        %v2459 = vadd.f32 %v2458, %v2332
        %v2460 = vadd.f32 %v2459, %v2333
        %v2461 = vadd.f32 %v2460, %v2334
        %v2462 = vadd.f32 %v2461, %v2335
        %v2463 = vadd.f32 %v2462, %v2336
        %v2464 = vadd.f32 %v2463, %v2337
        %v2465 = vadd.f32 %v2464, %v2338
        %v2466 = vadd.f32 %v2465, %v2339
        %v2467 = vadd.f32 %v2466, %v2340
        %v2468 = vadd.f32 %v2467, %v2341
        %v2469 = vadd.f32 %v2468, %v2342
        %v2470 = vadd.f32 %v2469, %v2343
        %v2471 = vadd.f32 %v2470, %v2344
        %v2472 = vadd.f32 %v2471, %v2345
        %v2473 = vadd.f32 %v2472, %v2346
        %v2474 = vadd.f32 %v2473, %v2347
        %v2475 = vadd.f32 %v2474, %v2348
        %v2476 = vadd.f32 %v2475, %v2349
        %v2477 = vadd.f32 %v2476, %v2350
        %v2478 = vadd.f32 %v2477, %v2351
        %v2479 = vadd.f32 %v2478, %v2352
        %v2480 = vadd.f32 %v2479, %v2353
        %v2481 = vadd.f32 %v2480, %v2354
        %v2482 = vadd.f32 %v2481, %v2355
        %v2483 = vadd.f32 %v2482, %v2356
        %v2484 = vadd.f32 %v2483, %v2357
        %v2485 = vadd.f32 %v2484, %v2358
        %v2486 = vadd.f32 %v2485, %v2359
        %v2487 = vadd.f32 %v2486, %v2360
        %v2488 = vadd.f32 %v2487, %v2361
        %v2489 = vadd.f32 %v2488, %v2362
        %v2490 = vadd.f32 %v2489, %v2363
        %v2491 = vadd.f32 %v2490, %v2364
        %v2492 = vadd.f32 %v2491, %v2365
        %v2493 = vadd.f32 %v2492, %v2366
        %v2494 = vadd.f32 %v2493, %v2367
        %v2495 = vadd.f32 %v2494, %v2368
        %v2496 = vadd.f32 %v2495, %v2369
        %v2497 = vadd.f32 %v2496, %v2370
        %v2498 = vadd.f32 %v2497, %v2371
        %v2499 = vadd.f32 %v2498, %v2372
        %v2500 = vadd.f32 %v2499, %v2373
        %v2501 = vadd.f32 %v2500, %v2374
        %v2502 = vadd.f32 %v2501, %v2375
        %v2503 = vadd.f32 %v2502, %v2376
        %v2504 = vadd.f32 %v2503, %v2377
        %v2505 = vadd.f32 %v2504, %v2378
        %v2506 = vadd.f32 %v2505, %v2379
        %v2507 = vadd.f32 %v2506, %v2380
        %v2508 = vadd.f32 %v2507, %v2381
        %v2509 = vadd.f32 %v2508, %v2382
        %v2510 = vadd.f32 %v2509, %v2383
        %v2511 = vadd.f32 %v2510, %v2384
        %v2512 = vadd.f32 %v2511, %v2385
        %v2513 = vadd.f32 %v2512, %v2386
        %v2514 = vadd.f32 %v2513, %v2387
        %v2515 = vadd.f32 %v2514, %v2388
        %v2516 = vadd.f32 %v2515, %v2389
        %v2517 = vadd.f32 %v2516, %v2390
        %v2518 = vadd.f32 %v2517, %v2391
        %v2519 = vadd.f32 %v2518, %v2392
        %v2520 = vadd.f32 %v2519, %v2393
        %v2521 = vadd.f32 %v2520, %v2394
        %v2522 = vadd.f32 %v2521, %v2395
        %v2523 = vadd.f32 %v2522, %v2396
        %v2524 = vadd.f32 %v2523, %v2397
        %v2525 = vadd.f32 %v2524, %v2398
        %v2526 = vadd.f32 %v2525, %v2399
        %v2527 = vadd.f32 %v2526, %v2400
        %v2528 = vadd.f32 %v2527, %v2401
        %v2529 = vadd.f32 %v2528, %v2402
        %v2530 = vadd.f32 %v2529, %v2403
        %v2531 = vadd.f32 %v2530, %v2404
        %v2532 = vadd.f32 %v2531, %v2405
        %v2533 = vadd.f32 %v2532, %v2406
        %v2534 = vadd.f32 %v2533, %v2407
        %v2535 = vadd.f32 %v2534, %v2408
        %v2536 = vadd.f32 %v2535, %v2409
        %v2537 = vadd.f32 %v2536, %v2410
        %v2538 = vadd.f32 %v2537, %v2411
        %v2539 = vadd.f32 %v2538, %v2412
        %v2540 = vadd.f32 %v2539, %v2413
        %v2541 = vadd.f32 %v2540, %v2414
        %v2542 = vadd.f32 %v2541, %v2415
        %v2543 = vadd.f32 %v2542, %v2416
        %v2544 = vadd.f32 %v2543, %v2417
        %v2545 = vadd.f32 %v2544, %v2418
        %v2546 = vadd.f32 %v2545, %v2419
        %v2547 = vadd.f32 %v2546, %v2420
        %v2548 = vadd.f32 %v2547, %v2421
        %v2549 = vadd.f32 %v2548, %v2422
        %v2550 = vadd.f32 %v2549, %v2423
        %v2551 = vadd.f32 %v2550, %v2424
        %v2552 = vadd.f32 %v2551, %v2425
        %v2553 = vadd.f32 %v2552, %v2426
        %v2554 = vadd.f32 %v2553, %v2427
        %v2555 = vadd.f32 %v2554, %v2428
        %v2556 = vadd.f32 %v2555, %v2429
        %v2557 = vadd.f32 %v2556, %v2430
        %v2558 = vadd.f32 %v2557, %v2431
        %v2559 = vadd.f32 %v2558, %v2432
        %v2560 = vadd.f32 %v2559, %v2433
        %v2561 = vadd.f32 %v2560, %v2434
        %v2562 = vadd.f32 %v2561, %v2435
        %v2563 = vadd.f32 %v2562, %v2436
        %v2564 = vadd.f32 %v2563, %v2437
        %v2565 = vadd.f32 %v2564, %v2438
        %v2566 = vadd.f32 %v2565, %v2439
        %v2567 = vadd.f32 %v2566, %v2440
        %2568 = vadd.xlane.f32.xlu0 %v2567
        %v2569 = vpop.xlane.xlu0 %2568
        %v2570 = vrot.slane %v2569, 4
        %v2571 = vadd.f32 %v2569, %v2570
        %v2572 = vrot.slane %v2571, 2
        %v2573 = vadd.f32 %v2571, %v2572
        %v2574 = vrot.slane %v2573, 1
        %v2575 = vadd.f32 %v2573, %v2574
        %s2576 = vtos %v2575
        %v2577 = vrcp.pop 131072.0
        %s2578 = vtos %v2577
        %s2579 = smul.f32 %s2576, %s2578
        %s2580 = sadd.f32 %s2579, 1e-05
        %v2581 = vstv %s2580
        %v2582 = vrsqrt.pop %v2581
        %s2583 = vtos %v2582
        %2584 = vst [vmem:[#allocation3] sm:$0xff] %v1917
        %2585 = vst [vmem:[#allocation3 + $0x8] sm:$0xff] %v1918
        %2586 = vst [vmem:[#allocation3 + $0x10] sm:$0xff] %v1919
        %2587 = vst [vmem:[#allocation3 + $0x18] sm:$0xff] %v1920
        %2588 = vst [vmem:[#allocation3 + $0x20] sm:$0xff] %v1921
        %2589 = vst [vmem:[#allocation3 + $0x28] sm:$0xff] %v1922
        %2590 = vst [vmem:[#allocation3 + $0x30] sm:$0xff] %v1923
        %2591 = vst [vmem:[#allocation3 + $0x38] sm:$0xff] %v1924
        %2592 = vst [vmem:[#allocation3 + $0x40] sm:$0xff] %v1925
        %2593 = vst [vmem:[#allocation3 + $0x48] sm:$0xff] %v1926
        %2594 = vst [vmem:[#allocation3 + $0x50] sm:$0xff] %v1927
        %2595 = vst [vmem:[#allocation3 + $0x58] sm:$0xff] %v1928
        %2596 = vst [vmem:[#allocation3 + $0x60] sm:$0xff] %v1929
        %2597 = vst [vmem:[#allocation3 + $0x68] sm:$0xff] %v1930
        %2598 = vst [vmem:[#allocation3 + $0x70] sm:$0xff] %v1931
        %2599 = vst [vmem:[#allocation3 + $0x78] sm:$0xff] %v1932
        %2600 = vst [vmem:[#allocation3 + $0x80] sm:$0xff] %v1933
        %2601 = vst [vmem:[#allocation3 + $0x88] sm:$0xff] %v1934
        %2602 = vst [vmem:[#allocation3 + $0x90] sm:$0xff] %v1935
        %2603 = vst [vmem:[#allocation3 + $0x98] sm:$0xff] %v1936
        %2604 = vst [vmem:[#allocation3 + $0xa0] sm:$0xff] %v1937
        %2605 = vst [vmem:[#allocation3 + $0xa8] sm:$0xff] %v1938
        %2606 = vst [vmem:[#allocation3 + $0xb0] sm:$0xff] %v1939
        %2607 = vst [vmem:[#allocation3 + $0xb8] sm:$0xff] %v1940
        %2608 = vst [vmem:[#allocation3 + $0xc0] sm:$0xff] %v1941
        %2609 = vst [vmem:[#allocation3 + $0xc8] sm:$0xff] %v1942
        %2610 = vst [vmem:[#allocation3 + $0xd0] sm:$0xff] %v1943
        %2611 = vst [vmem:[#allocation3 + $0xd8] sm:$0xff] %v1944
        %2612 = vst [vmem:[#allocation3 + $0xe0] sm:$0xff] %v1945
        %2613 = vst [vmem:[#allocation3 + $0xe8] sm:$0xff] %v1946
        %2614 = vst [vmem:[#allocation3 + $0xf0] sm:$0xff] %v1947
        %2615 = vst [vmem:[#allocation3 + $0xf8] sm:$0xff] %v1948
        %2616 = vst [vmem:[#allocation3 + $0x100] sm:$0xff] %v1949
        %2617 = vst [vmem:[#allocation3 + $0x108] sm:$0xff] %v1950
        %2618 = vst [vmem:[#allocation3 + $0x110] sm:$0xff] %v1951
        %2619 = vst [vmem:[#allocation3 + $0x118] sm:$0xff] %v1952
        %2620 = vst [vmem:[#allocation3 + $0x120] sm:$0xff] %v1953
        %2621 = vst [vmem:[#allocation3 + $0x128] sm:$0xff] %v1954
        %2622 = vst [vmem:[#allocation3 + $0x130] sm:$0xff] %v1955
        %2623 = vst [vmem:[#allocation3 + $0x138] sm:$0xff] %v1956
        %2624 = vst [vmem:[#allocation3 + $0x140] sm:$0xff] %v1957
        %2625 = vst [vmem:[#allocation3 + $0x148] sm:$0xff] %v1958
        %2626 = vst [vmem:[#allocation3 + $0x150] sm:$0xff] %v1959
        %2627 = vst [vmem:[#allocation3 + $0x158] sm:$0xff] %v1960
        %2628 = vst [vmem:[#allocation3 + $0x160] sm:$0xff] %v1961
        %2629 = vst [vmem:[#allocation3 + $0x168] sm:$0xff] %v1962
        %2630 = vst [vmem:[#allocation3 + $0x170] sm:$0xff] %v1963
        %2631 = vst [vmem:[#allocation3 + $0x178] sm:$0xff] %v1964
        %2632 = vst [vmem:[#allocation3 + $0x180] sm:$0xff] %v1965
        %2633 = vst [vmem:[#allocation3 + $0x188] sm:$0xff] %v1966
        %2634 = vst [vmem:[#allocation3 + $0x190] sm:$0xff] %v1967
        %2635 = vst [vmem:[#allocation3 + $0x198] sm:$0xff] %v1968
        %2636 = vst [vmem:[#allocation3 + $0x1a0] sm:$0xff] %v1969
        %2637 = vst [vmem:[#allocation3 + $0x1a8] sm:$0xff] %v1970
        %2638 = vst [vmem:[#allocation3 + $0x1b0] sm:$0xff] %v1971
        %2639 = vst [vmem:[#allocation3 + $0x1b8] sm:$0xff] %v1972
        %2640 = vst [vmem:[#allocation3 + $0x1c0] sm:$0xff] %v1973
        %2641 = vst [vmem:[#allocation3 + $0x1c8] sm:$0xff] %v1974
        %2642 = vst [vmem:[#allocation3 + $0x1d0] sm:$0xff] %v1975
        %2643 = vst [vmem:[#allocation3 + $0x1d8] sm:$0xff] %v1976
        %2644 = vst [vmem:[#allocation3 + $0x1e0] sm:$0xff] %v1977
        %2645 = vst [vmem:[#allocation3 + $0x1e8] sm:$0xff] %v1978
        %2646 = vst [vmem:[#allocation3 + $0x1f0] sm:$0xff] %v1979
        %2647 = vst [vmem:[#allocation3 + $0x1f8] sm:$0xff] %v1980
        %2648 = vst [vmem:[#allocation3 + $0x200] sm:$0xff] %v1981
        %2649 = vst [vmem:[#allocation3 + $0x208] sm:$0xff] %v1982
        %2650 = vst [vmem:[#allocation3 + $0x210] sm:$0xff] %v1983
        %2651 = vst [vmem:[#allocation3 + $0x218] sm:$0xff] %v1984
        %2652 = vst [vmem:[#allocation3 + $0x220] sm:$0xff] %v1985
        %2653 = vst [vmem:[#allocation3 + $0x228] sm:$0xff] %v1986
        %2654 = vst [vmem:[#allocation3 + $0x230] sm:$0xff] %v1987
        %2655 = vst [vmem:[#allocation3 + $0x238] sm:$0xff] %v1988
        %2656 = vst [vmem:[#allocation3 + $0x240] sm:$0xff] %v1989
        %2657 = vst [vmem:[#allocation3 + $0x248] sm:$0xff] %v1990
        %2658 = vst [vmem:[#allocation3 + $0x250] sm:$0xff] %v1991
        %2659 = vst [vmem:[#allocation3 + $0x258] sm:$0xff] %v1992
        %2660 = vst [vmem:[#allocation3 + $0x260] sm:$0xff] %v1993
        %2661 = vst [vmem:[#allocation3 + $0x268] sm:$0xff] %v1994
        %2662 = vst [vmem:[#allocation3 + $0x270] sm:$0xff] %v1995
        %2663 = vst [vmem:[#allocation3 + $0x278] sm:$0xff] %v1996
        %2664 = vst [vmem:[#allocation3 + $0x280] sm:$0xff] %v1997
        %2665 = vst [vmem:[#allocation3 + $0x288] sm:$0xff] %v1998
        %2666 = vst [vmem:[#allocation3 + $0x290] sm:$0xff] %v1999
        %2667 = vst [vmem:[#allocation3 + $0x298] sm:$0xff] %v2000
        %2668 = vst [vmem:[#allocation3 + $0x2a0] sm:$0xff] %v2001
        %2669 = vst [vmem:[#allocation3 + $0x2a8] sm:$0xff] %v2002
        %2670 = vst [vmem:[#allocation3 + $0x2b0] sm:$0xff] %v2003
        %2671 = vst [vmem:[#allocation3 + $0x2b8] sm:$0xff] %v2004
        %2672 = vst [vmem:[#allocation3 + $0x2c0] sm:$0xff] %v2005
        %2673 = vst [vmem:[#allocation3 + $0x2c8] sm:$0xff] %v2006
        %2674 = vst [vmem:[#allocation3 + $0x2d0] sm:$0xff] %v2007
        %2675 = vst [vmem:[#allocation3 + $0x2d8] sm:$0xff] %v2008
        %2676 = vst [vmem:[#allocation3 + $0x2e0] sm:$0xff] %v2009
        %2677 = vst [vmem:[#allocation3 + $0x2e8] sm:$0xff] %v2010
        %2678 = vst [vmem:[#allocation3 + $0x2f0] sm:$0xff] %v2011
        %2679 = vst [vmem:[#allocation3 + $0x2f8] sm:$0xff] %v2012
        %2680 = vst [vmem:[#allocation3 + $0x300] sm:$0xff] %v2013
        %2681 = vst [vmem:[#allocation3 + $0x308] sm:$0xff] %v2014
        %2682 = vst [vmem:[#allocation3 + $0x310] sm:$0xff] %v2015
        %2683 = vst [vmem:[#allocation3 + $0x318] sm:$0xff] %v2016
        %2684 = vst [vmem:[#allocation3 + $0x320] sm:$0xff] %v2017
        %2685 = vst [vmem:[#allocation3 + $0x328] sm:$0xff] %v2018
        %2686 = vst [vmem:[#allocation3 + $0x330] sm:$0xff] %v2019
        %2687 = vst [vmem:[#allocation3 + $0x338] sm:$0xff] %v2020
        %2688 = vst [vmem:[#allocation3 + $0x340] sm:$0xff] %v2021
        %2689 = vst [vmem:[#allocation3 + $0x348] sm:$0xff] %v2022
        %2690 = vst [vmem:[#allocation3 + $0x350] sm:$0xff] %v2023
        %2691 = vst [vmem:[#allocation3 + $0x358] sm:$0xff] %v2024
        %2692 = vst [vmem:[#allocation3 + $0x360] sm:$0xff] %v2025
        %2693 = vst [vmem:[#allocation3 + $0x368] sm:$0xff] %v2026
        %2694 = vst [vmem:[#allocation3 + $0x370] sm:$0xff] %v2027
        %2695 = vst [vmem:[#allocation3 + $0x378] sm:$0xff] %v2028
        %2696 = vst [vmem:[#allocation3 + $0x380] sm:$0xff] %v2029
        %2697 = vst [vmem:[#allocation3 + $0x388] sm:$0xff] %v2030
        %2698 = vst [vmem:[#allocation3 + $0x390] sm:$0xff] %v2031
        %2699 = vst [vmem:[#allocation3 + $0x398] sm:$0xff] %v2032
        %2700 = vst [vmem:[#allocation3 + $0x3a0] sm:$0xff] %v2033
        %2701 = vst [vmem:[#allocation3 + $0x3a8] sm:$0xff] %v2034
        %2702 = vst [vmem:[#allocation3 + $0x3b0] sm:$0xff] %v2035
        %2703 = vst [vmem:[#allocation3 + $0x3b8] sm:$0xff] %v2036
        %2704 = vst [vmem:[#allocation3 + $0x3c0] sm:$0xff] %v2037
        %2705 = vst [vmem:[#allocation3 + $0x3c8] sm:$0xff] %v2038
        %2706 = vst [vmem:[#allocation3 + $0x3d0] sm:$0xff] %v2039
        %2707 = vst [vmem:[#allocation3 + $0x3d8] sm:$0xff] %v2040
        %2708 = vst [vmem:[#allocation3 + $0x3e0] sm:$0xff] %v2041
        %2709 = vst [vmem:[#allocation3 + $0x3e8] sm:$0xff] %v2042
        %2710 = vst [vmem:[#allocation3 + $0x3f0] sm:$0xff] %v2043
        %2711 = vst [vmem:[#allocation3 + $0x3f8] sm:$0xff] %v2044
        %v2712 = vld [vmem:[#allocation3] sm:$0xff]
        %v2713 = vld [vmem:[#allocation3 + $0x8] sm:$0xff]
        %v2714 = vld [vmem:[#allocation3 + $0x20] sm:$0xff]
        %v2715 = vld [vmem:[#allocation3 + $0x28] sm:$0xff]
        %v2716 = vld [vmem:[#allocation3 + $0x40] sm:$0xff]
        %v2717 = vld [vmem:[#allocation3 + $0x48] sm:$0xff]
        %v2718 = vld [vmem:[#allocation3 + $0x60] sm:$0xff]
        %v2719 = vld [vmem:[#allocation3 + $0x68] sm:$0xff]
        %v2720 = vld [vmem:[#allocation3 + $0x80] sm:$0xff]
        %v2721 = vld [vmem:[#allocation3 + $0x88] sm:$0xff]
        %v2722 = vld [vmem:[#allocation3 + $0xa0] sm:$0xff]
        %v2723 = vld [vmem:[#allocation3 + $0xa8] sm:$0xff]
        %v2724 = vld [vmem:[#allocation3 + $0xc0] sm:$0xff]
        %v2725 = vld [vmem:[#allocation3 + $0xc8] sm:$0xff]
        %v2726 = vld [vmem:[#allocation3 + $0xe0] sm:$0xff]
        %v2727 = vld [vmem:[#allocation3 + $0xe8] sm:$0xff]
        %v2728 = vld [vmem:[#allocation3 + $0x100] sm:$0xff]
        %v2729 = vld [vmem:[#allocation3 + $0x108] sm:$0xff]
        %v2730 = vld [vmem:[#allocation3 + $0x120] sm:$0xff]
        %v2731 = vld [vmem:[#allocation3 + $0x128] sm:$0xff]
        %v2732 = vld [vmem:[#allocation3 + $0x140] sm:$0xff]
        %v2733 = vld [vmem:[#allocation3 + $0x148] sm:$0xff]
        %v2734 = vld [vmem:[#allocation3 + $0x160] sm:$0xff]
        %v2735 = vld [vmem:[#allocation3 + $0x168] sm:$0xff]
        %v2736 = vld [vmem:[#allocation3 + $0x180] sm:$0xff]
        %v2737 = vld [vmem:[#allocation3 + $0x188] sm:$0xff]
        %v2738 = vld [vmem:[#allocation3 + $0x1a0] sm:$0xff]
        %v2739 = vld [vmem:[#allocation3 + $0x1a8] sm:$0xff]
        %v2740 = vld [vmem:[#allocation3 + $0x1c0] sm:$0xff]
        %v2741 = vld [vmem:[#allocation3 + $0x1c8] sm:$0xff]
        %v2742 = vld [vmem:[#allocation3 + $0x1e0] sm:$0xff]
        %v2743 = vld [vmem:[#allocation3 + $0x1e8] sm:$0xff]
        %v2744 = vld [vmem:[#allocation3 + $0x200] sm:$0xff]
        %v2745 = vld [vmem:[#allocation3 + $0x208] sm:$0xff]
        %v2746 = vld [vmem:[#allocation3 + $0x220] sm:$0xff]
        %v2747 = vld [vmem:[#allocation3 + $0x228] sm:$0xff]
        %v2748 = vld [vmem:[#allocation3 + $0x240] sm:$0xff]
        %v2749 = vld [vmem:[#allocation3 + $0x248] sm:$0xff]
        %v2750 = vld [vmem:[#allocation3 + $0x260] sm:$0xff]
        %v2751 = vld [vmem:[#allocation3 + $0x268] sm:$0xff]
        %v2752 = vld [vmem:[#allocation3 + $0x280] sm:$0xff]
        %v2753 = vld [vmem:[#allocation3 + $0x288] sm:$0xff]
        %v2754 = vld [vmem:[#allocation3 + $0x2a0] sm:$0xff]
        %v2755 = vld [vmem:[#allocation3 + $0x2a8] sm:$0xff]
        %v2756 = vld [vmem:[#allocation3 + $0x2c0] sm:$0xff]
        %v2757 = vld [vmem:[#allocation3 + $0x2c8] sm:$0xff]
        %v2758 = vld [vmem:[#allocation3 + $0x2e0] sm:$0xff]
        %v2759 = vld [vmem:[#allocation3 + $0x2e8] sm:$0xff]
        %v2760 = vld [vmem:[#allocation3 + $0x300] sm:$0xff]
        %v2761 = vld [vmem:[#allocation3 + $0x308] sm:$0xff]
        %v2762 = vld [vmem:[#allocation3 + $0x320] sm:$0xff]
        %v2763 = vld [vmem:[#allocation3 + $0x328] sm:$0xff]
        %v2764 = vld [vmem:[#allocation3 + $0x340] sm:$0xff]
        %v2765 = vld [vmem:[#allocation3 + $0x348] sm:$0xff]
        %v2766 = vld [vmem:[#allocation3 + $0x360] sm:$0xff]
        %v2767 = vld [vmem:[#allocation3 + $0x368] sm:$0xff]
        %v2768 = vld [vmem:[#allocation3 + $0x380] sm:$0xff]
        %v2769 = vld [vmem:[#allocation3 + $0x388] sm:$0xff]
        %v2770 = vld [vmem:[#allocation3 + $0x3a0] sm:$0xff]
        %v2771 = vld [vmem:[#allocation3 + $0x3a8] sm:$0xff]
        %v2772 = vld [vmem:[#allocation3 + $0x3c0] sm:$0xff]
        %v2773 = vld [vmem:[#allocation3 + $0x3c8] sm:$0xff]
        %v2774 = vld [vmem:[#allocation3 + $0x3e0] sm:$0xff]
        %v2775 = vld [vmem:[#allocation3 + $0x3e8] sm:$0xff]
        %v2776 = vsub.f32 %v2712, %v2184
        %v2777 = vsub.f32 %v2713, %v2184
        %v2778 = vsub.f32 %v2714, %v2184
        %v2779 = vsub.f32 %v2715, %v2184
        %v2780 = vsub.f32 %v2716, %v2184
        %v2781 = vsub.f32 %v2717, %v2184
        %v2782 = vsub.f32 %v2718, %v2184
        %v2783 = vsub.f32 %v2719, %v2184
        %v2784 = vsub.f32 %v2720, %v2184
        %v2785 = vsub.f32 %v2721, %v2184
        %v2786 = vsub.f32 %v2722, %v2184
        %v2787 = vsub.f32 %v2723, %v2184
        %v2788 = vsub.f32 %v2724, %v2184
        %v2789 = vsub.f32 %v2725, %v2184
        %v2790 = vsub.f32 %v2726, %v2184
        %v2791 = vsub.f32 %v2727, %v2184
        %v2792 = vsub.f32 %v2728, %v2184
        %v2793 = vsub.f32 %v2729, %v2184
        %v2794 = vsub.f32 %v2730, %v2184
        %v2795 = vsub.f32 %v2731, %v2184
        %v2796 = vsub.f32 %v2732, %v2184
        %v2797 = vsub.f32 %v2733, %v2184
        %v2798 = vsub.f32 %v2734, %v2184
        %v2799 = vsub.f32 %v2735, %v2184
        %v2800 = vsub.f32 %v2736, %v2184
        %v2801 = vsub.f32 %v2737, %v2184
        %v2802 = vsub.f32 %v2738, %v2184
        %v2803 = vsub.f32 %v2739, %v2184
        %v2804 = vsub.f32 %v2740, %v2184
        %v2805 = vsub.f32 %v2741, %v2184
        %v2806 = vsub.f32 %v2742, %v2184
        %v2807 = vsub.f32 %v2743, %v2184
        %v2808 = vsub.f32 %v2744, %v2184
        %v2809 = vsub.f32 %v2745, %v2184
        %v2810 = vsub.f32 %v2746, %v2184
        %v2811 = vsub.f32 %v2747, %v2184
        %v2812 = vsub.f32 %v2748, %v2184
        %v2813 = vsub.f32 %v2749, %v2184
        %v2814 = vsub.f32 %v2750, %v2184
        %v2815 = vsub.f32 %v2751, %v2184
        %v2816 = vsub.f32 %v2752, %v2184
        %v2817 = vsub.f32 %v2753, %v2184
        %v2818 = vsub.f32 %v2754, %v2184
        %v2819 = vsub.f32 %v2755, %v2184
        %v2820 = vsub.f32 %v2756, %v2184
        %v2821 = vsub.f32 %v2757, %v2184
        %v2822 = vsub.f32 %v2758, %v2184
        %v2823 = vsub.f32 %v2759, %v2184
        %v2824 = vsub.f32 %v2760, %v2184
        %v2825 = vsub.f32 %v2761, %v2184
        %v2826 = vsub.f32 %v2762, %v2184
        %v2827 = vsub.f32 %v2763, %v2184
        %v2828 = vsub.f32 %v2764, %v2184
        %v2829 = vsub.f32 %v2765, %v2184
        %v2830 = vsub.f32 %v2766, %v2184
        %v2831 = vsub.f32 %v2767, %v2184
        %v2832 = vsub.f32 %v2768, %v2184
        %v2833 = vsub.f32 %v2769, %v2184
        %v2834 = vsub.f32 %v2770, %v2184
        %v2835 = vsub.f32 %v2771, %v2184
        %v2836 = vsub.f32 %v2772, %v2184
        %v2837 = vsub.f32 %v2773, %v2184
        %v2838 = vsub.f32 %v2774, %v2184
        %v2839 = vsub.f32 %v2775, %v2184
        %v2840 = vstv %s2583
        %v2841 = vmul.f32 %v2776, %v2840
        %v2842 = vmul.f32 %v2777, %v2840
        %v2843 = vmul.f32 %v2778, %v2840
        %v2844 = vmul.f32 %v2779, %v2840
        %v2845 = vmul.f32 %v2780, %v2840
        %v2846 = vmul.f32 %v2781, %v2840
        %v2847 = vmul.f32 %v2782, %v2840
        %v2848 = vmul.f32 %v2783, %v2840
        %v2849 = vmul.f32 %v2784, %v2840
        %v2850 = vmul.f32 %v2785, %v2840
        %v2851 = vmul.f32 %v2786, %v2840
        %v2852 = vmul.f32 %v2787, %v2840
        %v2853 = vmul.f32 %v2788, %v2840
        %v2854 = vmul.f32 %v2789, %v2840
        %v2855 = vmul.f32 %v2790, %v2840
        %v2856 = vmul.f32 %v2791, %v2840
        %v2857 = vmul.f32 %v2792, %v2840
        %v2858 = vmul.f32 %v2793, %v2840
        %v2859 = vmul.f32 %v2794, %v2840
        %v2860 = vmul.f32 %v2795, %v2840
        %v2861 = vmul.f32 %v2796, %v2840
        %v2862 = vmul.f32 %v2797, %v2840
        %v2863 = vmul.f32 %v2798, %v2840
        %v2864 = vmul.f32 %v2799, %v2840
        %v2865 = vmul.f32 %v2800, %v2840
        %v2866 = vmul.f32 %v2801, %v2840
        %v2867 = vmul.f32 %v2802, %v2840
        %v2868 = vmul.f32 %v2803, %v2840
        %v2869 = vmul.f32 %v2804, %v2840
        %v2870 = vmul.f32 %v2805, %v2840
        %v2871 = vmul.f32 %v2806, %v2840
        %v2872 = vmul.f32 %v2807, %v2840
        %v2873 = vmul.f32 %v2808, %v2840
        %v2874 = vmul.f32 %v2809, %v2840
        %v2875 = vmul.f32 %v2810, %v2840
        %v2876 = vmul.f32 %v2811, %v2840
        %v2877 = vmul.f32 %v2812, %v2840
        %v2878 = vmul.f32 %v2813, %v2840
        %v2879 = vmul.f32 %v2814, %v2840
        %v2880 = vmul.f32 %v2815, %v2840
        %v2881 = vmul.f32 %v2816, %v2840
        %v2882 = vmul.f32 %v2817, %v2840
        %v2883 = vmul.f32 %v2818, %v2840
        %v2884 = vmul.f32 %v2819, %v2840
        %v2885 = vmul.f32 %v2820, %v2840
        %v2886 = vmul.f32 %v2821, %v2840
        %v2887 = vmul.f32 %v2822, %v2840
        %v2888 = vmul.f32 %v2823, %v2840
        %v2889 = vmul.f32 %v2824, %v2840
        %v2890 = vmul.f32 %v2825, %v2840
        %v2891 = vmul.f32 %v2826, %v2840
        %v2892 = vmul.f32 %v2827, %v2840
        %v2893 = vmul.f32 %v2828, %v2840
        %v2894 = vmul.f32 %v2829, %v2840
        %v2895 = vmul.f32 %v2830, %v2840
        %v2896 = vmul.f32 %v2831, %v2840
        %v2897 = vmul.f32 %v2832, %v2840
        %v2898 = vmul.f32 %v2833, %v2840
        %v2899 = vmul.f32 %v2834, %v2840
        %v2900 = vmul.f32 %v2835, %v2840
        %v2901 = vmul.f32 %v2836, %v2840
        %v2902 = vmul.f32 %v2837, %v2840
        %v2903 = vmul.f32 %v2838, %v2840
        %v2904 = vmul.f32 %v2839, %v2840
        %v2905 = vld [vmem:[#allocation25] sm:$0xff]
        %v2906 = vld [vmem:[#allocation25 + $0x10] sm:$0xff]
        %v2907 = vld [vmem:[#allocation25 + $0x20] sm:$0xff]
        %v2908 = vld [vmem:[#allocation25 + $0x30] sm:$0xff]
        %v2909 = vld [vmem:[#allocation25 + $0x40] sm:$0xff]
        %v2910 = vld [vmem:[#allocation25 + $0x50] sm:$0xff]
        %v2911 = vld [vmem:[#allocation25 + $0x60] sm:$0xff]
        %v2912 = vld [vmem:[#allocation25 + $0x70] sm:$0xff]
        %v2913 = vld [vmem:[#allocation25 + $0x80] sm:$0xff]
        %v2914 = vld [vmem:[#allocation25 + $0x90] sm:$0xff]
        %v2915 = vld [vmem:[#allocation25 + $0xa0] sm:$0xff]
        %v2916 = vld [vmem:[#allocation25 + $0xb0] sm:$0xff]
        %v2917 = vld [vmem:[#allocation25 + $0xc0] sm:$0xff]
        %v2918 = vld [vmem:[#allocation25 + $0xd0] sm:$0xff]
        %v2919 = vld [vmem:[#allocation25 + $0xe0] sm:$0xff]
        %v2920 = vld [vmem:[#allocation25 + $0xf0] sm:$0xff]
        %v2921 = vld [vmem:[#allocation25 + $0x100] sm:$0xff]
        %v2922 = vld [vmem:[#allocation25 + $0x110] sm:$0xff]
        %v2923 = vld [vmem:[#allocation25 + $0x120] sm:$0xff]
        %v2924 = vld [vmem:[#allocation25 + $0x130] sm:$0xff]
        %v2925 = vld [vmem:[#allocation25 + $0x140] sm:$0xff]
        %v2926 = vld [vmem:[#allocation25 + $0x150] sm:$0xff]
        %v2927 = vld [vmem:[#allocation25 + $0x160] sm:$0xff]
        %v2928 = vld [vmem:[#allocation25 + $0x170] sm:$0xff]
        %v2929 = vld [vmem:[#allocation25 + $0x180] sm:$0xff]
        %v2930 = vld [vmem:[#allocation25 + $0x190] sm:$0xff]
        %v2931 = vld [vmem:[#allocation25 + $0x1a0] sm:$0xff]
        %v2932 = vld [vmem:[#allocation25 + $0x1b0] sm:$0xff]
        %v2933 = vld [vmem:[#allocation25 + $0x1c0] sm:$0xff]
        %v2934 = vld [vmem:[#allocation25 + $0x1d0] sm:$0xff]
        %v2935 = vld [vmem:[#allocation25 + $0x1e0] sm:$0xff]
        %v2936 = vld [vmem:[#allocation25 + $0x1f0] sm:$0xff]
        %v2937 = vunpack.c.l.bf16 %v2905
        %v2938 = vunpack.c.h.bf16 %v2905
        %v2939 = vunpack.c.l.bf16 %v2906
        %v2940 = vunpack.c.h.bf16 %v2906
        %v2941 = vunpack.c.l.bf16 %v2907
        %v2942 = vunpack.c.h.bf16 %v2907
        %v2943 = vunpack.c.l.bf16 %v2908
        %v2944 = vunpack.c.h.bf16 %v2908
        %v2945 = vunpack.c.l.bf16 %v2909
        %v2946 = vunpack.c.h.bf16 %v2909
        %v2947 = vunpack.c.l.bf16 %v2910
        %v2948 = vunpack.c.h.bf16 %v2910
        %v2949 = vunpack.c.l.bf16 %v2911
        %v2950 = vunpack.c.h.bf16 %v2911
        %v2951 = vunpack.c.l.bf16 %v2912
        %v2952 = vunpack.c.h.bf16 %v2912
        %v2953 = vunpack.c.l.bf16 %v2913
        %v2954 = vunpack.c.h.bf16 %v2913
        %v2955 = vunpack.c.l.bf16 %v2914
        %v2956 = vunpack.c.h.bf16 %v2914
        %v2957 = vunpack.c.l.bf16 %v2915
        %v2958 = vunpack.c.h.bf16 %v2915
        %v2959 = vunpack.c.l.bf16 %v2916
        %v2960 = vunpack.c.h.bf16 %v2916
        %v2961 = vunpack.c.l.bf16 %v2917
        %v2962 = vunpack.c.h.bf16 %v2917
        %v2963 = vunpack.c.l.bf16 %v2918
        %v2964 = vunpack.c.h.bf16 %v2918
        %v2965 = vunpack.c.l.bf16 %v2919
        %v2966 = vunpack.c.h.bf16 %v2919
        %v2967 = vunpack.c.l.bf16 %v2920
        %v2968 = vunpack.c.h.bf16 %v2920
        %v2969 = vunpack.c.l.bf16 %v2921
        %v2970 = vunpack.c.h.bf16 %v2921
        %v2971 = vunpack.c.l.bf16 %v2922
        %v2972 = vunpack.c.h.bf16 %v2922
        %v2973 = vunpack.c.l.bf16 %v2923
        %v2974 = vunpack.c.h.bf16 %v2923
        %v2975 = vunpack.c.l.bf16 %v2924
        %v2976 = vunpack.c.h.bf16 %v2924
        %v2977 = vunpack.c.l.bf16 %v2925
        %v2978 = vunpack.c.h.bf16 %v2925
        %v2979 = vunpack.c.l.bf16 %v2926
        %v2980 = vunpack.c.h.bf16 %v2926
        %v2981 = vunpack.c.l.bf16 %v2927
        %v2982 = vunpack.c.h.bf16 %v2927
        %v2983 = vunpack.c.l.bf16 %v2928
        %v2984 = vunpack.c.h.bf16 %v2928
        %v2985 = vunpack.c.l.bf16 %v2929
        %v2986 = vunpack.c.h.bf16 %v2929
        %v2987 = vunpack.c.l.bf16 %v2930
        %v2988 = vunpack.c.h.bf16 %v2930
        %v2989 = vunpack.c.l.bf16 %v2931
        %v2990 = vunpack.c.h.bf16 %v2931
        %v2991 = vunpack.c.l.bf16 %v2932
        %v2992 = vunpack.c.h.bf16 %v2932
        %v2993 = vunpack.c.l.bf16 %v2933
        %v2994 = vunpack.c.h.bf16 %v2933
        %v2995 = vunpack.c.l.bf16 %v2934
        %v2996 = vunpack.c.h.bf16 %v2934
        %v2997 = vunpack.c.l.bf16 %v2935
        %v2998 = vunpack.c.h.bf16 %v2935
        %v2999 = vunpack.c.l.bf16 %v2936
        %v3000 = vunpack.c.h.bf16 %v2936
        %v3001 = vmul.f32 %v2841, %v2937
        %v3002 = vmul.f32 %v2842, %v2938
        %v3003 = vmul.f32 %v2843, %v2939
        %v3004 = vmul.f32 %v2844, %v2940
        %v3005 = vmul.f32 %v2845, %v2941
        %v3006 = vmul.f32 %v2846, %v2942
        %v3007 = vmul.f32 %v2847, %v2943
        %v3008 = vmul.f32 %v2848, %v2944
        %v3009 = vmul.f32 %v2849, %v2945
        %v3010 = vmul.f32 %v2850, %v2946
        %v3011 = vmul.f32 %v2851, %v2947
        %v3012 = vmul.f32 %v2852, %v2948
        %v3013 = vmul.f32 %v2853, %v2949
        %v3014 = vmul.f32 %v2854, %v2950
        %v3015 = vmul.f32 %v2855, %v2951
        %v3016 = vmul.f32 %v2856, %v2952
        %v3017 = vmul.f32 %v2857, %v2953
        %v3018 = vmul.f32 %v2858, %v2954
        %v3019 = vmul.f32 %v2859, %v2955
        %v3020 = vmul.f32 %v2860, %v2956
        %v3021 = vmul.f32 %v2861, %v2957
        %v3022 = vmul.f32 %v2862, %v2958
        %v3023 = vmul.f32 %v2863, %v2959
        %v3024 = vmul.f32 %v2864, %v2960
        %v3025 = vmul.f32 %v2865, %v2961
        %v3026 = vmul.f32 %v2866, %v2962
        %v3027 = vmul.f32 %v2867, %v2963
        %v3028 = vmul.f32 %v2868, %v2964
        %v3029 = vmul.f32 %v2869, %v2965
        %v3030 = vmul.f32 %v2870, %v2966
        %v3031 = vmul.f32 %v2871, %v2967
        %v3032 = vmul.f32 %v2872, %v2968
        %v3033 = vmul.f32 %v2873, %v2969
        %v3034 = vmul.f32 %v2874, %v2970
        %v3035 = vmul.f32 %v2875, %v2971
        %v3036 = vmul.f32 %v2876, %v2972
        %v3037 = vmul.f32 %v2877, %v2973
        %v3038 = vmul.f32 %v2878, %v2974
        %v3039 = vmul.f32 %v2879, %v2975
        %v3040 = vmul.f32 %v2880, %v2976
        %v3041 = vmul.f32 %v2881, %v2977
        %v3042 = vmul.f32 %v2882, %v2978
        %v3043 = vmul.f32 %v2883, %v2979
        %v3044 = vmul.f32 %v2884, %v2980
        %v3045 = vmul.f32 %v2885, %v2981
        %v3046 = vmul.f32 %v2886, %v2982
        %v3047 = vmul.f32 %v2887, %v2983
        %v3048 = vmul.f32 %v2888, %v2984
        %v3049 = vmul.f32 %v2889, %v2985
        %v3050 = vmul.f32 %v2890, %v2986
        %v3051 = vmul.f32 %v2891, %v2987
        %v3052 = vmul.f32 %v2892, %v2988
        %v3053 = vmul.f32 %v2893, %v2989
        %v3054 = vmul.f32 %v2894, %v2990
        %v3055 = vmul.f32 %v2895, %v2991
        %v3056 = vmul.f32 %v2896, %v2992
        %v3057 = vmul.f32 %v2897, %v2993
        %v3058 = vmul.f32 %v2898, %v2994
        %v3059 = vmul.f32 %v2899, %v2995
        %v3060 = vmul.f32 %v2900, %v2996
        %v3061 = vmul.f32 %v2901, %v2997
        %v3062 = vmul.f32 %v2902, %v2998
        %v3063 = vmul.f32 %v2903, %v2999
        %v3064 = vmul.f32 %v2904, %v3000
        %v3065 = vld [vmem:[#allocation26] sm:$0xff]
        %v3066 = vld [vmem:[#allocation26 + $0x10] sm:$0xff]
        %v3067 = vld [vmem:[#allocation26 + $0x20] sm:$0xff]
        %v3068 = vld [vmem:[#allocation26 + $0x30] sm:$0xff]
        %v3069 = vld [vmem:[#allocation26 + $0x40] sm:$0xff]
        %v3070 = vld [vmem:[#allocation26 + $0x50] sm:$0xff]
        %v3071 = vld [vmem:[#allocation26 + $0x60] sm:$0xff]
        %v3072 = vld [vmem:[#allocation26 + $0x70] sm:$0xff]
        %v3073 = vld [vmem:[#allocation26 + $0x80] sm:$0xff]
        %v3074 = vld [vmem:[#allocation26 + $0x90] sm:$0xff]
        %v3075 = vld [vmem:[#allocation26 + $0xa0] sm:$0xff]
        %v3076 = vld [vmem:[#allocation26 + $0xb0] sm:$0xff]
        %v3077 = vld [vmem:[#allocation26 + $0xc0] sm:$0xff]
        %v3078 = vld [vmem:[#allocation26 + $0xd0] sm:$0xff]
        %v3079 = vld [vmem:[#allocation26 + $0xe0] sm:$0xff]
        %v3080 = vld [vmem:[#allocation26 + $0xf0] sm:$0xff]
        %v3081 = vld [vmem:[#allocation26 + $0x100] sm:$0xff]
        %v3082 = vld [vmem:[#allocation26 + $0x110] sm:$0xff]
        %v3083 = vld [vmem:[#allocation26 + $0x120] sm:$0xff]
        %v3084 = vld [vmem:[#allocation26 + $0x130] sm:$0xff]
        %v3085 = vld [vmem:[#allocation26 + $0x140] sm:$0xff]
        %v3086 = vld [vmem:[#allocation26 + $0x150] sm:$0xff]
        %v3087 = vld [vmem:[#allocation26 + $0x160] sm:$0xff]
        %v3088 = vld [vmem:[#allocation26 + $0x170] sm:$0xff]
        %v3089 = vld [vmem:[#allocation26 + $0x180] sm:$0xff]
        %v3090 = vld [vmem:[#allocation26 + $0x190] sm:$0xff]
        %v3091 = vld [vmem:[#allocation26 + $0x1a0] sm:$0xff]
        %v3092 = vld [vmem:[#allocation26 + $0x1b0] sm:$0xff]
        %v3093 = vld [vmem:[#allocation26 + $0x1c0] sm:$0xff]
        %v3094 = vld [vmem:[#allocation26 + $0x1d0] sm:$0xff]
        %v3095 = vld [vmem:[#allocation26 + $0x1e0] sm:$0xff]
        %v3096 = vld [vmem:[#allocation26 + $0x1f0] sm:$0xff]
        %v3097 = vunpack.c.l.bf16 %v3065
        %v3098 = vunpack.c.h.bf16 %v3065
        %v3099 = vunpack.c.l.bf16 %v3066
        %v3100 = vunpack.c.h.bf16 %v3066
        %v3101 = vunpack.c.l.bf16 %v3067
        %v3102 = vunpack.c.h.bf16 %v3067
        %v3103 = vunpack.c.l.bf16 %v3068
        %v3104 = vunpack.c.h.bf16 %v3068
        %v3105 = vunpack.c.l.bf16 %v3069
        %v3106 = vunpack.c.h.bf16 %v3069
        %v3107 = vunpack.c.l.bf16 %v3070
        %v3108 = vunpack.c.h.bf16 %v3070
        %v3109 = vunpack.c.l.bf16 %v3071
        %v3110 = vunpack.c.h.bf16 %v3071
        %v3111 = vunpack.c.l.bf16 %v3072
        %v3112 = vunpack.c.h.bf16 %v3072
        %v3113 = vunpack.c.l.bf16 %v3073
        %v3114 = vunpack.c.h.bf16 %v3073
        %v3115 = vunpack.c.l.bf16 %v3074
        %v3116 = vunpack.c.h.bf16 %v3074
        %v3117 = vunpack.c.l.bf16 %v3075
        %v3118 = vunpack.c.h.bf16 %v3075
        %v3119 = vunpack.c.l.bf16 %v3076
        %v3120 = vunpack.c.h.bf16 %v3076
        %v3121 = vunpack.c.l.bf16 %v3077
        %v3122 = vunpack.c.h.bf16 %v3077
        %v3123 = vunpack.c.l.bf16 %v3078
        %v3124 = vunpack.c.h.bf16 %v3078
        %v3125 = vunpack.c.l.bf16 %v3079
        %v3126 = vunpack.c.h.bf16 %v3079
        %v3127 = vunpack.c.l.bf16 %v3080
        %v3128 = vunpack.c.h.bf16 %v3080
        %v3129 = vunpack.c.l.bf16 %v3081
        %v3130 = vunpack.c.h.bf16 %v3081
        %v3131 = vunpack.c.l.bf16 %v3082
        %v3132 = vunpack.c.h.bf16 %v3082
        %v3133 = vunpack.c.l.bf16 %v3083
        %v3134 = vunpack.c.h.bf16 %v3083
        %v3135 = vunpack.c.l.bf16 %v3084
        %v3136 = vunpack.c.h.bf16 %v3084
        %v3137 = vunpack.c.l.bf16 %v3085
        %v3138 = vunpack.c.h.bf16 %v3085
        %v3139 = vunpack.c.l.bf16 %v3086
        %v3140 = vunpack.c.h.bf16 %v3086
        %v3141 = vunpack.c.l.bf16 %v3087
        %v3142 = vunpack.c.h.bf16 %v3087
        %v3143 = vunpack.c.l.bf16 %v3088
        %v3144 = vunpack.c.h.bf16 %v3088
        %v3145 = vunpack.c.l.bf16 %v3089
        %v3146 = vunpack.c.h.bf16 %v3089
        %v3147 = vunpack.c.l.bf16 %v3090
        %v3148 = vunpack.c.h.bf16 %v3090
        %v3149 = vunpack.c.l.bf16 %v3091
        %v3150 = vunpack.c.h.bf16 %v3091
        %v3151 = vunpack.c.l.bf16 %v3092
        %v3152 = vunpack.c.h.bf16 %v3092
        %v3153 = vunpack.c.l.bf16 %v3093
        %v3154 = vunpack.c.h.bf16 %v3093
        %v3155 = vunpack.c.l.bf16 %v3094
        %v3156 = vunpack.c.h.bf16 %v3094
        %v3157 = vunpack.c.l.bf16 %v3095
        %v3158 = vunpack.c.h.bf16 %v3095
        %v3159 = vunpack.c.l.bf16 %v3096
        %v3160 = vunpack.c.h.bf16 %v3096
        %v3161 = vadd.f32 %v3001, %v3097
        %v3162 = vadd.f32 %v3002, %v3098
        %v3163 = vadd.f32 %v3003, %v3099
        %v3164 = vadd.f32 %v3004, %v3100
        %v3165 = vadd.f32 %v3005, %v3101
        %v3166 = vadd.f32 %v3006, %v3102
        %v3167 = vadd.f32 %v3007, %v3103
        %v3168 = vadd.f32 %v3008, %v3104
        %v3169 = vadd.f32 %v3009, %v3105
        %v3170 = vadd.f32 %v3010, %v3106
        %v3171 = vadd.f32 %v3011, %v3107
        %v3172 = vadd.f32 %v3012, %v3108
        %v3173 = vadd.f32 %v3013, %v3109
        %v3174 = vadd.f32 %v3014, %v3110
        %v3175 = vadd.f32 %v3015, %v3111
        %v3176 = vadd.f32 %v3016, %v3112
        %v3177 = vadd.f32 %v3017, %v3113
        %v3178 = vadd.f32 %v3018, %v3114
        %v3179 = vadd.f32 %v3019, %v3115
        %v3180 = vadd.f32 %v3020, %v3116
        %v3181 = vadd.f32 %v3021, %v3117
        %v3182 = vadd.f32 %v3022, %v3118
        %v3183 = vadd.f32 %v3023, %v3119
        %v3184 = vadd.f32 %v3024, %v3120
        %v3185 = vadd.f32 %v3025, %v3121
        %v3186 = vadd.f32 %v3026, %v3122
        %v3187 = vadd.f32 %v3027, %v3123
        %v3188 = vadd.f32 %v3028, %v3124
        %v3189 = vadd.f32 %v3029, %v3125
        %v3190 = vadd.f32 %v3030, %v3126
        %v3191 = vadd.f32 %v3031, %v3127
        %v3192 = vadd.f32 %v3032, %v3128
        %v3193 = vadd.f32 %v3033, %v3129
        %v3194 = vadd.f32 %v3034, %v3130
        %v3195 = vadd.f32 %v3035, %v3131
        %v3196 = vadd.f32 %v3036, %v3132
        %v3197 = vadd.f32 %v3037, %v3133
        %v3198 = vadd.f32 %v3038, %v3134
        %v3199 = vadd.f32 %v3039, %v3135
        %v3200 = vadd.f32 %v3040, %v3136
        %v3201 = vadd.f32 %v3041, %v3137
        %v3202 = vadd.f32 %v3042, %v3138
        %v3203 = vadd.f32 %v3043, %v3139
        %v3204 = vadd.f32 %v3044, %v3140
        %v3205 = vadd.f32 %v3045, %v3141
        %v3206 = vadd.f32 %v3046, %v3142
        %v3207 = vadd.f32 %v3047, %v3143
        %v3208 = vadd.f32 %v3048, %v3144
        %v3209 = vadd.f32 %v3049, %v3145
        %v3210 = vadd.f32 %v3050, %v3146
        %v3211 = vadd.f32 %v3051, %v3147
        %v3212 = vadd.f32 %v3052, %v3148
        %v3213 = vadd.f32 %v3053, %v3149
        %v3214 = vadd.f32 %v3054, %v3150
        %v3215 = vadd.f32 %v3055, %v3151
        %v3216 = vadd.f32 %v3056, %v3152
        %v3217 = vadd.f32 %v3057, %v3153
        %v3218 = vadd.f32 %v3058, %v3154
        %v3219 = vadd.f32 %v3059, %v3155
        %v3220 = vadd.f32 %v3060, %v3156
        %v3221 = vadd.f32 %v3061, %v3157
        %v3222 = vadd.f32 %v3062, %v3158
        %v3223 = vadd.f32 %v3063, %v3159
        %v3224 = vadd.f32 %v3064, %v3160
        %v3225 = vpack.c.bf16 %v3163, %v3161
        %v3226 = vpack.c.bf16 %v3164, %v3162
        %v3227 = vpack.c.bf16 %v3167, %v3165
        %v3228 = vpack.c.bf16 %v3168, %v3166
        %v3229 = vpack.c.bf16 %v3171, %v3169
        %v3230 = vpack.c.bf16 %v3172, %v3170
        %v3231 = vpack.c.bf16 %v3175, %v3173
        %v3232 = vpack.c.bf16 %v3176, %v3174
        %v3233 = vpack.c.bf16 %v3179, %v3177
        %v3234 = vpack.c.bf16 %v3180, %v3178
        %v3235 = vpack.c.bf16 %v3183, %v3181
        %v3236 = vpack.c.bf16 %v3184, %v3182
        %v3237 = vpack.c.bf16 %v3187, %v3185
        %v3238 = vpack.c.bf16 %v3188, %v3186
        %v3239 = vpack.c.bf16 %v3191, %v3189
        %v3240 = vpack.c.bf16 %v3192, %v3190
        %v3241 = vpack.c.bf16 %v3195, %v3193
        %v3242 = vpack.c.bf16 %v3196, %v3194
        %v3243 = vpack.c.bf16 %v3199, %v3197
        %v3244 = vpack.c.bf16 %v3200, %v3198
        %v3245 = vpack.c.bf16 %v3203, %v3201
        %v3246 = vpack.c.bf16 %v3204, %v3202
        %v3247 = vpack.c.bf16 %v3207, %v3205
        %v3248 = vpack.c.bf16 %v3208, %v3206
        %v3249 = vpack.c.bf16 %v3211, %v3209
        %v3250 = vpack.c.bf16 %v3212, %v3210
        %v3251 = vpack.c.bf16 %v3215, %v3213
        %v3252 = vpack.c.bf16 %v3216, %v3214
        %v3253 = vpack.c.bf16 %v3219, %v3217
        %v3254 = vpack.c.bf16 %v3220, %v3218
        %v3255 = vpack.c.bf16 %v3223, %v3221
        %v3256 = vpack.c.bf16 %v3224, %v3222
        %3257 = vst [vmem:[#allocation5] sm:$0xff] %v3225
        %3258 = vst [vmem:[#allocation5 + $0x8] sm:$0xff] %v3226
        %3259 = vst [vmem:[#allocation5 + $0x10] sm:$0xff] %v3227
        %3260 = vst [vmem:[#allocation5 + $0x18] sm:$0xff] %v3228
        %3261 = vst [vmem:[#allocation5 + $0x20] sm:$0xff] %v3229
        %3262 = vst [vmem:[#allocation5 + $0x28] sm:$0xff] %v3230
        %3263 = vst [vmem:[#allocation5 + $0x30] sm:$0xff] %v3231
        %3264 = vst [vmem:[#allocation5 + $0x38] sm:$0xff] %v3232
        %3265 = vst [vmem:[#allocation5 + $0x40] sm:$0xff] %v3233
        %3266 = vst [vmem:[#allocation5 + $0x48] sm:$0xff] %v3234
        %3267 = vst [vmem:[#allocation5 + $0x50] sm:$0xff] %v3235
        %3268 = vst [vmem:[#allocation5 + $0x58] sm:$0xff] %v3236
        %3269 = vst [vmem:[#allocation5 + $0x60] sm:$0xff] %v3237
        %3270 = vst [vmem:[#allocation5 + $0x68] sm:$0xff] %v3238
        %3271 = vst [vmem:[#allocation5 + $0x70] sm:$0xff] %v3239
        %3272 = vst [vmem:[#allocation5 + $0x78] sm:$0xff] %v3240
        %3273 = vst [vmem:[#allocation5 + $0x80] sm:$0xff] %v3241
        %3274 = vst [vmem:[#allocation5 + $0x88] sm:$0xff] %v3242
        %3275 = vst [vmem:[#allocation5 + $0x90] sm:$0xff] %v3243
        %3276 = vst [vmem:[#allocation5 + $0x98] sm:$0xff] %v3244
        %3277 = vst [vmem:[#allocation5 + $0xa0] sm:$0xff] %v3245
        %3278 = vst [vmem:[#allocation5 + $0xa8] sm:$0xff] %v3246
        %3279 = vst [vmem:[#allocation5 + $0xb0] sm:$0xff] %v3247
        %3280 = vst [vmem:[#allocation5 + $0xb8] sm:$0xff] %v3248
        %3281 = vst [vmem:[#allocation5 + $0xc0] sm:$0xff] %v3249
        %3282 = vst [vmem:[#allocation5 + $0xc8] sm:$0xff] %v3250
        %3283 = vst [vmem:[#allocation5 + $0xd0] sm:$0xff] %v3251
        %3284 = vst [vmem:[#allocation5 + $0xd8] sm:$0xff] %v3252
        %3285 = vst [vmem:[#allocation5 + $0xe0] sm:$0xff] %v3253
        %3286 = vst [vmem:[#allocation5 + $0xe8] sm:$0xff] %v3254
        %3287 = vst [vmem:[#allocation5 + $0xf0] sm:$0xff] %v3255
        %3288 = vst [vmem:[#allocation5 + $0xf8] sm:$0xff] %v3256
        %v3289 = vld [vmem:[#allocation3 + $0x10] sm:$0xff]
        %v3290 = vld [vmem:[#allocation3 + $0x18] sm:$0xff]
        %v3291 = vld [vmem:[#allocation3 + $0x30] sm:$0xff]
        %v3292 = vld [vmem:[#allocation3 + $0x38] sm:$0xff]
        %v3293 = vld [vmem:[#allocation3 + $0x50] sm:$0xff]
        %v3294 = vld [vmem:[#allocation3 + $0x58] sm:$0xff]
        %v3295 = vld [vmem:[#allocation3 + $0x70] sm:$0xff]
        %v3296 = vld [vmem:[#allocation3 + $0x78] sm:$0xff]
        %v3297 = vld [vmem:[#allocation3 + $0x90] sm:$0xff]
        %v3298 = vld [vmem:[#allocation3 + $0x98] sm:$0xff]
        %v3299 = vld [vmem:[#allocation3 + $0xb0] sm:$0xff]
        %v3300 = vld [vmem:[#allocation3 + $0xb8] sm:$0xff]
        %v3301 = vld [vmem:[#allocation3 + $0xd0] sm:$0xff]
        %v3302 = vld [vmem:[#allocation3 + $0xd8] sm:$0xff]
        %v3303 = vld [vmem:[#allocation3 + $0xf0] sm:$0xff]
        %v3304 = vld [vmem:[#allocation3 + $0xf8] sm:$0xff]
        %v3305 = vld [vmem:[#allocation3 + $0x110] sm:$0xff]
        %v3306 = vld [vmem:[#allocation3 + $0x118] sm:$0xff]
        %v3307 = vld [vmem:[#allocation3 + $0x130] sm:$0xff]
        %v3308 = vld [vmem:[#allocation3 + $0x138] sm:$0xff]
        %v3309 = vld [vmem:[#allocation3 + $0x150] sm:$0xff]
        %v3310 = vld [vmem:[#allocation3 + $0x158] sm:$0xff]
        %v3311 = vld [vmem:[#allocation3 + $0x170] sm:$0xff]
        %v3312 = vld [vmem:[#allocation3 + $0x178] sm:$0xff]
        %v3313 = vld [vmem:[#allocation3 + $0x190] sm:$0xff]
        %v3314 = vld [vmem:[#allocation3 + $0x198] sm:$0xff]
        %v3315 = vld [vmem:[#allocation3 + $0x1b0] sm:$0xff]
        %v3316 = vld [vmem:[#allocation3 + $0x1b8] sm:$0xff]
        %v3317 = vld [vmem:[#allocation3 + $0x1d0] sm:$0xff]
        %v3318 = vld [vmem:[#allocation3 + $0x1d8] sm:$0xff]
        %v3319 = vld [vmem:[#allocation3 + $0x1f0] sm:$0xff]
        %v3320 = vld [vmem:[#allocation3 + $0x1f8] sm:$0xff]
        %v3321 = vld [vmem:[#allocation3 + $0x210] sm:$0xff]
        %v3322 = vld [vmem:[#allocation3 + $0x218] sm:$0xff]
        %v3323 = vld [vmem:[#allocation3 + $0x230] sm:$0xff]
        %v3324 = vld [vmem:[#allocation3 + $0x238] sm:$0xff]
        %v3325 = vld [vmem:[#allocation3 + $0x250] sm:$0xff]
        %v3326 = vld [vmem:[#allocation3 + $0x258] sm:$0xff]
        %v3327 = vld [vmem:[#allocation3 + $0x270] sm:$0xff]
        %v3328 = vld [vmem:[#allocation3 + $0x278] sm:$0xff]
        %v3329 = vld [vmem:[#allocation3 + $0x290] sm:$0xff]
        %v3330 = vld [vmem:[#allocation3 + $0x298] sm:$0xff]
        %v3331 = vld [vmem:[#allocation3 + $0x2b0] sm:$0xff]
        %v3332 = vld [vmem:[#allocation3 + $0x2b8] sm:$0xff]
        %v3333 = vld [vmem:[#allocation3 + $0x2d0] sm:$0xff]
        %v3334 = vld [vmem:[#allocation3 + $0x2d8] sm:$0xff]
        %v3335 = vld [vmem:[#allocation3 + $0x2f0] sm:$0xff]
        %v3336 = vld [vmem:[#allocation3 + $0x2f8] sm:$0xff]
        %v3337 = vld [vmem:[#allocation3 + $0x310] sm:$0xff]
        %v3338 = vld [vmem:[#allocation3 + $0x318] sm:$0xff]
        %v3339 = vld [vmem:[#allocation3 + $0x330] sm:$0xff]
        %v3340 = vld [vmem:[#allocation3 + $0x338] sm:$0xff]
        %v3341 = vld [vmem:[#allocation3 + $0x350] sm:$0xff]
        %v3342 = vld [vmem:[#allocation3 + $0x358] sm:$0xff]
        %v3343 = vld [vmem:[#allocation3 + $0x370] sm:$0xff]
        %v3344 = vld [vmem:[#allocation3 + $0x378] sm:$0xff]
        %v3345 = vld [vmem:[#allocation3 + $0x390] sm:$0xff]
        %v3346 = vld [vmem:[#allocation3 + $0x398] sm:$0xff]
        %v3347 = vld [vmem:[#allocation3 + $0x3b0] sm:$0xff]
        %v3348 = vld [vmem:[#allocation3 + $0x3b8] sm:$0xff]
        %v3349 = vld [vmem:[#allocation3 + $0x3d0] sm:$0xff]
        %v3350 = vld [vmem:[#allocation3 + $0x3d8] sm:$0xff]
        %v3351 = vld [vmem:[#allocation3 + $0x3f0] sm:$0xff]
        %v3352 = vld [vmem:[#allocation3 + $0x3f8] sm:$0xff]
        %v3353 = vsub.f32 %v3289, %v2184
        %v3354 = vsub.f32 %v3290, %v2184
        %v3355 = vsub.f32 %v3291, %v2184
        %v3356 = vsub.f32 %v3292, %v2184
        %v3357 = vsub.f32 %v3293, %v2184
        %v3358 = vsub.f32 %v3294, %v2184
        %v3359 = vsub.f32 %v3295, %v2184
        %v3360 = vsub.f32 %v3296, %v2184
        %v3361 = vsub.f32 %v3297, %v2184
        %v3362 = vsub.f32 %v3298, %v2184
        %v3363 = vsub.f32 %v3299, %v2184
        %v3364 = vsub.f32 %v3300, %v2184
        %v3365 = vsub.f32 %v3301, %v2184
        %v3366 = vsub.f32 %v3302, %v2184
        %v3367 = vsub.f32 %v3303, %v2184
        %v3368 = vsub.f32 %v3304, %v2184
        %v3369 = vsub.f32 %v3305, %v2184
        %v3370 = vsub.f32 %v3306, %v2184
        %v3371 = vsub.f32 %v3307, %v2184
        %v3372 = vsub.f32 %v3308, %v2184
        %v3373 = vsub.f32 %v3309, %v2184
        %v3374 = vsub.f32 %v3310, %v2184
        %v3375 = vsub.f32 %v3311, %v2184
        %v3376 = vsub.f32 %v3312, %v2184
        %v3377 = vsub.f32 %v3313, %v2184
        %v3378 = vsub.f32 %v3314, %v2184
        %v3379 = vsub.f32 %v3315, %v2184
        %v3380 = vsub.f32 %v3316, %v2184
        %v3381 = vsub.f32 %v3317, %v2184
        %v3382 = vsub.f32 %v3318, %v2184
        %v3383 = vsub.f32 %v3319, %v2184
        %v3384 = vsub.f32 %v3320, %v2184
        %v3385 = vsub.f32 %v3321, %v2184
        %v3386 = vsub.f32 %v3322, %v2184
        %v3387 = vsub.f32 %v3323, %v2184
        %v3388 = vsub.f32 %v3324, %v2184
        %v3389 = vsub.f32 %v3325, %v2184
        %v3390 = vsub.f32 %v3326, %v2184
        %v3391 = vsub.f32 %v3327, %v2184
        %v3392 = vsub.f32 %v3328, %v2184
        %v3393 = vsub.f32 %v3329, %v2184
        %v3394 = vsub.f32 %v3330, %v2184
        %v3395 = vsub.f32 %v3331, %v2184
        %v3396 = vsub.f32 %v3332, %v2184
        %v3397 = vsub.f32 %v3333, %v2184
        %v3398 = vsub.f32 %v3334, %v2184
        %v3399 = vsub.f32 %v3335, %v2184
        %v3400 = vsub.f32 %v3336, %v2184
        %v3401 = vsub.f32 %v3337, %v2184
        %v3402 = vsub.f32 %v3338, %v2184
        %v3403 = vsub.f32 %v3339, %v2184
        %v3404 = vsub.f32 %v3340, %v2184
        %v3405 = vsub.f32 %v3341, %v2184
        %v3406 = vsub.f32 %v3342, %v2184
        %v3407 = vsub.f32 %v3343, %v2184
        %v3408 = vsub.f32 %v3344, %v2184
        %v3409 = vsub.f32 %v3345, %v2184
        %v3410 = vsub.f32 %v3346, %v2184
        %v3411 = vsub.f32 %v3347, %v2184
        %v3412 = vsub.f32 %v3348, %v2184
        %v3413 = vsub.f32 %v3349, %v2184
        %v3414 = vsub.f32 %v3350, %v2184
        %v3415 = vsub.f32 %v3351, %v2184
        %v3416 = vsub.f32 %v3352, %v2184
        %v3417 = vmul.f32 %v3353, %v2840
        %v3418 = vmul.f32 %v3354, %v2840
        %v3419 = vmul.f32 %v3355, %v2840
        %v3420 = vmul.f32 %v3356, %v2840
        %v3421 = vmul.f32 %v3357, %v2840
        %v3422 = vmul.f32 %v3358, %v2840
        %v3423 = vmul.f32 %v3359, %v2840
        %v3424 = vmul.f32 %v3360, %v2840
        %v3425 = vmul.f32 %v3361, %v2840
        %v3426 = vmul.f32 %v3362, %v2840
        %v3427 = vmul.f32 %v3363, %v2840
        %v3428 = vmul.f32 %v3364, %v2840
        %v3429 = vmul.f32 %v3365, %v2840
        %v3430 = vmul.f32 %v3366, %v2840
        %v3431 = vmul.f32 %v3367, %v2840
        %v3432 = vmul.f32 %v3368, %v2840
        %v3433 = vmul.f32 %v3369, %v2840
        %v3434 = vmul.f32 %v3370, %v2840
        %v3435 = vmul.f32 %v3371, %v2840
        %v3436 = vmul.f32 %v3372, %v2840
        %v3437 = vmul.f32 %v3373, %v2840
        %v3438 = vmul.f32 %v3374, %v2840
        %v3439 = vmul.f32 %v3375, %v2840
        %v3440 = vmul.f32 %v3376, %v2840
        %v3441 = vmul.f32 %v3377, %v2840
        %v3442 = vmul.f32 %v3378, %v2840
        %v3443 = vmul.f32 %v3379, %v2840
        %v3444 = vmul.f32 %v3380, %v2840
        %v3445 = vmul.f32 %v3381, %v2840
        %v3446 = vmul.f32 %v3382, %v2840
        %v3447 = vmul.f32 %v3383, %v2840
        %v3448 = vmul.f32 %v3384, %v2840
        %v3449 = vmul.f32 %v3385, %v2840
        %v3450 = vmul.f32 %v3386, %v2840
        %v3451 = vmul.f32 %v3387, %v2840
        %v3452 = vmul.f32 %v3388, %v2840
        %v3453 = vmul.f32 %v3389, %v2840
        %v3454 = vmul.f32 %v3390, %v2840
        %v3455 = vmul.f32 %v3391, %v2840
        %v3456 = vmul.f32 %v3392, %v2840
        %v3457 = vmul.f32 %v3393, %v2840
        %v3458 = vmul.f32 %v3394, %v2840
        %v3459 = vmul.f32 %v3395, %v2840
        %v3460 = vmul.f32 %v3396, %v2840
        %v3461 = vmul.f32 %v3397, %v2840
        %v3462 = vmul.f32 %v3398, %v2840
        %v3463 = vmul.f32 %v3399, %v2840
        %v3464 = vmul.f32 %v3400, %v2840
        %v3465 = vmul.f32 %v3401, %v2840
        %v3466 = vmul.f32 %v3402, %v2840
        %v3467 = vmul.f32 %v3403, %v2840
        %v3468 = vmul.f32 %v3404, %v2840
        %v3469 = vmul.f32 %v3405, %v2840
        %v3470 = vmul.f32 %v3406, %v2840
        %v3471 = vmul.f32 %v3407, %v2840
        %v3472 = vmul.f32 %v3408, %v2840
        %v3473 = vmul.f32 %v3409, %v2840
        %v3474 = vmul.f32 %v3410, %v2840
        %v3475 = vmul.f32 %v3411, %v2840
        %v3476 = vmul.f32 %v3412, %v2840
        %v3477 = vmul.f32 %v3413, %v2840
        %v3478 = vmul.f32 %v3414, %v2840
        %v3479 = vmul.f32 %v3415, %v2840
        %v3480 = vmul.f32 %v3416, %v2840
        %v3481 = vld [vmem:[#allocation25 + $0x8] sm:$0xff]
        %v3482 = vld [vmem:[#allocation25 + $0x18] sm:$0xff]
        %v3483 = vld [vmem:[#allocation25 + $0x28] sm:$0xff]
        %v3484 = vld [vmem:[#allocation25 + $0x38] sm:$0xff]
        %v3485 = vld [vmem:[#allocation25 + $0x48] sm:$0xff]
        %v3486 = vld [vmem:[#allocation25 + $0x58] sm:$0xff]
        %v3487 = vld [vmem:[#allocation25 + $0x68] sm:$0xff]
        %v3488 = vld [vmem:[#allocation25 + $0x78] sm:$0xff]
        %v3489 = vld [vmem:[#allocation25 + $0x88] sm:$0xff]
        %v3490 = vld [vmem:[#allocation25 + $0x98] sm:$0xff]
        %v3491 = vld [vmem:[#allocation25 + $0xa8] sm:$0xff]
        %v3492 = vld [vmem:[#allocation25 + $0xb8] sm:$0xff]
        %v3493 = vld [vmem:[#allocation25 + $0xc8] sm:$0xff]
        %v3494 = vld [vmem:[#allocation25 + $0xd8] sm:$0xff]
        %v3495 = vld [vmem:[#allocation25 + $0xe8] sm:$0xff]
        %v3496 = vld [vmem:[#allocation25 + $0xf8] sm:$0xff]
        %v3497 = vld [vmem:[#allocation25 + $0x108] sm:$0xff]
        %v3498 = vld [vmem:[#allocation25 + $0x118] sm:$0xff]
        %v3499 = vld [vmem:[#allocation25 + $0x128] sm:$0xff]
        %v3500 = vld [vmem:[#allocation25 + $0x138] sm:$0xff]
        %v3501 = vld [vmem:[#allocation25 + $0x148] sm:$0xff]
        %v3502 = vld [vmem:[#allocation25 + $0x158] sm:$0xff]
        %v3503 = vld [vmem:[#allocation25 + $0x168] sm:$0xff]
        %v3504 = vld [vmem:[#allocation25 + $0x178] sm:$0xff]
        %v3505 = vld [vmem:[#allocation25 + $0x188] sm:$0xff]
        %v3506 = vld [vmem:[#allocation25 + $0x198] sm:$0xff]
        %v3507 = vld [vmem:[#allocation25 + $0x1a8] sm:$0xff]
        %v3508 = vld [vmem:[#allocation25 + $0x1b8] sm:$0xff]
        %v3509 = vld [vmem:[#allocation25 + $0x1c8] sm:$0xff]
        %v3510 = vld [vmem:[#allocation25 + $0x1d8] sm:$0xff]
        %v3511 = vld [vmem:[#allocation25 + $0x1e8] sm:$0xff]
        %v3512 = vld [vmem:[#allocation25 + $0x1f8] sm:$0xff]
        %v3513 = vunpack.c.l.bf16 %v3481
        %v3514 = vunpack.c.h.bf16 %v3481
        %v3515 = vunpack.c.l.bf16 %v3482
        %v3516 = vunpack.c.h.bf16 %v3482
        %v3517 = vunpack.c.l.bf16 %v3483
        %v3518 = vunpack.c.h.bf16 %v3483
        %v3519 = vunpack.c.l.bf16 %v3484
        %v3520 = vunpack.c.h.bf16 %v3484
        %v3521 = vunpack.c.l.bf16 %v3485
        %v3522 = vunpack.c.h.bf16 %v3485
        %v3523 = vunpack.c.l.bf16 %v3486
        %v3524 = vunpack.c.h.bf16 %v3486
        %v3525 = vunpack.c.l.bf16 %v3487
        %v3526 = vunpack.c.h.bf16 %v3487
        %v3527 = vunpack.c.l.bf16 %v3488
        %v3528 = vunpack.c.h.bf16 %v3488
        %v3529 = vunpack.c.l.bf16 %v3489
        %v3530 = vunpack.c.h.bf16 %v3489
        %v3531 = vunpack.c.l.bf16 %v3490
        %v3532 = vunpack.c.h.bf16 %v3490
        %v3533 = vunpack.c.l.bf16 %v3491
        %v3534 = vunpack.c.h.bf16 %v3491
        %v3535 = vunpack.c.l.bf16 %v3492
        %v3536 = vunpack.c.h.bf16 %v3492
        %v3537 = vunpack.c.l.bf16 %v3493
        %v3538 = vunpack.c.h.bf16 %v3493
        %v3539 = vunpack.c.l.bf16 %v3494
        %v3540 = vunpack.c.h.bf16 %v3494
        %v3541 = vunpack.c.l.bf16 %v3495
        %v3542 = vunpack.c.h.bf16 %v3495
        %v3543 = vunpack.c.l.bf16 %v3496
        %v3544 = vunpack.c.h.bf16 %v3496
        %v3545 = vunpack.c.l.bf16 %v3497
        %v3546 = vunpack.c.h.bf16 %v3497
        %v3547 = vunpack.c.l.bf16 %v3498
        %v3548 = vunpack.c.h.bf16 %v3498
        %v3549 = vunpack.c.l.bf16 %v3499
        %v3550 = vunpack.c.h.bf16 %v3499
        %v3551 = vunpack.c.l.bf16 %v3500
        %v3552 = vunpack.c.h.bf16 %v3500
        %v3553 = vunpack.c.l.bf16 %v3501
        %v3554 = vunpack.c.h.bf16 %v3501
        %v3555 = vunpack.c.l.bf16 %v3502
        %v3556 = vunpack.c.h.bf16 %v3502
        %v3557 = vunpack.c.l.bf16 %v3503
        %v3558 = vunpack.c.h.bf16 %v3503
        %v3559 = vunpack.c.l.bf16 %v3504
        %v3560 = vunpack.c.h.bf16 %v3504
        %v3561 = vunpack.c.l.bf16 %v3505
        %v3562 = vunpack.c.h.bf16 %v3505
        %v3563 = vunpack.c.l.bf16 %v3506
        %v3564 = vunpack.c.h.bf16 %v3506
        %v3565 = vunpack.c.l.bf16 %v3507
        %v3566 = vunpack.c.h.bf16 %v3507
        %v3567 = vunpack.c.l.bf16 %v3508
        %v3568 = vunpack.c.h.bf16 %v3508
        %v3569 = vunpack.c.l.bf16 %v3509
        %v3570 = vunpack.c.h.bf16 %v3509
        %v3571 = vunpack.c.l.bf16 %v3510
        %v3572 = vunpack.c.h.bf16 %v3510
        %v3573 = vunpack.c.l.bf16 %v3511
        %v3574 = vunpack.c.h.bf16 %v3511
        %v3575 = vunpack.c.l.bf16 %v3512
        %v3576 = vunpack.c.h.bf16 %v3512
        %v3577 = vmul.f32 %v3417, %v3513
        %v3578 = vmul.f32 %v3418, %v3514
        %v3579 = vmul.f32 %v3419, %v3515
        %v3580 = vmul.f32 %v3420, %v3516
        %v3581 = vmul.f32 %v3421, %v3517
        %v3582 = vmul.f32 %v3422, %v3518
        %v3583 = vmul.f32 %v3423, %v3519
        %v3584 = vmul.f32 %v3424, %v3520
        %v3585 = vmul.f32 %v3425, %v3521
        %v3586 = vmul.f32 %v3426, %v3522
        %v3587 = vmul.f32 %v3427, %v3523
        %v3588 = vmul.f32 %v3428, %v3524
        %v3589 = vmul.f32 %v3429, %v3525
        %v3590 = vmul.f32 %v3430, %v3526
        %v3591 = vmul.f32 %v3431, %v3527
        %v3592 = vmul.f32 %v3432, %v3528
        %v3593 = vmul.f32 %v3433, %v3529
        %v3594 = vmul.f32 %v3434, %v3530
        %v3595 = vmul.f32 %v3435, %v3531
        %v3596 = vmul.f32 %v3436, %v3532
        %v3597 = vmul.f32 %v3437, %v3533
        %v3598 = vmul.f32 %v3438, %v3534
        %v3599 = vmul.f32 %v3439, %v3535
        %v3600 = vmul.f32 %v3440, %v3536
        %v3601 = vmul.f32 %v3441, %v3537
        %v3602 = vmul.f32 %v3442, %v3538
        %v3603 = vmul.f32 %v3443, %v3539
        %v3604 = vmul.f32 %v3444, %v3540
        %v3605 = vmul.f32 %v3445, %v3541
        %v3606 = vmul.f32 %v3446, %v3542
        %v3607 = vmul.f32 %v3447, %v3543
        %v3608 = vmul.f32 %v3448, %v3544
        %v3609 = vmul.f32 %v3449, %v3545
        %v3610 = vmul.f32 %v3450, %v3546
        %v3611 = vmul.f32 %v3451, %v3547
        %v3612 = vmul.f32 %v3452, %v3548
        %v3613 = vmul.f32 %v3453, %v3549
        %v3614 = vmul.f32 %v3454, %v3550
        %v3615 = vmul.f32 %v3455, %v3551
        %v3616 = vmul.f32 %v3456, %v3552
        %v3617 = vmul.f32 %v3457, %v3553
        %v3618 = vmul.f32 %v3458, %v3554
        %v3619 = vmul.f32 %v3459, %v3555
        %v3620 = vmul.f32 %v3460, %v3556
        %v3621 = vmul.f32 %v3461, %v3557
        %v3622 = vmul.f32 %v3462, %v3558
        %v3623 = vmul.f32 %v3463, %v3559
        %v3624 = vmul.f32 %v3464, %v3560
        %v3625 = vmul.f32 %v3465, %v3561
        %v3626 = vmul.f32 %v3466, %v3562
        %v3627 = vmul.f32 %v3467, %v3563
        %v3628 = vmul.f32 %v3468, %v3564
        %v3629 = vmul.f32 %v3469, %v3565
        %v3630 = vmul.f32 %v3470, %v3566
        %v3631 = vmul.f32 %v3471, %v3567
        %v3632 = vmul.f32 %v3472, %v3568
        %v3633 = vmul.f32 %v3473, %v3569
        %v3634 = vmul.f32 %v3474, %v3570
        %v3635 = vmul.f32 %v3475, %v3571
        %v3636 = vmul.f32 %v3476, %v3572
        %v3637 = vmul.f32 %v3477, %v3573
        %v3638 = vmul.f32 %v3478, %v3574
        %v3639 = vmul.f32 %v3479, %v3575
        %v3640 = vmul.f32 %v3480, %v3576
        %v3641 = vld [vmem:[#allocation26 + $0x8] sm:$0xff]
        %v3642 = vld [vmem:[#allocation26 + $0x18] sm:$0xff]
        %v3643 = vld [vmem:[#allocation26 + $0x28] sm:$0xff]
        %v3644 = vld [vmem:[#allocation26 + $0x38] sm:$0xff]
        %v3645 = vld [vmem:[#allocation26 + $0x48] sm:$0xff]
        %v3646 = vld [vmem:[#allocation26 + $0x58] sm:$0xff]
        %v3647 = vld [vmem:[#allocation26 + $0x68] sm:$0xff]
        %v3648 = vld [vmem:[#allocation26 + $0x78] sm:$0xff]
        %v3649 = vld [vmem:[#allocation26 + $0x88] sm:$0xff]
        %v3650 = vld [vmem:[#allocation26 + $0x98] sm:$0xff]
        %v3651 = vld [vmem:[#allocation26 + $0xa8] sm:$0xff]
        %v3652 = vld [vmem:[#allocation26 + $0xb8] sm:$0xff]
        %v3653 = vld [vmem:[#allocation26 + $0xc8] sm:$0xff]
        %v3654 = vld [vmem:[#allocation26 + $0xd8] sm:$0xff]
        %v3655 = vld [vmem:[#allocation26 + $0xe8] sm:$0xff]
        %v3656 = vld [vmem:[#allocation26 + $0xf8] sm:$0xff]
        %v3657 = vld [vmem:[#allocation26 + $0x108] sm:$0xff]
        %v3658 = vld [vmem:[#allocation26 + $0x118] sm:$0xff]
        %v3659 = vld [vmem:[#allocation26 + $0x128] sm:$0xff]
        %v3660 = vld [vmem:[#allocation26 + $0x138] sm:$0xff]
        %v3661 = vld [vmem:[#allocation26 + $0x148] sm:$0xff]
        %v3662 = vld [vmem:[#allocation26 + $0x158] sm:$0xff]
        %v3663 = vld [vmem:[#allocation26 + $0x168] sm:$0xff]
        %v3664 = vld [vmem:[#allocation26 + $0x178] sm:$0xff]
        %v3665 = vld [vmem:[#allocation26 + $0x188] sm:$0xff]
        %v3666 = vld [vmem:[#allocation26 + $0x198] sm:$0xff]
        %v3667 = vld [vmem:[#allocation26 + $0x1a8] sm:$0xff]
        %v3668 = vld [vmem:[#allocation26 + $0x1b8] sm:$0xff]
        %v3669 = vld [vmem:[#allocation26 + $0x1c8] sm:$0xff]
        %v3670 = vld [vmem:[#allocation26 + $0x1d8] sm:$0xff]
        %v3671 = vld [vmem:[#allocation26 + $0x1e8] sm:$0xff]
        %v3672 = vld [vmem:[#allocation26 + $0x1f8] sm:$0xff]
        %v3673 = vunpack.c.l.bf16 %v3641
        %v3674 = vunpack.c.h.bf16 %v3641
        %v3675 = vunpack.c.l.bf16 %v3642
        %v3676 = vunpack.c.h.bf16 %v3642
        %v3677 = vunpack.c.l.bf16 %v3643
        %v3678 = vunpack.c.h.bf16 %v3643
        %v3679 = vunpack.c.l.bf16 %v3644
        %v3680 = vunpack.c.h.bf16 %v3644
        %v3681 = vunpack.c.l.bf16 %v3645
        %v3682 = vunpack.c.h.bf16 %v3645
        %v3683 = vunpack.c.l.bf16 %v3646
        %v3684 = vunpack.c.h.bf16 %v3646
        %v3685 = vunpack.c.l.bf16 %v3647
        %v3686 = vunpack.c.h.bf16 %v3647
        %v3687 = vunpack.c.l.bf16 %v3648
        %v3688 = vunpack.c.h.bf16 %v3648
        %v3689 = vunpack.c.l.bf16 %v3649
        %v3690 = vunpack.c.h.bf16 %v3649
        %v3691 = vunpack.c.l.bf16 %v3650
        %v3692 = vunpack.c.h.bf16 %v3650
        %v3693 = vunpack.c.l.bf16 %v3651
        %v3694 = vunpack.c.h.bf16 %v3651
        %v3695 = vunpack.c.l.bf16 %v3652
        %v3696 = vunpack.c.h.bf16 %v3652
        %v3697 = vunpack.c.l.bf16 %v3653
        %v3698 = vunpack.c.h.bf16 %v3653
        %v3699 = vunpack.c.l.bf16 %v3654
        %v3700 = vunpack.c.h.bf16 %v3654
        %v3701 = vunpack.c.l.bf16 %v3655
        %v3702 = vunpack.c.h.bf16 %v3655
        %v3703 = vunpack.c.l.bf16 %v3656
        %v3704 = vunpack.c.h.bf16 %v3656
        %v3705 = vunpack.c.l.bf16 %v3657
        %v3706 = vunpack.c.h.bf16 %v3657
        %v3707 = vunpack.c.l.bf16 %v3658
        %v3708 = vunpack.c.h.bf16 %v3658
        %v3709 = vunpack.c.l.bf16 %v3659
        %v3710 = vunpack.c.h.bf16 %v3659
        %v3711 = vunpack.c.l.bf16 %v3660
        %v3712 = vunpack.c.h.bf16 %v3660
        %v3713 = vunpack.c.l.bf16 %v3661
        %v3714 = vunpack.c.h.bf16 %v3661
        %v3715 = vunpack.c.l.bf16 %v3662
        %v3716 = vunpack.c.h.bf16 %v3662
        %v3717 = vunpack.c.l.bf16 %v3663
        %v3718 = vunpack.c.h.bf16 %v3663
        %v3719 = vunpack.c.l.bf16 %v3664
        %v3720 = vunpack.c.h.bf16 %v3664
        %v3721 = vunpack.c.l.bf16 %v3665
        %v3722 = vunpack.c.h.bf16 %v3665
        %v3723 = vunpack.c.l.bf16 %v3666
        %v3724 = vunpack.c.h.bf16 %v3666
        %v3725 = vunpack.c.l.bf16 %v3667
        %v3726 = vunpack.c.h.bf16 %v3667
        %v3727 = vunpack.c.l.bf16 %v3668
        %v3728 = vunpack.c.h.bf16 %v3668
        %v3729 = vunpack.c.l.bf16 %v3669
        %v3730 = vunpack.c.h.bf16 %v3669
        %v3731 = vunpack.c.l.bf16 %v3670
        %v3732 = vunpack.c.h.bf16 %v3670
        %v3733 = vunpack.c.l.bf16 %v3671
        %v3734 = vunpack.c.h.bf16 %v3671
        %v3735 = vunpack.c.l.bf16 %v3672
        %v3736 = vunpack.c.h.bf16 %v3672
        %v3737 = vadd.f32 %v3577, %v3673
        %v3738 = vadd.f32 %v3578, %v3674
        %v3739 = vadd.f32 %v3579, %v3675
        %v3740 = vadd.f32 %v3580, %v3676
        %v3741 = vadd.f32 %v3581, %v3677
        %v3742 = vadd.f32 %v3582, %v3678
        %v3743 = vadd.f32 %v3583, %v3679
        %v3744 = vadd.f32 %v3584, %v3680
        %v3745 = vadd.f32 %v3585, %v3681
        %v3746 = vadd.f32 %v3586, %v3682
        %v3747 = vadd.f32 %v3587, %v3683
        %v3748 = vadd.f32 %v3588, %v3684
        %v3749 = vadd.f32 %v3589, %v3685
        %v3750 = vadd.f32 %v3590, %v3686
        %v3751 = vadd.f32 %v3591, %v3687
        %v3752 = vadd.f32 %v3592, %v3688
        %v3753 = vadd.f32 %v3593, %v3689
        %v3754 = vadd.f32 %v3594, %v3690
        %v3755 = vadd.f32 %v3595, %v3691
        %v3756 = vadd.f32 %v3596, %v3692
        %v3757 = vadd.f32 %v3597, %v3693
        %v3758 = vadd.f32 %v3598, %v3694
        %v3759 = vadd.f32 %v3599, %v3695
        %v3760 = vadd.f32 %v3600, %v3696
        %v3761 = vadd.f32 %v3601, %v3697
        %v3762 = vadd.f32 %v3602, %v3698
        %v3763 = vadd.f32 %v3603, %v3699
        %v3764 = vadd.f32 %v3604, %v3700
        %v3765 = vadd.f32 %v3605, %v3701
        %v3766 = vadd.f32 %v3606, %v3702
        %v3767 = vadd.f32 %v3607, %v3703
        %v3768 = vadd.f32 %v3608, %v3704
        %v3769 = vadd.f32 %v3609, %v3705
        %v3770 = vadd.f32 %v3610, %v3706
        %v3771 = vadd.f32 %v3611, %v3707
        %v3772 = vadd.f32 %v3612, %v3708
        %v3773 = vadd.f32 %v3613, %v3709
        %v3774 = vadd.f32 %v3614, %v3710
        %v3775 = vadd.f32 %v3615, %v3711
        %v3776 = vadd.f32 %v3616, %v3712
        %v3777 = vadd.f32 %v3617, %v3713
        %v3778 = vadd.f32 %v3618, %v3714
        %v3779 = vadd.f32 %v3619, %v3715
        %v3780 = vadd.f32 %v3620, %v3716
        %v3781 = vadd.f32 %v3621, %v3717
        %v3782 = vadd.f32 %v3622, %v3718
        %v3783 = vadd.f32 %v3623, %v3719
        %v3784 = vadd.f32 %v3624, %v3720
        %v3785 = vadd.f32 %v3625, %v3721
        %v3786 = vadd.f32 %v3626, %v3722
        %v3787 = vadd.f32 %v3627, %v3723
        %v3788 = vadd.f32 %v3628, %v3724
        %v3789 = vadd.f32 %v3629, %v3725
        %v3790 = vadd.f32 %v3630, %v3726
        %v3791 = vadd.f32 %v3631, %v3727
        %v3792 = vadd.f32 %v3632, %v3728
        %v3793 = vadd.f32 %v3633, %v3729
        %v3794 = vadd.f32 %v3634, %v3730
        %v3795 = vadd.f32 %v3635, %v3731
        %v3796 = vadd.f32 %v3636, %v3732
        %v3797 = vadd.f32 %v3637, %v3733
        %v3798 = vadd.f32 %v3638, %v3734
        %v3799 = vadd.f32 %v3639, %v3735
        %v3800 = vadd.f32 %v3640, %v3736
        %v3801 = vpack.c.bf16 %v3739, %v3737
        %v3802 = vpack.c.bf16 %v3740, %v3738
        %v3803 = vpack.c.bf16 %v3743, %v3741
        %v3804 = vpack.c.bf16 %v3744, %v3742
        %v3805 = vpack.c.bf16 %v3747, %v3745
        %v3806 = vpack.c.bf16 %v3748, %v3746
        %v3807 = vpack.c.bf16 %v3751, %v3749
        %v3808 = vpack.c.bf16 %v3752, %v3750
        %v3809 = vpack.c.bf16 %v3755, %v3753
        %v3810 = vpack.c.bf16 %v3756, %v3754
        %v3811 = vpack.c.bf16 %v3759, %v3757
        %v3812 = vpack.c.bf16 %v3760, %v3758
        %v3813 = vpack.c.bf16 %v3763, %v3761
        %v3814 = vpack.c.bf16 %v3764, %v3762
        %v3815 = vpack.c.bf16 %v3767, %v3765
        %v3816 = vpack.c.bf16 %v3768, %v3766
        %v3817 = vpack.c.bf16 %v3771, %v3769
        %v3818 = vpack.c.bf16 %v3772, %v3770
        %v3819 = vpack.c.bf16 %v3775, %v3773
        %v3820 = vpack.c.bf16 %v3776, %v3774
        %v3821 = vpack.c.bf16 %v3779, %v3777
        %v3822 = vpack.c.bf16 %v3780, %v3778
        %v3823 = vpack.c.bf16 %v3783, %v3781
        %v3824 = vpack.c.bf16 %v3784, %v3782
        %v3825 = vpack.c.bf16 %v3787, %v3785
        %v3826 = vpack.c.bf16 %v3788, %v3786
        %v3827 = vpack.c.bf16 %v3791, %v3789
        %v3828 = vpack.c.bf16 %v3792, %v3790
        %v3829 = vpack.c.bf16 %v3795, %v3793
        %v3830 = vpack.c.bf16 %v3796, %v3794
        %v3831 = vpack.c.bf16 %v3799, %v3797
        %v3832 = vpack.c.bf16 %v3800, %v3798
        %3833 = vst [vmem:[#allocation5 + $0x100] sm:$0xff] %v3801
        %3834 = vst [vmem:[#allocation5 + $0x108] sm:$0xff] %v3802
        %3835 = vst [vmem:[#allocation5 + $0x110] sm:$0xff] %v3803
        %3836 = vst [vmem:[#allocation5 + $0x118] sm:$0xff] %v3804
        %3837 = vst [vmem:[#allocation5 + $0x120] sm:$0xff] %v3805
        %3838 = vst [vmem:[#allocation5 + $0x128] sm:$0xff] %v3806
        %3839 = vst [vmem:[#allocation5 + $0x130] sm:$0xff] %v3807
        %3840 = vst [vmem:[#allocation5 + $0x138] sm:$0xff] %v3808
        %3841 = vst [vmem:[#allocation5 + $0x140] sm:$0xff] %v3809
        %3842 = vst [vmem:[#allocation5 + $0x148] sm:$0xff] %v3810
        %3843 = vst [vmem:[#allocation5 + $0x150] sm:$0xff] %v3811
        %3844 = vst [vmem:[#allocation5 + $0x158] sm:$0xff] %v3812
        %3845 = vst [vmem:[#allocation5 + $0x160] sm:$0xff] %v3813
        %3846 = vst [vmem:[#allocation5 + $0x168] sm:$0xff] %v3814
        %3847 = vst [vmem:[#allocation5 + $0x170] sm:$0xff] %v3815
        %3848 = vst [vmem:[#allocation5 + $0x178] sm:$0xff] %v3816
        %3849 = vst [vmem:[#allocation5 + $0x180] sm:$0xff] %v3817
        %3850 = vst [vmem:[#allocation5 + $0x188] sm:$0xff] %v3818
        %3851 = vst [vmem:[#allocation5 + $0x190] sm:$0xff] %v3819
        %3852 = vst [vmem:[#allocation5 + $0x198] sm:$0xff] %v3820
        %3853 = vst [vmem:[#allocation5 + $0x1a0] sm:$0xff] %v3821
        %3854 = vst [vmem:[#allocation5 + $0x1a8] sm:$0xff] %v3822
        %3855 = vst [vmem:[#allocation5 + $0x1b0] sm:$0xff] %v3823
        %3856 = vst [vmem:[#allocation5 + $0x1b8] sm:$0xff] %v3824
        %3857 = vst [vmem:[#allocation5 + $0x1c0] sm:$0xff] %v3825
        %3858 = vst [vmem:[#allocation5 + $0x1c8] sm:$0xff] %v3826
        %3859 = vst [vmem:[#allocation5 + $0x1d0] sm:$0xff] %v3827
        %3860 = vst [vmem:[#allocation5 + $0x1d8] sm:$0xff] %v3828
        %3861 = vst [vmem:[#allocation5 + $0x1e0] sm:$0xff] %v3829
        %3862 = vst [vmem:[#allocation5 + $0x1e8] sm:$0xff] %v3830
        %3863 = vst [vmem:[#allocation5 + $0x1f0] sm:$0xff] %v3831
        %3864 = vst [vmem:[#allocation5 + $0x1f8] sm:$0xff] %v3832
        %v3865 = vld [vmem:[#allocation5] sm:$0xff]
        %v3866 = vld [vmem:[#allocation5 + $0x8] sm:$0xff]
        %v3867 = vld [vmem:[#allocation5 + $0x10] sm:$0xff]
        %v3868 = vld [vmem:[#allocation5 + $0x18] sm:$0xff]
        %v3869 = vld [vmem:[#allocation5 + $0x20] sm:$0xff]
        %v3870 = vld [vmem:[#allocation5 + $0x28] sm:$0xff]
        %v3871 = vld [vmem:[#allocation5 + $0x30] sm:$0xff]
        %v3872 = vld [vmem:[#allocation5 + $0x38] sm:$0xff]
        %v3873 = vld [vmem:[#allocation5 + $0x40] sm:$0xff]
        %v3874 = vld [vmem:[#allocation5 + $0x48] sm:$0xff]
        %v3875 = vld [vmem:[#allocation5 + $0x50] sm:$0xff]
        %v3876 = vld [vmem:[#allocation5 + $0x58] sm:$0xff]
        %v3877 = vld [vmem:[#allocation5 + $0x60] sm:$0xff]
        %v3878 = vld [vmem:[#allocation5 + $0x68] sm:$0xff]
        %v3879 = vld [vmem:[#allocation5 + $0x70] sm:$0xff]
        %v3880 = vld [vmem:[#allocation5 + $0x78] sm:$0xff]
        %v3881 = vld [vmem:[#allocation5 + $0x80] sm:$0xff]
        %v3882 = vld [vmem:[#allocation5 + $0x88] sm:$0xff]
        %v3883 = vld [vmem:[#allocation5 + $0x90] sm:$0xff]
        %v3884 = vld [vmem:[#allocation5 + $0x98] sm:$0xff]
        %v3885 = vld [vmem:[#allocation5 + $0xa0] sm:$0xff]
        %v3886 = vld [vmem:[#allocation5 + $0xa8] sm:$0xff]
        %v3887 = vld [vmem:[#allocation5 + $0xb0] sm:$0xff]
        %v3888 = vld [vmem:[#allocation5 + $0xb8] sm:$0xff]
        %v3889 = vld [vmem:[#allocation5 + $0xc0] sm:$0xff]
        %v3890 = vld [vmem:[#allocation5 + $0xc8] sm:$0xff]
        %v3891 = vld [vmem:[#allocation5 + $0xd0] sm:$0xff]
        %v3892 = vld [vmem:[#allocation5 + $0xd8] sm:$0xff]
        %v3893 = vld [vmem:[#allocation5 + $0xe0] sm:$0xff]
        %v3894 = vld [vmem:[#allocation5 + $0xe8] sm:$0xff]
        %v3895 = vld [vmem:[#allocation5 + $0xf0] sm:$0xff]
        %v3896 = vld [vmem:[#allocation5 + $0xf8] sm:$0xff]
        %v3897 = vld [vmem:[#allocation5 + $0x100] sm:$0xff]
        %v3898 = vld [vmem:[#allocation5 + $0x108] sm:$0xff]
        %v3899 = vld [vmem:[#allocation5 + $0x110] sm:$0xff]
        %v3900 = vld [vmem:[#allocation5 + $0x118] sm:$0xff]
        %v3901 = vld [vmem:[#allocation5 + $0x120] sm:$0xff]
        %v3902 = vld [vmem:[#allocation5 + $0x128] sm:$0xff]
        %v3903 = vld [vmem:[#allocation5 + $0x130] sm:$0xff]
        %v3904 = vld [vmem:[#allocation5 + $0x138] sm:$0xff]
        %v3905 = vld [vmem:[#allocation5 + $0x140] sm:$0xff]
        %v3906 = vld [vmem:[#allocation5 + $0x148] sm:$0xff]
        %v3907 = vld [vmem:[#allocation5 + $0x150] sm:$0xff]
        %v3908 = vld [vmem:[#allocation5 + $0x158] sm:$0xff]
        %v3909 = vld [vmem:[#allocation5 + $0x160] sm:$0xff]
        %v3910 = vld [vmem:[#allocation5 + $0x168] sm:$0xff]
        %v3911 = vld [vmem:[#allocation5 + $0x170] sm:$0xff]
        %v3912 = vld [vmem:[#allocation5 + $0x178] sm:$0xff]
        %v3913 = vld [vmem:[#allocation5 + $0x180] sm:$0xff]
        %v3914 = vld [vmem:[#allocation5 + $0x188] sm:$0xff]
        %v3915 = vld [vmem:[#allocation5 + $0x190] sm:$0xff]
        %v3916 = vld [vmem:[#allocation5 + $0x198] sm:$0xff]
        %v3917 = vld [vmem:[#allocation5 + $0x1a0] sm:$0xff]
        %v3918 = vld [vmem:[#allocation5 + $0x1a8] sm:$0xff]
        %v3919 = vld [vmem:[#allocation5 + $0x1b0] sm:$0xff]
        %v3920 = vld [vmem:[#allocation5 + $0x1b8] sm:$0xff]
        %v3921 = vld [vmem:[#allocation5 + $0x1c0] sm:$0xff]
        %v3922 = vld [vmem:[#allocation5 + $0x1c8] sm:$0xff]
        %v3923 = vld [vmem:[#allocation5 + $0x1d0] sm:$0xff]
        %v3924 = vld [vmem:[#allocation5 + $0x1d8] sm:$0xff]
        %v3925 = vld [vmem:[#allocation5 + $0x1e0] sm:$0xff]
        %v3926 = vld [vmem:[#allocation5 + $0x1e8] sm:$0xff]
        %v3927 = vld [vmem:[#allocation5 + $0x1f0] sm:$0xff]
        %v3928 = vld [vmem:[#allocation5 + $0x1f8] sm:$0xff]
        %v3929 = vld [vmem:[#allocation28] sm:$0xf]
        %v3930 = vld [vmem:[#allocation28 + $0x4] sm:$0xf]
        %v3931 = vld [vmem:[#allocation28 + $0x8] sm:$0xf]
        %v3932 = vld [vmem:[#allocation28 + $0xc] sm:$0xf]
        %v3933 = vld [vmem:[#allocation28 + $0x10] sm:$0xf]
        %v3934 = vld [vmem:[#allocation28 + $0x14] sm:$0xf]
        %v3935 = vld [vmem:[#allocation28 + $0x18] sm:$0xf]
        %v3936 = vld [vmem:[#allocation28 + $0x1c] sm:$0xf]
        %v3937 = vld [vmem:[#allocation28 + $0x20] sm:$0xf]
        %v3938 = vld [vmem:[#allocation28 + $0x24] sm:$0xf]
        %v3939 = vld [vmem:[#allocation28 + $0x28] sm:$0xf]
        %v3940 = vld [vmem:[#allocation28 + $0x2c] sm:$0xf]
        %v3941 = vld [vmem:[#allocation28 + $0x30] sm:$0xf]
        %v3942 = vld [vmem:[#allocation28 + $0x34] sm:$0xf]
        %v3943 = vld [vmem:[#allocation28 + $0x38] sm:$0xf]
        %v3944 = vld [vmem:[#allocation28 + $0x3c] sm:$0xf]
        %v3945 = vld [vmem:[#allocation28 + $0x40] sm:$0xf]
        %v3946 = vld [vmem:[#allocation28 + $0x44] sm:$0xf]
        %v3947 = vld [vmem:[#allocation28 + $0x48] sm:$0xf]
        %v3948 = vld [vmem:[#allocation28 + $0x4c] sm:$0xf]
        %v3949 = vld [vmem:[#allocation28 + $0x50] sm:$0xf]
        %v3950 = vld [vmem:[#allocation28 + $0x54] sm:$0xf]
        %v3951 = vld [vmem:[#allocation28 + $0x58] sm:$0xf]
        %v3952 = vld [vmem:[#allocation28 + $0x5c] sm:$0xf]
        %v3953 = vld [vmem:[#allocation28 + $0x60] sm:$0xf]
        %v3954 = vld [vmem:[#allocation28 + $0x64] sm:$0xf]
        %v3955 = vld [vmem:[#allocation28 + $0x68] sm:$0xf]
        %v3956 = vld [vmem:[#allocation28 + $0x6c] sm:$0xf]
        %v3957 = vld [vmem:[#allocation28 + $0x70] sm:$0xf]
        %v3958 = vld [vmem:[#allocation28 + $0x74] sm:$0xf]
        %v3959 = vld [vmem:[#allocation28 + $0x78] sm:$0xf]
        %v3960 = vld [vmem:[#allocation28 + $0x7c] sm:$0xf]
        %v3961 = vld [vmem:[#allocation29] sm:$0x1]
        %v3963 = vlaneseq
        %v3964 = vshrl.u32 %v3963, 7
        %v3965 = vsub.s32 0, %v3964
        %v3966 = vrot.slane %v3961, %v3965
        %v4000 = vunpack.c.l.b16 %v3929
        %v4001 = vunpack.c.l.b16 %v3930
        %v4002 = vunpack.c.l.b16 %v3931
        %v4003 = vunpack.c.l.b16 %v3932
        %v4004 = vunpack.c.l.b16 %v3933
        %v4005 = vunpack.c.l.b16 %v3934
        %v4006 = vunpack.c.l.b16 %v3935
        %v4007 = vunpack.c.l.b16 %v3936
        %v4008 = vunpack.c.l.b16 %v3937
        %v4009 = vunpack.c.l.b16 %v3938
        %v4010 = vunpack.c.l.b16 %v3939
        %v4011 = vunpack.c.l.b16 %v3940
        %v4012 = vunpack.c.l.b16 %v3941
        %v4013 = vunpack.c.l.b16 %v3942
        %v4014 = vunpack.c.l.b16 %v3943
        %v4015 = vunpack.c.l.b16 %v3944
        %v4016 = vunpack.c.l.b16 %v3945
        %v4017 = vunpack.c.l.b16 %v3946
        %v4018 = vunpack.c.l.b16 %v3947
        %v4019 = vunpack.c.l.b16 %v3948
        %v4020 = vunpack.c.l.b16 %v3949
        %v4021 = vunpack.c.l.b16 %v3950
        %v4022 = vunpack.c.l.b16 %v3951
        %v4023 = vunpack.c.l.b16 %v3952
        %v4024 = vunpack.c.l.b16 %v3953
        %v4025 = vunpack.c.l.b16 %v3954
        %v4026 = vunpack.c.l.b16 %v3955
        %v4027 = vunpack.c.l.b16 %v3956
        %v4028 = vunpack.c.l.b16 %v3957
        %v4029 = vunpack.c.l.b16 %v3958
        %v4030 = vunpack.c.l.b16 %v3959
        %v4031 = vunpack.c.l.b16 %v3960
        %v4032 = vpack.c.b16 %v4001, %v4000
        %v4033 = vpack.c.b16 %v4003, %v4002
        %v4034 = vpack.c.b16 %v4005, %v4004
        %v4035 = vpack.c.b16 %v4007, %v4006
        %v4036 = vpack.c.b16 %v4009, %v4008
        %v4037 = vpack.c.b16 %v4011, %v4010
        %v4038 = vpack.c.b16 %v4013, %v4012
        %v4039 = vpack.c.b16 %v4015, %v4014
        %v4040 = vpack.c.b16 %v4017, %v4016
        %v4041 = vpack.c.b16 %v4019, %v4018
        %v4042 = vpack.c.b16 %v4021, %v4020
        %v4043 = vpack.c.b16 %v4023, %v4022
        %v4044 = vpack.c.b16 %v4025, %v4024
        %v4045 = vpack.c.b16 %v4027, %v4026
        %v4046 = vpack.c.b16 %v4029, %v4028
        %v4047 = vpack.c.b16 %v4031, %v4030
        %4064 = vmatprep.subr.bf16.mxu0 0
        %4065 = vmatpush1.bf16.msra.mxu0 %v4032
        %4066 = vmatprep.subr.bf16.mxu0 0
        %4067 = vmatpush1.bf16.msra.mxu0 %v4033
        %4068 = vmatprep.subr.bf16.mxu0 0
        %4069 = vmatpush1.bf16.msra.mxu0 %v4034
        %4070 = vmatprep.subr.bf16.mxu0 0
        %4071 = vmatpush1.bf16.msra.mxu0 %v4035
        %4072 = vmatprep.subr.bf16.mxu0 0
        %4073 = vmatpush1.bf16.msra.mxu0 %v4036
        %4074 = vmatprep.subr.bf16.mxu0 0
        %4075 = vmatpush1.bf16.msra.mxu0 %v4037
        %4076 = vmatprep.subr.bf16.mxu0 0
        %4077 = vmatpush1.bf16.msra.mxu0 %v4038
        %4078 = vmatprep.subr.bf16.mxu0 0
        %4079 = vmatpush1.bf16.msra.mxu0 %v4039
        %4080 = vmatprep.subr.bf16.mxu0 0
        %4081 = vmatpush1.bf16.msra.mxu0 %v4040
        %4082 = vmatprep.subr.bf16.mxu0 0
        %4083 = vmatpush1.bf16.msra.mxu0 %v4041
        %4084 = vmatprep.subr.bf16.mxu0 0
        %4085 = vmatpush1.bf16.msra.mxu0 %v4042
        %4086 = vmatprep.subr.bf16.mxu0 0
        %4087 = vmatpush1.bf16.msra.mxu0 %v4043
        %4088 = vmatprep.subr.bf16.mxu0 0
        %4089 = vmatpush1.bf16.msra.mxu0 %v4044
        %4090 = vmatprep.subr.bf16.mxu0 0
        %4091 = vmatpush1.bf16.msra.mxu0 %v4045
        %4092 = vmatprep.subr.bf16.mxu0 0
        %4093 = vmatpush1.bf16.msra.mxu0 %v4046
        %4094 = vmatprep.subr.bf16.mxu0 0
        %4095 = vmatpush1.bf16.msra.mxu0 %v4047
        %4096 = vmatprep.mubr.bf16.mxu0 %v3866
        %4097 = vmatmul.mubr.bf16.gmra.mrb[0].mxu0 %v3865
        %v4098 = vpop.f32.mrb[0].mxu0
        %v4099 = vadd.f32 %v3966, %v4098
        %v4100 = vpop.f32.mrb[0].mxu0
        %v4101 = vpop.f32.mrb[0].mxu0
        %v4102 = vadd.f32 %v3966, %v4101
        %v4103 = vpop.f32.mrb[0].mxu0
        %4104 = vmatprep.mubr.bf16.mxu0 %v3868
        %4105 = vmatmul.mubr.bf16.gmra.mrb[0].mxu0 %v3867
        %v4106 = vpop.f32.mrb[0].mxu0
        %v4107 = vadd.f32 %v3966, %v4106
        %v4108 = vpop.f32.mrb[0].mxu0
        %v4109 = vpop.f32.mrb[0].mxu0
        %v4110 = vadd.f32 %v3966, %v4109
        %v4111 = vpop.f32.mrb[0].mxu0
        %4112 = vmatprep.mubr.bf16.mxu0 %v3870
        %4113 = vmatmul.mubr.bf16.gmra.mrb[0].mxu0 %v3869
        %v4114 = vpop.f32.mrb[0].mxu0
        %v4115 = vadd.f32 %v3966, %v4114
        %v4116 = vpop.f32.mrb[0].mxu0
        %v4117 = vpop.f32.mrb[0].mxu0
        %v4118 = vadd.f32 %v3966, %v4117
        %v4119 = vpop.f32.mrb[0].mxu0
        %4120 = vmatprep.mubr.bf16.mxu0 %v3872
        %4121 = vmatmul.mubr.bf16.gmra.mrb[0].mxu0 %v3871
        %v4122 = vpop.f32.mrb[0].mxu0
        %v4123 = vadd.f32 %v3966, %v4122
        %v4124 = vpop.f32.mrb[0].mxu0
        %v4125 = vpop.f32.mrb[0].mxu0
        %v4126 = vadd.f32 %v3966, %v4125
        %v4127 = vpop.f32.mrb[0].mxu0
        %4128 = vmatprep.mubr.bf16.mxu0 %v3874
        %4129 = vmatmul.mubr.bf16.gmra.mrb[0].mxu0 %v3873
        %v4130 = vpop.f32.mrb[0].mxu0
        %v4131 = vadd.f32 %v3966, %v4130
        %v4132 = vpop.f32.mrb[0].mxu0
        %v4133 = vpop.f32.mrb[0].mxu0
        %v4134 = vadd.f32 %v3966, %v4133
        %v4135 = vpop.f32.mrb[0].mxu0
        %4136 = vmatprep.mubr.bf16.mxu0 %v3876
        %4137 = vmatmul.mubr.bf16.gmra.mrb[0].mxu0 %v3875
        %v4138 = vpop.f32.mrb[0].mxu0
        %v4139 = vadd.f32 %v3966, %v4138
        %v4140 = vpop.f32.mrb[0].mxu0
        %v4141 = vpop.f32.mrb[0].mxu0
        %v4142 = vadd.f32 %v3966, %v4141
        %v4143 = vpop.f32.mrb[0].mxu0
        %4144 = vmatprep.mubr.bf16.mxu0 %v3878
        %4145 = vmatmul.mubr.bf16.gmra.mrb[0].mxu0 %v3877
        %v4146 = vpop.f32.mrb[0].mxu0
        %v4147 = vadd.f32 %v3966, %v4146
        %v4148 = vpop.f32.mrb[0].mxu0
        %v4149 = vpop.f32.mrb[0].mxu0
        %v4150 = vadd.f32 %v3966, %v4149
        %v4151 = vpop.f32.mrb[0].mxu0
        %4152 = vmatprep.mubr.bf16.mxu0 %v3880
        %4153 = vmatmul.mubr.bf16.gmra.mrb[0].mxu0 %v3879
        %v4154 = vpop.f32.mrb[0].mxu0
        %v4155 = vadd.f32 %v3966, %v4154
        %v4156 = vpop.f32.mrb[0].mxu0
        %v4157 = vpop.f32.mrb[0].mxu0
        %v4158 = vadd.f32 %v3966, %v4157
        %v4159 = vpop.f32.mrb[0].mxu0
        %4160 = vmatprep.mubr.bf16.mxu0 %v3882
        %4161 = vmatmul.mubr.bf16.gmra.mrb[0].mxu0 %v3881
        %v4162 = vpop.f32.mrb[0].mxu0
        %v4163 = vadd.f32 %v3966, %v4162
        %v4164 = vpop.f32.mrb[0].mxu0
        %v4165 = vpop.f32.mrb[0].mxu0
        %v4166 = vadd.f32 %v3966, %v4165
        %v4167 = vpop.f32.mrb[0].mxu0
        %4168 = vmatprep.mubr.bf16.mxu0 %v3884
        %4169 = vmatmul.mubr.bf16.gmra.mrb[0].mxu0 %v3883
        %v4170 = vpop.f32.mrb[0].mxu0
        %v4171 = vadd.f32 %v3966, %v4170
        %v4172 = vpop.f32.mrb[0].mxu0
        %v4173 = vpop.f32.mrb[0].mxu0
        %v4174 = vadd.f32 %v3966, %v4173
        %v4175 = vpop.f32.mrb[0].mxu0
        %4176 = vmatprep.mubr.bf16.mxu0 %v3886
        %4177 = vmatmul.mubr.bf16.gmra.mrb[0].mxu0 %v3885
        %v4178 = vpop.f32.mrb[0].mxu0
        %v4179 = vadd.f32 %v3966, %v4178
        %v4180 = vpop.f32.mrb[0].mxu0
        %v4181 = vpop.f32.mrb[0].mxu0
        %v4182 = vadd.f32 %v3966, %v4181
        %v4183 = vpop.f32.mrb[0].mxu0
        %4184 = vmatprep.mubr.bf16.mxu0 %v3888
        %4185 = vmatmul.mubr.bf16.gmra.mrb[0].mxu0 %v3887
        %v4186 = vpop.f32.mrb[0].mxu0
        %v4187 = vadd.f32 %v3966, %v4186
        %v4188 = vpop.f32.mrb[0].mxu0
        %v4189 = vpop.f32.mrb[0].mxu0
        %v4190 = vadd.f32 %v3966, %v4189
        %v4191 = vpop.f32.mrb[0].mxu0
        %4192 = vmatprep.mubr.bf16.mxu0 %v3890
        %4193 = vmatmul.mubr.bf16.gmra.mrb[0].mxu0 %v3889
        %v4194 = vpop.f32.mrb[0].mxu0
        %v4195 = vadd.f32 %v3966, %v4194
        %v4196 = vpop.f32.mrb[0].mxu0
        %v4197 = vpop.f32.mrb[0].mxu0
        %v4198 = vadd.f32 %v3966, %v4197
        %v4199 = vpop.f32.mrb[0].mxu0
        %4200 = vmatprep.mubr.bf16.mxu0 %v3892
        %4201 = vmatmul.mubr.bf16.gmra.mrb[0].mxu0 %v3891
        %v4202 = vpop.f32.mrb[0].mxu0
        %v4203 = vadd.f32 %v3966, %v4202
        %v4204 = vpop.f32.mrb[0].mxu0
        %v4205 = vpop.f32.mrb[0].mxu0
        %v4206 = vadd.f32 %v3966, %v4205
        %v4207 = vpop.f32.mrb[0].mxu0
        %4208 = vmatprep.mubr.bf16.mxu0 %v3894
        %4209 = vmatmul.mubr.bf16.gmra.mrb[0].mxu0 %v3893
        %v4210 = vpop.f32.mrb[0].mxu0
        %v4211 = vadd.f32 %v3966, %v4210
        %v4212 = vpop.f32.mrb[0].mxu0
        %v4213 = vpop.f32.mrb[0].mxu0
        %v4214 = vadd.f32 %v3966, %v4213
        %v4215 = vpop.f32.mrb[0].mxu0
        %4216 = vmatprep.mubr.bf16.mxu0 %v3896
        %4217 = vmatmul.mubr.bf16.gmra.mrb[0].mxu0 %v3895
        %v4218 = vpop.f32.mrb[0].mxu0
        %v4219 = vadd.f32 %v3966, %v4218
        %v4220 = vpop.f32.mrb[0].mxu0
        %v4221 = vpop.f32.mrb[0].mxu0
        %v4222 = vadd.f32 %v3966, %v4221
        %v4223 = vpop.f32.mrb[0].mxu0
        %4224 = vmatprep.mubr.bf16.mxu0 %v3898
        %4225 = vmatmul.mubr.bf16.gmra.mrb[0].mxu0 %v3897
        %v4226 = vpop.f32.mrb[0].mxu0
        %v4227 = vadd.f32 %v3966, %v4226
        %v4228 = vpop.f32.mrb[0].mxu0
        %v4229 = vpop.f32.mrb[0].mxu0
        %v4230 = vadd.f32 %v3966, %v4229
        %v4231 = vpop.f32.mrb[0].mxu0
        %4232 = vmatprep.mubr.bf16.mxu0 %v3900
        %4233 = vmatmul.mubr.bf16.gmra.mrb[0].mxu0 %v3899
        %v4234 = vpop.f32.mrb[0].mxu0
        %v4235 = vadd.f32 %v3966, %v4234
        %v4236 = vpop.f32.mrb[0].mxu0
        %v4237 = vpop.f32.mrb[0].mxu0
        %v4238 = vadd.f32 %v3966, %v4237
        %v4239 = vpop.f32.mrb[0].mxu0
        %4240 = vmatprep.mubr.bf16.mxu0 %v3902
        %4241 = vmatmul.mubr.bf16.gmra.mrb[0].mxu0 %v3901
        %v4242 = vpop.f32.mrb[0].mxu0
        %v4243 = vadd.f32 %v3966, %v4242
        %v4244 = vpop.f32.mrb[0].mxu0
        %v4245 = vpop.f32.mrb[0].mxu0
        %v4246 = vadd.f32 %v3966, %v4245
        %v4247 = vpop.f32.mrb[0].mxu0
        %4248 = vmatprep.mubr.bf16.mxu0 %v3904
        %4249 = vmatmul.mubr.bf16.gmra.mrb[0].mxu0 %v3903
        %v4250 = vpop.f32.mrb[0].mxu0
        %v4251 = vadd.f32 %v3966, %v4250
        %v4252 = vpop.f32.mrb[0].mxu0
        %v4253 = vpop.f32.mrb[0].mxu0
        %v4254 = vadd.f32 %v3966, %v4253
        %v4255 = vpop.f32.mrb[0].mxu0
        %4256 = vmatprep.mubr.bf16.mxu0 %v3906
        %4257 = vmatmul.mubr.bf16.gmra.mrb[0].mxu0 %v3905
        %v4258 = vpop.f32.mrb[0].mxu0
        %v4259 = vadd.f32 %v3966, %v4258
        %v4260 = vpop.f32.mrb[0].mxu0
        %v4261 = vpop.f32.mrb[0].mxu0
        %v4262 = vadd.f32 %v3966, %v4261
        %v4263 = vpop.f32.mrb[0].mxu0
        %4264 = vmatprep.mubr.bf16.mxu0 %v3908
        %4265 = vmatmul.mubr.bf16.gmra.mrb[0].mxu0 %v3907
        %v4266 = vpop.f32.mrb[0].mxu0
        %v4267 = vadd.f32 %v3966, %v4266
        %v4268 = vpop.f32.mrb[0].mxu0
        %v4269 = vpop.f32.mrb[0].mxu0
        %v4270 = vadd.f32 %v3966, %v4269
        %v4271 = vpop.f32.mrb[0].mxu0
        %4272 = vmatprep.mubr.bf16.mxu0 %v3910
        %4273 = vmatmul.mubr.bf16.gmra.mrb[0].mxu0 %v3909
        %v4274 = vpop.f32.mrb[0].mxu0
        %v4275 = vadd.f32 %v3966, %v4274
        %v4276 = vpop.f32.mrb[0].mxu0
        %v4277 = vpop.f32.mrb[0].mxu0
        %v4278 = vadd.f32 %v3966, %v4277
        %v4279 = vpop.f32.mrb[0].mxu0
        %4280 = vmatprep.mubr.bf16.mxu0 %v3912
        %4281 = vmatmul.mubr.bf16.gmra.mrb[0].mxu0 %v3911
        %v4282 = vpop.f32.mrb[0].mxu0
        %v4283 = vadd.f32 %v3966, %v4282
        %v4284 = vpop.f32.mrb[0].mxu0
        %v4285 = vpop.f32.mrb[0].mxu0
        %v4286 = vadd.f32 %v3966, %v4285
        %v4287 = vpop.f32.mrb[0].mxu0
        %4288 = vmatprep.mubr.bf16.mxu0 %v3914
        %4289 = vmatmul.mubr.bf16.gmra.mrb[0].mxu0 %v3913
        %v4290 = vpop.f32.mrb[0].mxu0
        %v4291 = vadd.f32 %v3966, %v4290
        %v4292 = vpop.f32.mrb[0].mxu0
        %v4293 = vpop.f32.mrb[0].mxu0
        %v4294 = vadd.f32 %v3966, %v4293
        %v4295 = vpop.f32.mrb[0].mxu0
        %4296 = vmatprep.mubr.bf16.mxu0 %v3916
        %4297 = vmatmul.mubr.bf16.gmra.mrb[0].mxu0 %v3915
        %v4298 = vpop.f32.mrb[0].mxu0
        %v4299 = vadd.f32 %v3966, %v4298
        %v4300 = vpop.f32.mrb[0].mxu0
        %v4301 = vpop.f32.mrb[0].mxu0
        %v4302 = vadd.f32 %v3966, %v4301
        %v4303 = vpop.f32.mrb[0].mxu0
        %4304 = vmatprep.mubr.bf16.mxu0 %v3918
        %4305 = vmatmul.mubr.bf16.gmra.mrb[0].mxu0 %v3917
        %v4306 = vpop.f32.mrb[0].mxu0
        %v4307 = vadd.f32 %v3966, %v4306
        %v4308 = vpop.f32.mrb[0].mxu0
        %v4309 = vpop.f32.mrb[0].mxu0
        %v4310 = vadd.f32 %v3966, %v4309
        %v4311 = vpop.f32.mrb[0].mxu0
        %4312 = vmatprep.mubr.bf16.mxu0 %v3920
        %4313 = vmatmul.mubr.bf16.gmra.mrb[0].mxu0 %v3919
        %v4314 = vpop.f32.mrb[0].mxu0
        %v4315 = vadd.f32 %v3966, %v4314
        %v4316 = vpop.f32.mrb[0].mxu0
        %v4317 = vpop.f32.mrb[0].mxu0
        %v4318 = vadd.f32 %v3966, %v4317
        %v4319 = vpop.f32.mrb[0].mxu0
        %4320 = vmatprep.mubr.bf16.mxu0 %v3922
        %4321 = vmatmul.mubr.bf16.gmra.mrb[0].mxu0 %v3921
        %v4322 = vpop.f32.mrb[0].mxu0
        %v4323 = vadd.f32 %v3966, %v4322
        %v4324 = vpop.f32.mrb[0].mxu0
        %v4325 = vpop.f32.mrb[0].mxu0
        %v4326 = vadd.f32 %v3966, %v4325
        %v4327 = vpop.f32.mrb[0].mxu0
        %4328 = vmatprep.mubr.bf16.mxu0 %v3924
        %4329 = vmatmul.mubr.bf16.gmra.mrb[0].mxu0 %v3923
        %v4330 = vpop.f32.mrb[0].mxu0
        %v4331 = vadd.f32 %v3966, %v4330
        %v4332 = vpop.f32.mrb[0].mxu0
        %v4333 = vpop.f32.mrb[0].mxu0
        %v4334 = vadd.f32 %v3966, %v4333
        %v4335 = vpop.f32.mrb[0].mxu0
        %4336 = vmatprep.mubr.bf16.mxu0 %v3926
        %4337 = vmatmul.mubr.bf16.gmra.mrb[0].mxu0 %v3925
        %v4338 = vpop.f32.mrb[0].mxu0
        %v4339 = vadd.f32 %v3966, %v4338
        %v4340 = vpop.f32.mrb[0].mxu0
        %v4341 = vpop.f32.mrb[0].mxu0
        %v4342 = vadd.f32 %v3966, %v4341
        %v4343 = vpop.f32.mrb[0].mxu0
        %4344 = vmatprep.mubr.bf16.mxu0 %v3928
        %4345 = vmatmul.mubr.bf16.gmra.mrb[0].mxu0 %v3927
        %v4346 = vpop.f32.mrb[0].mxu0
        %v4347 = vadd.f32 %v3966, %v4346
        %v4348 = vpop.f32.mrb[0].mxu0
        %v4349 = vpop.f32.mrb[0].mxu0
        %v4350 = vadd.f32 %v3966, %v4349
        %v4351 = vpop.f32.mrb[0].mxu0
        %4352 = vdwg.mxu0
        %v4353 = vld [vmem:[#allocation31] sm:$0xff]
        %v4354 = vld [vmem:[#allocation31 + $0x8] sm:$0xff]
        %v4355 = vld [vmem:[#allocation31 + $0x10] sm:$0xff]
        %v4356 = vld [vmem:[#allocation31 + $0x18] sm:$0xff]
        %v4357 = vld [vmem:[#allocation31 + $0x20] sm:$0xff]
        %v4358 = vld [vmem:[#allocation31 + $0x28] sm:$0xff]
        %v4359 = vld [vmem:[#allocation31 + $0x30] sm:$0xff]
        %v4360 = vld [vmem:[#allocation31 + $0x38] sm:$0xff]
        %v4361 = vld [vmem:[#allocation31 + $0x40] sm:$0xff]
        %v4362 = vld [vmem:[#allocation31 + $0x48] sm:$0xff]
        %v4363 = vld [vmem:[#allocation31 + $0x50] sm:$0xff]
        %v4364 = vld [vmem:[#allocation31 + $0x58] sm:$0xff]
        %v4365 = vld [vmem:[#allocation31 + $0x60] sm:$0xff]
        %v4366 = vld [vmem:[#allocation31 + $0x68] sm:$0xff]
        %v4367 = vld [vmem:[#allocation31 + $0x70] sm:$0xff]
        %v4368 = vld [vmem:[#allocation31 + $0x78] sm:$0xff]
        %v4369 = vld [vmem:[#allocation31 + $0x80] sm:$0xff]
        %v4370 = vld [vmem:[#allocation31 + $0x88] sm:$0xff]
        %v4371 = vld [vmem:[#allocation31 + $0x90] sm:$0xff]
        %v4372 = vld [vmem:[#allocation31 + $0x98] sm:$0xff]
        %v4373 = vld [vmem:[#allocation31 + $0xa0] sm:$0xff]
        %v4374 = vld [vmem:[#allocation31 + $0xa8] sm:$0xff]
        %v4375 = vld [vmem:[#allocation31 + $0xb0] sm:$0xff]
        %v4376 = vld [vmem:[#allocation31 + $0xb8] sm:$0xff]
        %v4377 = vld [vmem:[#allocation31 + $0xc0] sm:$0xff]
        %v4378 = vld [vmem:[#allocation31 + $0xc8] sm:$0xff]
        %v4379 = vld [vmem:[#allocation31 + $0xd0] sm:$0xff]
        %v4380 = vld [vmem:[#allocation31 + $0xd8] sm:$0xff]
        %v4381 = vld [vmem:[#allocation31 + $0xe0] sm:$0xff]
        %v4382 = vld [vmem:[#allocation31 + $0xe8] sm:$0xff]
        %v4383 = vld [vmem:[#allocation31 + $0xf0] sm:$0xff]
        %v4384 = vld [vmem:[#allocation31 + $0xf8] sm:$0xff]
        %v4385 = vld [vmem:[#allocation31 + $0x100] sm:$0xff]
        %v4386 = vld [vmem:[#allocation31 + $0x108] sm:$0xff]
        %v4387 = vld [vmem:[#allocation31 + $0x110] sm:$0xff]
        %v4388 = vld [vmem:[#allocation31 + $0x118] sm:$0xff]
        %v4389 = vld [vmem:[#allocation31 + $0x120] sm:$0xff]
        %v4390 = vld [vmem:[#allocation31 + $0x128] sm:$0xff]
        %v4391 = vld [vmem:[#allocation31 + $0x130] sm:$0xff]
        %v4392 = vld [vmem:[#allocation31 + $0x138] sm:$0xff]
        %v4393 = vld [vmem:[#allocation31 + $0x140] sm:$0xff]
        %v4394 = vld [vmem:[#allocation31 + $0x148] sm:$0xff]
        %v4395 = vld [vmem:[#allocation31 + $0x150] sm:$0xff]
        %v4396 = vld [vmem:[#allocation31 + $0x158] sm:$0xff]
        %v4397 = vld [vmem:[#allocation31 + $0x160] sm:$0xff]
        %v4398 = vld [vmem:[#allocation31 + $0x168] sm:$0xff]
        %v4399 = vld [vmem:[#allocation31 + $0x170] sm:$0xff]
        %v4400 = vld [vmem:[#allocation31 + $0x178] sm:$0xff]
        %v4401 = vld [vmem:[#allocation31 + $0x180] sm:$0xff]
        %v4402 = vld [vmem:[#allocation31 + $0x188] sm:$0xff]
        %v4403 = vld [vmem:[#allocation31 + $0x190] sm:$0xff]
        %v4404 = vld [vmem:[#allocation31 + $0x198] sm:$0xff]
        %v4405 = vld [vmem:[#allocation31 + $0x1a0] sm:$0xff]
        %v4406 = vld [vmem:[#allocation31 + $0x1a8] sm:$0xff]
        %v4407 = vld [vmem:[#allocation31 + $0x1b0] sm:$0xff]
        %v4408 = vld [vmem:[#allocation31 + $0x1b8] sm:$0xff]
        %v4409 = vld [vmem:[#allocation31 + $0x1c0] sm:$0xff]
        %v4410 = vld [vmem:[#allocation31 + $0x1c8] sm:$0xff]
        %v4411 = vld [vmem:[#allocation31 + $0x1d0] sm:$0xff]
        %v4412 = vld [vmem:[#allocation31 + $0x1d8] sm:$0xff]
        %v4413 = vld [vmem:[#allocation31 + $0x1e0] sm:$0xff]
        %v4414 = vld [vmem:[#allocation31 + $0x1e8] sm:$0xff]
        %v4415 = vld [vmem:[#allocation31 + $0x1f0] sm:$0xff]
        %v4416 = vld [vmem:[#allocation31 + $0x1f8] sm:$0xff]
        %v4417 = vmul.f32 %v4099, %v4353
        %v4418 = vmul.f32 %v4102, %v4354
        %v4419 = vmul.f32 %v4107, %v4355
        %v4420 = vmul.f32 %v4110, %v4356
        %v4421 = vmul.f32 %v4115, %v4357
        %v4422 = vmul.f32 %v4118, %v4358
        %v4423 = vmul.f32 %v4123, %v4359
        %v4424 = vmul.f32 %v4126, %v4360
        %v4425 = vmul.f32 %v4131, %v4361
        %v4426 = vmul.f32 %v4134, %v4362
        %v4427 = vmul.f32 %v4139, %v4363
        %v4428 = vmul.f32 %v4142, %v4364
        %v4429 = vmul.f32 %v4147, %v4365
        %v4430 = vmul.f32 %v4150, %v4366
        %v4431 = vmul.f32 %v4155, %v4367
        %v4432 = vmul.f32 %v4158, %v4368
        %v4433 = vmul.f32 %v4163, %v4369
        %v4434 = vmul.f32 %v4166, %v4370
        %v4435 = vmul.f32 %v4171, %v4371
        %v4436 = vmul.f32 %v4174, %v4372
        %v4437 = vmul.f32 %v4179, %v4373
        %v4438 = vmul.f32 %v4182, %v4374
        %v4439 = vmul.f32 %v4187, %v4375
        %v4440 = vmul.f32 %v4190, %v4376
        %v4441 = vmul.f32 %v4195, %v4377
        %v4442 = vmul.f32 %v4198, %v4378
        %v4443 = vmul.f32 %v4203, %v4379
        %v4444 = vmul.f32 %v4206, %v4380
        %v4445 = vmul.f32 %v4211, %v4381
        %v4446 = vmul.f32 %v4214, %v4382
        %v4447 = vmul.f32 %v4219, %v4383
        %v4448 = vmul.f32 %v4222, %v4384
        %v4449 = vmul.f32 %v4227, %v4385
        %v4450 = vmul.f32 %v4230, %v4386
        %v4451 = vmul.f32 %v4235, %v4387
        %v4452 = vmul.f32 %v4238, %v4388
        %v4453 = vmul.f32 %v4243, %v4389
        %v4454 = vmul.f32 %v4246, %v4390
        %v4455 = vmul.f32 %v4251, %v4391
        %v4456 = vmul.f32 %v4254, %v4392
        %v4457 = vmul.f32 %v4259, %v4393
        %v4458 = vmul.f32 %v4262, %v4394
        %v4459 = vmul.f32 %v4267, %v4395
        %v4460 = vmul.f32 %v4270, %v4396
        %v4461 = vmul.f32 %v4275, %v4397
        %v4462 = vmul.f32 %v4278, %v4398
        %v4463 = vmul.f32 %v4283, %v4399
        %v4464 = vmul.f32 %v4286, %v4400
        %v4465 = vmul.f32 %v4291, %v4401
        %v4466 = vmul.f32 %v4294, %v4402
        %v4467 = vmul.f32 %v4299, %v4403
        %v4468 = vmul.f32 %v4302, %v4404
        %v4469 = vmul.f32 %v4307, %v4405
        %v4470 = vmul.f32 %v4310, %v4406
        %v4471 = vmul.f32 %v4315, %v4407
        %v4472 = vmul.f32 %v4318, %v4408
        %v4473 = vmul.f32 %v4323, %v4409
        %v4474 = vmul.f32 %v4326, %v4410
        %v4475 = vmul.f32 %v4331, %v4411
        %v4476 = vmul.f32 %v4334, %v4412
        %v4477 = vmul.f32 %v4339, %v4413
        %v4478 = vmul.f32 %v4342, %v4414
        %v4479 = vmul.f32 %v4347, %v4415
        %v4480 = vmul.f32 %v4350, %v4416
        %4481 = vst [vmem:[%s721] sm:$0xff] %v4417
        %4482 = vst [vmem:[%s721 + $0x8] sm:$0xff] %v4418
        %4483 = vst [vmem:[%s721 + $0x10] sm:$0xff] %v4419
        %4484 = vst [vmem:[%s721 + $0x18] sm:$0xff] %v4420
        %4485 = vst [vmem:[%s721 + $0x20] sm:$0xff] %v4421
        %4486 = vst [vmem:[%s721 + $0x28] sm:$0xff] %v4422
        %4487 = vst [vmem:[%s721 + $0x30] sm:$0xff] %v4423
        %4488 = vst [vmem:[%s721 + $0x38] sm:$0xff] %v4424
        %4489 = vst [vmem:[%s721 + $0x40] sm:$0xff] %v4425
        %4490 = vst [vmem:[%s721 + $0x48] sm:$0xff] %v4426
        %4491 = vst [vmem:[%s721 + $0x50] sm:$0xff] %v4427
        %4492 = vst [vmem:[%s721 + $0x58] sm:$0xff] %v4428
        %4493 = vst [vmem:[%s721 + $0x60] sm:$0xff] %v4429
        %4494 = vst [vmem:[%s721 + $0x68] sm:$0xff] %v4430
        %4495 = vst [vmem:[%s721 + $0x70] sm:$0xff] %v4431
        %4496 = vst [vmem:[%s721 + $0x78] sm:$0xff] %v4432
        %4497 = vst [vmem:[%s721 + $0x80] sm:$0xff] %v4433
        %4498 = vst [vmem:[%s721 + $0x88] sm:$0xff] %v4434
        %4499 = vst [vmem:[%s721 + $0x90] sm:$0xff] %v4435
        %4500 = vst [vmem:[%s721 + $0x98] sm:$0xff] %v4436
        %4501 = vst [vmem:[%s721 + $0xa0] sm:$0xff] %v4437
        %4502 = vst [vmem:[%s721 + $0xa8] sm:$0xff] %v4438
        %4503 = vst [vmem:[%s721 + $0xb0] sm:$0xff] %v4439
        %4504 = vst [vmem:[%s721 + $0xb8] sm:$0xff] %v4440
        %4505 = vst [vmem:[%s721 + $0xc0] sm:$0xff] %v4441
        %4506 = vst [vmem:[%s721 + $0xc8] sm:$0xff] %v4442
        %4507 = vst [vmem:[%s721 + $0xd0] sm:$0xff] %v4443
        %4508 = vst [vmem:[%s721 + $0xd8] sm:$0xff] %v4444
        %4509 = vst [vmem:[%s721 + $0xe0] sm:$0xff] %v4445
        %4510 = vst [vmem:[%s721 + $0xe8] sm:$0xff] %v4446
        %4511 = vst [vmem:[%s721 + $0xf0] sm:$0xff] %v4447
        %4512 = vst [vmem:[%s721 + $0xf8] sm:$0xff] %v4448
        %4513 = vst [vmem:[%s721 + $0x100] sm:$0xff] %v4449
        %4514 = vst [vmem:[%s721 + $0x108] sm:$0xff] %v4450
        %4515 = vst [vmem:[%s721 + $0x110] sm:$0xff] %v4451
        %4516 = vst [vmem:[%s721 + $0x118] sm:$0xff] %v4452
        %4517 = vst [vmem:[%s721 + $0x120] sm:$0xff] %v4453
        %4518 = vst [vmem:[%s721 + $0x128] sm:$0xff] %v4454
        %4519 = vst [vmem:[%s721 + $0x130] sm:$0xff] %v4455
        %4520 = vst [vmem:[%s721 + $0x138] sm:$0xff] %v4456
        %4521 = vst [vmem:[%s721 + $0x140] sm:$0xff] %v4457
        %4522 = vst [vmem:[%s721 + $0x148] sm:$0xff] %v4458
        %4523 = vst [vmem:[%s721 + $0x150] sm:$0xff] %v4459
        %4524 = vst [vmem:[%s721 + $0x158] sm:$0xff] %v4460
        %4525 = vst [vmem:[%s721 + $0x160] sm:$0xff] %v4461
        %4526 = vst [vmem:[%s721 + $0x168] sm:$0xff] %v4462
        %4527 = vst [vmem:[%s721 + $0x170] sm:$0xff] %v4463
        %4528 = vst [vmem:[%s721 + $0x178] sm:$0xff] %v4464
        %4529 = vst [vmem:[%s721 + $0x180] sm:$0xff] %v4465
        %4530 = vst [vmem:[%s721 + $0x188] sm:$0xff] %v4466
        %4531 = vst [vmem:[%s721 + $0x190] sm:$0xff] %v4467
        %4532 = vst [vmem:[%s721 + $0x198] sm:$0xff] %v4468
        %4533 = vst [vmem:[%s721 + $0x1a0] sm:$0xff] %v4469
        %4534 = vst [vmem:[%s721 + $0x1a8] sm:$0xff] %v4470
        %4535 = vst [vmem:[%s721 + $0x1b0] sm:$0xff] %v4471
        %4536 = vst [vmem:[%s721 + $0x1b8] sm:$0xff] %v4472
        %4537 = vst [vmem:[%s721 + $0x1c0] sm:$0xff] %v4473
        %4538 = vst [vmem:[%s721 + $0x1c8] sm:$0xff] %v4474
        %4539 = vst [vmem:[%s721 + $0x1d0] sm:$0xff] %v4475
        %4540 = vst [vmem:[%s721 + $0x1d8] sm:$0xff] %v4476
        %4541 = vst [vmem:[%s721 + $0x1e0] sm:$0xff] %v4477
        %4542 = vst [vmem:[%s721 + $0x1e8] sm:$0xff] %v4478
        %4543 = vst [vmem:[%s721 + $0x1f0] sm:$0xff] %v4479
        %4544 = vst [vmem:[%s721 + $0x1f8] sm:$0xff] %v4480
        %s4545 = sadd.s32 %s724, 1
        %s4546 = sld [smem:[#allocation6 + %s4545]]
        %v4547 = vld [vmem:[#allocation10] sm:$0xff]
        %v4548 = vld [vmem:[#allocation10 + $0x8] sm:$0xff]
        %v4549 = vstv %s4546
        %v4550 = vmul.f32 %v4549, %v4547
        %v4551 = vmul.f32 %v4549, %v4548
        %v4552 = vld [vmem:[#allocation11] sm:$0x1]
        %v4554 = vlaneseq
        %v4555 = vshrl.u32 %v4554, 7
        %v4556 = vsub.s32 0, %v4555
        %v4557 = vrot.slane %v4552, %v4556
        %v4559 = vadd.f32 %v4550, %v4557
        %v4560 = vadd.f32 %v4551, %v4557
        %v4561 = vmax.f32 %v4559, 0.0
        %v4562 = vmax.f32 %v4560, 0.0
        %v4563 = vsel %vm742, %v4561, 0.0
        %v4564 = vsel %vm742, %v4562, 0.0
        %v4565 = vadd.f32 %v4563, %v4564
        %4566 = vadd.xlane.f32.xlu0 %v4565
        %v4567 = vpop.xlane.xlu0 %4566
        %v4568 = vrot.slane %v4567, 4
        %v4569 = vadd.f32 %v4567, %v4568
        %v4570 = vrot.slane %v4569, 2
        %v4571 = vadd.f32 %v4569, %v4570
        %v4572 = vrot.slane %v4571, 1
        %v4573 = vadd.f32 %v4571, %v4572
        %s4574 = vtos %v4573
        %v4575 = vrcp.pop 512.0
        %s4576 = vtos %v4575
        %s4577 = smul.f32 %s4574, %s4576
        %v4578 = vstv %s4577
        %v4579 = vsub.f32 %v4561, %v4578
        %v4580 = vsub.f32 %v4562, %v4578
        %v4581 = vmul.f32 %v4579, %v4579
        %v4582 = vmul.f32 %v4580, %v4580
        %v4583 = vsel %vm742, %v4581, 0.0
        %v4584 = vsel %vm742, %v4582, 0.0
        %v4585 = vadd.f32 %v4583, %v4584
        %4586 = vadd.xlane.f32.xlu0 %v4585
        %v4587 = vpop.xlane.xlu0 %4586
        %v4588 = vrot.slane %v4587, 4
        %v4589 = vadd.f32 %v4587, %v4588
        %v4590 = vrot.slane %v4589, 2
        %v4591 = vadd.f32 %v4589, %v4590
        %v4592 = vrot.slane %v4591, 1
        %v4593 = vadd.f32 %v4591, %v4592
        %s4594 = vtos %v4593
        %v4595 = vrcp.pop 512.0
        %s4596 = vtos %v4595
        %s4597 = smul.f32 %s4594, %s4596
        %s4598 = sadd.f32 %s4597, 1e-05
        %v4599 = vstv %s4598
        %v4600 = vrsqrt.pop %v4599
        %s4601 = vtos %v4600
        %v4602 = vstv %s4601
        %v4603 = vmul.f32 %v4579, %v4602
        %v4604 = vmul.f32 %v4580, %v4602
        %v4605 = vld [vmem:[#allocation13] sm:$0xff]
        %v4606 = vld [vmem:[#allocation13 + $0x8] sm:$0xff]
        %v4607 = vmul.f32 %v4603, %v4605
        %v4608 = vmul.f32 %v4604, %v4606
        %v4609 = vld [vmem:[#allocation14] sm:$0xff]
        %v4610 = vld [vmem:[#allocation14 + $0x8] sm:$0xff]
        %v4611 = vadd.f32 %v4607, %v4609
        %v4612 = vadd.f32 %v4608, %v4610
        %v4613 = vpack.c.bf16 %v4612, %v4611
        %v4614 = vld [vmem:[#allocation16] sm:$0xff]
        %v4615 = vld [vmem:[#allocation16 + $0x8] sm:$0xff]
        %v4616 = vld [vmem:[#allocation16 + $0x10] sm:$0xff]
        %v4617 = vld [vmem:[#allocation16 + $0x18] sm:$0xff]
        %v4618 = vld [vmem:[#allocation16 + $0x20] sm:$0xff]
        %v4619 = vld [vmem:[#allocation16 + $0x28] sm:$0xff]
        %v4620 = vld [vmem:[#allocation16 + $0x30] sm:$0xff]
        %v4621 = vld [vmem:[#allocation16 + $0x38] sm:$0xff]
        %v4622 = vld [vmem:[#allocation17] sm:$0xf]
        %v4624 = vlaneseq
        %v4625 = vshrl.u32 %v4624, 7
        %v4626 = vsub.s32 0, %v4625
        %v4627 = vrot.slane %v4622, %v4626
        %v4628 = vlaneseq
        %v4629 = vshrl.u32 %v4628, 7
        %v4630 = vsub.s32 1, %v4629
        %v4631 = vrot.slane %v4622, %v4630
        %v4632 = vlaneseq
        %v4633 = vshrl.u32 %v4632, 7
        %v4634 = vsub.s32 2, %v4633
        %v4635 = vrot.slane %v4622, %v4634
        %v4636 = vlaneseq
        %v4637 = vshrl.u32 %v4636, 7
        %v4638 = vsub.s32 3, %v4637
        %v4639 = vrot.slane %v4622, %v4638
        %v4652 = vunpack.c.l.b16 %v4614
        %v4653 = vunpack.c.h.b16 %v4614
        %v4654 = vunpack.c.l.b16 %v4615
        %v4655 = vunpack.c.h.b16 %v4615
        %v4656 = vunpack.c.l.b16 %v4616
        %v4657 = vunpack.c.h.b16 %v4616
        %v4658 = vunpack.c.l.b16 %v4617
        %v4659 = vunpack.c.h.b16 %v4617
        %v4660 = vunpack.c.l.b16 %v4618
        %v4661 = vunpack.c.h.b16 %v4618
        %v4662 = vunpack.c.l.b16 %v4619
        %v4663 = vunpack.c.h.b16 %v4619
        %v4664 = vunpack.c.l.b16 %v4620
        %v4665 = vunpack.c.h.b16 %v4620
        %v4666 = vunpack.c.l.b16 %v4621
        %v4667 = vunpack.c.h.b16 %v4621
        %v4668 = vpack.c.b16 %v4656, %v4652
        %v4669 = vpack.c.b16 %v4657, %v4653
        %v4670 = vpack.c.b16 %v4658, %v4654
        %v4671 = vpack.c.b16 %v4659, %v4655
        %v4672 = vpack.c.b16 %v4664, %v4660
        %v4673 = vpack.c.b16 %v4665, %v4661
        %v4674 = vpack.c.b16 %v4666, %v4662
        %v4675 = vpack.c.b16 %v4667, %v4663
        %v4685 = vsel %vm742, %v4613, 0
        %4687 = vmatprep.subr.bf16.mxu0 %v4669
        %4688 = vmatpush1.bf16.msra.mxu0 %v4668
        %4689 = vmatprep.subr.bf16.mxu0 %v4673
        %4690 = vmatpush1.bf16.msra.mxu0 %v4672
        %4691 = vmatprep.subr.bf16.mxu0 0
        %4692 = vmatpush1.bf16.msra.mxu0 0
        %4693 = vmatprep.subr.bf16.mxu0 0
        %4694 = vmatpush1.bf16.msra.mxu0 0
        %4695 = vmatprep.subr.bf16.mxu0 0
        %4696 = vmatpush1.bf16.msra.mxu0 0
        %4697 = vmatprep.subr.bf16.mxu0 0
        %4698 = vmatpush1.bf16.msra.mxu0 0
        %4699 = vmatprep.subr.bf16.mxu0 0
        %4700 = vmatpush1.bf16.msra.mxu0 0
        %4701 = vmatprep.subr.bf16.mxu0 0
        %4702 = vmatpush1.bf16.msra.mxu0 0
        %4703 = vmatprep.subr.bf16.mxu0 0
        %4704 = vmatpush1.bf16.msra.mxu0 0
        %4705 = vmatprep.subr.bf16.mxu0 0
        %4706 = vmatpush1.bf16.msra.mxu0 0
        %4707 = vmatprep.subr.bf16.mxu0 0
        %4708 = vmatpush1.bf16.msra.mxu0 0
        %4709 = vmatprep.subr.bf16.mxu0 0
        %4710 = vmatpush1.bf16.msra.mxu0 0
        %4711 = vmatprep.subr.bf16.mxu0 0
        %4712 = vmatpush1.bf16.msra.mxu0 0
        %4713 = vmatprep.subr.bf16.mxu0 0
        %4714 = vmatpush1.bf16.msra.mxu0 0
        %4715 = vmatprep.subr.bf16.mxu0 0
        %4716 = vmatpush1.bf16.msra.mxu0 0
        %4717 = vmatprep.subr.bf16.mxu0 0
        %4718 = vmatpush1.bf16.msra.mxu0 0
        %4719 = vmatprep.mubr.bf16.mxu0 0
        %4720 = vmatmul.mubr.bf16.gmra.mrb[0].mxu0 %v4685
        %v4721 = vpop.f32.mrb[0].mxu0
        %v4722 = vadd.f32 %v4627, %v4721
        %v4723 = vpop.f32.mrb[0].mxu0
        %v4724 = vadd.f32 %v4631, %v4723
        %v4725 = vpop.f32.mrb[0].mxu0
        %v4726 = vadd.f32 %v4627, %v4725
        %v4727 = vpop.f32.mrb[0].mxu0
        %v4728 = vadd.f32 %v4631, %v4727
        %4729 = vdwg.mxu0
        %4730 = vmatprep.subr.bf16.mxu0 %v4671
        %4731 = vmatpush1.bf16.msra.mxu0 %v4670
        %4732 = vmatprep.subr.bf16.mxu0 %v4675
        %4733 = vmatpush1.bf16.msra.mxu0 %v4674
        %4734 = vmatprep.subr.bf16.mxu0 0
        %4735 = vmatpush1.bf16.msra.mxu0 0
        %4736 = vmatprep.subr.bf16.mxu0 0
        %4737 = vmatpush1.bf16.msra.mxu0 0
        %4738 = vmatprep.subr.bf16.mxu0 0
        %4739 = vmatpush1.bf16.msra.mxu0 0
        %4740 = vmatprep.subr.bf16.mxu0 0
        %4741 = vmatpush1.bf16.msra.mxu0 0
        %4742 = vmatprep.subr.bf16.mxu0 0
        %4743 = vmatpush1.bf16.msra.mxu0 0
        %4744 = vmatprep.subr.bf16.mxu0 0
        %4745 = vmatpush1.bf16.msra.mxu0 0
        %4746 = vmatprep.subr.bf16.mxu0 0
        %4747 = vmatpush1.bf16.msra.mxu0 0
        %4748 = vmatprep.subr.bf16.mxu0 0
        %4749 = vmatpush1.bf16.msra.mxu0 0
        %4750 = vmatprep.subr.bf16.mxu0 0
        %4751 = vmatpush1.bf16.msra.mxu0 0
        %4752 = vmatprep.subr.bf16.mxu0 0
        %4753 = vmatpush1.bf16.msra.mxu0 0
        %4754 = vmatprep.subr.bf16.mxu0 0
        %4755 = vmatpush1.bf16.msra.mxu0 0
        %4756 = vmatprep.subr.bf16.mxu0 0
        %4757 = vmatpush1.bf16.msra.mxu0 0
        %4758 = vmatprep.subr.bf16.mxu0 0
        %4759 = vmatpush1.bf16.msra.mxu0 0
        %4760 = vmatprep.subr.bf16.mxu0 0
        %4761 = vmatpush1.bf16.msra.mxu0 0
        %4762 = vmatprep.mubr.bf16.mxu0 0
        %4763 = vmatmul.mubr.bf16.gmra.mrb[0].mxu0 %v4685
        %v4764 = vpop.f32.mrb[0].mxu0
        %v4765 = vadd.f32 %v4635, %v4764
        %v4766 = vpop.f32.mrb[0].mxu0
        %v4767 = vadd.f32 %v4639, %v4766
        %v4768 = vpop.f32.mrb[0].mxu0
        %v4769 = vadd.f32 %v4635, %v4768
        %v4770 = vpop.f32.mrb[0].mxu0
        %v4771 = vadd.f32 %v4639, %v4770
        %4772 = vdwg.mxu0
        %v4773 = vmax.f32 %v4722, 0.0
        %v4774 = vmax.f32 %v4724, 0.0
        %v4775 = vmax.f32 %v4765, 0.0
        %v4776 = vmax.f32 %v4767, 0.0
        %v4777 = vmax.f32 %v4726, 0.0
        %v4778 = vmax.f32 %v4728, 0.0
        %v4779 = vmax.f32 %v4769, 0.0
        %v4780 = vmax.f32 %v4771, 0.0
        %v4781 = vadd.f32 %v4773, %v4774
        %v4782 = vadd.f32 %v4781, %v4775
        %v4783 = vadd.f32 %v4782, %v4776
        %v4784 = vadd.f32 %v4783, %v4777
        %v4785 = vadd.f32 %v4784, %v4778
        %v4786 = vadd.f32 %v4785, %v4779
        %v4787 = vadd.f32 %v4786, %v4780
        %4788 = vadd.xlane.f32.xlu0 %v4787
        %v4789 = vpop.xlane.xlu0 %4788
        %v4790 = vrot.slane %v4789, 4
        %v4791 = vadd.f32 %v4789, %v4790
        %v4792 = vrot.slane %v4791, 2
        %v4793 = vadd.f32 %v4791, %v4792
        %v4794 = vrot.slane %v4793, 1
        %v4795 = vadd.f32 %v4793, %v4794
        %s4796 = vtos %v4795
        %v4797 = vrcp.pop 8192.0
        %s4798 = vtos %v4797
        %s4799 = smul.f32 %s4796, %s4798
        %v4800 = vstv %s4799
        %v4801 = vsub.f32 %v4773, %v4800
        %v4802 = vsub.f32 %v4774, %v4800
        %v4803 = vsub.f32 %v4775, %v4800
        %v4804 = vsub.f32 %v4776, %v4800
        %v4805 = vsub.f32 %v4777, %v4800
        %v4806 = vsub.f32 %v4778, %v4800
        %v4807 = vsub.f32 %v4779, %v4800
        %v4808 = vsub.f32 %v4780, %v4800
        %v4809 = vmul.f32 %v4801, %v4801
        %v4810 = vmul.f32 %v4802, %v4802
        %v4811 = vmul.f32 %v4803, %v4803
        %v4812 = vmul.f32 %v4804, %v4804
        %v4813 = vmul.f32 %v4805, %v4805
        %v4814 = vmul.f32 %v4806, %v4806
        %v4815 = vmul.f32 %v4807, %v4807
        %v4816 = vmul.f32 %v4808, %v4808
        %v4817 = vadd.f32 %v4809, %v4810
        %v4818 = vadd.f32 %v4817, %v4811
        %v4819 = vadd.f32 %v4818, %v4812
        %v4820 = vadd.f32 %v4819, %v4813
        %v4821 = vadd.f32 %v4820, %v4814
        %v4822 = vadd.f32 %v4821, %v4815
        %v4823 = vadd.f32 %v4822, %v4816
        %4824 = vadd.xlane.f32.xlu0 %v4823
        %v4825 = vpop.xlane.xlu0 %4824
        %v4826 = vrot.slane %v4825, 4
        %v4827 = vadd.f32 %v4825, %v4826
        %v4828 = vrot.slane %v4827, 2
        %v4829 = vadd.f32 %v4827, %v4828
        %v4830 = vrot.slane %v4829, 1
        %v4831 = vadd.f32 %v4829, %v4830
        %s4832 = vtos %v4831
        %v4833 = vrcp.pop 8192.0
        %s4834 = vtos %v4833
        %s4835 = smul.f32 %s4832, %s4834
        %s4836 = sadd.f32 %s4835, 1e-05
        %v4837 = vstv %s4836
        %v4838 = vrsqrt.pop %v4837
        %s4839 = vtos %v4838
        %4840 = vst [vmem:[#allocation2] sm:$0xff] %v4773
        %4841 = vst [vmem:[#allocation2 + $0x8] sm:$0xff] %v4774
        %4842 = vst [vmem:[#allocation2 + $0x10] sm:$0xff] %v4775
        %4843 = vst [vmem:[#allocation2 + $0x18] sm:$0xff] %v4776
        %4844 = vst [vmem:[#allocation2 + $0x20] sm:$0xff] %v4777
        %4845 = vst [vmem:[#allocation2 + $0x28] sm:$0xff] %v4778
        %4846 = vst [vmem:[#allocation2 + $0x30] sm:$0xff] %v4779
        %4847 = vst [vmem:[#allocation2 + $0x38] sm:$0xff] %v4780
        %v4848 = vld [vmem:[#allocation2] sm:$0xff]
        %v4849 = vld [vmem:[#allocation2 + $0x20] sm:$0xff]
        %v4850 = vsub.f32 %v4848, %v4800
        %v4851 = vsub.f32 %v4849, %v4800
        %v4852 = vstv %s4839
        %v4853 = vmul.f32 %v4850, %v4852
        %v4854 = vmul.f32 %v4851, %v4852
        %v4855 = vld [vmem:[#allocation19] sm:$0xf]
        %v4856 = vld [vmem:[#allocation19 + $0x10] sm:$0xf]
        %v4857 = vunpack.c.l.bf16 %v4855
        %v4858 = vunpack.c.l.bf16 %v4856
        %v4859 = vmul.f32 %v4853, %v4857
        %v4860 = vmul.f32 %v4854, %v4858
        %v4861 = vld [vmem:[#allocation20] sm:$0xf]
        %v4862 = vld [vmem:[#allocation20 + $0x10] sm:$0xf]
        %v4863 = vunpack.c.l.bf16 %v4861
        %v4864 = vunpack.c.l.bf16 %v4862
        %v4865 = vadd.f32 %v4859, %v4863
        %v4866 = vadd.f32 %v4860, %v4864
        %v4867 = vpack.c.bf16 %v4866, %v4865
        %4868 = vst.msk [vmem:[#allocation4] sm:$0xff] %vm742, %v4867
        %v4869 = vld [vmem:[#allocation2] sm:$0xff]
        %v4870 = vld [vmem:[#allocation2 + $0x20] sm:$0xff]
        %v4871 = vsub.f32 %v4869, %v4800
        %v4872 = vsub.f32 %v4870, %v4800
        %v4873 = vmul.f32 %v4871, %v4852
        %v4874 = vmul.f32 %v4872, %v4852
        %v4875 = vld [vmem:[#allocation19] sm:$0xf]
        %v4876 = vld [vmem:[#allocation19 + $0x10] sm:$0xf]
        %v4877 = vunpack.c.l.bf16 %v4875
        %v4878 = vunpack.c.l.bf16 %v4876
        %v4879 = vmul.f32 %v4873, %v4877
        %v4880 = vmul.f32 %v4874, %v4878
        %v4881 = vld [vmem:[#allocation20] sm:$0xf]
        %v4882 = vld [vmem:[#allocation20 + $0x10] sm:$0xf]
        %v4883 = vunpack.c.l.bf16 %v4881
        %v4884 = vunpack.c.l.bf16 %v4882
        %v4885 = vadd.f32 %v4879, %v4883
        %v4886 = vadd.f32 %v4880, %v4884
        %v4887 = vpack.c.bf16 %v4886, %v4885
        %4889 = vrot.lane.b32.xlu0 %v4887, 96
        %v4890 = vpop.permute.xlu0 %4889
        %4892 = vst.msk [vmem:[#allocation4 + $0x8] sm:$0xff] %vm742, %v4890
        %v4893 = vld [vmem:[#allocation2] sm:$0xff]
        %v4894 = vld [vmem:[#allocation2 + $0x20] sm:$0xff]
        %v4895 = vsub.f32 %v4893, %v4800
        %v4896 = vsub.f32 %v4894, %v4800
        %v4897 = vmul.f32 %v4895, %v4852
        %v4898 = vmul.f32 %v4896, %v4852
        %v4899 = vld [vmem:[#allocation19] sm:$0xf]
        %v4900 = vld [vmem:[#allocation19 + $0x10] sm:$0xf]
        %v4901 = vunpack.c.l.bf16 %v4899
        %v4902 = vunpack.c.l.bf16 %v4900
        %v4903 = vmul.f32 %v4897, %v4901
        %v4904 = vmul.f32 %v4898, %v4902
        %v4905 = vld [vmem:[#allocation20] sm:$0xf]
        %v4906 = vld [vmem:[#allocation20 + $0x10] sm:$0xf]
        %v4907 = vunpack.c.l.bf16 %v4905
        %v4908 = vunpack.c.l.bf16 %v4906
        %v4909 = vadd.f32 %v4903, %v4907
        %v4910 = vadd.f32 %v4904, %v4908
        %v4911 = vpack.c.bf16 %v4910, %v4909
        %4913 = vrot.lane.b32.xlu0 %v4911, 64
        %v4914 = vpop.permute.xlu0 %4913
        %4916 = vst.msk [vmem:[#allocation4 + $0x10] sm:$0xff] %vm742, %v4914
        %v4917 = vld [vmem:[#allocation2] sm:$0xff]
        %v4918 = vld [vmem:[#allocation2 + $0x20] sm:$0xff]
        %v4919 = vsub.f32 %v4917, %v4800
        %v4920 = vsub.f32 %v4918, %v4800
        %v4921 = vmul.f32 %v4919, %v4852
        %v4922 = vmul.f32 %v4920, %v4852
        %v4923 = vld [vmem:[#allocation19] sm:$0xf]
        %v4924 = vld [vmem:[#allocation19 + $0x10] sm:$0xf]
        %v4925 = vunpack.c.l.bf16 %v4923
        %v4926 = vunpack.c.l.bf16 %v4924
        %v4927 = vmul.f32 %v4921, %v4925
        %v4928 = vmul.f32 %v4922, %v4926
        %v4929 = vld [vmem:[#allocation20] sm:$0xf]
        %v4930 = vld [vmem:[#allocation20 + $0x10] sm:$0xf]
        %v4931 = vunpack.c.l.bf16 %v4929
        %v4932 = vunpack.c.l.bf16 %v4930
        %v4933 = vadd.f32 %v4927, %v4931
        %v4934 = vadd.f32 %v4928, %v4932
        %v4935 = vpack.c.bf16 %v4934, %v4933
        %4937 = vrot.lane.b32.xlu0 %v4935, 32
        %v4938 = vpop.permute.xlu0 %4937
        %4940 = vst.msk [vmem:[#allocation4 + $0x18] sm:$0xff] %vm742, %v4938
        %v4941 = vld [vmem:[#allocation2 + $0x8] sm:$0xff]
        %v4942 = vld [vmem:[#allocation2 + $0x28] sm:$0xff]
        %v4943 = vsub.f32 %v4941, %v4800
        %v4944 = vsub.f32 %v4942, %v4800
        %v4945 = vmul.f32 %v4943, %v4852
        %v4946 = vmul.f32 %v4944, %v4852
        %v4947 = vld [vmem:[#allocation19 + $0x4] sm:$0xf]
        %v4948 = vld [vmem:[#allocation19 + $0x14] sm:$0xf]
        %v4949 = vunpack.c.l.bf16 %v4947
        %v4950 = vunpack.c.l.bf16 %v4948
        %v4951 = vmul.f32 %v4945, %v4949
        %v4952 = vmul.f32 %v4946, %v4950
        %v4953 = vld [vmem:[#allocation20 + $0x4] sm:$0xf]
        %v4954 = vld [vmem:[#allocation20 + $0x14] sm:$0xf]
        %v4955 = vunpack.c.l.bf16 %v4953
        %v4956 = vunpack.c.l.bf16 %v4954
        %v4957 = vadd.f32 %v4951, %v4955
        %v4958 = vadd.f32 %v4952, %v4956
        %v4959 = vpack.c.bf16 %v4958, %v4957
        %4960 = vst.msk [vmem:[#allocation4 + $0x20] sm:$0xff] %vm742, %v4959
        %v4961 = vld [vmem:[#allocation2 + $0x8] sm:$0xff]
        %v4962 = vld [vmem:[#allocation2 + $0x28] sm:$0xff]
        %v4963 = vsub.f32 %v4961, %v4800
        %v4964 = vsub.f32 %v4962, %v4800
        %v4965 = vmul.f32 %v4963, %v4852
        %v4966 = vmul.f32 %v4964, %v4852
        %v4967 = vld [vmem:[#allocation19 + $0x4] sm:$0xf]
        %v4968 = vld [vmem:[#allocation19 + $0x14] sm:$0xf]
        %v4969 = vunpack.c.l.bf16 %v4967
        %v4970 = vunpack.c.l.bf16 %v4968
        %v4971 = vmul.f32 %v4965, %v4969
        %v4972 = vmul.f32 %v4966, %v4970
        %v4973 = vld [vmem:[#allocation20 + $0x4] sm:$0xf]
        %v4974 = vld [vmem:[#allocation20 + $0x14] sm:$0xf]
        %v4975 = vunpack.c.l.bf16 %v4973
        %v4976 = vunpack.c.l.bf16 %v4974
        %v4977 = vadd.f32 %v4971, %v4975
        %v4978 = vadd.f32 %v4972, %v4976
        %v4979 = vpack.c.bf16 %v4978, %v4977
        %4981 = vrot.lane.b32.xlu0 %v4979, 96
        %v4982 = vpop.permute.xlu0 %4981
        %4984 = vst.msk [vmem:[#allocation4 + $0x28] sm:$0xff] %vm742, %v4982
        %v4985 = vld [vmem:[#allocation2 + $0x8] sm:$0xff]
        %v4986 = vld [vmem:[#allocation2 + $0x28] sm:$0xff]
        %v4987 = vsub.f32 %v4985, %v4800
        %v4988 = vsub.f32 %v4986, %v4800
        %v4989 = vmul.f32 %v4987, %v4852
        %v4990 = vmul.f32 %v4988, %v4852
        %v4991 = vld [vmem:[#allocation19 + $0x4] sm:$0xf]
        %v4992 = vld [vmem:[#allocation19 + $0x14] sm:$0xf]
        %v4993 = vunpack.c.l.bf16 %v4991
        %v4994 = vunpack.c.l.bf16 %v4992
        %v4995 = vmul.f32 %v4989, %v4993
        %v4996 = vmul.f32 %v4990, %v4994
        %v4997 = vld [vmem:[#allocation20 + $0x4] sm:$0xf]
        %v4998 = vld [vmem:[#allocation20 + $0x14] sm:$0xf]
        %v4999 = vunpack.c.l.bf16 %v4997
        %v5000 = vunpack.c.l.bf16 %v4998
        %v5001 = vadd.f32 %v4995, %v4999
        %v5002 = vadd.f32 %v4996, %v5000
        %v5003 = vpack.c.bf16 %v5002, %v5001
        %5005 = vrot.lane.b32.xlu0 %v5003, 64
        %v5006 = vpop.permute.xlu0 %5005
        %5008 = vst.msk [vmem:[#allocation4 + $0x30] sm:$0xff] %vm742, %v5006
        %v5009 = vld [vmem:[#allocation2 + $0x8] sm:$0xff]
        %v5010 = vld [vmem:[#allocation2 + $0x28] sm:$0xff]
        %v5011 = vsub.f32 %v5009, %v4800
        %v5012 = vsub.f32 %v5010, %v4800
        %v5013 = vmul.f32 %v5011, %v4852
        %v5014 = vmul.f32 %v5012, %v4852
        %v5015 = vld [vmem:[#allocation19 + $0x4] sm:$0xf]
        %v5016 = vld [vmem:[#allocation19 + $0x14] sm:$0xf]
        %v5017 = vunpack.c.l.bf16 %v5015
        %v5018 = vunpack.c.l.bf16 %v5016
        %v5019 = vmul.f32 %v5013, %v5017
        %v5020 = vmul.f32 %v5014, %v5018
        %v5021 = vld [vmem:[#allocation20 + $0x4] sm:$0xf]
        %v5022 = vld [vmem:[#allocation20 + $0x14] sm:$0xf]
        %v5023 = vunpack.c.l.bf16 %v5021
        %v5024 = vunpack.c.l.bf16 %v5022
        %v5025 = vadd.f32 %v5019, %v5023
        %v5026 = vadd.f32 %v5020, %v5024
        %v5027 = vpack.c.bf16 %v5026, %v5025
        %5029 = vrot.lane.b32.xlu0 %v5027, 32
        %v5030 = vpop.permute.xlu0 %5029
        %5032 = vst.msk [vmem:[#allocation4 + $0x38] sm:$0xff] %vm742, %v5030
        %v5033 = vld [vmem:[#allocation2 + $0x10] sm:$0xff]
        %v5034 = vld [vmem:[#allocation2 + $0x30] sm:$0xff]
        %v5035 = vsub.f32 %v5033, %v4800
        %v5036 = vsub.f32 %v5034, %v4800
        %v5037 = vmul.f32 %v5035, %v4852
        %v5038 = vmul.f32 %v5036, %v4852
        %v5039 = vld [vmem:[#allocation19 + $0x8] sm:$0xf]
        %v5040 = vld [vmem:[#allocation19 + $0x18] sm:$0xf]
        %v5041 = vunpack.c.l.bf16 %v5039
        %v5042 = vunpack.c.l.bf16 %v5040
        %v5043 = vmul.f32 %v5037, %v5041
        %v5044 = vmul.f32 %v5038, %v5042
        %v5045 = vld [vmem:[#allocation20 + $0x8] sm:$0xf]
        %v5046 = vld [vmem:[#allocation20 + $0x18] sm:$0xf]
        %v5047 = vunpack.c.l.bf16 %v5045
        %v5048 = vunpack.c.l.bf16 %v5046
        %v5049 = vadd.f32 %v5043, %v5047
        %v5050 = vadd.f32 %v5044, %v5048
        %v5051 = vpack.c.bf16 %v5050, %v5049
        %5052 = vst.msk [vmem:[#allocation4 + $0x40] sm:$0xff] %vm742, %v5051
        %v5053 = vld [vmem:[#allocation2 + $0x10] sm:$0xff]
        %v5054 = vld [vmem:[#allocation2 + $0x30] sm:$0xff]
        %v5055 = vsub.f32 %v5053, %v4800
        %v5056 = vsub.f32 %v5054, %v4800
        %v5057 = vmul.f32 %v5055, %v4852
        %v5058 = vmul.f32 %v5056, %v4852
        %v5059 = vld [vmem:[#allocation19 + $0x8] sm:$0xf]
        %v5060 = vld [vmem:[#allocation19 + $0x18] sm:$0xf]
        %v5061 = vunpack.c.l.bf16 %v5059
        %v5062 = vunpack.c.l.bf16 %v5060
        %v5063 = vmul.f32 %v5057, %v5061
        %v5064 = vmul.f32 %v5058, %v5062
        %v5065 = vld [vmem:[#allocation20 + $0x8] sm:$0xf]
        %v5066 = vld [vmem:[#allocation20 + $0x18] sm:$0xf]
        %v5067 = vunpack.c.l.bf16 %v5065
        %v5068 = vunpack.c.l.bf16 %v5066
        %v5069 = vadd.f32 %v5063, %v5067
        %v5070 = vadd.f32 %v5064, %v5068
        %v5071 = vpack.c.bf16 %v5070, %v5069
        %5073 = vrot.lane.b32.xlu0 %v5071, 96
        %v5074 = vpop.permute.xlu0 %5073
        %5076 = vst.msk [vmem:[#allocation4 + $0x48] sm:$0xff] %vm742, %v5074
        %v5077 = vld [vmem:[#allocation2 + $0x10] sm:$0xff]
        %v5078 = vld [vmem:[#allocation2 + $0x30] sm:$0xff]
        %v5079 = vsub.f32 %v5077, %v4800
        %v5080 = vsub.f32 %v5078, %v4800
        %v5081 = vmul.f32 %v5079, %v4852
        %v5082 = vmul.f32 %v5080, %v4852
        %v5083 = vld [vmem:[#allocation19 + $0x8] sm:$0xf]
        %v5084 = vld [vmem:[#allocation19 + $0x18] sm:$0xf]
        %v5085 = vunpack.c.l.bf16 %v5083
        %v5086 = vunpack.c.l.bf16 %v5084
        %v5087 = vmul.f32 %v5081, %v5085
        %v5088 = vmul.f32 %v5082, %v5086
        %v5089 = vld [vmem:[#allocation20 + $0x8] sm:$0xf]
        %v5090 = vld [vmem:[#allocation20 + $0x18] sm:$0xf]
        %v5091 = vunpack.c.l.bf16 %v5089
        %v5092 = vunpack.c.l.bf16 %v5090
        %v5093 = vadd.f32 %v5087, %v5091
        %v5094 = vadd.f32 %v5088, %v5092
        %v5095 = vpack.c.bf16 %v5094, %v5093
        %5097 = vrot.lane.b32.xlu0 %v5095, 64
        %v5098 = vpop.permute.xlu0 %5097
        %5100 = vst.msk [vmem:[#allocation4 + $0x50] sm:$0xff] %vm742, %v5098
        %v5101 = vld [vmem:[#allocation2 + $0x10] sm:$0xff]
        %v5102 = vld [vmem:[#allocation2 + $0x30] sm:$0xff]
        %v5103 = vsub.f32 %v5101, %v4800
        %v5104 = vsub.f32 %v5102, %v4800
        %v5105 = vmul.f32 %v5103, %v4852
        %v5106 = vmul.f32 %v5104, %v4852
        %v5107 = vld [vmem:[#allocation19 + $0x8] sm:$0xf]
        %v5108 = vld [vmem:[#allocation19 + $0x18] sm:$0xf]
        %v5109 = vunpack.c.l.bf16 %v5107
        %v5110 = vunpack.c.l.bf16 %v5108
        %v5111 = vmul.f32 %v5105, %v5109
        %v5112 = vmul.f32 %v5106, %v5110
        %v5113 = vld [vmem:[#allocation20 + $0x8] sm:$0xf]
        %v5114 = vld [vmem:[#allocation20 + $0x18] sm:$0xf]
        %v5115 = vunpack.c.l.bf16 %v5113
        %v5116 = vunpack.c.l.bf16 %v5114
        %v5117 = vadd.f32 %v5111, %v5115
        %v5118 = vadd.f32 %v5112, %v5116
        %v5119 = vpack.c.bf16 %v5118, %v5117
        %5121 = vrot.lane.b32.xlu0 %v5119, 32
        %v5122 = vpop.permute.xlu0 %5121
        %5124 = vst.msk [vmem:[#allocation4 + $0x58] sm:$0xff] %vm742, %v5122
        %v5125 = vld [vmem:[#allocation2 + $0x18] sm:$0xff]
        %v5126 = vld [vmem:[#allocation2 + $0x38] sm:$0xff]
        %v5127 = vsub.f32 %v5125, %v4800
        %v5128 = vsub.f32 %v5126, %v4800
        %v5129 = vmul.f32 %v5127, %v4852
        %v5130 = vmul.f32 %v5128, %v4852
        %v5131 = vld [vmem:[#allocation19 + $0xc] sm:$0xf]
        %v5132 = vld [vmem:[#allocation19 + $0x1c] sm:$0xf]
        %v5133 = vunpack.c.l.bf16 %v5131
        %v5134 = vunpack.c.l.bf16 %v5132
        %v5135 = vmul.f32 %v5129, %v5133
        %v5136 = vmul.f32 %v5130, %v5134
        %v5137 = vld [vmem:[#allocation20 + $0xc] sm:$0xf]
        %v5138 = vld [vmem:[#allocation20 + $0x1c] sm:$0xf]
        %v5139 = vunpack.c.l.bf16 %v5137
        %v5140 = vunpack.c.l.bf16 %v5138
        %v5141 = vadd.f32 %v5135, %v5139
        %v5142 = vadd.f32 %v5136, %v5140
        %v5143 = vpack.c.bf16 %v5142, %v5141
        %5144 = vst.msk [vmem:[#allocation4 + $0x60] sm:$0xff] %vm742, %v5143
        %v5145 = vld [vmem:[#allocation2 + $0x18] sm:$0xff]
        %v5146 = vld [vmem:[#allocation2 + $0x38] sm:$0xff]
        %v5147 = vsub.f32 %v5145, %v4800
        %v5148 = vsub.f32 %v5146, %v4800
        %v5149 = vmul.f32 %v5147, %v4852
        %v5150 = vmul.f32 %v5148, %v4852
        %v5151 = vld [vmem:[#allocation19 + $0xc] sm:$0xf]
        %v5152 = vld [vmem:[#allocation19 + $0x1c] sm:$0xf]
        %v5153 = vunpack.c.l.bf16 %v5151
        %v5154 = vunpack.c.l.bf16 %v5152
        %v5155 = vmul.f32 %v5149, %v5153
        %v5156 = vmul.f32 %v5150, %v5154
        %v5157 = vld [vmem:[#allocation20 + $0xc] sm:$0xf]
        %v5158 = vld [vmem:[#allocation20 + $0x1c] sm:$0xf]
        %v5159 = vunpack.c.l.bf16 %v5157
        %v5160 = vunpack.c.l.bf16 %v5158
        %v5161 = vadd.f32 %v5155, %v5159
        %v5162 = vadd.f32 %v5156, %v5160
        %v5163 = vpack.c.bf16 %v5162, %v5161
        %5165 = vrot.lane.b32.xlu0 %v5163, 96
        %v5166 = vpop.permute.xlu0 %5165
        %5168 = vst.msk [vmem:[#allocation4 + $0x68] sm:$0xff] %vm742, %v5166
        %v5169 = vld [vmem:[#allocation2 + $0x18] sm:$0xff]
        %v5170 = vld [vmem:[#allocation2 + $0x38] sm:$0xff]
        %v5171 = vsub.f32 %v5169, %v4800
        %v5172 = vsub.f32 %v5170, %v4800
        %v5173 = vmul.f32 %v5171, %v4852
        %v5174 = vmul.f32 %v5172, %v4852
        %v5175 = vld [vmem:[#allocation19 + $0xc] sm:$0xf]
        %v5176 = vld [vmem:[#allocation19 + $0x1c] sm:$0xf]
        %v5177 = vunpack.c.l.bf16 %v5175
        %v5178 = vunpack.c.l.bf16 %v5176
        %v5179 = vmul.f32 %v5173, %v5177
        %v5180 = vmul.f32 %v5174, %v5178
        %v5181 = vld [vmem:[#allocation20 + $0xc] sm:$0xf]
        %v5182 = vld [vmem:[#allocation20 + $0x1c] sm:$0xf]
        %v5183 = vunpack.c.l.bf16 %v5181
        %v5184 = vunpack.c.l.bf16 %v5182
        %v5185 = vadd.f32 %v5179, %v5183
        %v5186 = vadd.f32 %v5180, %v5184
        %v5187 = vpack.c.bf16 %v5186, %v5185
        %5189 = vrot.lane.b32.xlu0 %v5187, 64
        %v5190 = vpop.permute.xlu0 %5189
        %5192 = vst.msk [vmem:[#allocation4 + $0x70] sm:$0xff] %vm742, %v5190
        %v5193 = vld [vmem:[#allocation2 + $0x18] sm:$0xff]
        %v5194 = vld [vmem:[#allocation2 + $0x38] sm:$0xff]
        %v5195 = vsub.f32 %v5193, %v4800
        %v5196 = vsub.f32 %v5194, %v4800
        %v5197 = vmul.f32 %v5195, %v4852
        %v5198 = vmul.f32 %v5196, %v4852
        %v5199 = vld [vmem:[#allocation19 + $0xc] sm:$0xf]
        %v5200 = vld [vmem:[#allocation19 + $0x1c] sm:$0xf]
        %v5201 = vunpack.c.l.bf16 %v5199
        %v5202 = vunpack.c.l.bf16 %v5200
        %v5203 = vmul.f32 %v5197, %v5201
        %v5204 = vmul.f32 %v5198, %v5202
        %v5205 = vld [vmem:[#allocation20 + $0xc] sm:$0xf]
        %v5206 = vld [vmem:[#allocation20 + $0x1c] sm:$0xf]
        %v5207 = vunpack.c.l.bf16 %v5205
        %v5208 = vunpack.c.l.bf16 %v5206
        %v5209 = vadd.f32 %v5203, %v5207
        %v5210 = vadd.f32 %v5204, %v5208
        %v5211 = vpack.c.bf16 %v5210, %v5209
        %5213 = vrot.lane.b32.xlu0 %v5211, 32
        %v5214 = vpop.permute.xlu0 %5213
        %5216 = vst.msk [vmem:[#allocation4 + $0x78] sm:$0xff] %vm742, %v5214
        %v5217 = vld [vmem:[#allocation4] sm:$0xff]
        %v5218 = vld [vmem:[#allocation4 + $0x8] sm:$0xff]
        %v5219 = vld [vmem:[#allocation4 + $0x10] sm:$0xff]
        %v5220 = vld [vmem:[#allocation4 + $0x18] sm:$0xff]
        %v5221 = vld [vmem:[#allocation4 + $0x20] sm:$0xff]
        %v5222 = vld [vmem:[#allocation4 + $0x28] sm:$0xff]
        %v5223 = vld [vmem:[#allocation4 + $0x30] sm:$0xff]
        %v5224 = vld [vmem:[#allocation4 + $0x38] sm:$0xff]
        %v5225 = vld [vmem:[#allocation4 + $0x40] sm:$0xff]
        %v5226 = vld [vmem:[#allocation4 + $0x48] sm:$0xff]
        %v5227 = vld [vmem:[#allocation4 + $0x50] sm:$0xff]
        %v5228 = vld [vmem:[#allocation4 + $0x58] sm:$0xff]
        %v5229 = vld [vmem:[#allocation4 + $0x60] sm:$0xff]
        %v5230 = vld [vmem:[#allocation4 + $0x68] sm:$0xff]
        %v5231 = vld [vmem:[#allocation4 + $0x70] sm:$0xff]
        %v5232 = vld [vmem:[#allocation4 + $0x78] sm:$0xff]
        %v5233 = vld [vmem:[#allocation22] sm:$0xff]
        %v5234 = vld [vmem:[#allocation22 + $0x8] sm:$0xff]
        %v5235 = vld [vmem:[#allocation22 + $0x10] sm:$0xff]
        %v5236 = vld [vmem:[#allocation22 + $0x18] sm:$0xff]
        %v5237 = vld [vmem:[#allocation22 + $0x20] sm:$0xff]
        %v5238 = vld [vmem:[#allocation22 + $0x28] sm:$0xff]
        %v5239 = vld [vmem:[#allocation22 + $0x30] sm:$0xff]
        %v5240 = vld [vmem:[#allocation22 + $0x38] sm:$0xff]
        %v5241 = vld [vmem:[#allocation23] sm:$0xf]
        %v5243 = vlaneseq
        %v5244 = vshrl.u32 %v5243, 7
        %v5245 = vsub.s32 0, %v5244
        %v5246 = vrot.slane %v5241, %v5245
        %v5247 = vlaneseq
        %v5248 = vshrl.u32 %v5247, 7
        %v5249 = vsub.s32 1, %v5248
        %v5250 = vrot.slane %v5241, %v5249
        %v5251 = vlaneseq
        %v5252 = vshrl.u32 %v5251, 7
        %v5253 = vsub.s32 2, %v5252
        %v5254 = vrot.slane %v5241, %v5253
        %v5255 = vlaneseq
        %v5256 = vshrl.u32 %v5255, 7
        %v5257 = vsub.s32 3, %v5256
        %v5258 = vrot.slane %v5241, %v5257
        %v5271 = vunpack.c.l.b16 %v5233
        %v5272 = vunpack.c.h.b16 %v5233
        %v5273 = vunpack.c.l.b16 %v5234
        %v5274 = vunpack.c.h.b16 %v5234
        %v5275 = vunpack.c.l.b16 %v5235
        %v5276 = vunpack.c.h.b16 %v5235
        %v5277 = vunpack.c.l.b16 %v5236
        %v5278 = vunpack.c.h.b16 %v5236
        %v5279 = vunpack.c.l.b16 %v5237
        %v5280 = vunpack.c.h.b16 %v5237
        %v5281 = vunpack.c.l.b16 %v5238
        %v5282 = vunpack.c.h.b16 %v5238
        %v5283 = vunpack.c.l.b16 %v5239
        %v5284 = vunpack.c.h.b16 %v5239
        %v5285 = vunpack.c.l.b16 %v5240
        %v5286 = vunpack.c.h.b16 %v5240
        %v5287 = vpack.c.b16 %v5275, %v5271
        %v5288 = vpack.c.b16 %v5276, %v5272
        %v5289 = vpack.c.b16 %v5277, %v5273
        %v5290 = vpack.c.b16 %v5278, %v5274
        %v5291 = vpack.c.b16 %v5283, %v5279
        %v5292 = vpack.c.b16 %v5284, %v5280
        %v5293 = vpack.c.b16 %v5285, %v5281
        %v5294 = vpack.c.b16 %v5286, %v5282
        %v5304 = vsel %vm742, %v5217, 0
        %v5307 = vsel %vm742, %v5218, 0
        %v5310 = vsel %vm742, %v5219, 0
        %v5313 = vsel %vm742, %v5220, 0
        %v5316 = vsel %vm742, %v5221, 0
        %v5319 = vsel %vm742, %v5222, 0
        %v5322 = vsel %vm742, %v5223, 0
        %v5325 = vsel %vm742, %v5224, 0
        %v5328 = vsel %vm742, %v5225, 0
        %v5331 = vsel %vm742, %v5226, 0
        %v5334 = vsel %vm742, %v5227, 0
        %v5337 = vsel %vm742, %v5228, 0
        %v5340 = vsel %vm742, %v5229, 0
        %v5343 = vsel %vm742, %v5230, 0
        %v5346 = vsel %vm742, %v5231, 0
        %v5349 = vsel %vm742, %v5232, 0
        %5351 = vmatprep.subr.bf16.mxu0 %v5288
        %5352 = vmatpush1.bf16.msra.mxu0 %v5287
        %5353 = vmatprep.subr.bf16.mxu0 %v5292
        %5354 = vmatpush1.bf16.msra.mxu0 %v5291
        %5355 = vmatprep.subr.bf16.mxu0 0
        %5356 = vmatpush1.bf16.msra.mxu0 0
        %5357 = vmatprep.subr.bf16.mxu0 0
        %5358 = vmatpush1.bf16.msra.mxu0 0
        %5359 = vmatprep.subr.bf16.mxu0 0
        %5360 = vmatpush1.bf16.msra.mxu0 0
        %5361 = vmatprep.subr.bf16.mxu0 0
        %5362 = vmatpush1.bf16.msra.mxu0 0
        %5363 = vmatprep.subr.bf16.mxu0 0
        %5364 = vmatpush1.bf16.msra.mxu0 0
        %5365 = vmatprep.subr.bf16.mxu0 0
        %5366 = vmatpush1.bf16.msra.mxu0 0
        %5367 = vmatprep.subr.bf16.mxu0 0
        %5368 = vmatpush1.bf16.msra.mxu0 0
        %5369 = vmatprep.subr.bf16.mxu0 0
        %5370 = vmatpush1.bf16.msra.mxu0 0
        %5371 = vmatprep.subr.bf16.mxu0 0
        %5372 = vmatpush1.bf16.msra.mxu0 0
        %5373 = vmatprep.subr.bf16.mxu0 0
        %5374 = vmatpush1.bf16.msra.mxu0 0
        %5375 = vmatprep.subr.bf16.mxu0 0
        %5376 = vmatpush1.bf16.msra.mxu0 0
        %5377 = vmatprep.subr.bf16.mxu0 0
        %5378 = vmatpush1.bf16.msra.mxu0 0
        %5379 = vmatprep.subr.bf16.mxu0 0
        %5380 = vmatpush1.bf16.msra.mxu0 0
        %5381 = vmatprep.subr.bf16.mxu0 0
        %5382 = vmatpush1.bf16.msra.mxu0 0
        %5383 = vmatprep.mubr.bf16.mxu0 0
        %5384 = vmatmul.mubr.bf16.gmra.mrb[0].mxu0 %v5304
        %v5385 = vpop.f32.mrb[0].mxu0
        %v5386 = vadd.f32 %v5246, %v5385
        %v5387 = vpop.f32.mrb[0].mxu0
        %v5388 = vadd.f32 %v5250, %v5387
        %v5389 = vpop.f32.mrb[0].mxu0
        %v5390 = vadd.f32 %v5246, %v5389
        %v5391 = vpop.f32.mrb[0].mxu0
        %v5392 = vadd.f32 %v5250, %v5391
        %5393 = vmatprep.mubr.bf16.mxu0 0
        %5394 = vmatmul.mubr.bf16.gmra.mrb[0].mxu0 %v5307
        %v5395 = vpop.f32.mrb[0].mxu0
        %v5396 = vadd.f32 %v5246, %v5395
        %v5397 = vpop.f32.mrb[0].mxu0
        %v5398 = vadd.f32 %v5250, %v5397
        %v5399 = vpop.f32.mrb[0].mxu0
        %v5400 = vadd.f32 %v5246, %v5399
        %v5401 = vpop.f32.mrb[0].mxu0
        %v5402 = vadd.f32 %v5250, %v5401
        %5403 = vmatprep.mubr.bf16.mxu0 0
        %5404 = vmatmul.mubr.bf16.gmra.mrb[0].mxu0 %v5310
        %v5405 = vpop.f32.mrb[0].mxu0
        %v5406 = vadd.f32 %v5246, %v5405
        %v5407 = vpop.f32.mrb[0].mxu0
        %v5408 = vadd.f32 %v5250, %v5407
        %v5409 = vpop.f32.mrb[0].mxu0
        %v5410 = vadd.f32 %v5246, %v5409
        %v5411 = vpop.f32.mrb[0].mxu0
        %v5412 = vadd.f32 %v5250, %v5411
        %5413 = vmatprep.mubr.bf16.mxu0 0
        %5414 = vmatmul.mubr.bf16.gmra.mrb[0].mxu0 %v5313
        %v5415 = vpop.f32.mrb[0].mxu0
        %v5416 = vadd.f32 %v5246, %v5415
        %v5417 = vpop.f32.mrb[0].mxu0
        %v5418 = vadd.f32 %v5250, %v5417
        %v5419 = vpop.f32.mrb[0].mxu0
        %v5420 = vadd.f32 %v5246, %v5419
        %v5421 = vpop.f32.mrb[0].mxu0
        %v5422 = vadd.f32 %v5250, %v5421
        %5423 = vmatprep.mubr.bf16.mxu0 0
        %5424 = vmatmul.mubr.bf16.gmra.mrb[0].mxu0 %v5316
        %v5425 = vpop.f32.mrb[0].mxu0
        %v5426 = vadd.f32 %v5246, %v5425
        %v5427 = vpop.f32.mrb[0].mxu0
        %v5428 = vadd.f32 %v5250, %v5427
        %v5429 = vpop.f32.mrb[0].mxu0
        %v5430 = vadd.f32 %v5246, %v5429
        %v5431 = vpop.f32.mrb[0].mxu0
        %v5432 = vadd.f32 %v5250, %v5431
        %5433 = vmatprep.mubr.bf16.mxu0 0
        %5434 = vmatmul.mubr.bf16.gmra.mrb[0].mxu0 %v5319
        %v5435 = vpop.f32.mrb[0].mxu0
        %v5436 = vadd.f32 %v5246, %v5435
        %v5437 = vpop.f32.mrb[0].mxu0
        %v5438 = vadd.f32 %v5250, %v5437
        %v5439 = vpop.f32.mrb[0].mxu0
        %v5440 = vadd.f32 %v5246, %v5439
        %v5441 = vpop.f32.mrb[0].mxu0
        %v5442 = vadd.f32 %v5250, %v5441
        %5443 = vmatprep.mubr.bf16.mxu0 0
        %5444 = vmatmul.mubr.bf16.gmra.mrb[0].mxu0 %v5322
        %v5445 = vpop.f32.mrb[0].mxu0
        %v5446 = vadd.f32 %v5246, %v5445
        %v5447 = vpop.f32.mrb[0].mxu0
        %v5448 = vadd.f32 %v5250, %v5447
        %v5449 = vpop.f32.mrb[0].mxu0
        %v5450 = vadd.f32 %v5246, %v5449
        %v5451 = vpop.f32.mrb[0].mxu0
        %v5452 = vadd.f32 %v5250, %v5451
        %5453 = vmatprep.mubr.bf16.mxu0 0
        %5454 = vmatmul.mubr.bf16.gmra.mrb[0].mxu0 %v5325
        %v5455 = vpop.f32.mrb[0].mxu0
        %v5456 = vadd.f32 %v5246, %v5455
        %v5457 = vpop.f32.mrb[0].mxu0
        %v5458 = vadd.f32 %v5250, %v5457
        %v5459 = vpop.f32.mrb[0].mxu0
        %v5460 = vadd.f32 %v5246, %v5459
        %v5461 = vpop.f32.mrb[0].mxu0
        %v5462 = vadd.f32 %v5250, %v5461
        %5463 = vmatprep.mubr.bf16.mxu0 0
        %5464 = vmatmul.mubr.bf16.gmra.mrb[0].mxu0 %v5328
        %v5465 = vpop.f32.mrb[0].mxu0
        %v5466 = vadd.f32 %v5246, %v5465
        %v5467 = vpop.f32.mrb[0].mxu0
        %v5468 = vadd.f32 %v5250, %v5467
        %v5469 = vpop.f32.mrb[0].mxu0
        %v5470 = vadd.f32 %v5246, %v5469
        %v5471 = vpop.f32.mrb[0].mxu0
        %v5472 = vadd.f32 %v5250, %v5471
        %5473 = vmatprep.mubr.bf16.mxu0 0
        %5474 = vmatmul.mubr.bf16.gmra.mrb[0].mxu0 %v5331
        %v5475 = vpop.f32.mrb[0].mxu0
        %v5476 = vadd.f32 %v5246, %v5475
        %v5477 = vpop.f32.mrb[0].mxu0
        %v5478 = vadd.f32 %v5250, %v5477
        %v5479 = vpop.f32.mrb[0].mxu0
        %v5480 = vadd.f32 %v5246, %v5479
        %v5481 = vpop.f32.mrb[0].mxu0
        %v5482 = vadd.f32 %v5250, %v5481
        %5483 = vmatprep.mubr.bf16.mxu0 0
        %5484 = vmatmul.mubr.bf16.gmra.mrb[0].mxu0 %v5334
        %v5485 = vpop.f32.mrb[0].mxu0
        %v5486 = vadd.f32 %v5246, %v5485
        %v5487 = vpop.f32.mrb[0].mxu0
        %v5488 = vadd.f32 %v5250, %v5487
        %v5489 = vpop.f32.mrb[0].mxu0
        %v5490 = vadd.f32 %v5246, %v5489
        %v5491 = vpop.f32.mrb[0].mxu0
        %v5492 = vadd.f32 %v5250, %v5491
        %5493 = vmatprep.mubr.bf16.mxu0 0
        %5494 = vmatmul.mubr.bf16.gmra.mrb[0].mxu0 %v5337
        %v5495 = vpop.f32.mrb[0].mxu0
        %v5496 = vadd.f32 %v5246, %v5495
        %v5497 = vpop.f32.mrb[0].mxu0
        %v5498 = vadd.f32 %v5250, %v5497
        %v5499 = vpop.f32.mrb[0].mxu0
        %v5500 = vadd.f32 %v5246, %v5499
        %v5501 = vpop.f32.mrb[0].mxu0
        %v5502 = vadd.f32 %v5250, %v5501
        %5503 = vmatprep.mubr.bf16.mxu0 0
        %5504 = vmatmul.mubr.bf16.gmra.mrb[0].mxu0 %v5340
        %v5505 = vpop.f32.mrb[0].mxu0
        %v5506 = vadd.f32 %v5246, %v5505
        %v5507 = vpop.f32.mrb[0].mxu0
        %v5508 = vadd.f32 %v5250, %v5507
        %v5509 = vpop.f32.mrb[0].mxu0
        %v5510 = vadd.f32 %v5246, %v5509
        %v5511 = vpop.f32.mrb[0].mxu0
        %v5512 = vadd.f32 %v5250, %v5511
        %5513 = vmatprep.mubr.bf16.mxu0 0
        %5514 = vmatmul.mubr.bf16.gmra.mrb[0].mxu0 %v5343
        %v5515 = vpop.f32.mrb[0].mxu0
        %v5516 = vadd.f32 %v5246, %v5515
        %v5517 = vpop.f32.mrb[0].mxu0
        %v5518 = vadd.f32 %v5250, %v5517
        %v5519 = vpop.f32.mrb[0].mxu0
        %v5520 = vadd.f32 %v5246, %v5519
        %v5521 = vpop.f32.mrb[0].mxu0
        %v5522 = vadd.f32 %v5250, %v5521
        %5523 = vmatprep.mubr.bf16.mxu0 0
        %5524 = vmatmul.mubr.bf16.gmra.mrb[0].mxu0 %v5346
        %v5525 = vpop.f32.mrb[0].mxu0
        %v5526 = vadd.f32 %v5246, %v5525
        %v5527 = vpop.f32.mrb[0].mxu0
        %v5528 = vadd.f32 %v5250, %v5527
        %v5529 = vpop.f32.mrb[0].mxu0
        %v5530 = vadd.f32 %v5246, %v5529
        %v5531 = vpop.f32.mrb[0].mxu0
        %v5532 = vadd.f32 %v5250, %v5531
        %5533 = vmatprep.mubr.bf16.mxu0 0
        %5534 = vmatmul.mubr.bf16.gmra.mrb[0].mxu0 %v5349
        %v5535 = vpop.f32.mrb[0].mxu0
        %v5536 = vadd.f32 %v5246, %v5535
        %v5537 = vpop.f32.mrb[0].mxu0
        %v5538 = vadd.f32 %v5250, %v5537
        %v5539 = vpop.f32.mrb[0].mxu0
        %v5540 = vadd.f32 %v5246, %v5539
        %v5541 = vpop.f32.mrb[0].mxu0
        %v5542 = vadd.f32 %v5250, %v5541
        %5543 = vdwg.mxu0
        %5544 = vmatprep.subr.bf16.mxu0 %v5290
        %5545 = vmatpush1.bf16.msra.mxu0 %v5289
        %5546 = vmatprep.subr.bf16.mxu0 %v5294
        %5547 = vmatpush1.bf16.msra.mxu0 %v5293
        %5548 = vmatprep.subr.bf16.mxu0 0
        %5549 = vmatpush1.bf16.msra.mxu0 0
        %5550 = vmatprep.subr.bf16.mxu0 0
        %5551 = vmatpush1.bf16.msra.mxu0 0
        %5552 = vmatprep.subr.bf16.mxu0 0
        %5553 = vmatpush1.bf16.msra.mxu0 0
        %5554 = vmatprep.subr.bf16.mxu0 0
        %5555 = vmatpush1.bf16.msra.mxu0 0
        %5556 = vmatprep.subr.bf16.mxu0 0
        %5557 = vmatpush1.bf16.msra.mxu0 0
        %5558 = vmatprep.subr.bf16.mxu0 0
        %5559 = vmatpush1.bf16.msra.mxu0 0
        %5560 = vmatprep.subr.bf16.mxu0 0
        %5561 = vmatpush1.bf16.msra.mxu0 0
        %5562 = vmatprep.subr.bf16.mxu0 0
        %5563 = vmatpush1.bf16.msra.mxu0 0
        %5564 = vmatprep.subr.bf16.mxu0 0
        %5565 = vmatpush1.bf16.msra.mxu0 0
        %5566 = vmatprep.subr.bf16.mxu0 0
        %5567 = vmatpush1.bf16.msra.mxu0 0
        %5568 = vmatprep.subr.bf16.mxu0 0
        %5569 = vmatpush1.bf16.msra.mxu0 0
        %5570 = vmatprep.subr.bf16.mxu0 0
        %5571 = vmatpush1.bf16.msra.mxu0 0
        %5572 = vmatprep.subr.bf16.mxu0 0
        %5573 = vmatpush1.bf16.msra.mxu0 0
        %5574 = vmatprep.subr.bf16.mxu0 0
        %5575 = vmatpush1.bf16.msra.mxu0 0
        %5576 = vmatprep.mubr.bf16.mxu0 0
        %5577 = vmatmul.mubr.bf16.gmra.mrb[0].mxu0 %v5304
        %v5578 = vpop.f32.mrb[0].mxu0
        %v5579 = vadd.f32 %v5254, %v5578
        %v5580 = vpop.f32.mrb[0].mxu0
        %v5581 = vadd.f32 %v5258, %v5580
        %v5582 = vpop.f32.mrb[0].mxu0
        %v5583 = vadd.f32 %v5254, %v5582
        %v5584 = vpop.f32.mrb[0].mxu0
        %v5585 = vadd.f32 %v5258, %v5584
        %5586 = vmatprep.mubr.bf16.mxu0 0
        %5587 = vmatmul.mubr.bf16.gmra.mrb[0].mxu0 %v5307
        %v5588 = vpop.f32.mrb[0].mxu0
        %v5589 = vadd.f32 %v5254, %v5588
        %v5590 = vpop.f32.mrb[0].mxu0
        %v5591 = vadd.f32 %v5258, %v5590
        %v5592 = vpop.f32.mrb[0].mxu0
        %v5593 = vadd.f32 %v5254, %v5592
        %v5594 = vpop.f32.mrb[0].mxu0
        %v5595 = vadd.f32 %v5258, %v5594
        %5596 = vmatprep.mubr.bf16.mxu0 0
        %5597 = vmatmul.mubr.bf16.gmra.mrb[0].mxu0 %v5310
        %v5598 = vpop.f32.mrb[0].mxu0
        %v5599 = vadd.f32 %v5254, %v5598
        %v5600 = vpop.f32.mrb[0].mxu0
        %v5601 = vadd.f32 %v5258, %v5600
        %v5602 = vpop.f32.mrb[0].mxu0
        %v5603 = vadd.f32 %v5254, %v5602
        %v5604 = vpop.f32.mrb[0].mxu0
        %v5605 = vadd.f32 %v5258, %v5604
        %5606 = vmatprep.mubr.bf16.mxu0 0
        %5607 = vmatmul.mubr.bf16.gmra.mrb[0].mxu0 %v5313
        %v5608 = vpop.f32.mrb[0].mxu0
        %v5609 = vadd.f32 %v5254, %v5608
        %v5610 = vpop.f32.mrb[0].mxu0
        %v5611 = vadd.f32 %v5258, %v5610
        %v5612 = vpop.f32.mrb[0].mxu0
        %v5613 = vadd.f32 %v5254, %v5612
        %v5614 = vpop.f32.mrb[0].mxu0
        %v5615 = vadd.f32 %v5258, %v5614
        %5616 = vmatprep.mubr.bf16.mxu0 0
        %5617 = vmatmul.mubr.bf16.gmra.mrb[0].mxu0 %v5316
        %v5618 = vpop.f32.mrb[0].mxu0
        %v5619 = vadd.f32 %v5254, %v5618
        %v5620 = vpop.f32.mrb[0].mxu0
        %v5621 = vadd.f32 %v5258, %v5620
        %v5622 = vpop.f32.mrb[0].mxu0
        %v5623 = vadd.f32 %v5254, %v5622
        %v5624 = vpop.f32.mrb[0].mxu0
        %v5625 = vadd.f32 %v5258, %v5624
        %5626 = vmatprep.mubr.bf16.mxu0 0
        %5627 = vmatmul.mubr.bf16.gmra.mrb[0].mxu0 %v5319
        %v5628 = vpop.f32.mrb[0].mxu0
        %v5629 = vadd.f32 %v5254, %v5628
        %v5630 = vpop.f32.mrb[0].mxu0
        %v5631 = vadd.f32 %v5258, %v5630
        %v5632 = vpop.f32.mrb[0].mxu0
        %v5633 = vadd.f32 %v5254, %v5632
        %v5634 = vpop.f32.mrb[0].mxu0
        %v5635 = vadd.f32 %v5258, %v5634
        %5636 = vmatprep.mubr.bf16.mxu0 0
        %5637 = vmatmul.mubr.bf16.gmra.mrb[0].mxu0 %v5322
        %v5638 = vpop.f32.mrb[0].mxu0
        %v5639 = vadd.f32 %v5254, %v5638
        %v5640 = vpop.f32.mrb[0].mxu0
        %v5641 = vadd.f32 %v5258, %v5640
        %v5642 = vpop.f32.mrb[0].mxu0
        %v5643 = vadd.f32 %v5254, %v5642
        %v5644 = vpop.f32.mrb[0].mxu0
        %v5645 = vadd.f32 %v5258, %v5644
        %5646 = vmatprep.mubr.bf16.mxu0 0
        %5647 = vmatmul.mubr.bf16.gmra.mrb[0].mxu0 %v5325
        %v5648 = vpop.f32.mrb[0].mxu0
        %v5649 = vadd.f32 %v5254, %v5648
        %v5650 = vpop.f32.mrb[0].mxu0
        %v5651 = vadd.f32 %v5258, %v5650
        %v5652 = vpop.f32.mrb[0].mxu0
        %v5653 = vadd.f32 %v5254, %v5652
        %v5654 = vpop.f32.mrb[0].mxu0
        %v5655 = vadd.f32 %v5258, %v5654
        %5656 = vmatprep.mubr.bf16.mxu0 0
        %5657 = vmatmul.mubr.bf16.gmra.mrb[0].mxu0 %v5328
        %v5658 = vpop.f32.mrb[0].mxu0
        %v5659 = vadd.f32 %v5254, %v5658
        %v5660 = vpop.f32.mrb[0].mxu0
        %v5661 = vadd.f32 %v5258, %v5660
        %v5662 = vpop.f32.mrb[0].mxu0
        %v5663 = vadd.f32 %v5254, %v5662
        %v5664 = vpop.f32.mrb[0].mxu0
        %v5665 = vadd.f32 %v5258, %v5664
        %5666 = vmatprep.mubr.bf16.mxu0 0
        %5667 = vmatmul.mubr.bf16.gmra.mrb[0].mxu0 %v5331
        %v5668 = vpop.f32.mrb[0].mxu0
        %v5669 = vadd.f32 %v5254, %v5668
        %v5670 = vpop.f32.mrb[0].mxu0
        %v5671 = vadd.f32 %v5258, %v5670
        %v5672 = vpop.f32.mrb[0].mxu0
        %v5673 = vadd.f32 %v5254, %v5672
        %v5674 = vpop.f32.mrb[0].mxu0
        %v5675 = vadd.f32 %v5258, %v5674
        %5676 = vmatprep.mubr.bf16.mxu0 0
        %5677 = vmatmul.mubr.bf16.gmra.mrb[0].mxu0 %v5334
        %v5678 = vpop.f32.mrb[0].mxu0
        %v5679 = vadd.f32 %v5254, %v5678
        %v5680 = vpop.f32.mrb[0].mxu0
        %v5681 = vadd.f32 %v5258, %v5680
        %v5682 = vpop.f32.mrb[0].mxu0
        %v5683 = vadd.f32 %v5254, %v5682
        %v5684 = vpop.f32.mrb[0].mxu0
        %v5685 = vadd.f32 %v5258, %v5684
        %5686 = vmatprep.mubr.bf16.mxu0 0
        %5687 = vmatmul.mubr.bf16.gmra.mrb[0].mxu0 %v5337
        %v5688 = vpop.f32.mrb[0].mxu0
        %v5689 = vadd.f32 %v5254, %v5688
        %v5690 = vpop.f32.mrb[0].mxu0
        %v5691 = vadd.f32 %v5258, %v5690
        %v5692 = vpop.f32.mrb[0].mxu0
        %v5693 = vadd.f32 %v5254, %v5692
        %v5694 = vpop.f32.mrb[0].mxu0
        %v5695 = vadd.f32 %v5258, %v5694
        %5696 = vmatprep.mubr.bf16.mxu0 0
        %5697 = vmatmul.mubr.bf16.gmra.mrb[0].mxu0 %v5340
        %v5698 = vpop.f32.mrb[0].mxu0
        %v5699 = vadd.f32 %v5254, %v5698
        %v5700 = vpop.f32.mrb[0].mxu0
        %v5701 = vadd.f32 %v5258, %v5700
        %v5702 = vpop.f32.mrb[0].mxu0
        %v5703 = vadd.f32 %v5254, %v5702
        %v5704 = vpop.f32.mrb[0].mxu0
        %v5705 = vadd.f32 %v5258, %v5704
        %5706 = vmatprep.mubr.bf16.mxu0 0
        %5707 = vmatmul.mubr.bf16.gmra.mrb[0].mxu0 %v5343
        %v5708 = vpop.f32.mrb[0].mxu0
        %v5709 = vadd.f32 %v5254, %v5708
        %v5710 = vpop.f32.mrb[0].mxu0
        %v5711 = vadd.f32 %v5258, %v5710
        %v5712 = vpop.f32.mrb[0].mxu0
        %v5713 = vadd.f32 %v5254, %v5712
        %v5714 = vpop.f32.mrb[0].mxu0
        %v5715 = vadd.f32 %v5258, %v5714
        %5716 = vmatprep.mubr.bf16.mxu0 0
        %5717 = vmatmul.mubr.bf16.gmra.mrb[0].mxu0 %v5346
        %v5718 = vpop.f32.mrb[0].mxu0
        %v5719 = vadd.f32 %v5254, %v5718
        %v5720 = vpop.f32.mrb[0].mxu0
        %v5721 = vadd.f32 %v5258, %v5720
        %v5722 = vpop.f32.mrb[0].mxu0
        %v5723 = vadd.f32 %v5254, %v5722
        %v5724 = vpop.f32.mrb[0].mxu0
        %v5725 = vadd.f32 %v5258, %v5724
        %5726 = vmatprep.mubr.bf16.mxu0 0
        %5727 = vmatmul.mubr.bf16.gmra.mrb[0].mxu0 %v5349
        %v5728 = vpop.f32.mrb[0].mxu0
        %v5729 = vadd.f32 %v5254, %v5728
        %v5730 = vpop.f32.mrb[0].mxu0
        %v5731 = vadd.f32 %v5258, %v5730
        %v5732 = vpop.f32.mrb[0].mxu0
        %v5733 = vadd.f32 %v5254, %v5732
        %v5734 = vpop.f32.mrb[0].mxu0
        %v5735 = vadd.f32 %v5258, %v5734
        %5736 = vdwg.mxu0
        %v5737 = vmax.f32 %v5386, 0.0
        %v5738 = vmax.f32 %v5388, 0.0
        %v5739 = vmax.f32 %v5579, 0.0
        %v5740 = vmax.f32 %v5581, 0.0
        %v5741 = vmax.f32 %v5390, 0.0
        %v5742 = vmax.f32 %v5392, 0.0
        %v5743 = vmax.f32 %v5583, 0.0
        %v5744 = vmax.f32 %v5585, 0.0
        %v5745 = vmax.f32 %v5396, 0.0
        %v5746 = vmax.f32 %v5398, 0.0
        %v5747 = vmax.f32 %v5589, 0.0
        %v5748 = vmax.f32 %v5591, 0.0
        %v5749 = vmax.f32 %v5400, 0.0
        %v5750 = vmax.f32 %v5402, 0.0
        %v5751 = vmax.f32 %v5593, 0.0
        %v5752 = vmax.f32 %v5595, 0.0
        %v5753 = vmax.f32 %v5406, 0.0
        %v5754 = vmax.f32 %v5408, 0.0
        %v5755 = vmax.f32 %v5599, 0.0
        %v5756 = vmax.f32 %v5601, 0.0
        %v5757 = vmax.f32 %v5410, 0.0
        %v5758 = vmax.f32 %v5412, 0.0
        %v5759 = vmax.f32 %v5603, 0.0
        %v5760 = vmax.f32 %v5605, 0.0
        %v5761 = vmax.f32 %v5416, 0.0
        %v5762 = vmax.f32 %v5418, 0.0
        %v5763 = vmax.f32 %v5609, 0.0
        %v5764 = vmax.f32 %v5611, 0.0
        %v5765 = vmax.f32 %v5420, 0.0
        %v5766 = vmax.f32 %v5422, 0.0
        %v5767 = vmax.f32 %v5613, 0.0
        %v5768 = vmax.f32 %v5615, 0.0
        %v5769 = vmax.f32 %v5426, 0.0
        %v5770 = vmax.f32 %v5428, 0.0
        %v5771 = vmax.f32 %v5619, 0.0
        %v5772 = vmax.f32 %v5621, 0.0
        %v5773 = vmax.f32 %v5430, 0.0
        %v5774 = vmax.f32 %v5432, 0.0
        %v5775 = vmax.f32 %v5623, 0.0
        %v5776 = vmax.f32 %v5625, 0.0
        %v5777 = vmax.f32 %v5436, 0.0
        %v5778 = vmax.f32 %v5438, 0.0
        %v5779 = vmax.f32 %v5629, 0.0
        %v5780 = vmax.f32 %v5631, 0.0
        %v5781 = vmax.f32 %v5440, 0.0
        %v5782 = vmax.f32 %v5442, 0.0
        %v5783 = vmax.f32 %v5633, 0.0
        %v5784 = vmax.f32 %v5635, 0.0
        %v5785 = vmax.f32 %v5446, 0.0
        %v5786 = vmax.f32 %v5448, 0.0
        %v5787 = vmax.f32 %v5639, 0.0
        %v5788 = vmax.f32 %v5641, 0.0
        %v5789 = vmax.f32 %v5450, 0.0
        %v5790 = vmax.f32 %v5452, 0.0
        %v5791 = vmax.f32 %v5643, 0.0
        %v5792 = vmax.f32 %v5645, 0.0
        %v5793 = vmax.f32 %v5456, 0.0
        %v5794 = vmax.f32 %v5458, 0.0
        %v5795 = vmax.f32 %v5649, 0.0
        %v5796 = vmax.f32 %v5651, 0.0
        %v5797 = vmax.f32 %v5460, 0.0
        %v5798 = vmax.f32 %v5462, 0.0
        %v5799 = vmax.f32 %v5653, 0.0
        %v5800 = vmax.f32 %v5655, 0.0
        %v5801 = vmax.f32 %v5466, 0.0
        %v5802 = vmax.f32 %v5468, 0.0
        %v5803 = vmax.f32 %v5659, 0.0
        %v5804 = vmax.f32 %v5661, 0.0
        %v5805 = vmax.f32 %v5470, 0.0
        %v5806 = vmax.f32 %v5472, 0.0
        %v5807 = vmax.f32 %v5663, 0.0
        %v5808 = vmax.f32 %v5665, 0.0
        %v5809 = vmax.f32 %v5476, 0.0
        %v5810 = vmax.f32 %v5478, 0.0
        %v5811 = vmax.f32 %v5669, 0.0
        %v5812 = vmax.f32 %v5671, 0.0
        %v5813 = vmax.f32 %v5480, 0.0
        %v5814 = vmax.f32 %v5482, 0.0
        %v5815 = vmax.f32 %v5673, 0.0
        %v5816 = vmax.f32 %v5675, 0.0
        %v5817 = vmax.f32 %v5486, 0.0
        %v5818 = vmax.f32 %v5488, 0.0
        %v5819 = vmax.f32 %v5679, 0.0
        %v5820 = vmax.f32 %v5681, 0.0
        %v5821 = vmax.f32 %v5490, 0.0
        %v5822 = vmax.f32 %v5492, 0.0
        %v5823 = vmax.f32 %v5683, 0.0
        %v5824 = vmax.f32 %v5685, 0.0
        %v5825 = vmax.f32 %v5496, 0.0
        %v5826 = vmax.f32 %v5498, 0.0
        %v5827 = vmax.f32 %v5689, 0.0
        %v5828 = vmax.f32 %v5691, 0.0
        %v5829 = vmax.f32 %v5500, 0.0
        %v5830 = vmax.f32 %v5502, 0.0
        %v5831 = vmax.f32 %v5693, 0.0
        %v5832 = vmax.f32 %v5695, 0.0
        %v5833 = vmax.f32 %v5506, 0.0
        %v5834 = vmax.f32 %v5508, 0.0
        %v5835 = vmax.f32 %v5699, 0.0
        %v5836 = vmax.f32 %v5701, 0.0
        %v5837 = vmax.f32 %v5510, 0.0
        %v5838 = vmax.f32 %v5512, 0.0
        %v5839 = vmax.f32 %v5703, 0.0
        %v5840 = vmax.f32 %v5705, 0.0
        %v5841 = vmax.f32 %v5516, 0.0
        %v5842 = vmax.f32 %v5518, 0.0
        %v5843 = vmax.f32 %v5709, 0.0
        %v5844 = vmax.f32 %v5711, 0.0
        %v5845 = vmax.f32 %v5520, 0.0
        %v5846 = vmax.f32 %v5522, 0.0
        %v5847 = vmax.f32 %v5713, 0.0
        %v5848 = vmax.f32 %v5715, 0.0
        %v5849 = vmax.f32 %v5526, 0.0
        %v5850 = vmax.f32 %v5528, 0.0
        %v5851 = vmax.f32 %v5719, 0.0
        %v5852 = vmax.f32 %v5721, 0.0
        %v5853 = vmax.f32 %v5530, 0.0
        %v5854 = vmax.f32 %v5532, 0.0
        %v5855 = vmax.f32 %v5723, 0.0
        %v5856 = vmax.f32 %v5725, 0.0
        %v5857 = vmax.f32 %v5536, 0.0
        %v5858 = vmax.f32 %v5538, 0.0
        %v5859 = vmax.f32 %v5729, 0.0
        %v5860 = vmax.f32 %v5731, 0.0
        %v5861 = vmax.f32 %v5540, 0.0
        %v5862 = vmax.f32 %v5542, 0.0
        %v5863 = vmax.f32 %v5733, 0.0
        %v5864 = vmax.f32 %v5735, 0.0
        %v5865 = vadd.f32 %v5737, %v5738
        %v5866 = vadd.f32 %v5865, %v5739
        %v5867 = vadd.f32 %v5866, %v5740
        %v5868 = vadd.f32 %v5867, %v5741
        %v5869 = vadd.f32 %v5868, %v5742
        %v5870 = vadd.f32 %v5869, %v5743
        %v5871 = vadd.f32 %v5870, %v5744
        %v5872 = vadd.f32 %v5871, %v5745
        %v5873 = vadd.f32 %v5872, %v5746
        %v5874 = vadd.f32 %v5873, %v5747
        %v5875 = vadd.f32 %v5874, %v5748
        %v5876 = vadd.f32 %v5875, %v5749
        %v5877 = vadd.f32 %v5876, %v5750
        %v5878 = vadd.f32 %v5877, %v5751
        %v5879 = vadd.f32 %v5878, %v5752
        %v5880 = vadd.f32 %v5879, %v5753
        %v5881 = vadd.f32 %v5880, %v5754
        %v5882 = vadd.f32 %v5881, %v5755
        %v5883 = vadd.f32 %v5882, %v5756
        %v5884 = vadd.f32 %v5883, %v5757
        %v5885 = vadd.f32 %v5884, %v5758
        %v5886 = vadd.f32 %v5885, %v5759
        %v5887 = vadd.f32 %v5886, %v5760
        %v5888 = vadd.f32 %v5887, %v5761
        %v5889 = vadd.f32 %v5888, %v5762
        %v5890 = vadd.f32 %v5889, %v5763
        %v5891 = vadd.f32 %v5890, %v5764
        %v5892 = vadd.f32 %v5891, %v5765
        %v5893 = vadd.f32 %v5892, %v5766
        %v5894 = vadd.f32 %v5893, %v5767
        %v5895 = vadd.f32 %v5894, %v5768
        %v5896 = vadd.f32 %v5895, %v5769
        %v5897 = vadd.f32 %v5896, %v5770
        %v5898 = vadd.f32 %v5897, %v5771
        %v5899 = vadd.f32 %v5898, %v5772
        %v5900 = vadd.f32 %v5899, %v5773
        %v5901 = vadd.f32 %v5900, %v5774
        %v5902 = vadd.f32 %v5901, %v5775
        %v5903 = vadd.f32 %v5902, %v5776
        %v5904 = vadd.f32 %v5903, %v5777
        %v5905 = vadd.f32 %v5904, %v5778
        %v5906 = vadd.f32 %v5905, %v5779
        %v5907 = vadd.f32 %v5906, %v5780
        %v5908 = vadd.f32 %v5907, %v5781
        %v5909 = vadd.f32 %v5908, %v5782
        %v5910 = vadd.f32 %v5909, %v5783
        %v5911 = vadd.f32 %v5910, %v5784
        %v5912 = vadd.f32 %v5911, %v5785
        %v5913 = vadd.f32 %v5912, %v5786
        %v5914 = vadd.f32 %v5913, %v5787
        %v5915 = vadd.f32 %v5914, %v5788
        %v5916 = vadd.f32 %v5915, %v5789
        %v5917 = vadd.f32 %v5916, %v5790
        %v5918 = vadd.f32 %v5917, %v5791
        %v5919 = vadd.f32 %v5918, %v5792
        %v5920 = vadd.f32 %v5919, %v5793
        %v5921 = vadd.f32 %v5920, %v5794
        %v5922 = vadd.f32 %v5921, %v5795
        %v5923 = vadd.f32 %v5922, %v5796
        %v5924 = vadd.f32 %v5923, %v5797
        %v5925 = vadd.f32 %v5924, %v5798
        %v5926 = vadd.f32 %v5925, %v5799
        %v5927 = vadd.f32 %v5926, %v5800
        %v5928 = vadd.f32 %v5927, %v5801
        %v5929 = vadd.f32 %v5928, %v5802
        %v5930 = vadd.f32 %v5929, %v5803
        %v5931 = vadd.f32 %v5930, %v5804
        %v5932 = vadd.f32 %v5931, %v5805
        %v5933 = vadd.f32 %v5932, %v5806
        %v5934 = vadd.f32 %v5933, %v5807
        %v5935 = vadd.f32 %v5934, %v5808
        %v5936 = vadd.f32 %v5935, %v5809
        %v5937 = vadd.f32 %v5936, %v5810
        %v5938 = vadd.f32 %v5937, %v5811
        %v5939 = vadd.f32 %v5938, %v5812
        %v5940 = vadd.f32 %v5939, %v5813
        %v5941 = vadd.f32 %v5940, %v5814
        %v5942 = vadd.f32 %v5941, %v5815
        %v5943 = vadd.f32 %v5942, %v5816
        %v5944 = vadd.f32 %v5943, %v5817
        %v5945 = vadd.f32 %v5944, %v5818
        %v5946 = vadd.f32 %v5945, %v5819
        %v5947 = vadd.f32 %v5946, %v5820
        %v5948 = vadd.f32 %v5947, %v5821
        %v5949 = vadd.f32 %v5948, %v5822
        %v5950 = vadd.f32 %v5949, %v5823
        %v5951 = vadd.f32 %v5950, %v5824
        %v5952 = vadd.f32 %v5951, %v5825
        %v5953 = vadd.f32 %v5952, %v5826
        %v5954 = vadd.f32 %v5953, %v5827
        %v5955 = vadd.f32 %v5954, %v5828
        %v5956 = vadd.f32 %v5955, %v5829
        %v5957 = vadd.f32 %v5956, %v5830
        %v5958 = vadd.f32 %v5957, %v5831
        %v5959 = vadd.f32 %v5958, %v5832
        %v5960 = vadd.f32 %v5959, %v5833
        %v5961 = vadd.f32 %v5960, %v5834
        %v5962 = vadd.f32 %v5961, %v5835
        %v5963 = vadd.f32 %v5962, %v5836
        %v5964 = vadd.f32 %v5963, %v5837
        %v5965 = vadd.f32 %v5964, %v5838
        %v5966 = vadd.f32 %v5965, %v5839
        %v5967 = vadd.f32 %v5966, %v5840
        %v5968 = vadd.f32 %v5967, %v5841
        %v5969 = vadd.f32 %v5968, %v5842
        %v5970 = vadd.f32 %v5969, %v5843
        %v5971 = vadd.f32 %v5970, %v5844
        %v5972 = vadd.f32 %v5971, %v5845
        %v5973 = vadd.f32 %v5972, %v5846
        %v5974 = vadd.f32 %v5973, %v5847
        %v5975 = vadd.f32 %v5974, %v5848
        %v5976 = vadd.f32 %v5975, %v5849
        %v5977 = vadd.f32 %v5976, %v5850
        %v5978 = vadd.f32 %v5977, %v5851
        %v5979 = vadd.f32 %v5978, %v5852
        %v5980 = vadd.f32 %v5979, %v5853
        %v5981 = vadd.f32 %v5980, %v5854
        %v5982 = vadd.f32 %v5981, %v5855
        %v5983 = vadd.f32 %v5982, %v5856
        %v5984 = vadd.f32 %v5983, %v5857
        %v5985 = vadd.f32 %v5984, %v5858
        %v5986 = vadd.f32 %v5985, %v5859
        %v5987 = vadd.f32 %v5986, %v5860
        %v5988 = vadd.f32 %v5987, %v5861
        %v5989 = vadd.f32 %v5988, %v5862
        %v5990 = vadd.f32 %v5989, %v5863
        %v5991 = vadd.f32 %v5990, %v5864
        %5992 = vadd.xlane.f32.xlu0 %v5991
        %v5993 = vpop.xlane.xlu0 %5992
        %v5994 = vrot.slane %v5993, 4
        %v5995 = vadd.f32 %v5993, %v5994
        %v5996 = vrot.slane %v5995, 2
        %v5997 = vadd.f32 %v5995, %v5996
        %v5998 = vrot.slane %v5997, 1
        %v5999 = vadd.f32 %v5997, %v5998
        %s6000 = vtos %v5999
        %v6001 = vrcp.pop 131072.0
        %s6002 = vtos %v6001
        %s6003 = smul.f32 %s6000, %s6002
        %v6004 = vstv %s6003
        %v6005 = vsub.f32 %v5737, %v6004
        %v6006 = vsub.f32 %v5738, %v6004
        %v6007 = vsub.f32 %v5739, %v6004
        %v6008 = vsub.f32 %v5740, %v6004
        %v6009 = vsub.f32 %v5741, %v6004
        %v6010 = vsub.f32 %v5742, %v6004
        %v6011 = vsub.f32 %v5743, %v6004
        %v6012 = vsub.f32 %v5744, %v6004
        %v6013 = vsub.f32 %v5745, %v6004
        %v6014 = vsub.f32 %v5746, %v6004
        %v6015 = vsub.f32 %v5747, %v6004
        %v6016 = vsub.f32 %v5748, %v6004
        %v6017 = vsub.f32 %v5749, %v6004
        %v6018 = vsub.f32 %v5750, %v6004
        %v6019 = vsub.f32 %v5751, %v6004
        %v6020 = vsub.f32 %v5752, %v6004
        %v6021 = vsub.f32 %v5753, %v6004
        %v6022 = vsub.f32 %v5754, %v6004
        %v6023 = vsub.f32 %v5755, %v6004
        %v6024 = vsub.f32 %v5756, %v6004
        %v6025 = vsub.f32 %v5757, %v6004
        %v6026 = vsub.f32 %v5758, %v6004
        %v6027 = vsub.f32 %v5759, %v6004
        %v6028 = vsub.f32 %v5760, %v6004
        %v6029 = vsub.f32 %v5761, %v6004
        %v6030 = vsub.f32 %v5762, %v6004
        %v6031 = vsub.f32 %v5763, %v6004
        %v6032 = vsub.f32 %v5764, %v6004
        %v6033 = vsub.f32 %v5765, %v6004
        %v6034 = vsub.f32 %v5766, %v6004
        %v6035 = vsub.f32 %v5767, %v6004
        %v6036 = vsub.f32 %v5768, %v6004
        %v6037 = vsub.f32 %v5769, %v6004
        %v6038 = vsub.f32 %v5770, %v6004
        %v6039 = vsub.f32 %v5771, %v6004
        %v6040 = vsub.f32 %v5772, %v6004
        %v6041 = vsub.f32 %v5773, %v6004
        %v6042 = vsub.f32 %v5774, %v6004
        %v6043 = vsub.f32 %v5775, %v6004
        %v6044 = vsub.f32 %v5776, %v6004
        %v6045 = vsub.f32 %v5777, %v6004
        %v6046 = vsub.f32 %v5778, %v6004
        %v6047 = vsub.f32 %v5779, %v6004
        %v6048 = vsub.f32 %v5780, %v6004
        %v6049 = vsub.f32 %v5781, %v6004
        %v6050 = vsub.f32 %v5782, %v6004
        %v6051 = vsub.f32 %v5783, %v6004
        %v6052 = vsub.f32 %v5784, %v6004
        %v6053 = vsub.f32 %v5785, %v6004
        %v6054 = vsub.f32 %v5786, %v6004
        %v6055 = vsub.f32 %v5787, %v6004
        %v6056 = vsub.f32 %v5788, %v6004
        %v6057 = vsub.f32 %v5789, %v6004
        %v6058 = vsub.f32 %v5790, %v6004
        %v6059 = vsub.f32 %v5791, %v6004
        %v6060 = vsub.f32 %v5792, %v6004
        %v6061 = vsub.f32 %v5793, %v6004
        %v6062 = vsub.f32 %v5794, %v6004
        %v6063 = vsub.f32 %v5795, %v6004
        %v6064 = vsub.f32 %v5796, %v6004
        %v6065 = vsub.f32 %v5797, %v6004
        %v6066 = vsub.f32 %v5798, %v6004
        %v6067 = vsub.f32 %v5799, %v6004
        %v6068 = vsub.f32 %v5800, %v6004
        %v6069 = vsub.f32 %v5801, %v6004
        %v6070 = vsub.f32 %v5802, %v6004
        %v6071 = vsub.f32 %v5803, %v6004
        %v6072 = vsub.f32 %v5804, %v6004
        %v6073 = vsub.f32 %v5805, %v6004
        %v6074 = vsub.f32 %v5806, %v6004
        %v6075 = vsub.f32 %v5807, %v6004
        %v6076 = vsub.f32 %v5808, %v6004
        %v6077 = vsub.f32 %v5809, %v6004
        %v6078 = vsub.f32 %v5810, %v6004
        %v6079 = vsub.f32 %v5811, %v6004
        %v6080 = vsub.f32 %v5812, %v6004
        %v6081 = vsub.f32 %v5813, %v6004
        %v6082 = vsub.f32 %v5814, %v6004
        %v6083 = vsub.f32 %v5815, %v6004
        %v6084 = vsub.f32 %v5816, %v6004
        %v6085 = vsub.f32 %v5817, %v6004
        %v6086 = vsub.f32 %v5818, %v6004
        %v6087 = vsub.f32 %v5819, %v6004
        %v6088 = vsub.f32 %v5820, %v6004
        %v6089 = vsub.f32 %v5821, %v6004
        %v6090 = vsub.f32 %v5822, %v6004
        %v6091 = vsub.f32 %v5823, %v6004
        %v6092 = vsub.f32 %v5824, %v6004
        %v6093 = vsub.f32 %v5825, %v6004
        %v6094 = vsub.f32 %v5826, %v6004
        %v6095 = vsub.f32 %v5827, %v6004
        %v6096 = vsub.f32 %v5828, %v6004
        %v6097 = vsub.f32 %v5829, %v6004
        %v6098 = vsub.f32 %v5830, %v6004
        %v6099 = vsub.f32 %v5831, %v6004
        %v6100 = vsub.f32 %v5832, %v6004
        %v6101 = vsub.f32 %v5833, %v6004
        %v6102 = vsub.f32 %v5834, %v6004
        %v6103 = vsub.f32 %v5835, %v6004
        %v6104 = vsub.f32 %v5836, %v6004
        %v6105 = vsub.f32 %v5837, %v6004
        %v6106 = vsub.f32 %v5838, %v6004
        %v6107 = vsub.f32 %v5839, %v6004
        %v6108 = vsub.f32 %v5840, %v6004
        %v6109 = vsub.f32 %v5841, %v6004
        %v6110 = vsub.f32 %v5842, %v6004
        %v6111 = vsub.f32 %v5843, %v6004
        %v6112 = vsub.f32 %v5844, %v6004
        %v6113 = vsub.f32 %v5845, %v6004
        %v6114 = vsub.f32 %v5846, %v6004
        %v6115 = vsub.f32 %v5847, %v6004
        %v6116 = vsub.f32 %v5848, %v6004
        %v6117 = vsub.f32 %v5849, %v6004
        %v6118 = vsub.f32 %v5850, %v6004
        %v6119 = vsub.f32 %v5851, %v6004
        %v6120 = vsub.f32 %v5852, %v6004
        %v6121 = vsub.f32 %v5853, %v6004
        %v6122 = vsub.f32 %v5854, %v6004
        %v6123 = vsub.f32 %v5855, %v6004
        %v6124 = vsub.f32 %v5856, %v6004
        %v6125 = vsub.f32 %v5857, %v6004
        %v6126 = vsub.f32 %v5858, %v6004
        %v6127 = vsub.f32 %v5859, %v6004
        %v6128 = vsub.f32 %v5860, %v6004
        %v6129 = vsub.f32 %v5861, %v6004
        %v6130 = vsub.f32 %v5862, %v6004
        %v6131 = vsub.f32 %v5863, %v6004
        %v6132 = vsub.f32 %v5864, %v6004
        %v6133 = vmul.f32 %v6005, %v6005
        %v6134 = vmul.f32 %v6006, %v6006
        %v6135 = vmul.f32 %v6007, %v6007
        %v6136 = vmul.f32 %v6008, %v6008
        %v6137 = vmul.f32 %v6009, %v6009
        %v6138 = vmul.f32 %v6010, %v6010
        %v6139 = vmul.f32 %v6011, %v6011
        %v6140 = vmul.f32 %v6012, %v6012
        %v6141 = vmul.f32 %v6013, %v6013
        %v6142 = vmul.f32 %v6014, %v6014
        %v6143 = vmul.f32 %v6015, %v6015
        %v6144 = vmul.f32 %v6016, %v6016
        %v6145 = vmul.f32 %v6017, %v6017
        %v6146 = vmul.f32 %v6018, %v6018
        %v6147 = vmul.f32 %v6019, %v6019
        %v6148 = vmul.f32 %v6020, %v6020
        %v6149 = vmul.f32 %v6021, %v6021
        %v6150 = vmul.f32 %v6022, %v6022
        %v6151 = vmul.f32 %v6023, %v6023
        %v6152 = vmul.f32 %v6024, %v6024
        %v6153 = vmul.f32 %v6025, %v6025
        %v6154 = vmul.f32 %v6026, %v6026
        %v6155 = vmul.f32 %v6027, %v6027
        %v6156 = vmul.f32 %v6028, %v6028
        %v6157 = vmul.f32 %v6029, %v6029
        %v6158 = vmul.f32 %v6030, %v6030
        %v6159 = vmul.f32 %v6031, %v6031
        %v6160 = vmul.f32 %v6032, %v6032
        %v6161 = vmul.f32 %v6033, %v6033
        %v6162 = vmul.f32 %v6034, %v6034
        %v6163 = vmul.f32 %v6035, %v6035
        %v6164 = vmul.f32 %v6036, %v6036
        %v6165 = vmul.f32 %v6037, %v6037
        %v6166 = vmul.f32 %v6038, %v6038
        %v6167 = vmul.f32 %v6039, %v6039
        %v6168 = vmul.f32 %v6040, %v6040
        %v6169 = vmul.f32 %v6041, %v6041
        %v6170 = vmul.f32 %v6042, %v6042
        %v6171 = vmul.f32 %v6043, %v6043
        %v6172 = vmul.f32 %v6044, %v6044
        %v6173 = vmul.f32 %v6045, %v6045
        %v6174 = vmul.f32 %v6046, %v6046
        %v6175 = vmul.f32 %v6047, %v6047
        %v6176 = vmul.f32 %v6048, %v6048
        %v6177 = vmul.f32 %v6049, %v6049
        %v6178 = vmul.f32 %v6050, %v6050
        %v6179 = vmul.f32 %v6051, %v6051
        %v6180 = vmul.f32 %v6052, %v6052
        %v6181 = vmul.f32 %v6053, %v6053
        %v6182 = vmul.f32 %v6054, %v6054
        %v6183 = vmul.f32 %v6055, %v6055
        %v6184 = vmul.f32 %v6056, %v6056
        %v6185 = vmul.f32 %v6057, %v6057
        %v6186 = vmul.f32 %v6058, %v6058
        %v6187 = vmul.f32 %v6059, %v6059
        %v6188 = vmul.f32 %v6060, %v6060
        %v6189 = vmul.f32 %v6061, %v6061
        %v6190 = vmul.f32 %v6062, %v6062
        %v6191 = vmul.f32 %v6063, %v6063
        %v6192 = vmul.f32 %v6064, %v6064
        %v6193 = vmul.f32 %v6065, %v6065
        %v6194 = vmul.f32 %v6066, %v6066
        %v6195 = vmul.f32 %v6067, %v6067
        %v6196 = vmul.f32 %v6068, %v6068
        %v6197 = vmul.f32 %v6069, %v6069
        %v6198 = vmul.f32 %v6070, %v6070
        %v6199 = vmul.f32 %v6071, %v6071
        %v6200 = vmul.f32 %v6072, %v6072
        %v6201 = vmul.f32 %v6073, %v6073
        %v6202 = vmul.f32 %v6074, %v6074
        %v6203 = vmul.f32 %v6075, %v6075
        %v6204 = vmul.f32 %v6076, %v6076
        %v6205 = vmul.f32 %v6077, %v6077
        %v6206 = vmul.f32 %v6078, %v6078
        %v6207 = vmul.f32 %v6079, %v6079
        %v6208 = vmul.f32 %v6080, %v6080
        %v6209 = vmul.f32 %v6081, %v6081
        %v6210 = vmul.f32 %v6082, %v6082
        %v6211 = vmul.f32 %v6083, %v6083
        %v6212 = vmul.f32 %v6084, %v6084
        %v6213 = vmul.f32 %v6085, %v6085
        %v6214 = vmul.f32 %v6086, %v6086
        %v6215 = vmul.f32 %v6087, %v6087
        %v6216 = vmul.f32 %v6088, %v6088
        %v6217 = vmul.f32 %v6089, %v6089
        %v6218 = vmul.f32 %v6090, %v6090
        %v6219 = vmul.f32 %v6091, %v6091
        %v6220 = vmul.f32 %v6092, %v6092
        %v6221 = vmul.f32 %v6093, %v6093
        %v6222 = vmul.f32 %v6094, %v6094
        %v6223 = vmul.f32 %v6095, %v6095
        %v6224 = vmul.f32 %v6096, %v6096
        %v6225 = vmul.f32 %v6097, %v6097
        %v6226 = vmul.f32 %v6098, %v6098
        %v6227 = vmul.f32 %v6099, %v6099
        %v6228 = vmul.f32 %v6100, %v6100
        %v6229 = vmul.f32 %v6101, %v6101
        %v6230 = vmul.f32 %v6102, %v6102
        %v6231 = vmul.f32 %v6103, %v6103
        %v6232 = vmul.f32 %v6104, %v6104
        %v6233 = vmul.f32 %v6105, %v6105
        %v6234 = vmul.f32 %v6106, %v6106
        %v6235 = vmul.f32 %v6107, %v6107
        %v6236 = vmul.f32 %v6108, %v6108
        %v6237 = vmul.f32 %v6109, %v6109
        %v6238 = vmul.f32 %v6110, %v6110
        %v6239 = vmul.f32 %v6111, %v6111
        %v6240 = vmul.f32 %v6112, %v6112
        %v6241 = vmul.f32 %v6113, %v6113
        %v6242 = vmul.f32 %v6114, %v6114
        %v6243 = vmul.f32 %v6115, %v6115
        %v6244 = vmul.f32 %v6116, %v6116
        %v6245 = vmul.f32 %v6117, %v6117
        %v6246 = vmul.f32 %v6118, %v6118
        %v6247 = vmul.f32 %v6119, %v6119
        %v6248 = vmul.f32 %v6120, %v6120
        %v6249 = vmul.f32 %v6121, %v6121
        %v6250 = vmul.f32 %v6122, %v6122
        %v6251 = vmul.f32 %v6123, %v6123
        %v6252 = vmul.f32 %v6124, %v6124
        %v6253 = vmul.f32 %v6125, %v6125
        %v6254 = vmul.f32 %v6126, %v6126
        %v6255 = vmul.f32 %v6127, %v6127
        %v6256 = vmul.f32 %v6128, %v6128
        %v6257 = vmul.f32 %v6129, %v6129
        %v6258 = vmul.f32 %v6130, %v6130
        %v6259 = vmul.f32 %v6131, %v6131
        %v6260 = vmul.f32 %v6132, %v6132
        %v6261 = vadd.f32 %v6133, %v6134
        %v6262 = vadd.f32 %v6261, %v6135
        %v6263 = vadd.f32 %v6262, %v6136
        %v6264 = vadd.f32 %v6263, %v6137
        %v6265 = vadd.f32 %v6264, %v6138
        %v6266 = vadd.f32 %v6265, %v6139
        %v6267 = vadd.f32 %v6266, %v6140
        %v6268 = vadd.f32 %v6267, %v6141
        %v6269 = vadd.f32 %v6268, %v6142
        %v6270 = vadd.f32 %v6269, %v6143
        %v6271 = vadd.f32 %v6270, %v6144
        %v6272 = vadd.f32 %v6271, %v6145
        %v6273 = vadd.f32 %v6272, %v6146
        %v6274 = vadd.f32 %v6273, %v6147
        %v6275 = vadd.f32 %v6274, %v6148
        %v6276 = vadd.f32 %v6275, %v6149
        %v6277 = vadd.f32 %v6276, %v6150
        %v6278 = vadd.f32 %v6277, %v6151
        %v6279 = vadd.f32 %v6278, %v6152
        %v6280 = vadd.f32 %v6279, %v6153
        %v6281 = vadd.f32 %v6280, %v6154
        %v6282 = vadd.f32 %v6281, %v6155
        %v6283 = vadd.f32 %v6282, %v6156
        %v6284 = vadd.f32 %v6283, %v6157
        %v6285 = vadd.f32 %v6284, %v6158
        %v6286 = vadd.f32 %v6285, %v6159
        %v6287 = vadd.f32 %v6286, %v6160
        %v6288 = vadd.f32 %v6287, %v6161
        %v6289 = vadd.f32 %v6288, %v6162
        %v6290 = vadd.f32 %v6289, %v6163
        %v6291 = vadd.f32 %v6290, %v6164
        %v6292 = vadd.f32 %v6291, %v6165
        %v6293 = vadd.f32 %v6292, %v6166
        %v6294 = vadd.f32 %v6293, %v6167
        %v6295 = vadd.f32 %v6294, %v6168
        %v6296 = vadd.f32 %v6295, %v6169
        %v6297 = vadd.f32 %v6296, %v6170
        %v6298 = vadd.f32 %v6297, %v6171
        %v6299 = vadd.f32 %v6298, %v6172
        %v6300 = vadd.f32 %v6299, %v6173
        %v6301 = vadd.f32 %v6300, %v6174
        %v6302 = vadd.f32 %v6301, %v6175
        %v6303 = vadd.f32 %v6302, %v6176
        %v6304 = vadd.f32 %v6303, %v6177
        %v6305 = vadd.f32 %v6304, %v6178
        %v6306 = vadd.f32 %v6305, %v6179
        %v6307 = vadd.f32 %v6306, %v6180
        %v6308 = vadd.f32 %v6307, %v6181
        %v6309 = vadd.f32 %v6308, %v6182
        %v6310 = vadd.f32 %v6309, %v6183
        %v6311 = vadd.f32 %v6310, %v6184
        %v6312 = vadd.f32 %v6311, %v6185
        %v6313 = vadd.f32 %v6312, %v6186
        %v6314 = vadd.f32 %v6313, %v6187
        %v6315 = vadd.f32 %v6314, %v6188
        %v6316 = vadd.f32 %v6315, %v6189
        %v6317 = vadd.f32 %v6316, %v6190
        %v6318 = vadd.f32 %v6317, %v6191
        %v6319 = vadd.f32 %v6318, %v6192
        %v6320 = vadd.f32 %v6319, %v6193
        %v6321 = vadd.f32 %v6320, %v6194
        %v6322 = vadd.f32 %v6321, %v6195
        %v6323 = vadd.f32 %v6322, %v6196
        %v6324 = vadd.f32 %v6323, %v6197
        %v6325 = vadd.f32 %v6324, %v6198
        %v6326 = vadd.f32 %v6325, %v6199
        %v6327 = vadd.f32 %v6326, %v6200
        %v6328 = vadd.f32 %v6327, %v6201
        %v6329 = vadd.f32 %v6328, %v6202
        %v6330 = vadd.f32 %v6329, %v6203
        %v6331 = vadd.f32 %v6330, %v6204
        %v6332 = vadd.f32 %v6331, %v6205
        %v6333 = vadd.f32 %v6332, %v6206
        %v6334 = vadd.f32 %v6333, %v6207
        %v6335 = vadd.f32 %v6334, %v6208
        %v6336 = vadd.f32 %v6335, %v6209
        %v6337 = vadd.f32 %v6336, %v6210
        %v6338 = vadd.f32 %v6337, %v6211
        %v6339 = vadd.f32 %v6338, %v6212
        %v6340 = vadd.f32 %v6339, %v6213
        %v6341 = vadd.f32 %v6340, %v6214
        %v6342 = vadd.f32 %v6341, %v6215
        %v6343 = vadd.f32 %v6342, %v6216
        %v6344 = vadd.f32 %v6343, %v6217
        %v6345 = vadd.f32 %v6344, %v6218
        %v6346 = vadd.f32 %v6345, %v6219
        %v6347 = vadd.f32 %v6346, %v6220
        %v6348 = vadd.f32 %v6347, %v6221
        %v6349 = vadd.f32 %v6348, %v6222
        %v6350 = vadd.f32 %v6349, %v6223
        %v6351 = vadd.f32 %v6350, %v6224
        %v6352 = vadd.f32 %v6351, %v6225
        %v6353 = vadd.f32 %v6352, %v6226
        %v6354 = vadd.f32 %v6353, %v6227
        %v6355 = vadd.f32 %v6354, %v6228
        %v6356 = vadd.f32 %v6355, %v6229
        %v6357 = vadd.f32 %v6356, %v6230
        %v6358 = vadd.f32 %v6357, %v6231
        %v6359 = vadd.f32 %v6358, %v6232
        %v6360 = vadd.f32 %v6359, %v6233
        %v6361 = vadd.f32 %v6360, %v6234
        %v6362 = vadd.f32 %v6361, %v6235
        %v6363 = vadd.f32 %v6362, %v6236
        %v6364 = vadd.f32 %v6363, %v6237
        %v6365 = vadd.f32 %v6364, %v6238
        %v6366 = vadd.f32 %v6365, %v6239
        %v6367 = vadd.f32 %v6366, %v6240
        %v6368 = vadd.f32 %v6367, %v6241
        %v6369 = vadd.f32 %v6368, %v6242
        %v6370 = vadd.f32 %v6369, %v6243
        %v6371 = vadd.f32 %v6370, %v6244
        %v6372 = vadd.f32 %v6371, %v6245
        %v6373 = vadd.f32 %v6372, %v6246
        %v6374 = vadd.f32 %v6373, %v6247
        %v6375 = vadd.f32 %v6374, %v6248
        %v6376 = vadd.f32 %v6375, %v6249
        %v6377 = vadd.f32 %v6376, %v6250
        %v6378 = vadd.f32 %v6377, %v6251
        %v6379 = vadd.f32 %v6378, %v6252
        %v6380 = vadd.f32 %v6379, %v6253
        %v6381 = vadd.f32 %v6380, %v6254
        %v6382 = vadd.f32 %v6381, %v6255
        %v6383 = vadd.f32 %v6382, %v6256
        %v6384 = vadd.f32 %v6383, %v6257
        %v6385 = vadd.f32 %v6384, %v6258
        %v6386 = vadd.f32 %v6385, %v6259
        %v6387 = vadd.f32 %v6386, %v6260
        %6388 = vadd.xlane.f32.xlu0 %v6387
        %v6389 = vpop.xlane.xlu0 %6388
        %v6390 = vrot.slane %v6389, 4
        %v6391 = vadd.f32 %v6389, %v6390
        %v6392 = vrot.slane %v6391, 2
        %v6393 = vadd.f32 %v6391, %v6392
        %v6394 = vrot.slane %v6393, 1
        %v6395 = vadd.f32 %v6393, %v6394
        %s6396 = vtos %v6395
        %v6397 = vrcp.pop 131072.0
        %s6398 = vtos %v6397
        %s6399 = smul.f32 %s6396, %s6398
        %s6400 = sadd.f32 %s6399, 1e-05
        %v6401 = vstv %s6400
        %v6402 = vrsqrt.pop %v6401
        %s6403 = vtos %v6402
        %6404 = vst [vmem:[#allocation3] sm:$0xff] %v5737
        %6405 = vst [vmem:[#allocation3 + $0x8] sm:$0xff] %v5738
        %6406 = vst [vmem:[#allocation3 + $0x10] sm:$0xff] %v5739
        %6407 = vst [vmem:[#allocation3 + $0x18] sm:$0xff] %v5740
        %6408 = vst [vmem:[#allocation3 + $0x20] sm:$0xff] %v5741
        %6409 = vst [vmem:[#allocation3 + $0x28] sm:$0xff] %v5742
        %6410 = vst [vmem:[#allocation3 + $0x30] sm:$0xff] %v5743
        %6411 = vst [vmem:[#allocation3 + $0x38] sm:$0xff] %v5744
        %6412 = vst [vmem:[#allocation3 + $0x40] sm:$0xff] %v5745
        %6413 = vst [vmem:[#allocation3 + $0x48] sm:$0xff] %v5746
        %6414 = vst [vmem:[#allocation3 + $0x50] sm:$0xff] %v5747
        %6415 = vst [vmem:[#allocation3 + $0x58] sm:$0xff] %v5748
        %6416 = vst [vmem:[#allocation3 + $0x60] sm:$0xff] %v5749
        %6417 = vst [vmem:[#allocation3 + $0x68] sm:$0xff] %v5750
        %6418 = vst [vmem:[#allocation3 + $0x70] sm:$0xff] %v5751
        %6419 = vst [vmem:[#allocation3 + $0x78] sm:$0xff] %v5752
        %6420 = vst [vmem:[#allocation3 + $0x80] sm:$0xff] %v5753
        %6421 = vst [vmem:[#allocation3 + $0x88] sm:$0xff] %v5754
        %6422 = vst [vmem:[#allocation3 + $0x90] sm:$0xff] %v5755
        %6423 = vst [vmem:[#allocation3 + $0x98] sm:$0xff] %v5756
        %6424 = vst [vmem:[#allocation3 + $0xa0] sm:$0xff] %v5757
        %6425 = vst [vmem:[#allocation3 + $0xa8] sm:$0xff] %v5758
        %6426 = vst [vmem:[#allocation3 + $0xb0] sm:$0xff] %v5759
        %6427 = vst [vmem:[#allocation3 + $0xb8] sm:$0xff] %v5760
        %6428 = vst [vmem:[#allocation3 + $0xc0] sm:$0xff] %v5761
        %6429 = vst [vmem:[#allocation3 + $0xc8] sm:$0xff] %v5762
        %6430 = vst [vmem:[#allocation3 + $0xd0] sm:$0xff] %v5763
        %6431 = vst [vmem:[#allocation3 + $0xd8] sm:$0xff] %v5764
        %6432 = vst [vmem:[#allocation3 + $0xe0] sm:$0xff] %v5765
        %6433 = vst [vmem:[#allocation3 + $0xe8] sm:$0xff] %v5766
        %6434 = vst [vmem:[#allocation3 + $0xf0] sm:$0xff] %v5767
        %6435 = vst [vmem:[#allocation3 + $0xf8] sm:$0xff] %v5768
        %6436 = vst [vmem:[#allocation3 + $0x100] sm:$0xff] %v5769
        %6437 = vst [vmem:[#allocation3 + $0x108] sm:$0xff] %v5770
        %6438 = vst [vmem:[#allocation3 + $0x110] sm:$0xff] %v5771
        %6439 = vst [vmem:[#allocation3 + $0x118] sm:$0xff] %v5772
        %6440 = vst [vmem:[#allocation3 + $0x120] sm:$0xff] %v5773
        %6441 = vst [vmem:[#allocation3 + $0x128] sm:$0xff] %v5774
        %6442 = vst [vmem:[#allocation3 + $0x130] sm:$0xff] %v5775
        %6443 = vst [vmem:[#allocation3 + $0x138] sm:$0xff] %v5776
        %6444 = vst [vmem:[#allocation3 + $0x140] sm:$0xff] %v5777
        %6445 = vst [vmem:[#allocation3 + $0x148] sm:$0xff] %v5778
        %6446 = vst [vmem:[#allocation3 + $0x150] sm:$0xff] %v5779
        %6447 = vst [vmem:[#allocation3 + $0x158] sm:$0xff] %v5780
        %6448 = vst [vmem:[#allocation3 + $0x160] sm:$0xff] %v5781
        %6449 = vst [vmem:[#allocation3 + $0x168] sm:$0xff] %v5782
        %6450 = vst [vmem:[#allocation3 + $0x170] sm:$0xff] %v5783
        %6451 = vst [vmem:[#allocation3 + $0x178] sm:$0xff] %v5784
        %6452 = vst [vmem:[#allocation3 + $0x180] sm:$0xff] %v5785
        %6453 = vst [vmem:[#allocation3 + $0x188] sm:$0xff] %v5786
        %6454 = vst [vmem:[#allocation3 + $0x190] sm:$0xff] %v5787
        %6455 = vst [vmem:[#allocation3 + $0x198] sm:$0xff] %v5788
        %6456 = vst [vmem:[#allocation3 + $0x1a0] sm:$0xff] %v5789
        %6457 = vst [vmem:[#allocation3 + $0x1a8] sm:$0xff] %v5790
        %6458 = vst [vmem:[#allocation3 + $0x1b0] sm:$0xff] %v5791
        %6459 = vst [vmem:[#allocation3 + $0x1b8] sm:$0xff] %v5792
        %6460 = vst [vmem:[#allocation3 + $0x1c0] sm:$0xff] %v5793
        %6461 = vst [vmem:[#allocation3 + $0x1c8] sm:$0xff] %v5794
        %6462 = vst [vmem:[#allocation3 + $0x1d0] sm:$0xff] %v5795
        %6463 = vst [vmem:[#allocation3 + $0x1d8] sm:$0xff] %v5796
        %6464 = vst [vmem:[#allocation3 + $0x1e0] sm:$0xff] %v5797
        %6465 = vst [vmem:[#allocation3 + $0x1e8] sm:$0xff] %v5798
        %6466 = vst [vmem:[#allocation3 + $0x1f0] sm:$0xff] %v5799
        %6467 = vst [vmem:[#allocation3 + $0x1f8] sm:$0xff] %v5800
        %6468 = vst [vmem:[#allocation3 + $0x200] sm:$0xff] %v5801
        %6469 = vst [vmem:[#allocation3 + $0x208] sm:$0xff] %v5802
        %6470 = vst [vmem:[#allocation3 + $0x210] sm:$0xff] %v5803
        %6471 = vst [vmem:[#allocation3 + $0x218] sm:$0xff] %v5804
        %6472 = vst [vmem:[#allocation3 + $0x220] sm:$0xff] %v5805
        %6473 = vst [vmem:[#allocation3 + $0x228] sm:$0xff] %v5806
        %6474 = vst [vmem:[#allocation3 + $0x230] sm:$0xff] %v5807
        %6475 = vst [vmem:[#allocation3 + $0x238] sm:$0xff] %v5808
        %6476 = vst [vmem:[#allocation3 + $0x240] sm:$0xff] %v5809
        %6477 = vst [vmem:[#allocation3 + $0x248] sm:$0xff] %v5810
        %6478 = vst [vmem:[#allocation3 + $0x250] sm:$0xff] %v5811
        %6479 = vst [vmem:[#allocation3 + $0x258] sm:$0xff] %v5812
        %6480 = vst [vmem:[#allocation3 + $0x260] sm:$0xff] %v5813
        %6481 = vst [vmem:[#allocation3 + $0x268] sm:$0xff] %v5814
        %6482 = vst [vmem:[#allocation3 + $0x270] sm:$0xff] %v5815
        %6483 = vst [vmem:[#allocation3 + $0x278] sm:$0xff] %v5816
        %6484 = vst [vmem:[#allocation3 + $0x280] sm:$0xff] %v5817
        %6485 = vst [vmem:[#allocation3 + $0x288] sm:$0xff] %v5818
        %6486 = vst [vmem:[#allocation3 + $0x290] sm:$0xff] %v5819
        %6487 = vst [vmem:[#allocation3 + $0x298] sm:$0xff] %v5820
        %6488 = vst [vmem:[#allocation3 + $0x2a0] sm:$0xff] %v5821
        %6489 = vst [vmem:[#allocation3 + $0x2a8] sm:$0xff] %v5822
        %6490 = vst [vmem:[#allocation3 + $0x2b0] sm:$0xff] %v5823
        %6491 = vst [vmem:[#allocation3 + $0x2b8] sm:$0xff] %v5824
        %6492 = vst [vmem:[#allocation3 + $0x2c0] sm:$0xff] %v5825
        %6493 = vst [vmem:[#allocation3 + $0x2c8] sm:$0xff] %v5826
        %6494 = vst [vmem:[#allocation3 + $0x2d0] sm:$0xff] %v5827
        %6495 = vst [vmem:[#allocation3 + $0x2d8] sm:$0xff] %v5828
        %6496 = vst [vmem:[#allocation3 + $0x2e0] sm:$0xff] %v5829
        %6497 = vst [vmem:[#allocation3 + $0x2e8] sm:$0xff] %v5830
        %6498 = vst [vmem:[#allocation3 + $0x2f0] sm:$0xff] %v5831
        %6499 = vst [vmem:[#allocation3 + $0x2f8] sm:$0xff] %v5832
        %6500 = vst [vmem:[#allocation3 + $0x300] sm:$0xff] %v5833
        %6501 = vst [vmem:[#allocation3 + $0x308] sm:$0xff] %v5834
        %6502 = vst [vmem:[#allocation3 + $0x310] sm:$0xff] %v5835
        %6503 = vst [vmem:[#allocation3 + $0x318] sm:$0xff] %v5836
        %6504 = vst [vmem:[#allocation3 + $0x320] sm:$0xff] %v5837
        %6505 = vst [vmem:[#allocation3 + $0x328] sm:$0xff] %v5838
        %6506 = vst [vmem:[#allocation3 + $0x330] sm:$0xff] %v5839
        %6507 = vst [vmem:[#allocation3 + $0x338] sm:$0xff] %v5840
        %6508 = vst [vmem:[#allocation3 + $0x340] sm:$0xff] %v5841
        %6509 = vst [vmem:[#allocation3 + $0x348] sm:$0xff] %v5842
        %6510 = vst [vmem:[#allocation3 + $0x350] sm:$0xff] %v5843
        %6511 = vst [vmem:[#allocation3 + $0x358] sm:$0xff] %v5844
        %6512 = vst [vmem:[#allocation3 + $0x360] sm:$0xff] %v5845
        %6513 = vst [vmem:[#allocation3 + $0x368] sm:$0xff] %v5846
        %6514 = vst [vmem:[#allocation3 + $0x370] sm:$0xff] %v5847
        %6515 = vst [vmem:[#allocation3 + $0x378] sm:$0xff] %v5848
        %6516 = vst [vmem:[#allocation3 + $0x380] sm:$0xff] %v5849
        %6517 = vst [vmem:[#allocation3 + $0x388] sm:$0xff] %v5850
        %6518 = vst [vmem:[#allocation3 + $0x390] sm:$0xff] %v5851
        %6519 = vst [vmem:[#allocation3 + $0x398] sm:$0xff] %v5852
        %6520 = vst [vmem:[#allocation3 + $0x3a0] sm:$0xff] %v5853
        %6521 = vst [vmem:[#allocation3 + $0x3a8] sm:$0xff] %v5854
        %6522 = vst [vmem:[#allocation3 + $0x3b0] sm:$0xff] %v5855
        %6523 = vst [vmem:[#allocation3 + $0x3b8] sm:$0xff] %v5856
        %6524 = vst [vmem:[#allocation3 + $0x3c0] sm:$0xff] %v5857
        %6525 = vst [vmem:[#allocation3 + $0x3c8] sm:$0xff] %v5858
        %6526 = vst [vmem:[#allocation3 + $0x3d0] sm:$0xff] %v5859
        %6527 = vst [vmem:[#allocation3 + $0x3d8] sm:$0xff] %v5860
        %6528 = vst [vmem:[#allocation3 + $0x3e0] sm:$0xff] %v5861
        %6529 = vst [vmem:[#allocation3 + $0x3e8] sm:$0xff] %v5862
        %6530 = vst [vmem:[#allocation3 + $0x3f0] sm:$0xff] %v5863
        %6531 = vst [vmem:[#allocation3 + $0x3f8] sm:$0xff] %v5864
        %v6532 = vld [vmem:[#allocation3] sm:$0xff]
        %v6533 = vld [vmem:[#allocation3 + $0x8] sm:$0xff]
        %v6534 = vld [vmem:[#allocation3 + $0x20] sm:$0xff]
        %v6535 = vld [vmem:[#allocation3 + $0x28] sm:$0xff]
        %v6536 = vld [vmem:[#allocation3 + $0x40] sm:$0xff]
        %v6537 = vld [vmem:[#allocation3 + $0x48] sm:$0xff]
        %v6538 = vld [vmem:[#allocation3 + $0x60] sm:$0xff]
        %v6539 = vld [vmem:[#allocation3 + $0x68] sm:$0xff]
        %v6540 = vld [vmem:[#allocation3 + $0x80] sm:$0xff]
        %v6541 = vld [vmem:[#allocation3 + $0x88] sm:$0xff]
        %v6542 = vld [vmem:[#allocation3 + $0xa0] sm:$0xff]
        %v6543 = vld [vmem:[#allocation3 + $0xa8] sm:$0xff]
        %v6544 = vld [vmem:[#allocation3 + $0xc0] sm:$0xff]
        %v6545 = vld [vmem:[#allocation3 + $0xc8] sm:$0xff]
        %v6546 = vld [vmem:[#allocation3 + $0xe0] sm:$0xff]
        %v6547 = vld [vmem:[#allocation3 + $0xe8] sm:$0xff]
        %v6548 = vld [vmem:[#allocation3 + $0x100] sm:$0xff]
        %v6549 = vld [vmem:[#allocation3 + $0x108] sm:$0xff]
        %v6550 = vld [vmem:[#allocation3 + $0x120] sm:$0xff]
        %v6551 = vld [vmem:[#allocation3 + $0x128] sm:$0xff]
        %v6552 = vld [vmem:[#allocation3 + $0x140] sm:$0xff]
        %v6553 = vld [vmem:[#allocation3 + $0x148] sm:$0xff]
        %v6554 = vld [vmem:[#allocation3 + $0x160] sm:$0xff]
        %v6555 = vld [vmem:[#allocation3 + $0x168] sm:$0xff]
        %v6556 = vld [vmem:[#allocation3 + $0x180] sm:$0xff]
        %v6557 = vld [vmem:[#allocation3 + $0x188] sm:$0xff]
        %v6558 = vld [vmem:[#allocation3 + $0x1a0] sm:$0xff]
        %v6559 = vld [vmem:[#allocation3 + $0x1a8] sm:$0xff]
        %v6560 = vld [vmem:[#allocation3 + $0x1c0] sm:$0xff]
        %v6561 = vld [vmem:[#allocation3 + $0x1c8] sm:$0xff]
        %v6562 = vld [vmem:[#allocation3 + $0x1e0] sm:$0xff]
        %v6563 = vld [vmem:[#allocation3 + $0x1e8] sm:$0xff]
        %v6564 = vld [vmem:[#allocation3 + $0x200] sm:$0xff]
        %v6565 = vld [vmem:[#allocation3 + $0x208] sm:$0xff]
        %v6566 = vld [vmem:[#allocation3 + $0x220] sm:$0xff]
        %v6567 = vld [vmem:[#allocation3 + $0x228] sm:$0xff]
        %v6568 = vld [vmem:[#allocation3 + $0x240] sm:$0xff]
        %v6569 = vld [vmem:[#allocation3 + $0x248] sm:$0xff]
        %v6570 = vld [vmem:[#allocation3 + $0x260] sm:$0xff]
        %v6571 = vld [vmem:[#allocation3 + $0x268] sm:$0xff]
        %v6572 = vld [vmem:[#allocation3 + $0x280] sm:$0xff]
        %v6573 = vld [vmem:[#allocation3 + $0x288] sm:$0xff]
        %v6574 = vld [vmem:[#allocation3 + $0x2a0] sm:$0xff]
        %v6575 = vld [vmem:[#allocation3 + $0x2a8] sm:$0xff]
        %v6576 = vld [vmem:[#allocation3 + $0x2c0] sm:$0xff]
        %v6577 = vld [vmem:[#allocation3 + $0x2c8] sm:$0xff]
        %v6578 = vld [vmem:[#allocation3 + $0x2e0] sm:$0xff]
        %v6579 = vld [vmem:[#allocation3 + $0x2e8] sm:$0xff]
        %v6580 = vld [vmem:[#allocation3 + $0x300] sm:$0xff]
        %v6581 = vld [vmem:[#allocation3 + $0x308] sm:$0xff]
        %v6582 = vld [vmem:[#allocation3 + $0x320] sm:$0xff]
        %v6583 = vld [vmem:[#allocation3 + $0x328] sm:$0xff]
        %v6584 = vld [vmem:[#allocation3 + $0x340] sm:$0xff]
        %v6585 = vld [vmem:[#allocation3 + $0x348] sm:$0xff]
        %v6586 = vld [vmem:[#allocation3 + $0x360] sm:$0xff]
        %v6587 = vld [vmem:[#allocation3 + $0x368] sm:$0xff]
        %v6588 = vld [vmem:[#allocation3 + $0x380] sm:$0xff]
        %v6589 = vld [vmem:[#allocation3 + $0x388] sm:$0xff]
        %v6590 = vld [vmem:[#allocation3 + $0x3a0] sm:$0xff]
        %v6591 = vld [vmem:[#allocation3 + $0x3a8] sm:$0xff]
        %v6592 = vld [vmem:[#allocation3 + $0x3c0] sm:$0xff]
        %v6593 = vld [vmem:[#allocation3 + $0x3c8] sm:$0xff]
        %v6594 = vld [vmem:[#allocation3 + $0x3e0] sm:$0xff]
        %v6595 = vld [vmem:[#allocation3 + $0x3e8] sm:$0xff]
        %v6596 = vsub.f32 %v6532, %v6004
        %v6597 = vsub.f32 %v6533, %v6004
        %v6598 = vsub.f32 %v6534, %v6004
        %v6599 = vsub.f32 %v6535, %v6004
        %v6600 = vsub.f32 %v6536, %v6004
        %v6601 = vsub.f32 %v6537, %v6004
        %v6602 = vsub.f32 %v6538, %v6004
        %v6603 = vsub.f32 %v6539, %v6004
        %v6604 = vsub.f32 %v6540, %v6004
        %v6605 = vsub.f32 %v6541, %v6004
        %v6606 = vsub.f32 %v6542, %v6004
        %v6607 = vsub.f32 %v6543, %v6004
        %v6608 = vsub.f32 %v6544, %v6004
        %v6609 = vsub.f32 %v6545, %v6004
        %v6610 = vsub.f32 %v6546, %v6004
        %v6611 = vsub.f32 %v6547, %v6004
        %v6612 = vsub.f32 %v6548, %v6004
        %v6613 = vsub.f32 %v6549, %v6004
        %v6614 = vsub.f32 %v6550, %v6004
        %v6615 = vsub.f32 %v6551, %v6004
        %v6616 = vsub.f32 %v6552, %v6004
        %v6617 = vsub.f32 %v6553, %v6004
        %v6618 = vsub.f32 %v6554, %v6004
        %v6619 = vsub.f32 %v6555, %v6004
        %v6620 = vsub.f32 %v6556, %v6004
        %v6621 = vsub.f32 %v6557, %v6004
        %v6622 = vsub.f32 %v6558, %v6004
        %v6623 = vsub.f32 %v6559, %v6004
        %v6624 = vsub.f32 %v6560, %v6004
        %v6625 = vsub.f32 %v6561, %v6004
        %v6626 = vsub.f32 %v6562, %v6004
        %v6627 = vsub.f32 %v6563, %v6004
        %v6628 = vsub.f32 %v6564, %v6004
        %v6629 = vsub.f32 %v6565, %v6004
        %v6630 = vsub.f32 %v6566, %v6004
        %v6631 = vsub.f32 %v6567, %v6004
        %v6632 = vsub.f32 %v6568, %v6004
        %v6633 = vsub.f32 %v6569, %v6004
        %v6634 = vsub.f32 %v6570, %v6004
        %v6635 = vsub.f32 %v6571, %v6004
        %v6636 = vsub.f32 %v6572, %v6004
        %v6637 = vsub.f32 %v6573, %v6004
        %v6638 = vsub.f32 %v6574, %v6004
        %v6639 = vsub.f32 %v6575, %v6004
        %v6640 = vsub.f32 %v6576, %v6004
        %v6641 = vsub.f32 %v6577, %v6004
        %v6642 = vsub.f32 %v6578, %v6004
        %v6643 = vsub.f32 %v6579, %v6004
        %v6644 = vsub.f32 %v6580, %v6004
        %v6645 = vsub.f32 %v6581, %v6004
        %v6646 = vsub.f32 %v6582, %v6004
        %v6647 = vsub.f32 %v6583, %v6004
        %v6648 = vsub.f32 %v6584, %v6004
        %v6649 = vsub.f32 %v6585, %v6004
        %v6650 = vsub.f32 %v6586, %v6004
        %v6651 = vsub.f32 %v6587, %v6004
        %v6652 = vsub.f32 %v6588, %v6004
        %v6653 = vsub.f32 %v6589, %v6004
        %v6654 = vsub.f32 %v6590, %v6004
        %v6655 = vsub.f32 %v6591, %v6004
        %v6656 = vsub.f32 %v6592, %v6004
        %v6657 = vsub.f32 %v6593, %v6004
        %v6658 = vsub.f32 %v6594, %v6004
        %v6659 = vsub.f32 %v6595, %v6004
        %v6660 = vstv %s6403
        %v6661 = vmul.f32 %v6596, %v6660
        %v6662 = vmul.f32 %v6597, %v6660
        %v6663 = vmul.f32 %v6598, %v6660
        %v6664 = vmul.f32 %v6599, %v6660
        %v6665 = vmul.f32 %v6600, %v6660
        %v6666 = vmul.f32 %v6601, %v6660
        %v6667 = vmul.f32 %v6602, %v6660
        %v6668 = vmul.f32 %v6603, %v6660
        %v6669 = vmul.f32 %v6604, %v6660
        %v6670 = vmul.f32 %v6605, %v6660
        %v6671 = vmul.f32 %v6606, %v6660
        %v6672 = vmul.f32 %v6607, %v6660
        %v6673 = vmul.f32 %v6608, %v6660
        %v6674 = vmul.f32 %v6609, %v6660
        %v6675 = vmul.f32 %v6610, %v6660
        %v6676 = vmul.f32 %v6611, %v6660
        %v6677 = vmul.f32 %v6612, %v6660
        %v6678 = vmul.f32 %v6613, %v6660
        %v6679 = vmul.f32 %v6614, %v6660
        %v6680 = vmul.f32 %v6615, %v6660
        %v6681 = vmul.f32 %v6616, %v6660
        %v6682 = vmul.f32 %v6617, %v6660
        %v6683 = vmul.f32 %v6618, %v6660
        %v6684 = vmul.f32 %v6619, %v6660
        %v6685 = vmul.f32 %v6620, %v6660
        %v6686 = vmul.f32 %v6621, %v6660
        %v6687 = vmul.f32 %v6622, %v6660
        %v6688 = vmul.f32 %v6623, %v6660
        %v6689 = vmul.f32 %v6624, %v6660
        %v6690 = vmul.f32 %v6625, %v6660
        %v6691 = vmul.f32 %v6626, %v6660
        %v6692 = vmul.f32 %v6627, %v6660
        %v6693 = vmul.f32 %v6628, %v6660
        %v6694 = vmul.f32 %v6629, %v6660
        %v6695 = vmul.f32 %v6630, %v6660
        %v6696 = vmul.f32 %v6631, %v6660
        %v6697 = vmul.f32 %v6632, %v6660
        %v6698 = vmul.f32 %v6633, %v6660
        %v6699 = vmul.f32 %v6634, %v6660
        %v6700 = vmul.f32 %v6635, %v6660
        %v6701 = vmul.f32 %v6636, %v6660
        %v6702 = vmul.f32 %v6637, %v6660
        %v6703 = vmul.f32 %v6638, %v6660
        %v6704 = vmul.f32 %v6639, %v6660
        %v6705 = vmul.f32 %v6640, %v6660
        %v6706 = vmul.f32 %v6641, %v6660
        %v6707 = vmul.f32 %v6642, %v6660
        %v6708 = vmul.f32 %v6643, %v6660
        %v6709 = vmul.f32 %v6644, %v6660
        %v6710 = vmul.f32 %v6645, %v6660
        %v6711 = vmul.f32 %v6646, %v6660
        %v6712 = vmul.f32 %v6647, %v6660
        %v6713 = vmul.f32 %v6648, %v6660
        %v6714 = vmul.f32 %v6649, %v6660
        %v6715 = vmul.f32 %v6650, %v6660
        %v6716 = vmul.f32 %v6651, %v6660
        %v6717 = vmul.f32 %v6652, %v6660
        %v6718 = vmul.f32 %v6653, %v6660
        %v6719 = vmul.f32 %v6654, %v6660
        %v6720 = vmul.f32 %v6655, %v6660
        %v6721 = vmul.f32 %v6656, %v6660
        %v6722 = vmul.f32 %v6657, %v6660
        %v6723 = vmul.f32 %v6658, %v6660
        %v6724 = vmul.f32 %v6659, %v6660
        %v6725 = vld [vmem:[#allocation25] sm:$0xff]
        %v6726 = vld [vmem:[#allocation25 + $0x10] sm:$0xff]
        %v6727 = vld [vmem:[#allocation25 + $0x20] sm:$0xff]
        %v6728 = vld [vmem:[#allocation25 + $0x30] sm:$0xff]
        %v6729 = vld [vmem:[#allocation25 + $0x40] sm:$0xff]
        %v6730 = vld [vmem:[#allocation25 + $0x50] sm:$0xff]
        %v6731 = vld [vmem:[#allocation25 + $0x60] sm:$0xff]
        %v6732 = vld [vmem:[#allocation25 + $0x70] sm:$0xff]
        %v6733 = vld [vmem:[#allocation25 + $0x80] sm:$0xff]
        %v6734 = vld [vmem:[#allocation25 + $0x90] sm:$0xff]
        %v6735 = vld [vmem:[#allocation25 + $0xa0] sm:$0xff]
        %v6736 = vld [vmem:[#allocation25 + $0xb0] sm:$0xff]
        %v6737 = vld [vmem:[#allocation25 + $0xc0] sm:$0xff]
        %v6738 = vld [vmem:[#allocation25 + $0xd0] sm:$0xff]
        %v6739 = vld [vmem:[#allocation25 + $0xe0] sm:$0xff]
        %v6740 = vld [vmem:[#allocation25 + $0xf0] sm:$0xff]
        %v6741 = vld [vmem:[#allocation25 + $0x100] sm:$0xff]
        %v6742 = vld [vmem:[#allocation25 + $0x110] sm:$0xff]
        %v6743 = vld [vmem:[#allocation25 + $0x120] sm:$0xff]
        %v6744 = vld [vmem:[#allocation25 + $0x130] sm:$0xff]
        %v6745 = vld [vmem:[#allocation25 + $0x140] sm:$0xff]
        %v6746 = vld [vmem:[#allocation25 + $0x150] sm:$0xff]
        %v6747 = vld [vmem:[#allocation25 + $0x160] sm:$0xff]
        %v6748 = vld [vmem:[#allocation25 + $0x170] sm:$0xff]
        %v6749 = vld [vmem:[#allocation25 + $0x180] sm:$0xff]
        %v6750 = vld [vmem:[#allocation25 + $0x190] sm:$0xff]
        %v6751 = vld [vmem:[#allocation25 + $0x1a0] sm:$0xff]
        %v6752 = vld [vmem:[#allocation25 + $0x1b0] sm:$0xff]
        %v6753 = vld [vmem:[#allocation25 + $0x1c0] sm:$0xff]
        %v6754 = vld [vmem:[#allocation25 + $0x1d0] sm:$0xff]
        %v6755 = vld [vmem:[#allocation25 + $0x1e0] sm:$0xff]
        %v6756 = vld [vmem:[#allocation25 + $0x1f0] sm:$0xff]
        %v6757 = vunpack.c.l.bf16 %v6725
        %v6758 = vunpack.c.h.bf16 %v6725
        %v6759 = vunpack.c.l.bf16 %v6726
        %v6760 = vunpack.c.h.bf16 %v6726
        %v6761 = vunpack.c.l.bf16 %v6727
        %v6762 = vunpack.c.h.bf16 %v6727
        %v6763 = vunpack.c.l.bf16 %v6728
        %v6764 = vunpack.c.h.bf16 %v6728
        %v6765 = vunpack.c.l.bf16 %v6729
        %v6766 = vunpack.c.h.bf16 %v6729
        %v6767 = vunpack.c.l.bf16 %v6730
        %v6768 = vunpack.c.h.bf16 %v6730
        %v6769 = vunpack.c.l.bf16 %v6731
        %v6770 = vunpack.c.h.bf16 %v6731
        %v6771 = vunpack.c.l.bf16 %v6732
        %v6772 = vunpack.c.h.bf16 %v6732
        %v6773 = vunpack.c.l.bf16 %v6733
        %v6774 = vunpack.c.h.bf16 %v6733
        %v6775 = vunpack.c.l.bf16 %v6734
        %v6776 = vunpack.c.h.bf16 %v6734
        %v6777 = vunpack.c.l.bf16 %v6735
        %v6778 = vunpack.c.h.bf16 %v6735
        %v6779 = vunpack.c.l.bf16 %v6736
        %v6780 = vunpack.c.h.bf16 %v6736
        %v6781 = vunpack.c.l.bf16 %v6737
        %v6782 = vunpack.c.h.bf16 %v6737
        %v6783 = vunpack.c.l.bf16 %v6738
        %v6784 = vunpack.c.h.bf16 %v6738
        %v6785 = vunpack.c.l.bf16 %v6739
        %v6786 = vunpack.c.h.bf16 %v6739
        %v6787 = vunpack.c.l.bf16 %v6740
        %v6788 = vunpack.c.h.bf16 %v6740
        %v6789 = vunpack.c.l.bf16 %v6741
        %v6790 = vunpack.c.h.bf16 %v6741
        %v6791 = vunpack.c.l.bf16 %v6742
        %v6792 = vunpack.c.h.bf16 %v6742
        %v6793 = vunpack.c.l.bf16 %v6743
        %v6794 = vunpack.c.h.bf16 %v6743
        %v6795 = vunpack.c.l.bf16 %v6744
        %v6796 = vunpack.c.h.bf16 %v6744
        %v6797 = vunpack.c.l.bf16 %v6745
        %v6798 = vunpack.c.h.bf16 %v6745
        %v6799 = vunpack.c.l.bf16 %v6746
        %v6800 = vunpack.c.h.bf16 %v6746
        %v6801 = vunpack.c.l.bf16 %v6747
        %v6802 = vunpack.c.h.bf16 %v6747
        %v6803 = vunpack.c.l.bf16 %v6748
        %v6804 = vunpack.c.h.bf16 %v6748
        %v6805 = vunpack.c.l.bf16 %v6749
        %v6806 = vunpack.c.h.bf16 %v6749
        %v6807 = vunpack.c.l.bf16 %v6750
        %v6808 = vunpack.c.h.bf16 %v6750
        %v6809 = vunpack.c.l.bf16 %v6751
        %v6810 = vunpack.c.h.bf16 %v6751
        %v6811 = vunpack.c.l.bf16 %v6752
        %v6812 = vunpack.c.h.bf16 %v6752
        %v6813 = vunpack.c.l.bf16 %v6753
        %v6814 = vunpack.c.h.bf16 %v6753
        %v6815 = vunpack.c.l.bf16 %v6754
        %v6816 = vunpack.c.h.bf16 %v6754
        %v6817 = vunpack.c.l.bf16 %v6755
        %v6818 = vunpack.c.h.bf16 %v6755
        %v6819 = vunpack.c.l.bf16 %v6756
        %v6820 = vunpack.c.h.bf16 %v6756
        %v6821 = vmul.f32 %v6661, %v6757
        %v6822 = vmul.f32 %v6662, %v6758
        %v6823 = vmul.f32 %v6663, %v6759
        %v6824 = vmul.f32 %v6664, %v6760
        %v6825 = vmul.f32 %v6665, %v6761
        %v6826 = vmul.f32 %v6666, %v6762
        %v6827 = vmul.f32 %v6667, %v6763
        %v6828 = vmul.f32 %v6668, %v6764
        %v6829 = vmul.f32 %v6669, %v6765
        %v6830 = vmul.f32 %v6670, %v6766
        %v6831 = vmul.f32 %v6671, %v6767
        %v6832 = vmul.f32 %v6672, %v6768
        %v6833 = vmul.f32 %v6673, %v6769
        %v6834 = vmul.f32 %v6674, %v6770
        %v6835 = vmul.f32 %v6675, %v6771
        %v6836 = vmul.f32 %v6676, %v6772
        %v6837 = vmul.f32 %v6677, %v6773
        %v6838 = vmul.f32 %v6678, %v6774
        %v6839 = vmul.f32 %v6679, %v6775
        %v6840 = vmul.f32 %v6680, %v6776
        %v6841 = vmul.f32 %v6681, %v6777
        %v6842 = vmul.f32 %v6682, %v6778
        %v6843 = vmul.f32 %v6683, %v6779
        %v6844 = vmul.f32 %v6684, %v6780
        %v6845 = vmul.f32 %v6685, %v6781
        %v6846 = vmul.f32 %v6686, %v6782
        %v6847 = vmul.f32 %v6687, %v6783
        %v6848 = vmul.f32 %v6688, %v6784
        %v6849 = vmul.f32 %v6689, %v6785
        %v6850 = vmul.f32 %v6690, %v6786
        %v6851 = vmul.f32 %v6691, %v6787
        %v6852 = vmul.f32 %v6692, %v6788
        %v6853 = vmul.f32 %v6693, %v6789
        %v6854 = vmul.f32 %v6694, %v6790
        %v6855 = vmul.f32 %v6695, %v6791
        %v6856 = vmul.f32 %v6696, %v6792
        %v6857 = vmul.f32 %v6697, %v6793
        %v6858 = vmul.f32 %v6698, %v6794
        %v6859 = vmul.f32 %v6699, %v6795
        %v6860 = vmul.f32 %v6700, %v6796
        %v6861 = vmul.f32 %v6701, %v6797
        %v6862 = vmul.f32 %v6702, %v6798
        %v6863 = vmul.f32 %v6703, %v6799
        %v6864 = vmul.f32 %v6704, %v6800
        %v6865 = vmul.f32 %v6705, %v6801
        %v6866 = vmul.f32 %v6706, %v6802
        %v6867 = vmul.f32 %v6707, %v6803
        %v6868 = vmul.f32 %v6708, %v6804
        %v6869 = vmul.f32 %v6709, %v6805
        %v6870 = vmul.f32 %v6710, %v6806
        %v6871 = vmul.f32 %v6711, %v6807
        %v6872 = vmul.f32 %v6712, %v6808
        %v6873 = vmul.f32 %v6713, %v6809
        %v6874 = vmul.f32 %v6714, %v6810
        %v6875 = vmul.f32 %v6715, %v6811
        %v6876 = vmul.f32 %v6716, %v6812
        %v6877 = vmul.f32 %v6717, %v6813
        %v6878 = vmul.f32 %v6718, %v6814
        %v6879 = vmul.f32 %v6719, %v6815
        %v6880 = vmul.f32 %v6720, %v6816
        %v6881 = vmul.f32 %v6721, %v6817
        %v6882 = vmul.f32 %v6722, %v6818
        %v6883 = vmul.f32 %v6723, %v6819
        %v6884 = vmul.f32 %v6724, %v6820
        %v6885 = vld [vmem:[#allocation26] sm:$0xff]
        %v6886 = vld [vmem:[#allocation26 + $0x10] sm:$0xff]
        %v6887 = vld [vmem:[#allocation26 + $0x20] sm:$0xff]
        %v6888 = vld [vmem:[#allocation26 + $0x30] sm:$0xff]
        %v6889 = vld [vmem:[#allocation26 + $0x40] sm:$0xff]
        %v6890 = vld [vmem:[#allocation26 + $0x50] sm:$0xff]
        %v6891 = vld [vmem:[#allocation26 + $0x60] sm:$0xff]
        %v6892 = vld [vmem:[#allocation26 + $0x70] sm:$0xff]
        %v6893 = vld [vmem:[#allocation26 + $0x80] sm:$0xff]
        %v6894 = vld [vmem:[#allocation26 + $0x90] sm:$0xff]
        %v6895 = vld [vmem:[#allocation26 + $0xa0] sm:$0xff]
        %v6896 = vld [vmem:[#allocation26 + $0xb0] sm:$0xff]
        %v6897 = vld [vmem:[#allocation26 + $0xc0] sm:$0xff]
        %v6898 = vld [vmem:[#allocation26 + $0xd0] sm:$0xff]
        %v6899 = vld [vmem:[#allocation26 + $0xe0] sm:$0xff]
        %v6900 = vld [vmem:[#allocation26 + $0xf0] sm:$0xff]
        %v6901 = vld [vmem:[#allocation26 + $0x100] sm:$0xff]
        %v6902 = vld [vmem:[#allocation26 + $0x110] sm:$0xff]
        %v6903 = vld [vmem:[#allocation26 + $0x120] sm:$0xff]
        %v6904 = vld [vmem:[#allocation26 + $0x130] sm:$0xff]
        %v6905 = vld [vmem:[#allocation26 + $0x140] sm:$0xff]
        %v6906 = vld [vmem:[#allocation26 + $0x150] sm:$0xff]
        %v6907 = vld [vmem:[#allocation26 + $0x160] sm:$0xff]
        %v6908 = vld [vmem:[#allocation26 + $0x170] sm:$0xff]
        %v6909 = vld [vmem:[#allocation26 + $0x180] sm:$0xff]
        %v6910 = vld [vmem:[#allocation26 + $0x190] sm:$0xff]
        %v6911 = vld [vmem:[#allocation26 + $0x1a0] sm:$0xff]
        %v6912 = vld [vmem:[#allocation26 + $0x1b0] sm:$0xff]
        %v6913 = vld [vmem:[#allocation26 + $0x1c0] sm:$0xff]
        %v6914 = vld [vmem:[#allocation26 + $0x1d0] sm:$0xff]
        %v6915 = vld [vmem:[#allocation26 + $0x1e0] sm:$0xff]
        %v6916 = vld [vmem:[#allocation26 + $0x1f0] sm:$0xff]
        %v6917 = vunpack.c.l.bf16 %v6885
        %v6918 = vunpack.c.h.bf16 %v6885
        %v6919 = vunpack.c.l.bf16 %v6886
        %v6920 = vunpack.c.h.bf16 %v6886
        %v6921 = vunpack.c.l.bf16 %v6887
        %v6922 = vunpack.c.h.bf16 %v6887
        %v6923 = vunpack.c.l.bf16 %v6888
        %v6924 = vunpack.c.h.bf16 %v6888
        %v6925 = vunpack.c.l.bf16 %v6889
        %v6926 = vunpack.c.h.bf16 %v6889
        %v6927 = vunpack.c.l.bf16 %v6890
        %v6928 = vunpack.c.h.bf16 %v6890
        %v6929 = vunpack.c.l.bf16 %v6891
        %v6930 = vunpack.c.h.bf16 %v6891
        %v6931 = vunpack.c.l.bf16 %v6892
        %v6932 = vunpack.c.h.bf16 %v6892
        %v6933 = vunpack.c.l.bf16 %v6893
        %v6934 = vunpack.c.h.bf16 %v6893
        %v6935 = vunpack.c.l.bf16 %v6894
        %v6936 = vunpack.c.h.bf16 %v6894
        %v6937 = vunpack.c.l.bf16 %v6895
        %v6938 = vunpack.c.h.bf16 %v6895
        %v6939 = vunpack.c.l.bf16 %v6896
        %v6940 = vunpack.c.h.bf16 %v6896
        %v6941 = vunpack.c.l.bf16 %v6897
        %v6942 = vunpack.c.h.bf16 %v6897
        %v6943 = vunpack.c.l.bf16 %v6898
        %v6944 = vunpack.c.h.bf16 %v6898
        %v6945 = vunpack.c.l.bf16 %v6899
        %v6946 = vunpack.c.h.bf16 %v6899
        %v6947 = vunpack.c.l.bf16 %v6900
        %v6948 = vunpack.c.h.bf16 %v6900
        %v6949 = vunpack.c.l.bf16 %v6901
        %v6950 = vunpack.c.h.bf16 %v6901
        %v6951 = vunpack.c.l.bf16 %v6902
        %v6952 = vunpack.c.h.bf16 %v6902
        %v6953 = vunpack.c.l.bf16 %v6903
        %v6954 = vunpack.c.h.bf16 %v6903
        %v6955 = vunpack.c.l.bf16 %v6904
        %v6956 = vunpack.c.h.bf16 %v6904
        %v6957 = vunpack.c.l.bf16 %v6905
        %v6958 = vunpack.c.h.bf16 %v6905
        %v6959 = vunpack.c.l.bf16 %v6906
        %v6960 = vunpack.c.h.bf16 %v6906
        %v6961 = vunpack.c.l.bf16 %v6907
        %v6962 = vunpack.c.h.bf16 %v6907
        %v6963 = vunpack.c.l.bf16 %v6908
        %v6964 = vunpack.c.h.bf16 %v6908
        %v6965 = vunpack.c.l.bf16 %v6909
        %v6966 = vunpack.c.h.bf16 %v6909
        %v6967 = vunpack.c.l.bf16 %v6910
        %v6968 = vunpack.c.h.bf16 %v6910
        %v6969 = vunpack.c.l.bf16 %v6911
        %v6970 = vunpack.c.h.bf16 %v6911
        %v6971 = vunpack.c.l.bf16 %v6912
        %v6972 = vunpack.c.h.bf16 %v6912
        %v6973 = vunpack.c.l.bf16 %v6913
        %v6974 = vunpack.c.h.bf16 %v6913
        %v6975 = vunpack.c.l.bf16 %v6914
        %v6976 = vunpack.c.h.bf16 %v6914
        %v6977 = vunpack.c.l.bf16 %v6915
        %v6978 = vunpack.c.h.bf16 %v6915
        %v6979 = vunpack.c.l.bf16 %v6916
        %v6980 = vunpack.c.h.bf16 %v6916
        %v6981 = vadd.f32 %v6821, %v6917
        %v6982 = vadd.f32 %v6822, %v6918
        %v6983 = vadd.f32 %v6823, %v6919
        %v6984 = vadd.f32 %v6824, %v6920
        %v6985 = vadd.f32 %v6825, %v6921
        %v6986 = vadd.f32 %v6826, %v6922
        %v6987 = vadd.f32 %v6827, %v6923
        %v6988 = vadd.f32 %v6828, %v6924
        %v6989 = vadd.f32 %v6829, %v6925
        %v6990 = vadd.f32 %v6830, %v6926
        %v6991 = vadd.f32 %v6831, %v6927
        %v6992 = vadd.f32 %v6832, %v6928
        %v6993 = vadd.f32 %v6833, %v6929
        %v6994 = vadd.f32 %v6834, %v6930
        %v6995 = vadd.f32 %v6835, %v6931
        %v6996 = vadd.f32 %v6836, %v6932
        %v6997 = vadd.f32 %v6837, %v6933
        %v6998 = vadd.f32 %v6838, %v6934
        %v6999 = vadd.f32 %v6839, %v6935
        %v7000 = vadd.f32 %v6840, %v6936
        %v7001 = vadd.f32 %v6841, %v6937
        %v7002 = vadd.f32 %v6842, %v6938
        %v7003 = vadd.f32 %v6843, %v6939
        %v7004 = vadd.f32 %v6844, %v6940
        %v7005 = vadd.f32 %v6845, %v6941
        %v7006 = vadd.f32 %v6846, %v6942
        %v7007 = vadd.f32 %v6847, %v6943
        %v7008 = vadd.f32 %v6848, %v6944
        %v7009 = vadd.f32 %v6849, %v6945
        %v7010 = vadd.f32 %v6850, %v6946
        %v7011 = vadd.f32 %v6851, %v6947
        %v7012 = vadd.f32 %v6852, %v6948
        %v7013 = vadd.f32 %v6853, %v6949
        %v7014 = vadd.f32 %v6854, %v6950
        %v7015 = vadd.f32 %v6855, %v6951
        %v7016 = vadd.f32 %v6856, %v6952
        %v7017 = vadd.f32 %v6857, %v6953
        %v7018 = vadd.f32 %v6858, %v6954
        %v7019 = vadd.f32 %v6859, %v6955
        %v7020 = vadd.f32 %v6860, %v6956
        %v7021 = vadd.f32 %v6861, %v6957
        %v7022 = vadd.f32 %v6862, %v6958
        %v7023 = vadd.f32 %v6863, %v6959
        %v7024 = vadd.f32 %v6864, %v6960
        %v7025 = vadd.f32 %v6865, %v6961
        %v7026 = vadd.f32 %v6866, %v6962
        %v7027 = vadd.f32 %v6867, %v6963
        %v7028 = vadd.f32 %v6868, %v6964
        %v7029 = vadd.f32 %v6869, %v6965
        %v7030 = vadd.f32 %v6870, %v6966
        %v7031 = vadd.f32 %v6871, %v6967
        %v7032 = vadd.f32 %v6872, %v6968
        %v7033 = vadd.f32 %v6873, %v6969
        %v7034 = vadd.f32 %v6874, %v6970
        %v7035 = vadd.f32 %v6875, %v6971
        %v7036 = vadd.f32 %v6876, %v6972
        %v7037 = vadd.f32 %v6877, %v6973
        %v7038 = vadd.f32 %v6878, %v6974
        %v7039 = vadd.f32 %v6879, %v6975
        %v7040 = vadd.f32 %v6880, %v6976
        %v7041 = vadd.f32 %v6881, %v6977
        %v7042 = vadd.f32 %v6882, %v6978
        %v7043 = vadd.f32 %v6883, %v6979
        %v7044 = vadd.f32 %v6884, %v6980
        %v7045 = vpack.c.bf16 %v6983, %v6981
        %v7046 = vpack.c.bf16 %v6984, %v6982
        %v7047 = vpack.c.bf16 %v6987, %v6985
        %v7048 = vpack.c.bf16 %v6988, %v6986
        %v7049 = vpack.c.bf16 %v6991, %v6989
        %v7050 = vpack.c.bf16 %v6992, %v6990
        %v7051 = vpack.c.bf16 %v6995, %v6993
        %v7052 = vpack.c.bf16 %v6996, %v6994
        %v7053 = vpack.c.bf16 %v6999, %v6997
        %v7054 = vpack.c.bf16 %v7000, %v6998
        %v7055 = vpack.c.bf16 %v7003, %v7001
        %v7056 = vpack.c.bf16 %v7004, %v7002
        %v7057 = vpack.c.bf16 %v7007, %v7005
        %v7058 = vpack.c.bf16 %v7008, %v7006
        %v7059 = vpack.c.bf16 %v7011, %v7009
        %v7060 = vpack.c.bf16 %v7012, %v7010
        %v7061 = vpack.c.bf16 %v7015, %v7013
        %v7062 = vpack.c.bf16 %v7016, %v7014
        %v7063 = vpack.c.bf16 %v7019, %v7017
        %v7064 = vpack.c.bf16 %v7020, %v7018
        %v7065 = vpack.c.bf16 %v7023, %v7021
        %v7066 = vpack.c.bf16 %v7024, %v7022
        %v7067 = vpack.c.bf16 %v7027, %v7025
        %v7068 = vpack.c.bf16 %v7028, %v7026
        %v7069 = vpack.c.bf16 %v7031, %v7029
        %v7070 = vpack.c.bf16 %v7032, %v7030
        %v7071 = vpack.c.bf16 %v7035, %v7033
        %v7072 = vpack.c.bf16 %v7036, %v7034
        %v7073 = vpack.c.bf16 %v7039, %v7037
        %v7074 = vpack.c.bf16 %v7040, %v7038
        %v7075 = vpack.c.bf16 %v7043, %v7041
        %v7076 = vpack.c.bf16 %v7044, %v7042
        %7077 = vst [vmem:[#allocation5] sm:$0xff] %v7045
        %7078 = vst [vmem:[#allocation5 + $0x8] sm:$0xff] %v7046
        %7079 = vst [vmem:[#allocation5 + $0x10] sm:$0xff] %v7047
        %7080 = vst [vmem:[#allocation5 + $0x18] sm:$0xff] %v7048
        %7081 = vst [vmem:[#allocation5 + $0x20] sm:$0xff] %v7049
        %7082 = vst [vmem:[#allocation5 + $0x28] sm:$0xff] %v7050
        %7083 = vst [vmem:[#allocation5 + $0x30] sm:$0xff] %v7051
        %7084 = vst [vmem:[#allocation5 + $0x38] sm:$0xff] %v7052
        %7085 = vst [vmem:[#allocation5 + $0x40] sm:$0xff] %v7053
        %7086 = vst [vmem:[#allocation5 + $0x48] sm:$0xff] %v7054
        %7087 = vst [vmem:[#allocation5 + $0x50] sm:$0xff] %v7055
        %7088 = vst [vmem:[#allocation5 + $0x58] sm:$0xff] %v7056
        %7089 = vst [vmem:[#allocation5 + $0x60] sm:$0xff] %v7057
        %7090 = vst [vmem:[#allocation5 + $0x68] sm:$0xff] %v7058
        %7091 = vst [vmem:[#allocation5 + $0x70] sm:$0xff] %v7059
        %7092 = vst [vmem:[#allocation5 + $0x78] sm:$0xff] %v7060
        %7093 = vst [vmem:[#allocation5 + $0x80] sm:$0xff] %v7061
        %7094 = vst [vmem:[#allocation5 + $0x88] sm:$0xff] %v7062
        %7095 = vst [vmem:[#allocation5 + $0x90] sm:$0xff] %v7063
        %7096 = vst [vmem:[#allocation5 + $0x98] sm:$0xff] %v7064
        %7097 = vst [vmem:[#allocation5 + $0xa0] sm:$0xff] %v7065
        %7098 = vst [vmem:[#allocation5 + $0xa8] sm:$0xff] %v7066
        %7099 = vst [vmem:[#allocation5 + $0xb0] sm:$0xff] %v7067
        %7100 = vst [vmem:[#allocation5 + $0xb8] sm:$0xff] %v7068
        %7101 = vst [vmem:[#allocation5 + $0xc0] sm:$0xff] %v7069
        %7102 = vst [vmem:[#allocation5 + $0xc8] sm:$0xff] %v7070
        %7103 = vst [vmem:[#allocation5 + $0xd0] sm:$0xff] %v7071
        %7104 = vst [vmem:[#allocation5 + $0xd8] sm:$0xff] %v7072
        %7105 = vst [vmem:[#allocation5 + $0xe0] sm:$0xff] %v7073
        %7106 = vst [vmem:[#allocation5 + $0xe8] sm:$0xff] %v7074
        %7107 = vst [vmem:[#allocation5 + $0xf0] sm:$0xff] %v7075
        %7108 = vst [vmem:[#allocation5 + $0xf8] sm:$0xff] %v7076
        %v7109 = vld [vmem:[#allocation3 + $0x10] sm:$0xff]
        %v7110 = vld [vmem:[#allocation3 + $0x18] sm:$0xff]
        %v7111 = vld [vmem:[#allocation3 + $0x30] sm:$0xff]
        %v7112 = vld [vmem:[#allocation3 + $0x38] sm:$0xff]
        %v7113 = vld [vmem:[#allocation3 + $0x50] sm:$0xff]
        %v7114 = vld [vmem:[#allocation3 + $0x58] sm:$0xff]
        %v7115 = vld [vmem:[#allocation3 + $0x70] sm:$0xff]
        %v7116 = vld [vmem:[#allocation3 + $0x78] sm:$0xff]
        %v7117 = vld [vmem:[#allocation3 + $0x90] sm:$0xff]
        %v7118 = vld [vmem:[#allocation3 + $0x98] sm:$0xff]
        %v7119 = vld [vmem:[#allocation3 + $0xb0] sm:$0xff]
        %v7120 = vld [vmem:[#allocation3 + $0xb8] sm:$0xff]
        %v7121 = vld [vmem:[#allocation3 + $0xd0] sm:$0xff]
        %v7122 = vld [vmem:[#allocation3 + $0xd8] sm:$0xff]
        %v7123 = vld [vmem:[#allocation3 + $0xf0] sm:$0xff]
        %v7124 = vld [vmem:[#allocation3 + $0xf8] sm:$0xff]
        %v7125 = vld [vmem:[#allocation3 + $0x110] sm:$0xff]
        %v7126 = vld [vmem:[#allocation3 + $0x118] sm:$0xff]
        %v7127 = vld [vmem:[#allocation3 + $0x130] sm:$0xff]
        %v7128 = vld [vmem:[#allocation3 + $0x138] sm:$0xff]
        %v7129 = vld [vmem:[#allocation3 + $0x150] sm:$0xff]
        %v7130 = vld [vmem:[#allocation3 + $0x158] sm:$0xff]
        %v7131 = vld [vmem:[#allocation3 + $0x170] sm:$0xff]
        %v7132 = vld [vmem:[#allocation3 + $0x178] sm:$0xff]
        %v7133 = vld [vmem:[#allocation3 + $0x190] sm:$0xff]
        %v7134 = vld [vmem:[#allocation3 + $0x198] sm:$0xff]
        %v7135 = vld [vmem:[#allocation3 + $0x1b0] sm:$0xff]
        %v7136 = vld [vmem:[#allocation3 + $0x1b8] sm:$0xff]
        %v7137 = vld [vmem:[#allocation3 + $0x1d0] sm:$0xff]
        %v7138 = vld [vmem:[#allocation3 + $0x1d8] sm:$0xff]
        %v7139 = vld [vmem:[#allocation3 + $0x1f0] sm:$0xff]
        %v7140 = vld [vmem:[#allocation3 + $0x1f8] sm:$0xff]
        %v7141 = vld [vmem:[#allocation3 + $0x210] sm:$0xff]
        %v7142 = vld [vmem:[#allocation3 + $0x218] sm:$0xff]
        %v7143 = vld [vmem:[#allocation3 + $0x230] sm:$0xff]
        %v7144 = vld [vmem:[#allocation3 + $0x238] sm:$0xff]
        %v7145 = vld [vmem:[#allocation3 + $0x250] sm:$0xff]
        %v7146 = vld [vmem:[#allocation3 + $0x258] sm:$0xff]
        %v7147 = vld [vmem:[#allocation3 + $0x270] sm:$0xff]
        %v7148 = vld [vmem:[#allocation3 + $0x278] sm:$0xff]
        %v7149 = vld [vmem:[#allocation3 + $0x290] sm:$0xff]
        %v7150 = vld [vmem:[#allocation3 + $0x298] sm:$0xff]
        %v7151 = vld [vmem:[#allocation3 + $0x2b0] sm:$0xff]
        %v7152 = vld [vmem:[#allocation3 + $0x2b8] sm:$0xff]
        %v7153 = vld [vmem:[#allocation3 + $0x2d0] sm:$0xff]
        %v7154 = vld [vmem:[#allocation3 + $0x2d8] sm:$0xff]
        %v7155 = vld [vmem:[#allocation3 + $0x2f0] sm:$0xff]
        %v7156 = vld [vmem:[#allocation3 + $0x2f8] sm:$0xff]
        %v7157 = vld [vmem:[#allocation3 + $0x310] sm:$0xff]
        %v7158 = vld [vmem:[#allocation3 + $0x318] sm:$0xff]
        %v7159 = vld [vmem:[#allocation3 + $0x330] sm:$0xff]
        %v7160 = vld [vmem:[#allocation3 + $0x338] sm:$0xff]
        %v7161 = vld [vmem:[#allocation3 + $0x350] sm:$0xff]
        %v7162 = vld [vmem:[#allocation3 + $0x358] sm:$0xff]
        %v7163 = vld [vmem:[#allocation3 + $0x370] sm:$0xff]
        %v7164 = vld [vmem:[#allocation3 + $0x378] sm:$0xff]
        %v7165 = vld [vmem:[#allocation3 + $0x390] sm:$0xff]
        %v7166 = vld [vmem:[#allocation3 + $0x398] sm:$0xff]
        %v7167 = vld [vmem:[#allocation3 + $0x3b0] sm:$0xff]
        %v7168 = vld [vmem:[#allocation3 + $0x3b8] sm:$0xff]
        %v7169 = vld [vmem:[#allocation3 + $0x3d0] sm:$0xff]
        %v7170 = vld [vmem:[#allocation3 + $0x3d8] sm:$0xff]
        %v7171 = vld [vmem:[#allocation3 + $0x3f0] sm:$0xff]
        %v7172 = vld [vmem:[#allocation3 + $0x3f8] sm:$0xff]
        %v7173 = vsub.f32 %v7109, %v6004
        %v7174 = vsub.f32 %v7110, %v6004
        %v7175 = vsub.f32 %v7111, %v6004
        %v7176 = vsub.f32 %v7112, %v6004
        %v7177 = vsub.f32 %v7113, %v6004
        %v7178 = vsub.f32 %v7114, %v6004
        %v7179 = vsub.f32 %v7115, %v6004
        %v7180 = vsub.f32 %v7116, %v6004
        %v7181 = vsub.f32 %v7117, %v6004
        %v7182 = vsub.f32 %v7118, %v6004
        %v7183 = vsub.f32 %v7119, %v6004
        %v7184 = vsub.f32 %v7120, %v6004
        %v7185 = vsub.f32 %v7121, %v6004
        %v7186 = vsub.f32 %v7122, %v6004
        %v7187 = vsub.f32 %v7123, %v6004
        %v7188 = vsub.f32 %v7124, %v6004
        %v7189 = vsub.f32 %v7125, %v6004
        %v7190 = vsub.f32 %v7126, %v6004
        %v7191 = vsub.f32 %v7127, %v6004
        %v7192 = vsub.f32 %v7128, %v6004
        %v7193 = vsub.f32 %v7129, %v6004
        %v7194 = vsub.f32 %v7130, %v6004
        %v7195 = vsub.f32 %v7131, %v6004
        %v7196 = vsub.f32 %v7132, %v6004
        %v7197 = vsub.f32 %v7133, %v6004
        %v7198 = vsub.f32 %v7134, %v6004
        %v7199 = vsub.f32 %v7135, %v6004
        %v7200 = vsub.f32 %v7136, %v6004
        %v7201 = vsub.f32 %v7137, %v6004
        %v7202 = vsub.f32 %v7138, %v6004
        %v7203 = vsub.f32 %v7139, %v6004
        %v7204 = vsub.f32 %v7140, %v6004
        %v7205 = vsub.f32 %v7141, %v6004
        %v7206 = vsub.f32 %v7142, %v6004
        %v7207 = vsub.f32 %v7143, %v6004
        %v7208 = vsub.f32 %v7144, %v6004
        %v7209 = vsub.f32 %v7145, %v6004
        %v7210 = vsub.f32 %v7146, %v6004
        %v7211 = vsub.f32 %v7147, %v6004
        %v7212 = vsub.f32 %v7148, %v6004
        %v7213 = vsub.f32 %v7149, %v6004
        %v7214 = vsub.f32 %v7150, %v6004
        %v7215 = vsub.f32 %v7151, %v6004
        %v7216 = vsub.f32 %v7152, %v6004
        %v7217 = vsub.f32 %v7153, %v6004
        %v7218 = vsub.f32 %v7154, %v6004
        %v7219 = vsub.f32 %v7155, %v6004
        %v7220 = vsub.f32 %v7156, %v6004
        %v7221 = vsub.f32 %v7157, %v6004
        %v7222 = vsub.f32 %v7158, %v6004
        %v7223 = vsub.f32 %v7159, %v6004
        %v7224 = vsub.f32 %v7160, %v6004
        %v7225 = vsub.f32 %v7161, %v6004
        %v7226 = vsub.f32 %v7162, %v6004
        %v7227 = vsub.f32 %v7163, %v6004
        %v7228 = vsub.f32 %v7164, %v6004
        %v7229 = vsub.f32 %v7165, %v6004
        %v7230 = vsub.f32 %v7166, %v6004
        %v7231 = vsub.f32 %v7167, %v6004
        %v7232 = vsub.f32 %v7168, %v6004
        %v7233 = vsub.f32 %v7169, %v6004
        %v7234 = vsub.f32 %v7170, %v6004
        %v7235 = vsub.f32 %v7171, %v6004
        %v7236 = vsub.f32 %v7172, %v6004
        %v7237 = vmul.f32 %v7173, %v6660
        %v7238 = vmul.f32 %v7174, %v6660
        %v7239 = vmul.f32 %v7175, %v6660
        %v7240 = vmul.f32 %v7176, %v6660
        %v7241 = vmul.f32 %v7177, %v6660
        %v7242 = vmul.f32 %v7178, %v6660
        %v7243 = vmul.f32 %v7179, %v6660
        %v7244 = vmul.f32 %v7180, %v6660
        %v7245 = vmul.f32 %v7181, %v6660
        %v7246 = vmul.f32 %v7182, %v6660
        %v7247 = vmul.f32 %v7183, %v6660
        %v7248 = vmul.f32 %v7184, %v6660
        %v7249 = vmul.f32 %v7185, %v6660
        %v7250 = vmul.f32 %v7186, %v6660
        %v7251 = vmul.f32 %v7187, %v6660
        %v7252 = vmul.f32 %v7188, %v6660
        %v7253 = vmul.f32 %v7189, %v6660
        %v7254 = vmul.f32 %v7190, %v6660
        %v7255 = vmul.f32 %v7191, %v6660
        %v7256 = vmul.f32 %v7192, %v6660
        %v7257 = vmul.f32 %v7193, %v6660
        %v7258 = vmul.f32 %v7194, %v6660
        %v7259 = vmul.f32 %v7195, %v6660
        %v7260 = vmul.f32 %v7196, %v6660
        %v7261 = vmul.f32 %v7197, %v6660
        %v7262 = vmul.f32 %v7198, %v6660
        %v7263 = vmul.f32 %v7199, %v6660
        %v7264 = vmul.f32 %v7200, %v6660
        %v7265 = vmul.f32 %v7201, %v6660
        %v7266 = vmul.f32 %v7202, %v6660
        %v7267 = vmul.f32 %v7203, %v6660
        %v7268 = vmul.f32 %v7204, %v6660
        %v7269 = vmul.f32 %v7205, %v6660
        %v7270 = vmul.f32 %v7206, %v6660
        %v7271 = vmul.f32 %v7207, %v6660
        %v7272 = vmul.f32 %v7208, %v6660
        %v7273 = vmul.f32 %v7209, %v6660
        %v7274 = vmul.f32 %v7210, %v6660
        %v7275 = vmul.f32 %v7211, %v6660
        %v7276 = vmul.f32 %v7212, %v6660
        %v7277 = vmul.f32 %v7213, %v6660
        %v7278 = vmul.f32 %v7214, %v6660
        %v7279 = vmul.f32 %v7215, %v6660
        %v7280 = vmul.f32 %v7216, %v6660
        %v7281 = vmul.f32 %v7217, %v6660
        %v7282 = vmul.f32 %v7218, %v6660
        %v7283 = vmul.f32 %v7219, %v6660
        %v7284 = vmul.f32 %v7220, %v6660
        %v7285 = vmul.f32 %v7221, %v6660
        %v7286 = vmul.f32 %v7222, %v6660
        %v7287 = vmul.f32 %v7223, %v6660
        %v7288 = vmul.f32 %v7224, %v6660
        %v7289 = vmul.f32 %v7225, %v6660
        %v7290 = vmul.f32 %v7226, %v6660
        %v7291 = vmul.f32 %v7227, %v6660
        %v7292 = vmul.f32 %v7228, %v6660
        %v7293 = vmul.f32 %v7229, %v6660
        %v7294 = vmul.f32 %v7230, %v6660
        %v7295 = vmul.f32 %v7231, %v6660
        %v7296 = vmul.f32 %v7232, %v6660
        %v7297 = vmul.f32 %v7233, %v6660
        %v7298 = vmul.f32 %v7234, %v6660
        %v7299 = vmul.f32 %v7235, %v6660
        %v7300 = vmul.f32 %v7236, %v6660
        %v7301 = vld [vmem:[#allocation25 + $0x8] sm:$0xff]
        %v7302 = vld [vmem:[#allocation25 + $0x18] sm:$0xff]
        %v7303 = vld [vmem:[#allocation25 + $0x28] sm:$0xff]
        %v7304 = vld [vmem:[#allocation25 + $0x38] sm:$0xff]
        %v7305 = vld [vmem:[#allocation25 + $0x48] sm:$0xff]
        %v7306 = vld [vmem:[#allocation25 + $0x58] sm:$0xff]
        %v7307 = vld [vmem:[#allocation25 + $0x68] sm:$0xff]
        %v7308 = vld [vmem:[#allocation25 + $0x78] sm:$0xff]
        %v7309 = vld [vmem:[#allocation25 + $0x88] sm:$0xff]
        %v7310 = vld [vmem:[#allocation25 + $0x98] sm:$0xff]
        %v7311 = vld [vmem:[#allocation25 + $0xa8] sm:$0xff]
        %v7312 = vld [vmem:[#allocation25 + $0xb8] sm:$0xff]
        %v7313 = vld [vmem:[#allocation25 + $0xc8] sm:$0xff]
        %v7314 = vld [vmem:[#allocation25 + $0xd8] sm:$0xff]
        %v7315 = vld [vmem:[#allocation25 + $0xe8] sm:$0xff]
        %v7316 = vld [vmem:[#allocation25 + $0xf8] sm:$0xff]
        %v7317 = vld [vmem:[#allocation25 + $0x108] sm:$0xff]
        %v7318 = vld [vmem:[#allocation25 + $0x118] sm:$0xff]
        %v7319 = vld [vmem:[#allocation25 + $0x128] sm:$0xff]
        %v7320 = vld [vmem:[#allocation25 + $0x138] sm:$0xff]
        %v7321 = vld [vmem:[#allocation25 + $0x148] sm:$0xff]
        %v7322 = vld [vmem:[#allocation25 + $0x158] sm:$0xff]
        %v7323 = vld [vmem:[#allocation25 + $0x168] sm:$0xff]
        %v7324 = vld [vmem:[#allocation25 + $0x178] sm:$0xff]
        %v7325 = vld [vmem:[#allocation25 + $0x188] sm:$0xff]
        %v7326 = vld [vmem:[#allocation25 + $0x198] sm:$0xff]
        %v7327 = vld [vmem:[#allocation25 + $0x1a8] sm:$0xff]
        %v7328 = vld [vmem:[#allocation25 + $0x1b8] sm:$0xff]
        %v7329 = vld [vmem:[#allocation25 + $0x1c8] sm:$0xff]
        %v7330 = vld [vmem:[#allocation25 + $0x1d8] sm:$0xff]
        %v7331 = vld [vmem:[#allocation25 + $0x1e8] sm:$0xff]
        %v7332 = vld [vmem:[#allocation25 + $0x1f8] sm:$0xff]
        %v7333 = vunpack.c.l.bf16 %v7301
        %v7334 = vunpack.c.h.bf16 %v7301
        %v7335 = vunpack.c.l.bf16 %v7302
        %v7336 = vunpack.c.h.bf16 %v7302
        %v7337 = vunpack.c.l.bf16 %v7303
        %v7338 = vunpack.c.h.bf16 %v7303
        %v7339 = vunpack.c.l.bf16 %v7304
        %v7340 = vunpack.c.h.bf16 %v7304
        %v7341 = vunpack.c.l.bf16 %v7305
        %v7342 = vunpack.c.h.bf16 %v7305
        %v7343 = vunpack.c.l.bf16 %v7306
        %v7344 = vunpack.c.h.bf16 %v7306
        %v7345 = vunpack.c.l.bf16 %v7307
        %v7346 = vunpack.c.h.bf16 %v7307
        %v7347 = vunpack.c.l.bf16 %v7308
        %v7348 = vunpack.c.h.bf16 %v7308
        %v7349 = vunpack.c.l.bf16 %v7309
        %v7350 = vunpack.c.h.bf16 %v7309
        %v7351 = vunpack.c.l.bf16 %v7310
        %v7352 = vunpack.c.h.bf16 %v7310
        %v7353 = vunpack.c.l.bf16 %v7311
        %v7354 = vunpack.c.h.bf16 %v7311
        %v7355 = vunpack.c.l.bf16 %v7312
        %v7356 = vunpack.c.h.bf16 %v7312
        %v7357 = vunpack.c.l.bf16 %v7313
        %v7358 = vunpack.c.h.bf16 %v7313
        %v7359 = vunpack.c.l.bf16 %v7314
        %v7360 = vunpack.c.h.bf16 %v7314
        %v7361 = vunpack.c.l.bf16 %v7315
        %v7362 = vunpack.c.h.bf16 %v7315
        %v7363 = vunpack.c.l.bf16 %v7316
        %v7364 = vunpack.c.h.bf16 %v7316
        %v7365 = vunpack.c.l.bf16 %v7317
        %v7366 = vunpack.c.h.bf16 %v7317
        %v7367 = vunpack.c.l.bf16 %v7318
        %v7368 = vunpack.c.h.bf16 %v7318
        %v7369 = vunpack.c.l.bf16 %v7319
        %v7370 = vunpack.c.h.bf16 %v7319
        %v7371 = vunpack.c.l.bf16 %v7320
        %v7372 = vunpack.c.h.bf16 %v7320
        %v7373 = vunpack.c.l.bf16 %v7321
        %v7374 = vunpack.c.h.bf16 %v7321
        %v7375 = vunpack.c.l.bf16 %v7322
        %v7376 = vunpack.c.h.bf16 %v7322
        %v7377 = vunpack.c.l.bf16 %v7323
        %v7378 = vunpack.c.h.bf16 %v7323
        %v7379 = vunpack.c.l.bf16 %v7324
        %v7380 = vunpack.c.h.bf16 %v7324
        %v7381 = vunpack.c.l.bf16 %v7325
        %v7382 = vunpack.c.h.bf16 %v7325
        %v7383 = vunpack.c.l.bf16 %v7326
        %v7384 = vunpack.c.h.bf16 %v7326
        %v7385 = vunpack.c.l.bf16 %v7327
        %v7386 = vunpack.c.h.bf16 %v7327
        %v7387 = vunpack.c.l.bf16 %v7328
        %v7388 = vunpack.c.h.bf16 %v7328
        %v7389 = vunpack.c.l.bf16 %v7329
        %v7390 = vunpack.c.h.bf16 %v7329
        %v7391 = vunpack.c.l.bf16 %v7330
        %v7392 = vunpack.c.h.bf16 %v7330
        %v7393 = vunpack.c.l.bf16 %v7331
        %v7394 = vunpack.c.h.bf16 %v7331
        %v7395 = vunpack.c.l.bf16 %v7332
        %v7396 = vunpack.c.h.bf16 %v7332
        %v7397 = vmul.f32 %v7237, %v7333
        %v7398 = vmul.f32 %v7238, %v7334
        %v7399 = vmul.f32 %v7239, %v7335
        %v7400 = vmul.f32 %v7240, %v7336
        %v7401 = vmul.f32 %v7241, %v7337
        %v7402 = vmul.f32 %v7242, %v7338
        %v7403 = vmul.f32 %v7243, %v7339
        %v7404 = vmul.f32 %v7244, %v7340
        %v7405 = vmul.f32 %v7245, %v7341
        %v7406 = vmul.f32 %v7246, %v7342
        %v7407 = vmul.f32 %v7247, %v7343
        %v7408 = vmul.f32 %v7248, %v7344
        %v7409 = vmul.f32 %v7249, %v7345
        %v7410 = vmul.f32 %v7250, %v7346
        %v7411 = vmul.f32 %v7251, %v7347
        %v7412 = vmul.f32 %v7252, %v7348
        %v7413 = vmul.f32 %v7253, %v7349
        %v7414 = vmul.f32 %v7254, %v7350
        %v7415 = vmul.f32 %v7255, %v7351
        %v7416 = vmul.f32 %v7256, %v7352
        %v7417 = vmul.f32 %v7257, %v7353
        %v7418 = vmul.f32 %v7258, %v7354
        %v7419 = vmul.f32 %v7259, %v7355
        %v7420 = vmul.f32 %v7260, %v7356
        %v7421 = vmul.f32 %v7261, %v7357
        %v7422 = vmul.f32 %v7262, %v7358
        %v7423 = vmul.f32 %v7263, %v7359
        %v7424 = vmul.f32 %v7264, %v7360
        %v7425 = vmul.f32 %v7265, %v7361
        %v7426 = vmul.f32 %v7266, %v7362
        %v7427 = vmul.f32 %v7267, %v7363
        %v7428 = vmul.f32 %v7268, %v7364
        %v7429 = vmul.f32 %v7269, %v7365
        %v7430 = vmul.f32 %v7270, %v7366
        %v7431 = vmul.f32 %v7271, %v7367
        %v7432 = vmul.f32 %v7272, %v7368
        %v7433 = vmul.f32 %v7273, %v7369
        %v7434 = vmul.f32 %v7274, %v7370
        %v7435 = vmul.f32 %v7275, %v7371
        %v7436 = vmul.f32 %v7276, %v7372
        %v7437 = vmul.f32 %v7277, %v7373
        %v7438 = vmul.f32 %v7278, %v7374
        %v7439 = vmul.f32 %v7279, %v7375
        %v7440 = vmul.f32 %v7280, %v7376
        %v7441 = vmul.f32 %v7281, %v7377
        %v7442 = vmul.f32 %v7282, %v7378
        %v7443 = vmul.f32 %v7283, %v7379
        %v7444 = vmul.f32 %v7284, %v7380
        %v7445 = vmul.f32 %v7285, %v7381
        %v7446 = vmul.f32 %v7286, %v7382
        %v7447 = vmul.f32 %v7287, %v7383
        %v7448 = vmul.f32 %v7288, %v7384
        %v7449 = vmul.f32 %v7289, %v7385
        %v7450 = vmul.f32 %v7290, %v7386
        %v7451 = vmul.f32 %v7291, %v7387
        %v7452 = vmul.f32 %v7292, %v7388
        %v7453 = vmul.f32 %v7293, %v7389
        %v7454 = vmul.f32 %v7294, %v7390
        %v7455 = vmul.f32 %v7295, %v7391
        %v7456 = vmul.f32 %v7296, %v7392
        %v7457 = vmul.f32 %v7297, %v7393
        %v7458 = vmul.f32 %v7298, %v7394
        %v7459 = vmul.f32 %v7299, %v7395
        %v7460 = vmul.f32 %v7300, %v7396
        %v7461 = vld [vmem:[#allocation26 + $0x8] sm:$0xff]
        %v7462 = vld [vmem:[#allocation26 + $0x18] sm:$0xff]
        %v7463 = vld [vmem:[#allocation26 + $0x28] sm:$0xff]
        %v7464 = vld [vmem:[#allocation26 + $0x38] sm:$0xff]
        %v7465 = vld [vmem:[#allocation26 + $0x48] sm:$0xff]
        %v7466 = vld [vmem:[#allocation26 + $0x58] sm:$0xff]
        %v7467 = vld [vmem:[#allocation26 + $0x68] sm:$0xff]
        %v7468 = vld [vmem:[#allocation26 + $0x78] sm:$0xff]
        %v7469 = vld [vmem:[#allocation26 + $0x88] sm:$0xff]
        %v7470 = vld [vmem:[#allocation26 + $0x98] sm:$0xff]
        %v7471 = vld [vmem:[#allocation26 + $0xa8] sm:$0xff]
        %v7472 = vld [vmem:[#allocation26 + $0xb8] sm:$0xff]
        %v7473 = vld [vmem:[#allocation26 + $0xc8] sm:$0xff]
        %v7474 = vld [vmem:[#allocation26 + $0xd8] sm:$0xff]
        %v7475 = vld [vmem:[#allocation26 + $0xe8] sm:$0xff]
        %v7476 = vld [vmem:[#allocation26 + $0xf8] sm:$0xff]
        %v7477 = vld [vmem:[#allocation26 + $0x108] sm:$0xff]
        %v7478 = vld [vmem:[#allocation26 + $0x118] sm:$0xff]
        %v7479 = vld [vmem:[#allocation26 + $0x128] sm:$0xff]
        %v7480 = vld [vmem:[#allocation26 + $0x138] sm:$0xff]
        %v7481 = vld [vmem:[#allocation26 + $0x148] sm:$0xff]
        %v7482 = vld [vmem:[#allocation26 + $0x158] sm:$0xff]
        %v7483 = vld [vmem:[#allocation26 + $0x168] sm:$0xff]
        %v7484 = vld [vmem:[#allocation26 + $0x178] sm:$0xff]
        %v7485 = vld [vmem:[#allocation26 + $0x188] sm:$0xff]
        %v7486 = vld [vmem:[#allocation26 + $0x198] sm:$0xff]
        %v7487 = vld [vmem:[#allocation26 + $0x1a8] sm:$0xff]
        %v7488 = vld [vmem:[#allocation26 + $0x1b8] sm:$0xff]
        %v7489 = vld [vmem:[#allocation26 + $0x1c8] sm:$0xff]
        %v7490 = vld [vmem:[#allocation26 + $0x1d8] sm:$0xff]
        %v7491 = vld [vmem:[#allocation26 + $0x1e8] sm:$0xff]
        %v7492 = vld [vmem:[#allocation26 + $0x1f8] sm:$0xff]
        %v7493 = vunpack.c.l.bf16 %v7461
        %v7494 = vunpack.c.h.bf16 %v7461
        %v7495 = vunpack.c.l.bf16 %v7462
        %v7496 = vunpack.c.h.bf16 %v7462
        %v7497 = vunpack.c.l.bf16 %v7463
        %v7498 = vunpack.c.h.bf16 %v7463
        %v7499 = vunpack.c.l.bf16 %v7464
        %v7500 = vunpack.c.h.bf16 %v7464
        %v7501 = vunpack.c.l.bf16 %v7465
        %v7502 = vunpack.c.h.bf16 %v7465
        %v7503 = vunpack.c.l.bf16 %v7466
        %v7504 = vunpack.c.h.bf16 %v7466
        %v7505 = vunpack.c.l.bf16 %v7467
        %v7506 = vunpack.c.h.bf16 %v7467
        %v7507 = vunpack.c.l.bf16 %v7468
        %v7508 = vunpack.c.h.bf16 %v7468
        %v7509 = vunpack.c.l.bf16 %v7469
        %v7510 = vunpack.c.h.bf16 %v7469
        %v7511 = vunpack.c.l.bf16 %v7470
        %v7512 = vunpack.c.h.bf16 %v7470
        %v7513 = vunpack.c.l.bf16 %v7471
        %v7514 = vunpack.c.h.bf16 %v7471
        %v7515 = vunpack.c.l.bf16 %v7472
        %v7516 = vunpack.c.h.bf16 %v7472
        %v7517 = vunpack.c.l.bf16 %v7473
        %v7518 = vunpack.c.h.bf16 %v7473
        %v7519 = vunpack.c.l.bf16 %v7474
        %v7520 = vunpack.c.h.bf16 %v7474
        %v7521 = vunpack.c.l.bf16 %v7475
        %v7522 = vunpack.c.h.bf16 %v7475
        %v7523 = vunpack.c.l.bf16 %v7476
        %v7524 = vunpack.c.h.bf16 %v7476
        %v7525 = vunpack.c.l.bf16 %v7477
        %v7526 = vunpack.c.h.bf16 %v7477
        %v7527 = vunpack.c.l.bf16 %v7478
        %v7528 = vunpack.c.h.bf16 %v7478
        %v7529 = vunpack.c.l.bf16 %v7479
        %v7530 = vunpack.c.h.bf16 %v7479
        %v7531 = vunpack.c.l.bf16 %v7480
        %v7532 = vunpack.c.h.bf16 %v7480
        %v7533 = vunpack.c.l.bf16 %v7481
        %v7534 = vunpack.c.h.bf16 %v7481
        %v7535 = vunpack.c.l.bf16 %v7482
        %v7536 = vunpack.c.h.bf16 %v7482
        %v7537 = vunpack.c.l.bf16 %v7483
        %v7538 = vunpack.c.h.bf16 %v7483
        %v7539 = vunpack.c.l.bf16 %v7484
        %v7540 = vunpack.c.h.bf16 %v7484
        %v7541 = vunpack.c.l.bf16 %v7485
        %v7542 = vunpack.c.h.bf16 %v7485
        %v7543 = vunpack.c.l.bf16 %v7486
        %v7544 = vunpack.c.h.bf16 %v7486
        %v7545 = vunpack.c.l.bf16 %v7487
        %v7546 = vunpack.c.h.bf16 %v7487
        %v7547 = vunpack.c.l.bf16 %v7488
        %v7548 = vunpack.c.h.bf16 %v7488
        %v7549 = vunpack.c.l.bf16 %v7489
        %v7550 = vunpack.c.h.bf16 %v7489
        %v7551 = vunpack.c.l.bf16 %v7490
        %v7552 = vunpack.c.h.bf16 %v7490
        %v7553 = vunpack.c.l.bf16 %v7491
        %v7554 = vunpack.c.h.bf16 %v7491
        %v7555 = vunpack.c.l.bf16 %v7492
        %v7556 = vunpack.c.h.bf16 %v7492
        %v7557 = vadd.f32 %v7397, %v7493
        %v7558 = vadd.f32 %v7398, %v7494
        %v7559 = vadd.f32 %v7399, %v7495
        %v7560 = vadd.f32 %v7400, %v7496
        %v7561 = vadd.f32 %v7401, %v7497
        %v7562 = vadd.f32 %v7402, %v7498
        %v7563 = vadd.f32 %v7403, %v7499
        %v7564 = vadd.f32 %v7404, %v7500
        %v7565 = vadd.f32 %v7405, %v7501
        %v7566 = vadd.f32 %v7406, %v7502
        %v7567 = vadd.f32 %v7407, %v7503
        %v7568 = vadd.f32 %v7408, %v7504
        %v7569 = vadd.f32 %v7409, %v7505
        %v7570 = vadd.f32 %v7410, %v7506
        %v7571 = vadd.f32 %v7411, %v7507
        %v7572 = vadd.f32 %v7412, %v7508
        %v7573 = vadd.f32 %v7413, %v7509
        %v7574 = vadd.f32 %v7414, %v7510
        %v7575 = vadd.f32 %v7415, %v7511
        %v7576 = vadd.f32 %v7416, %v7512
        %v7577 = vadd.f32 %v7417, %v7513
        %v7578 = vadd.f32 %v7418, %v7514
        %v7579 = vadd.f32 %v7419, %v7515
        %v7580 = vadd.f32 %v7420, %v7516
        %v7581 = vadd.f32 %v7421, %v7517
        %v7582 = vadd.f32 %v7422, %v7518
        %v7583 = vadd.f32 %v7423, %v7519
        %v7584 = vadd.f32 %v7424, %v7520
        %v7585 = vadd.f32 %v7425, %v7521
        %v7586 = vadd.f32 %v7426, %v7522
        %v7587 = vadd.f32 %v7427, %v7523
        %v7588 = vadd.f32 %v7428, %v7524
        %v7589 = vadd.f32 %v7429, %v7525
        %v7590 = vadd.f32 %v7430, %v7526
        %v7591 = vadd.f32 %v7431, %v7527
        %v7592 = vadd.f32 %v7432, %v7528
        %v7593 = vadd.f32 %v7433, %v7529
        %v7594 = vadd.f32 %v7434, %v7530
        %v7595 = vadd.f32 %v7435, %v7531
        %v7596 = vadd.f32 %v7436, %v7532
        %v7597 = vadd.f32 %v7437, %v7533
        %v7598 = vadd.f32 %v7438, %v7534
        %v7599 = vadd.f32 %v7439, %v7535
        %v7600 = vadd.f32 %v7440, %v7536
        %v7601 = vadd.f32 %v7441, %v7537
        %v7602 = vadd.f32 %v7442, %v7538
        %v7603 = vadd.f32 %v7443, %v7539
        %v7604 = vadd.f32 %v7444, %v7540
        %v7605 = vadd.f32 %v7445, %v7541
        %v7606 = vadd.f32 %v7446, %v7542
        %v7607 = vadd.f32 %v7447, %v7543
        %v7608 = vadd.f32 %v7448, %v7544
        %v7609 = vadd.f32 %v7449, %v7545
        %v7610 = vadd.f32 %v7450, %v7546
        %v7611 = vadd.f32 %v7451, %v7547
        %v7612 = vadd.f32 %v7452, %v7548
        %v7613 = vadd.f32 %v7453, %v7549
        %v7614 = vadd.f32 %v7454, %v7550
        %v7615 = vadd.f32 %v7455, %v7551
        %v7616 = vadd.f32 %v7456, %v7552
        %v7617 = vadd.f32 %v7457, %v7553
        %v7618 = vadd.f32 %v7458, %v7554
        %v7619 = vadd.f32 %v7459, %v7555
        %v7620 = vadd.f32 %v7460, %v7556
        %v7621 = vpack.c.bf16 %v7559, %v7557
        %v7622 = vpack.c.bf16 %v7560, %v7558
        %v7623 = vpack.c.bf16 %v7563, %v7561
        %v7624 = vpack.c.bf16 %v7564, %v7562
        %v7625 = vpack.c.bf16 %v7567, %v7565
        %v7626 = vpack.c.bf16 %v7568, %v7566
        %v7627 = vpack.c.bf16 %v7571, %v7569
        %v7628 = vpack.c.bf16 %v7572, %v7570
        %v7629 = vpack.c.bf16 %v7575, %v7573
        %v7630 = vpack.c.bf16 %v7576, %v7574
        %v7631 = vpack.c.bf16 %v7579, %v7577
        %v7632 = vpack.c.bf16 %v7580, %v7578
        %v7633 = vpack.c.bf16 %v7583, %v7581
        %v7634 = vpack.c.bf16 %v7584, %v7582
        %v7635 = vpack.c.bf16 %v7587, %v7585
        %v7636 = vpack.c.bf16 %v7588, %v7586
        %v7637 = vpack.c.bf16 %v7591, %v7589
        %v7638 = vpack.c.bf16 %v7592, %v7590
        %v7639 = vpack.c.bf16 %v7595, %v7593
        %v7640 = vpack.c.bf16 %v7596, %v7594
        %v7641 = vpack.c.bf16 %v7599, %v7597
        %v7642 = vpack.c.bf16 %v7600, %v7598
        %v7643 = vpack.c.bf16 %v7603, %v7601
        %v7644 = vpack.c.bf16 %v7604, %v7602
        %v7645 = vpack.c.bf16 %v7607, %v7605
        %v7646 = vpack.c.bf16 %v7608, %v7606
        %v7647 = vpack.c.bf16 %v7611, %v7609
        %v7648 = vpack.c.bf16 %v7612, %v7610
        %v7649 = vpack.c.bf16 %v7615, %v7613
        %v7650 = vpack.c.bf16 %v7616, %v7614
        %v7651 = vpack.c.bf16 %v7619, %v7617
        %v7652 = vpack.c.bf16 %v7620, %v7618
        %7653 = vst [vmem:[#allocation5 + $0x100] sm:$0xff] %v7621
        %7654 = vst [vmem:[#allocation5 + $0x108] sm:$0xff] %v7622
        %7655 = vst [vmem:[#allocation5 + $0x110] sm:$0xff] %v7623
        %7656 = vst [vmem:[#allocation5 + $0x118] sm:$0xff] %v7624
        %7657 = vst [vmem:[#allocation5 + $0x120] sm:$0xff] %v7625
        %7658 = vst [vmem:[#allocation5 + $0x128] sm:$0xff] %v7626
        %7659 = vst [vmem:[#allocation5 + $0x130] sm:$0xff] %v7627
        %7660 = vst [vmem:[#allocation5 + $0x138] sm:$0xff] %v7628
        %7661 = vst [vmem:[#allocation5 + $0x140] sm:$0xff] %v7629
        %7662 = vst [vmem:[#allocation5 + $0x148] sm:$0xff] %v7630
        %7663 = vst [vmem:[#allocation5 + $0x150] sm:$0xff] %v7631
        %7664 = vst [vmem:[#allocation5 + $0x158] sm:$0xff] %v7632
        %7665 = vst [vmem:[#allocation5 + $0x160] sm:$0xff] %v7633
        %7666 = vst [vmem:[#allocation5 + $0x168] sm:$0xff] %v7634
        %7667 = vst [vmem:[#allocation5 + $0x170] sm:$0xff] %v7635
        %7668 = vst [vmem:[#allocation5 + $0x178] sm:$0xff] %v7636
        %7669 = vst [vmem:[#allocation5 + $0x180] sm:$0xff] %v7637
        %7670 = vst [vmem:[#allocation5 + $0x188] sm:$0xff] %v7638
        %7671 = vst [vmem:[#allocation5 + $0x190] sm:$0xff] %v7639
        %7672 = vst [vmem:[#allocation5 + $0x198] sm:$0xff] %v7640
        %7673 = vst [vmem:[#allocation5 + $0x1a0] sm:$0xff] %v7641
        %7674 = vst [vmem:[#allocation5 + $0x1a8] sm:$0xff] %v7642
        %7675 = vst [vmem:[#allocation5 + $0x1b0] sm:$0xff] %v7643
        %7676 = vst [vmem:[#allocation5 + $0x1b8] sm:$0xff] %v7644
        %7677 = vst [vmem:[#allocation5 + $0x1c0] sm:$0xff] %v7645
        %7678 = vst [vmem:[#allocation5 + $0x1c8] sm:$0xff] %v7646
        %7679 = vst [vmem:[#allocation5 + $0x1d0] sm:$0xff] %v7647
        %7680 = vst [vmem:[#allocation5 + $0x1d8] sm:$0xff] %v7648
        %7681 = vst [vmem:[#allocation5 + $0x1e0] sm:$0xff] %v7649
        %7682 = vst [vmem:[#allocation5 + $0x1e8] sm:$0xff] %v7650
        %7683 = vst [vmem:[#allocation5 + $0x1f0] sm:$0xff] %v7651
        %7684 = vst [vmem:[#allocation5 + $0x1f8] sm:$0xff] %v7652
        %v7685 = vld [vmem:[#allocation5] sm:$0xff]
        %v7686 = vld [vmem:[#allocation5 + $0x8] sm:$0xff]
        %v7687 = vld [vmem:[#allocation5 + $0x10] sm:$0xff]
        %v7688 = vld [vmem:[#allocation5 + $0x18] sm:$0xff]
        %v7689 = vld [vmem:[#allocation5 + $0x20] sm:$0xff]
        %v7690 = vld [vmem:[#allocation5 + $0x28] sm:$0xff]
        %v7691 = vld [vmem:[#allocation5 + $0x30] sm:$0xff]
        %v7692 = vld [vmem:[#allocation5 + $0x38] sm:$0xff]
        %v7693 = vld [vmem:[#allocation5 + $0x40] sm:$0xff]
        %v7694 = vld [vmem:[#allocation5 + $0x48] sm:$0xff]
        %v7695 = vld [vmem:[#allocation5 + $0x50] sm:$0xff]
        %v7696 = vld [vmem:[#allocation5 + $0x58] sm:$0xff]
        %v7697 = vld [vmem:[#allocation5 + $0x60] sm:$0xff]
        %v7698 = vld [vmem:[#allocation5 + $0x68] sm:$0xff]
        %v7699 = vld [vmem:[#allocation5 + $0x70] sm:$0xff]
        %v7700 = vld [vmem:[#allocation5 + $0x78] sm:$0xff]
        %v7701 = vld [vmem:[#allocation5 + $0x80] sm:$0xff]
        %v7702 = vld [vmem:[#allocation5 + $0x88] sm:$0xff]
        %v7703 = vld [vmem:[#allocation5 + $0x90] sm:$0xff]
        %v7704 = vld [vmem:[#allocation5 + $0x98] sm:$0xff]
        %v7705 = vld [vmem:[#allocation5 + $0xa0] sm:$0xff]
        %v7706 = vld [vmem:[#allocation5 + $0xa8] sm:$0xff]
        %v7707 = vld [vmem:[#allocation5 + $0xb0] sm:$0xff]
        %v7708 = vld [vmem:[#allocation5 + $0xb8] sm:$0xff]
        %v7709 = vld [vmem:[#allocation5 + $0xc0] sm:$0xff]
        %v7710 = vld [vmem:[#allocation5 + $0xc8] sm:$0xff]
        %v7711 = vld [vmem:[#allocation5 + $0xd0] sm:$0xff]
        %v7712 = vld [vmem:[#allocation5 + $0xd8] sm:$0xff]
        %v7713 = vld [vmem:[#allocation5 + $0xe0] sm:$0xff]
        %v7714 = vld [vmem:[#allocation5 + $0xe8] sm:$0xff]
        %v7715 = vld [vmem:[#allocation5 + $0xf0] sm:$0xff]
        %v7716 = vld [vmem:[#allocation5 + $0xf8] sm:$0xff]
        %v7717 = vld [vmem:[#allocation5 + $0x100] sm:$0xff]
        %v7718 = vld [vmem:[#allocation5 + $0x108] sm:$0xff]
        %v7719 = vld [vmem:[#allocation5 + $0x110] sm:$0xff]
        %v7720 = vld [vmem:[#allocation5 + $0x118] sm:$0xff]
        %v7721 = vld [vmem:[#allocation5 + $0x120] sm:$0xff]
        %v7722 = vld [vmem:[#allocation5 + $0x128] sm:$0xff]
        %v7723 = vld [vmem:[#allocation5 + $0x130] sm:$0xff]
        %v7724 = vld [vmem:[#allocation5 + $0x138] sm:$0xff]
        %v7725 = vld [vmem:[#allocation5 + $0x140] sm:$0xff]
        %v7726 = vld [vmem:[#allocation5 + $0x148] sm:$0xff]
        %v7727 = vld [vmem:[#allocation5 + $0x150] sm:$0xff]
        %v7728 = vld [vmem:[#allocation5 + $0x158] sm:$0xff]
        %v7729 = vld [vmem:[#allocation5 + $0x160] sm:$0xff]
        %v7730 = vld [vmem:[#allocation5 + $0x168] sm:$0xff]
        %v7731 = vld [vmem:[#allocation5 + $0x170] sm:$0xff]
        %v7732 = vld [vmem:[#allocation5 + $0x178] sm:$0xff]
        %v7733 = vld [vmem:[#allocation5 + $0x180] sm:$0xff]
        %v7734 = vld [vmem:[#allocation5 + $0x188] sm:$0xff]
        %v7735 = vld [vmem:[#allocation5 + $0x190] sm:$0xff]
        %v7736 = vld [vmem:[#allocation5 + $0x198] sm:$0xff]
        %v7737 = vld [vmem:[#allocation5 + $0x1a0] sm:$0xff]
        %v7738 = vld [vmem:[#allocation5 + $0x1a8] sm:$0xff]
        %v7739 = vld [vmem:[#allocation5 + $0x1b0] sm:$0xff]
        %v7740 = vld [vmem:[#allocation5 + $0x1b8] sm:$0xff]
        %v7741 = vld [vmem:[#allocation5 + $0x1c0] sm:$0xff]
        %v7742 = vld [vmem:[#allocation5 + $0x1c8] sm:$0xff]
        %v7743 = vld [vmem:[#allocation5 + $0x1d0] sm:$0xff]
        %v7744 = vld [vmem:[#allocation5 + $0x1d8] sm:$0xff]
        %v7745 = vld [vmem:[#allocation5 + $0x1e0] sm:$0xff]
        %v7746 = vld [vmem:[#allocation5 + $0x1e8] sm:$0xff]
        %v7747 = vld [vmem:[#allocation5 + $0x1f0] sm:$0xff]
        %v7748 = vld [vmem:[#allocation5 + $0x1f8] sm:$0xff]
        %v7749 = vld [vmem:[#allocation28] sm:$0xf]
        %v7750 = vld [vmem:[#allocation28 + $0x4] sm:$0xf]
        %v7751 = vld [vmem:[#allocation28 + $0x8] sm:$0xf]
        %v7752 = vld [vmem:[#allocation28 + $0xc] sm:$0xf]
        %v7753 = vld [vmem:[#allocation28 + $0x10] sm:$0xf]
        %v7754 = vld [vmem:[#allocation28 + $0x14] sm:$0xf]
        %v7755 = vld [vmem:[#allocation28 + $0x18] sm:$0xf]
        %v7756 = vld [vmem:[#allocation28 + $0x1c] sm:$0xf]
        %v7757 = vld [vmem:[#allocation28 + $0x20] sm:$0xf]
        %v7758 = vld [vmem:[#allocation28 + $0x24] sm:$0xf]
        %v7759 = vld [vmem:[#allocation28 + $0x28] sm:$0xf]
        %v7760 = vld [vmem:[#allocation28 + $0x2c] sm:$0xf]
        %v7761 = vld [vmem:[#allocation28 + $0x30] sm:$0xf]
        %v7762 = vld [vmem:[#allocation28 + $0x34] sm:$0xf]
        %v7763 = vld [vmem:[#allocation28 + $0x38] sm:$0xf]
        %v7764 = vld [vmem:[#allocation28 + $0x3c] sm:$0xf]
        %v7765 = vld [vmem:[#allocation28 + $0x40] sm:$0xf]
        %v7766 = vld [vmem:[#allocation28 + $0x44] sm:$0xf]
        %v7767 = vld [vmem:[#allocation28 + $0x48] sm:$0xf]
        %v7768 = vld [vmem:[#allocation28 + $0x4c] sm:$0xf]
        %v7769 = vld [vmem:[#allocation28 + $0x50] sm:$0xf]
        %v7770 = vld [vmem:[#allocation28 + $0x54] sm:$0xf]
        %v7771 = vld [vmem:[#allocation28 + $0x58] sm:$0xf]
        %v7772 = vld [vmem:[#allocation28 + $0x5c] sm:$0xf]
        %v7773 = vld [vmem:[#allocation28 + $0x60] sm:$0xf]
        %v7774 = vld [vmem:[#allocation28 + $0x64] sm:$0xf]
        %v7775 = vld [vmem:[#allocation28 + $0x68] sm:$0xf]
        %v7776 = vld [vmem:[#allocation28 + $0x6c] sm:$0xf]
        %v7777 = vld [vmem:[#allocation28 + $0x70] sm:$0xf]
        %v7778 = vld [vmem:[#allocation28 + $0x74] sm:$0xf]
        %v7779 = vld [vmem:[#allocation28 + $0x78] sm:$0xf]
        %v7780 = vld [vmem:[#allocation28 + $0x7c] sm:$0xf]
        %v7781 = vld [vmem:[#allocation29] sm:$0x1]
        %v7783 = vlaneseq
        %v7784 = vshrl.u32 %v7783, 7
        %v7785 = vsub.s32 0, %v7784
        %v7786 = vrot.slane %v7781, %v7785
        %v7820 = vunpack.c.l.b16 %v7749
        %v7821 = vunpack.c.l.b16 %v7750
        %v7822 = vunpack.c.l.b16 %v7751
        %v7823 = vunpack.c.l.b16 %v7752
        %v7824 = vunpack.c.l.b16 %v7753
        %v7825 = vunpack.c.l.b16 %v7754
        %v7826 = vunpack.c.l.b16 %v7755
        %v7827 = vunpack.c.l.b16 %v7756
        %v7828 = vunpack.c.l.b16 %v7757
        %v7829 = vunpack.c.l.b16 %v7758
        %v7830 = vunpack.c.l.b16 %v7759
        %v7831 = vunpack.c.l.b16 %v7760
        %v7832 = vunpack.c.l.b16 %v7761
        %v7833 = vunpack.c.l.b16 %v7762
        %v7834 = vunpack.c.l.b16 %v7763
        %v7835 = vunpack.c.l.b16 %v7764
        %v7836 = vunpack.c.l.b16 %v7765
        %v7837 = vunpack.c.l.b16 %v7766
        %v7838 = vunpack.c.l.b16 %v7767
        %v7839 = vunpack.c.l.b16 %v7768
        %v7840 = vunpack.c.l.b16 %v7769
        %v7841 = vunpack.c.l.b16 %v7770
        %v7842 = vunpack.c.l.b16 %v7771
        %v7843 = vunpack.c.l.b16 %v7772
        %v7844 = vunpack.c.l.b16 %v7773
        %v7845 = vunpack.c.l.b16 %v7774
        %v7846 = vunpack.c.l.b16 %v7775
        %v7847 = vunpack.c.l.b16 %v7776
        %v7848 = vunpack.c.l.b16 %v7777
        %v7849 = vunpack.c.l.b16 %v7778
        %v7850 = vunpack.c.l.b16 %v7779
        %v7851 = vunpack.c.l.b16 %v7780
        %v7852 = vpack.c.b16 %v7821, %v7820
        %v7853 = vpack.c.b16 %v7823, %v7822
        %v7854 = vpack.c.b16 %v7825, %v7824
        %v7855 = vpack.c.b16 %v7827, %v7826
        %v7856 = vpack.c.b16 %v7829, %v7828
        %v7857 = vpack.c.b16 %v7831, %v7830
        %v7858 = vpack.c.b16 %v7833, %v7832
        %v7859 = vpack.c.b16 %v7835, %v7834
        %v7860 = vpack.c.b16 %v7837, %v7836
        %v7861 = vpack.c.b16 %v7839, %v7838
        %v7862 = vpack.c.b16 %v7841, %v7840
        %v7863 = vpack.c.b16 %v7843, %v7842
        %v7864 = vpack.c.b16 %v7845, %v7844
        %v7865 = vpack.c.b16 %v7847, %v7846
        %v7866 = vpack.c.b16 %v7849, %v7848
        %v7867 = vpack.c.b16 %v7851, %v7850
        %7884 = vmatprep.subr.bf16.mxu0 0
        %7885 = vmatpush1.bf16.msra.mxu0 %v7852
        %7886 = vmatprep.subr.bf16.mxu0 0
        %7887 = vmatpush1.bf16.msra.mxu0 %v7853
        %7888 = vmatprep.subr.bf16.mxu0 0
        %7889 = vmatpush1.bf16.msra.mxu0 %v7854
        %7890 = vmatprep.subr.bf16.mxu0 0
        %7891 = vmatpush1.bf16.msra.mxu0 %v7855
        %7892 = vmatprep.subr.bf16.mxu0 0
        %7893 = vmatpush1.bf16.msra.mxu0 %v7856
        %7894 = vmatprep.subr.bf16.mxu0 0
        %7895 = vmatpush1.bf16.msra.mxu0 %v7857
        %7896 = vmatprep.subr.bf16.mxu0 0
        %7897 = vmatpush1.bf16.msra.mxu0 %v7858
        %7898 = vmatprep.subr.bf16.mxu0 0
        %7899 = vmatpush1.bf16.msra.mxu0 %v7859
        %7900 = vmatprep.subr.bf16.mxu0 0
        %7901 = vmatpush1.bf16.msra.mxu0 %v7860
        %7902 = vmatprep.subr.bf16.mxu0 0
        %7903 = vmatpush1.bf16.msra.mxu0 %v7861
        %7904 = vmatprep.subr.bf16.mxu0 0
        %7905 = vmatpush1.bf16.msra.mxu0 %v7862
        %7906 = vmatprep.subr.bf16.mxu0 0
        %7907 = vmatpush1.bf16.msra.mxu0 %v7863
        %7908 = vmatprep.subr.bf16.mxu0 0
        %7909 = vmatpush1.bf16.msra.mxu0 %v7864
        %7910 = vmatprep.subr.bf16.mxu0 0
        %7911 = vmatpush1.bf16.msra.mxu0 %v7865
        %7912 = vmatprep.subr.bf16.mxu0 0
        %7913 = vmatpush1.bf16.msra.mxu0 %v7866
        %7914 = vmatprep.subr.bf16.mxu0 0
        %7915 = vmatpush1.bf16.msra.mxu0 %v7867
        %7916 = vmatprep.mubr.bf16.mxu0 %v7686
        %7917 = vmatmul.mubr.bf16.gmra.mrb[0].mxu0 %v7685
        %v7918 = vpop.f32.mrb[0].mxu0
        %v7919 = vadd.f32 %v7786, %v7918
        %v7920 = vpop.f32.mrb[0].mxu0
        %v7921 = vpop.f32.mrb[0].mxu0
        %v7922 = vadd.f32 %v7786, %v7921
        %v7923 = vpop.f32.mrb[0].mxu0
        %7924 = vmatprep.mubr.bf16.mxu0 %v7688
        %7925 = vmatmul.mubr.bf16.gmra.mrb[0].mxu0 %v7687
        %v7926 = vpop.f32.mrb[0].mxu0
        %v7927 = vadd.f32 %v7786, %v7926
        %v7928 = vpop.f32.mrb[0].mxu0
        %v7929 = vpop.f32.mrb[0].mxu0
        %v7930 = vadd.f32 %v7786, %v7929
        %v7931 = vpop.f32.mrb[0].mxu0
        %7932 = vmatprep.mubr.bf16.mxu0 %v7690
        %7933 = vmatmul.mubr.bf16.gmra.mrb[0].mxu0 %v7689
        %v7934 = vpop.f32.mrb[0].mxu0
        %v7935 = vadd.f32 %v7786, %v7934
        %v7936 = vpop.f32.mrb[0].mxu0
        %v7937 = vpop.f32.mrb[0].mxu0
        %v7938 = vadd.f32 %v7786, %v7937
        %v7939 = vpop.f32.mrb[0].mxu0
        %7940 = vmatprep.mubr.bf16.mxu0 %v7692
        %7941 = vmatmul.mubr.bf16.gmra.mrb[0].mxu0 %v7691
        %v7942 = vpop.f32.mrb[0].mxu0
        %v7943 = vadd.f32 %v7786, %v7942
        %v7944 = vpop.f32.mrb[0].mxu0
        %v7945 = vpop.f32.mrb[0].mxu0
        %v7946 = vadd.f32 %v7786, %v7945
        %v7947 = vpop.f32.mrb[0].mxu0
        %7948 = vmatprep.mubr.bf16.mxu0 %v7694
        %7949 = vmatmul.mubr.bf16.gmra.mrb[0].mxu0 %v7693
        %v7950 = vpop.f32.mrb[0].mxu0
        %v7951 = vadd.f32 %v7786, %v7950
        %v7952 = vpop.f32.mrb[0].mxu0
        %v7953 = vpop.f32.mrb[0].mxu0
        %v7954 = vadd.f32 %v7786, %v7953
        %v7955 = vpop.f32.mrb[0].mxu0
        %7956 = vmatprep.mubr.bf16.mxu0 %v7696
        %7957 = vmatmul.mubr.bf16.gmra.mrb[0].mxu0 %v7695
        %v7958 = vpop.f32.mrb[0].mxu0
        %v7959 = vadd.f32 %v7786, %v7958
        %v7960 = vpop.f32.mrb[0].mxu0
        %v7961 = vpop.f32.mrb[0].mxu0
        %v7962 = vadd.f32 %v7786, %v7961
        %v7963 = vpop.f32.mrb[0].mxu0
        %7964 = vmatprep.mubr.bf16.mxu0 %v7698
        %7965 = vmatmul.mubr.bf16.gmra.mrb[0].mxu0 %v7697
        %v7966 = vpop.f32.mrb[0].mxu0
        %v7967 = vadd.f32 %v7786, %v7966
        %v7968 = vpop.f32.mrb[0].mxu0
        %v7969 = vpop.f32.mrb[0].mxu0
        %v7970 = vadd.f32 %v7786, %v7969
        %v7971 = vpop.f32.mrb[0].mxu0
        %7972 = vmatprep.mubr.bf16.mxu0 %v7700
        %7973 = vmatmul.mubr.bf16.gmra.mrb[0].mxu0 %v7699
        %v7974 = vpop.f32.mrb[0].mxu0
        %v7975 = vadd.f32 %v7786, %v7974
        %v7976 = vpop.f32.mrb[0].mxu0
        %v7977 = vpop.f32.mrb[0].mxu0
        %v7978 = vadd.f32 %v7786, %v7977
        %v7979 = vpop.f32.mrb[0].mxu0
        %7980 = vmatprep.mubr.bf16.mxu0 %v7702
        %7981 = vmatmul.mubr.bf16.gmra.mrb[0].mxu0 %v7701
        %v7982 = vpop.f32.mrb[0].mxu0
        %v7983 = vadd.f32 %v7786, %v7982
        %v7984 = vpop.f32.mrb[0].mxu0
        %v7985 = vpop.f32.mrb[0].mxu0
        %v7986 = vadd.f32 %v7786, %v7985
        %v7987 = vpop.f32.mrb[0].mxu0
        %7988 = vmatprep.mubr.bf16.mxu0 %v7704
        %7989 = vmatmul.mubr.bf16.gmra.mrb[0].mxu0 %v7703
        %v7990 = vpop.f32.mrb[0].mxu0
        %v7991 = vadd.f32 %v7786, %v7990
        %v7992 = vpop.f32.mrb[0].mxu0
        %v7993 = vpop.f32.mrb[0].mxu0
        %v7994 = vadd.f32 %v7786, %v7993
        %v7995 = vpop.f32.mrb[0].mxu0
        %7996 = vmatprep.mubr.bf16.mxu0 %v7706
        %7997 = vmatmul.mubr.bf16.gmra.mrb[0].mxu0 %v7705
        %v7998 = vpop.f32.mrb[0].mxu0
        %v7999 = vadd.f32 %v7786, %v7998
        %v8000 = vpop.f32.mrb[0].mxu0
        %v8001 = vpop.f32.mrb[0].mxu0
        %v8002 = vadd.f32 %v7786, %v8001
        %v8003 = vpop.f32.mrb[0].mxu0
        %8004 = vmatprep.mubr.bf16.mxu0 %v7708
        %8005 = vmatmul.mubr.bf16.gmra.mrb[0].mxu0 %v7707
        %v8006 = vpop.f32.mrb[0].mxu0
        %v8007 = vadd.f32 %v7786, %v8006
        %v8008 = vpop.f32.mrb[0].mxu0
        %v8009 = vpop.f32.mrb[0].mxu0
        %v8010 = vadd.f32 %v7786, %v8009
        %v8011 = vpop.f32.mrb[0].mxu0
        %8012 = vmatprep.mubr.bf16.mxu0 %v7710
        %8013 = vmatmul.mubr.bf16.gmra.mrb[0].mxu0 %v7709
        %v8014 = vpop.f32.mrb[0].mxu0
        %v8015 = vadd.f32 %v7786, %v8014
        %v8016 = vpop.f32.mrb[0].mxu0
        %v8017 = vpop.f32.mrb[0].mxu0
        %v8018 = vadd.f32 %v7786, %v8017
        %v8019 = vpop.f32.mrb[0].mxu0
        %8020 = vmatprep.mubr.bf16.mxu0 %v7712
        %8021 = vmatmul.mubr.bf16.gmra.mrb[0].mxu0 %v7711
        %v8022 = vpop.f32.mrb[0].mxu0
        %v8023 = vadd.f32 %v7786, %v8022
        %v8024 = vpop.f32.mrb[0].mxu0
        %v8025 = vpop.f32.mrb[0].mxu0
        %v8026 = vadd.f32 %v7786, %v8025
        %v8027 = vpop.f32.mrb[0].mxu0
        %8028 = vmatprep.mubr.bf16.mxu0 %v7714
        %8029 = vmatmul.mubr.bf16.gmra.mrb[0].mxu0 %v7713
        %v8030 = vpop.f32.mrb[0].mxu0
        %v8031 = vadd.f32 %v7786, %v8030
        %v8032 = vpop.f32.mrb[0].mxu0
        %v8033 = vpop.f32.mrb[0].mxu0
        %v8034 = vadd.f32 %v7786, %v8033
        %v8035 = vpop.f32.mrb[0].mxu0
        %8036 = vmatprep.mubr.bf16.mxu0 %v7716
        %8037 = vmatmul.mubr.bf16.gmra.mrb[0].mxu0 %v7715
        %v8038 = vpop.f32.mrb[0].mxu0
        %v8039 = vadd.f32 %v7786, %v8038
        %v8040 = vpop.f32.mrb[0].mxu0
        %v8041 = vpop.f32.mrb[0].mxu0
        %v8042 = vadd.f32 %v7786, %v8041
        %v8043 = vpop.f32.mrb[0].mxu0
        %8044 = vmatprep.mubr.bf16.mxu0 %v7718
        %8045 = vmatmul.mubr.bf16.gmra.mrb[0].mxu0 %v7717
        %v8046 = vpop.f32.mrb[0].mxu0
        %v8047 = vadd.f32 %v7786, %v8046
        %v8048 = vpop.f32.mrb[0].mxu0
        %v8049 = vpop.f32.mrb[0].mxu0
        %v8050 = vadd.f32 %v7786, %v8049
        %v8051 = vpop.f32.mrb[0].mxu0
        %8052 = vmatprep.mubr.bf16.mxu0 %v7720
        %8053 = vmatmul.mubr.bf16.gmra.mrb[0].mxu0 %v7719
        %v8054 = vpop.f32.mrb[0].mxu0
        %v8055 = vadd.f32 %v7786, %v8054
        %v8056 = vpop.f32.mrb[0].mxu0
        %v8057 = vpop.f32.mrb[0].mxu0
        %v8058 = vadd.f32 %v7786, %v8057
        %v8059 = vpop.f32.mrb[0].mxu0
        %8060 = vmatprep.mubr.bf16.mxu0 %v7722
        %8061 = vmatmul.mubr.bf16.gmra.mrb[0].mxu0 %v7721
        %v8062 = vpop.f32.mrb[0].mxu0
        %v8063 = vadd.f32 %v7786, %v8062
        %v8064 = vpop.f32.mrb[0].mxu0
        %v8065 = vpop.f32.mrb[0].mxu0
        %v8066 = vadd.f32 %v7786, %v8065
        %v8067 = vpop.f32.mrb[0].mxu0
        %8068 = vmatprep.mubr.bf16.mxu0 %v7724
        %8069 = vmatmul.mubr.bf16.gmra.mrb[0].mxu0 %v7723
        %v8070 = vpop.f32.mrb[0].mxu0
        %v8071 = vadd.f32 %v7786, %v8070
        %v8072 = vpop.f32.mrb[0].mxu0
        %v8073 = vpop.f32.mrb[0].mxu0
        %v8074 = vadd.f32 %v7786, %v8073
        %v8075 = vpop.f32.mrb[0].mxu0
        %8076 = vmatprep.mubr.bf16.mxu0 %v7726
        %8077 = vmatmul.mubr.bf16.gmra.mrb[0].mxu0 %v7725
        %v8078 = vpop.f32.mrb[0].mxu0
        %v8079 = vadd.f32 %v7786, %v8078
        %v8080 = vpop.f32.mrb[0].mxu0
        %v8081 = vpop.f32.mrb[0].mxu0
        %v8082 = vadd.f32 %v7786, %v8081
        %v8083 = vpop.f32.mrb[0].mxu0
        %8084 = vmatprep.mubr.bf16.mxu0 %v7728
        %8085 = vmatmul.mubr.bf16.gmra.mrb[0].mxu0 %v7727
        %v8086 = vpop.f32.mrb[0].mxu0
        %v8087 = vadd.f32 %v7786, %v8086
        %v8088 = vpop.f32.mrb[0].mxu0
        %v8089 = vpop.f32.mrb[0].mxu0
        %v8090 = vadd.f32 %v7786, %v8089
        %v8091 = vpop.f32.mrb[0].mxu0
        %8092 = vmatprep.mubr.bf16.mxu0 %v7730
        %8093 = vmatmul.mubr.bf16.gmra.mrb[0].mxu0 %v7729
        %v8094 = vpop.f32.mrb[0].mxu0
        %v8095 = vadd.f32 %v7786, %v8094
        %v8096 = vpop.f32.mrb[0].mxu0
        %v8097 = vpop.f32.mrb[0].mxu0
        %v8098 = vadd.f32 %v7786, %v8097
        %v8099 = vpop.f32.mrb[0].mxu0
        %8100 = vmatprep.mubr.bf16.mxu0 %v7732
        %8101 = vmatmul.mubr.bf16.gmra.mrb[0].mxu0 %v7731
        %v8102 = vpop.f32.mrb[0].mxu0
        %v8103 = vadd.f32 %v7786, %v8102
        %v8104 = vpop.f32.mrb[0].mxu0
        %v8105 = vpop.f32.mrb[0].mxu0
        %v8106 = vadd.f32 %v7786, %v8105
        %v8107 = vpop.f32.mrb[0].mxu0
        %8108 = vmatprep.mubr.bf16.mxu0 %v7734
        %8109 = vmatmul.mubr.bf16.gmra.mrb[0].mxu0 %v7733
        %v8110 = vpop.f32.mrb[0].mxu0
        %v8111 = vadd.f32 %v7786, %v8110
        %v8112 = vpop.f32.mrb[0].mxu0
        %v8113 = vpop.f32.mrb[0].mxu0
        %v8114 = vadd.f32 %v7786, %v8113
        %v8115 = vpop.f32.mrb[0].mxu0
        %8116 = vmatprep.mubr.bf16.mxu0 %v7736
        %8117 = vmatmul.mubr.bf16.gmra.mrb[0].mxu0 %v7735
        %v8118 = vpop.f32.mrb[0].mxu0
        %v8119 = vadd.f32 %v7786, %v8118
        %v8120 = vpop.f32.mrb[0].mxu0
        %v8121 = vpop.f32.mrb[0].mxu0
        %v8122 = vadd.f32 %v7786, %v8121
        %v8123 = vpop.f32.mrb[0].mxu0
        %8124 = vmatprep.mubr.bf16.mxu0 %v7738
        %8125 = vmatmul.mubr.bf16.gmra.mrb[0].mxu0 %v7737
        %v8126 = vpop.f32.mrb[0].mxu0
        %v8127 = vadd.f32 %v7786, %v8126
        %v8128 = vpop.f32.mrb[0].mxu0
        %v8129 = vpop.f32.mrb[0].mxu0
        %v8130 = vadd.f32 %v7786, %v8129
        %v8131 = vpop.f32.mrb[0].mxu0
        %8132 = vmatprep.mubr.bf16.mxu0 %v7740
        %8133 = vmatmul.mubr.bf16.gmra.mrb[0].mxu0 %v7739
        %v8134 = vpop.f32.mrb[0].mxu0
        %v8135 = vadd.f32 %v7786, %v8134
        %v8136 = vpop.f32.mrb[0].mxu0
        %v8137 = vpop.f32.mrb[0].mxu0
        %v8138 = vadd.f32 %v7786, %v8137
        %v8139 = vpop.f32.mrb[0].mxu0
        %8140 = vmatprep.mubr.bf16.mxu0 %v7742
        %8141 = vmatmul.mubr.bf16.gmra.mrb[0].mxu0 %v7741
        %v8142 = vpop.f32.mrb[0].mxu0
        %v8143 = vadd.f32 %v7786, %v8142
        %v8144 = vpop.f32.mrb[0].mxu0
        %v8145 = vpop.f32.mrb[0].mxu0
        %v8146 = vadd.f32 %v7786, %v8145
        %v8147 = vpop.f32.mrb[0].mxu0
        %8148 = vmatprep.mubr.bf16.mxu0 %v7744
        %8149 = vmatmul.mubr.bf16.gmra.mrb[0].mxu0 %v7743
        %v8150 = vpop.f32.mrb[0].mxu0
        %v8151 = vadd.f32 %v7786, %v8150
        %v8152 = vpop.f32.mrb[0].mxu0
        %v8153 = vpop.f32.mrb[0].mxu0
        %v8154 = vadd.f32 %v7786, %v8153
        %v8155 = vpop.f32.mrb[0].mxu0
        %8156 = vmatprep.mubr.bf16.mxu0 %v7746
        %8157 = vmatmul.mubr.bf16.gmra.mrb[0].mxu0 %v7745
        %v8158 = vpop.f32.mrb[0].mxu0
        %v8159 = vadd.f32 %v7786, %v8158
        %v8160 = vpop.f32.mrb[0].mxu0
        %v8161 = vpop.f32.mrb[0].mxu0
        %v8162 = vadd.f32 %v7786, %v8161
        %v8163 = vpop.f32.mrb[0].mxu0
        %8164 = vmatprep.mubr.bf16.mxu0 %v7748
        %8165 = vmatmul.mubr.bf16.gmra.mrb[0].mxu0 %v7747
        %v8166 = vpop.f32.mrb[0].mxu0
        %v8167 = vadd.f32 %v7786, %v8166
        %v8168 = vpop.f32.mrb[0].mxu0
        %v8169 = vpop.f32.mrb[0].mxu0
        %v8170 = vadd.f32 %v7786, %v8169
        %v8171 = vpop.f32.mrb[0].mxu0
        %8172 = vdwg.mxu0
        %v8173 = vld [vmem:[#allocation31] sm:$0xff]
        %v8174 = vld [vmem:[#allocation31 + $0x8] sm:$0xff]
        %v8175 = vld [vmem:[#allocation31 + $0x10] sm:$0xff]
        %v8176 = vld [vmem:[#allocation31 + $0x18] sm:$0xff]
        %v8177 = vld [vmem:[#allocation31 + $0x20] sm:$0xff]
        %v8178 = vld [vmem:[#allocation31 + $0x28] sm:$0xff]
        %v8179 = vld [vmem:[#allocation31 + $0x30] sm:$0xff]
        %v8180 = vld [vmem:[#allocation31 + $0x38] sm:$0xff]
        %v8181 = vld [vmem:[#allocation31 + $0x40] sm:$0xff]
        %v8182 = vld [vmem:[#allocation31 + $0x48] sm:$0xff]
        %v8183 = vld [vmem:[#allocation31 + $0x50] sm:$0xff]
        %v8184 = vld [vmem:[#allocation31 + $0x58] sm:$0xff]
        %v8185 = vld [vmem:[#allocation31 + $0x60] sm:$0xff]
        %v8186 = vld [vmem:[#allocation31 + $0x68] sm:$0xff]
        %v8187 = vld [vmem:[#allocation31 + $0x70] sm:$0xff]
        %v8188 = vld [vmem:[#allocation31 + $0x78] sm:$0xff]
        %v8189 = vld [vmem:[#allocation31 + $0x80] sm:$0xff]
        %v8190 = vld [vmem:[#allocation31 + $0x88] sm:$0xff]
        %v8191 = vld [vmem:[#allocation31 + $0x90] sm:$0xff]
        %v8192 = vld [vmem:[#allocation31 + $0x98] sm:$0xff]
        %v8193 = vld [vmem:[#allocation31 + $0xa0] sm:$0xff]
        %v8194 = vld [vmem:[#allocation31 + $0xa8] sm:$0xff]
        %v8195 = vld [vmem:[#allocation31 + $0xb0] sm:$0xff]
        %v8196 = vld [vmem:[#allocation31 + $0xb8] sm:$0xff]
        %v8197 = vld [vmem:[#allocation31 + $0xc0] sm:$0xff]
        %v8198 = vld [vmem:[#allocation31 + $0xc8] sm:$0xff]
        %v8199 = vld [vmem:[#allocation31 + $0xd0] sm:$0xff]
        %v8200 = vld [vmem:[#allocation31 + $0xd8] sm:$0xff]
        %v8201 = vld [vmem:[#allocation31 + $0xe0] sm:$0xff]
        %v8202 = vld [vmem:[#allocation31 + $0xe8] sm:$0xff]
        %v8203 = vld [vmem:[#allocation31 + $0xf0] sm:$0xff]
        %v8204 = vld [vmem:[#allocation31 + $0xf8] sm:$0xff]
        %v8205 = vld [vmem:[#allocation31 + $0x100] sm:$0xff]
        %v8206 = vld [vmem:[#allocation31 + $0x108] sm:$0xff]
        %v8207 = vld [vmem:[#allocation31 + $0x110] sm:$0xff]
        %v8208 = vld [vmem:[#allocation31 + $0x118] sm:$0xff]
        %v8209 = vld [vmem:[#allocation31 + $0x120] sm:$0xff]
        %v8210 = vld [vmem:[#allocation31 + $0x128] sm:$0xff]
        %v8211 = vld [vmem:[#allocation31 + $0x130] sm:$0xff]
        %v8212 = vld [vmem:[#allocation31 + $0x138] sm:$0xff]
        %v8213 = vld [vmem:[#allocation31 + $0x140] sm:$0xff]
        %v8214 = vld [vmem:[#allocation31 + $0x148] sm:$0xff]
        %v8215 = vld [vmem:[#allocation31 + $0x150] sm:$0xff]
        %v8216 = vld [vmem:[#allocation31 + $0x158] sm:$0xff]
        %v8217 = vld [vmem:[#allocation31 + $0x160] sm:$0xff]
        %v8218 = vld [vmem:[#allocation31 + $0x168] sm:$0xff]
        %v8219 = vld [vmem:[#allocation31 + $0x170] sm:$0xff]
        %v8220 = vld [vmem:[#allocation31 + $0x178] sm:$0xff]
        %v8221 = vld [vmem:[#allocation31 + $0x180] sm:$0xff]
        %v8222 = vld [vmem:[#allocation31 + $0x188] sm:$0xff]
        %v8223 = vld [vmem:[#allocation31 + $0x190] sm:$0xff]
        %v8224 = vld [vmem:[#allocation31 + $0x198] sm:$0xff]
        %v8225 = vld [vmem:[#allocation31 + $0x1a0] sm:$0xff]
        %v8226 = vld [vmem:[#allocation31 + $0x1a8] sm:$0xff]
        %v8227 = vld [vmem:[#allocation31 + $0x1b0] sm:$0xff]
        %v8228 = vld [vmem:[#allocation31 + $0x1b8] sm:$0xff]
        %v8229 = vld [vmem:[#allocation31 + $0x1c0] sm:$0xff]
        %v8230 = vld [vmem:[#allocation31 + $0x1c8] sm:$0xff]
        %v8231 = vld [vmem:[#allocation31 + $0x1d0] sm:$0xff]
        %v8232 = vld [vmem:[#allocation31 + $0x1d8] sm:$0xff]
        %v8233 = vld [vmem:[#allocation31 + $0x1e0] sm:$0xff]
        %v8234 = vld [vmem:[#allocation31 + $0x1e8] sm:$0xff]
        %v8235 = vld [vmem:[#allocation31 + $0x1f0] sm:$0xff]
        %v8236 = vld [vmem:[#allocation31 + $0x1f8] sm:$0xff]
        %v8237 = vmul.f32 %v7919, %v8173
        %v8238 = vmul.f32 %v7922, %v8174
        %v8239 = vmul.f32 %v7927, %v8175
        %v8240 = vmul.f32 %v7930, %v8176
        %v8241 = vmul.f32 %v7935, %v8177
        %v8242 = vmul.f32 %v7938, %v8178
        %v8243 = vmul.f32 %v7943, %v8179
        %v8244 = vmul.f32 %v7946, %v8180
        %v8245 = vmul.f32 %v7951, %v8181
        %v8246 = vmul.f32 %v7954, %v8182
        %v8247 = vmul.f32 %v7959, %v8183
        %v8248 = vmul.f32 %v7962, %v8184
        %v8249 = vmul.f32 %v7967, %v8185
        %v8250 = vmul.f32 %v7970, %v8186
        %v8251 = vmul.f32 %v7975, %v8187
        %v8252 = vmul.f32 %v7978, %v8188
        %v8253 = vmul.f32 %v7983, %v8189
        %v8254 = vmul.f32 %v7986, %v8190
        %v8255 = vmul.f32 %v7991, %v8191
        %v8256 = vmul.f32 %v7994, %v8192
        %v8257 = vmul.f32 %v7999, %v8193
        %v8258 = vmul.f32 %v8002, %v8194
        %v8259 = vmul.f32 %v8007, %v8195
        %v8260 = vmul.f32 %v8010, %v8196
        %v8261 = vmul.f32 %v8015, %v8197
        %v8262 = vmul.f32 %v8018, %v8198
        %v8263 = vmul.f32 %v8023, %v8199
        %v8264 = vmul.f32 %v8026, %v8200
        %v8265 = vmul.f32 %v8031, %v8201
        %v8266 = vmul.f32 %v8034, %v8202
        %v8267 = vmul.f32 %v8039, %v8203
        %v8268 = vmul.f32 %v8042, %v8204
        %v8269 = vmul.f32 %v8047, %v8205
        %v8270 = vmul.f32 %v8050, %v8206
        %v8271 = vmul.f32 %v8055, %v8207
        %v8272 = vmul.f32 %v8058, %v8208
        %v8273 = vmul.f32 %v8063, %v8209
        %v8274 = vmul.f32 %v8066, %v8210
        %v8275 = vmul.f32 %v8071, %v8211
        %v8276 = vmul.f32 %v8074, %v8212
        %v8277 = vmul.f32 %v8079, %v8213
        %v8278 = vmul.f32 %v8082, %v8214
        %v8279 = vmul.f32 %v8087, %v8215
        %v8280 = vmul.f32 %v8090, %v8216
        %v8281 = vmul.f32 %v8095, %v8217
        %v8282 = vmul.f32 %v8098, %v8218
        %v8283 = vmul.f32 %v8103, %v8219
        %v8284 = vmul.f32 %v8106, %v8220
        %v8285 = vmul.f32 %v8111, %v8221
        %v8286 = vmul.f32 %v8114, %v8222
        %v8287 = vmul.f32 %v8119, %v8223
        %v8288 = vmul.f32 %v8122, %v8224
        %v8289 = vmul.f32 %v8127, %v8225
        %v8290 = vmul.f32 %v8130, %v8226
        %v8291 = vmul.f32 %v8135, %v8227
        %v8292 = vmul.f32 %v8138, %v8228
        %v8293 = vmul.f32 %v8143, %v8229
        %v8294 = vmul.f32 %v8146, %v8230
        %v8295 = vmul.f32 %v8151, %v8231
        %v8296 = vmul.f32 %v8154, %v8232
        %v8297 = vmul.f32 %v8159, %v8233
        %v8298 = vmul.f32 %v8162, %v8234
        %v8299 = vmul.f32 %v8167, %v8235
        %v8300 = vmul.f32 %v8170, %v8236
        %s8301 = scalar_lea.vmem %s721, 512 [#allocation32]
        %8302 = vst [vmem:[%s8301] sm:$0xff] %v8237
        %8303 = vst [vmem:[%s8301 + $0x8] sm:$0xff] %v8238
        %8304 = vst [vmem:[%s8301 + $0x10] sm:$0xff] %v8239
        %8305 = vst [vmem:[%s8301 + $0x18] sm:$0xff] %v8240
        %8306 = vst [vmem:[%s8301 + $0x20] sm:$0xff] %v8241
        %8307 = vst [vmem:[%s8301 + $0x28] sm:$0xff] %v8242
        %8308 = vst [vmem:[%s8301 + $0x30] sm:$0xff] %v8243
        %8309 = vst [vmem:[%s8301 + $0x38] sm:$0xff] %v8244
        %8310 = vst [vmem:[%s8301 + $0x40] sm:$0xff] %v8245
        %8311 = vst [vmem:[%s8301 + $0x48] sm:$0xff] %v8246
        %8312 = vst [vmem:[%s8301 + $0x50] sm:$0xff] %v8247
        %8313 = vst [vmem:[%s8301 + $0x58] sm:$0xff] %v8248
        %8314 = vst [vmem:[%s8301 + $0x60] sm:$0xff] %v8249
        %8315 = vst [vmem:[%s8301 + $0x68] sm:$0xff] %v8250
        %8316 = vst [vmem:[%s8301 + $0x70] sm:$0xff] %v8251
        %8317 = vst [vmem:[%s8301 + $0x78] sm:$0xff] %v8252
        %8318 = vst [vmem:[%s8301 + $0x80] sm:$0xff] %v8253
        %8319 = vst [vmem:[%s8301 + $0x88] sm:$0xff] %v8254
        %8320 = vst [vmem:[%s8301 + $0x90] sm:$0xff] %v8255
        %8321 = vst [vmem:[%s8301 + $0x98] sm:$0xff] %v8256
        %8322 = vst [vmem:[%s8301 + $0xa0] sm:$0xff] %v8257
        %8323 = vst [vmem:[%s8301 + $0xa8] sm:$0xff] %v8258
        %8324 = vst [vmem:[%s8301 + $0xb0] sm:$0xff] %v8259
        %8325 = vst [vmem:[%s8301 + $0xb8] sm:$0xff] %v8260
        %8326 = vst [vmem:[%s8301 + $0xc0] sm:$0xff] %v8261
        %8327 = vst [vmem:[%s8301 + $0xc8] sm:$0xff] %v8262
        %8328 = vst [vmem:[%s8301 + $0xd0] sm:$0xff] %v8263
        %8329 = vst [vmem:[%s8301 + $0xd8] sm:$0xff] %v8264
        %8330 = vst [vmem:[%s8301 + $0xe0] sm:$0xff] %v8265
        %8331 = vst [vmem:[%s8301 + $0xe8] sm:$0xff] %v8266
        %8332 = vst [vmem:[%s8301 + $0xf0] sm:$0xff] %v8267
        %8333 = vst [vmem:[%s8301 + $0xf8] sm:$0xff] %v8268
        %8334 = vst [vmem:[%s8301 + $0x100] sm:$0xff] %v8269
        %8335 = vst [vmem:[%s8301 + $0x108] sm:$0xff] %v8270
        %8336 = vst [vmem:[%s8301 + $0x110] sm:$0xff] %v8271
        %8337 = vst [vmem:[%s8301 + $0x118] sm:$0xff] %v8272
        %8338 = vst [vmem:[%s8301 + $0x120] sm:$0xff] %v8273
        %8339 = vst [vmem:[%s8301 + $0x128] sm:$0xff] %v8274
        %8340 = vst [vmem:[%s8301 + $0x130] sm:$0xff] %v8275
        %8341 = vst [vmem:[%s8301 + $0x138] sm:$0xff] %v8276
        %8342 = vst [vmem:[%s8301 + $0x140] sm:$0xff] %v8277
        %8343 = vst [vmem:[%s8301 + $0x148] sm:$0xff] %v8278
        %8344 = vst [vmem:[%s8301 + $0x150] sm:$0xff] %v8279
        %8345 = vst [vmem:[%s8301 + $0x158] sm:$0xff] %v8280
        %8346 = vst [vmem:[%s8301 + $0x160] sm:$0xff] %v8281
        %8347 = vst [vmem:[%s8301 + $0x168] sm:$0xff] %v8282
        %8348 = vst [vmem:[%s8301 + $0x170] sm:$0xff] %v8283
        %8349 = vst [vmem:[%s8301 + $0x178] sm:$0xff] %v8284
        %8350 = vst [vmem:[%s8301 + $0x180] sm:$0xff] %v8285
        %8351 = vst [vmem:[%s8301 + $0x188] sm:$0xff] %v8286
        %8352 = vst [vmem:[%s8301 + $0x190] sm:$0xff] %v8287
        %8353 = vst [vmem:[%s8301 + $0x198] sm:$0xff] %v8288
        %8354 = vst [vmem:[%s8301 + $0x1a0] sm:$0xff] %v8289
        %8355 = vst [vmem:[%s8301 + $0x1a8] sm:$0xff] %v8290
        %8356 = vst [vmem:[%s8301 + $0x1b0] sm:$0xff] %v8291
        %8357 = vst [vmem:[%s8301 + $0x1b8] sm:$0xff] %v8292
        %8358 = vst [vmem:[%s8301 + $0x1c0] sm:$0xff] %v8293
        %8359 = vst [vmem:[%s8301 + $0x1c8] sm:$0xff] %v8294
        %8360 = vst [vmem:[%s8301 + $0x1d0] sm:$0xff] %v8295
        %8361 = vst [vmem:[%s8301 + $0x1d8] sm:$0xff] %v8296
        %8362 = vst [vmem:[%s8301 + $0x1e0] sm:$0xff] %v8297
        %8363 = vst [vmem:[%s8301 + $0x1e8] sm:$0xff] %v8298
        %8364 = vst [vmem:[%s8301 + $0x1f0] sm:$0xff] %v8299
        %8365 = vst [vmem:[%s8301 + $0x1f8] sm:$0xff] %v8300
        %s8366 = sand.u32 %s383, 1
        %s8367 = scalar_lea.sflag [#allocation8], %s8366
        %s8368 = sand.u32 %s383, 1
        %s8369 = smul.addr %s8368, 1024
        %s8370 = scalar_lea.vmem [#allocation32], %s8369
        // Predicated region
        $region149: #{scalar_cnn_forward.1} parent=83 // pred_check
          %p8371 = pneg %p393
        $region150: #{scalar_cnn_forward.1} parent=83 // pred_check_branch
          %8373 = sbr.rel (%p8371) target = $region152
        $region151: #{scalar_cnn_forward.1} parent=83 // pred_region
          %s8374 = smul.u32 2, %s39
          %s8376 = ssub.s32 16384, 16384
          %8377 = vsyncadd %s8367, %s8376
          %s8378 = smul.addr %s8374, 64
          %s8379 = smul.addr %s8378, 128
          %s8380 = scalar_lea.hbm %s16, %s8379
          %s8381 = sshll.u32 %s8370, 4
          %s8382 = int_to_ptr.vmem [resolvable:$true] %s8381
          %8387 = dma.vmem_to_hbm [thread:$0]  %s8382, 16384, %s8380, %s8367, 128, 128, 8
        $region152: #{scalar_cnn_forward.1} parent=83 // pred_fallthru
          _
      $region84: #{scalar_cnn_forward.1} parent=5 // pred_fallthru
        _
      %p8388 = scmp.le.s32.totalorder 2, %s34
      // Predicated region
      $region153: #{scalar_cnn_forward.1} parent=5 // pred_check
        %p8389 = pneg %p8388
      $region154: #{scalar_cnn_forward.1} parent=5 // pred_check_branch
        %8391 = sbr.rel (%p8389) target = $region156
      $region155: #{scalar_cnn_forward.1} parent=5 // pred_region
        %s8392 = ssub.s32 %s34, 2
        // Predicated region
        $region157: #{scalar_cnn_forward.1} parent=155 // pred_check
          %p8393 = pneg %p399
        $region158: #{scalar_cnn_forward.1} parent=155 // pred_check_branch
          %8395 = sbr.rel (%p8393) target = $region160
        $region159: #{scalar_cnn_forward.1} parent=155 // pred_region
          %s8396 = sand.u32 %s384, 1
          %s8397 = scalar_lea.sflag [#allocation8], %s8396
          %s8398 = sand.u32 %s384, 1
          %s8399 = smul.addr %s8398, 1024
          %s8400 = scalar_lea.vmem [#allocation32], %s8399
          %8401 = dma.done %s8397, 16384
        $region160: #{scalar_cnn_forward.1} parent=155 // pred_fallthru
          _
      $region156: #{scalar_cnn_forward.1} parent=5 // pred_fallthru
        _
    $region6: #{scalar_cnn_forward.1} parent=1 // loop_footer
      %s38 = sadd.s32 1, %s34
    $region7: #{scalar_cnn_forward.1} parent=1 // loop_footer_branch
      %33 = sbr.rel target = $region3
    $region8: #{scalar_cnn_forward.1} parent=1 // loop_exit
      _
    %8402 = vsyncpa [#allocation7], 1
    %s8403 = scalar_lea.sflag [#allocation7], 1
    %8404 = vsyncpa %s8403, 1
    %8405 = vsyncpa [#allocation12], 1
    %8406 = vsyncpa [#allocation15], 1
    %8407 = vsyncpa [#allocation18], 1
    %8408 = vsyncpa [#allocation21], 1
    %8409 = vsyncpa [#allocation24], 1
    %8410 = vsyncpa [#allocation27], 1
    %8411 = vsyncpa [#allocation30], 1
    %8412 = vsyncpa [#allocation8], 1
    %s8413 = scalar_lea.sflag [#allocation8], 1
    %8414 = vsyncpa %s8413, 1
    %8415 = vsyncpa [#allocation9], 1
    %s8416 = scalar_lea.sflag [#allocation9], 1
    %8417 = vsyncpa %s8416, 1

</llo_original>
